<compile_context>
chip_gen: v5e
topology: v5e:2x2
jax: 0.10.0
libtpu: 0.0.40
codegen_flags: <defaults>
</compile_context>

<pallas_src>
import jax
import jax.numpy as jnp
from jax import lax
from jax.experimental import pallas as pl
from jax.experimental.pallas import tpu as pltpu

F32 = jnp.float32


# ---------------------------------------------------------------------------
# in-kernel helpers.  Channel-major flat layout: an SxS activation with C
# channels and flattening width Wf is a (C, ...) value whose lane index is
# h*Wf + w  (lanes with w >= valid width hold finite garbage and are ignored).
# ---------------------------------------------------------------------------
def _conv_taps_cf(x_cf, w_ref, b_ref, *, K, Wf, M):
    """KxK convolution as K*K per-tap whole-plane MXU matmuls (+ bias)."""
    acc = None
    for kh in range(K):
        for kw in range(K):
            slab = x_cf[:, kh * Wf + kw: kh * Wf + kw + M]              # (Cin, M)
            t = jnp.dot(w_ref[kh * K + kw], slab,
                        preferred_element_type=jnp.float32)             # (Cout, M)
            acc = t if acc is None else acc + t
    return acc + b_ref[...]


def _pool2_and_pad_cf(x_cf, *, Win, S, C):
    """2x2/stride-2 max-pool of the SxS valid region of a width-`Win` flat
    plane, then add a 1-pixel zero border -> (C, (S//2 + 2)**2), width S//2+2."""
    P = S // 2
    zcol = jnp.zeros((C, 1), F32)
    zrow = jnp.zeros((C, P + 2), F32)
    rows = [zrow]
    for h in range(P):
        a = x_cf[:, (2 * h) * Win: (2 * h) * Win + S]                   # image row 2h
        b = x_cf[:, (2 * h + 1) * Win: (2 * h + 1) * Win + S]           # image row 2h+1
        m = jnp.maximum(a, b)                                           # (C, S)
        cols = [jnp.maximum(m[:, 2 * v: 2 * v + 1], m[:, 2 * v + 1: 2 * v + 2])
                for v in range(P)]
        rows.append(jnp.concatenate([zcol] + cols + [zcol], axis=1))    # (C, P+2)
    rows.append(zrow)
    return jnp.concatenate(rows, axis=1)                                # (C, (P+2)**2)


def _residual_block_cf(x_pad_cf, wa_ref, ba_ref, wb_ref, bb_ref, *, Wf, C):
    """relu(conv3x3) -> conv3x3 -> add -> relu on an SxS plane (S = Wf-2) given
    in channel-major flat form with a 1-pixel zero border (C, Wf*Wf)."""
    S = Wf - 2
    M = (S - 1) * Wf + S
    # lane-validity mask: flat index j is valid iff (j mod Wf) < S
    pat = jnp.concatenate([jnp.ones((1, S), F32), jnp.zeros((1, 2), F32)], axis=1)
    mask = jnp.concatenate([pat] * S, axis=1)[:, :M]                    # (1, M)
    z = jnp.maximum(_conv_taps_cf(x_pad_cf, wa_ref, ba_ref, K=3, Wf=Wf, M=M), 0.0)
    z = z * mask                      # zero wrap-around lanes -> they become the
    #                                   zero border of the re-padded plane below
    zpad = jnp.concatenate(
        [jnp.zeros((C, Wf + 1), F32), z, jnp.zeros((C, Wf + 1), F32)], axis=1)  # (C, Wf*Wf)
    y = _conv_taps_cf(zpad, wb_ref, bb_ref, K=3, Wf=Wf, M=M)
    return jnp.maximum(z + y, 0.0)                                      # (C, M)


# ---------------------------------------------------------------------------
# the fused forward kernel (one grid step == one image)
# ---------------------------------------------------------------------------
def _residual_net_kernel(x_ref, w1_ref, b1_ref,
                         wa1_ref, ba1_ref, wb1_ref, bb1_ref,
                         w2_ref, b2_ref,
                         wa2_ref, ba2_ref, wb2_ref, bb2_ref,
                         fcw_ref, fcb_ref, o_ref):
    # ---- conv1: 5x5, 1->16, VALID, as a single K=25 MXU contraction ---------
    xr = x_ref[0]                                                       # (1, 784)
    taps = [xr[:, kh * 28 + kw: kh * 28 + kw + 668]
            for kh in range(5) for kw in range(5)]                      # 25 x (1, 668)
    im2col_t = jnp.concatenate(taps, axis=0)                            # (25, 668)
    z = jnp.dot(w1_ref[...], im2col_t,
                preferred_element_type=jnp.float32)                     # (16, 668)
    z = jnp.maximum(z + b1_ref[...], 0.0)          # channel-major, flat width 28

    # ---- maxpool 2x2 (24x24 -> 12x12) + zero border for the 3x3 convs -------
    x1 = _pool2_and_pad_cf(z, Win=28, S=24, C=16)                       # (16, 196)

    # ---- residual block 1 (16 ch, 12x12) -------------------------------------
    r1 = _residual_block_cf(x1, wa1_ref, ba1_ref, wb1_ref, bb1_ref,
                            Wf=14, C=16)                                # (16, 166)

    # ---- conv2: 5x5, 16->32, VALID (12x12 -> 8x8): 25 per-tap matmuls --------
    c2 = jnp.maximum(_conv_taps_cf(r1, w2_ref, b2_ref, K=5, Wf=14, M=106), 0.0)  # (32, 106)

    # ---- maxpool 2x2 (8x8 -> 4x4) + zero border -------------------------------
    x2 = _pool2_and_pad_cf(c2, Win=14, S=8, C=32)                       # (32, 36)

    # ---- residual block 2 (32 ch, 4x4) ----------------------------------------
    r2 = _residual_block_cf(x2, wa2_ref, ba2_ref, wb2_ref, bb2_ref,
                            Wf=6, C=32)                                 # (32, 22)

    # ---- flatten (channel-major == PyTorch NCHW .view order) + FC -------------
    r2c = jnp.concatenate([r2[:, h * 6: h * 6 + 4] for h in range(4)], axis=1)   # (32, 16)
    fc_in = jnp.concatenate([r2c[c: c + 1, :] for c in range(32)], axis=1)       # (1, 512)
    out = jnp.dot(fc_in, fcw_ref[...],
                  preferred_element_type=jnp.float32) + fcb_ref[...]    # (1, 128)
    o_ref[0] = out                                  # lanes >= 10 are zero padding


# ---------------------------------------------------------------------------
# wrapper
# ---------------------------------------------------------------------------
_WEIGHT_ORDER = ("w1", "b1", "rb1_wa", "rb1_ba", "rb1_wb", "rb1_bb",
                 "w2", "b2", "rb2_wa", "rb2_ba", "rb2_wb", "rb2_bb",
                 "fc_w", "fc_b")


def _full_spec(a):
    n = a.ndim
    return pl.BlockSpec(a.shape, lambda i, _n=n: (0,) * _n)


@jax.jit
def residual_net_forward(x_nchw, kparams):
    """x_nchw: (B, 1, 28, 28) float32; kparams: output of prepare_params()."""
    B = x_nchw.shape[0]
    xf = x_nchw.astype(F32).reshape(B, 1, 28 * 28)        # lane-dense input rows
    weights = [kparams[k] for k in _WEIGHT_ORDER]
    out = pl.pallas_call(
        _residual_net_kernel,
        out_shape=jax.ShapeDtypeStruct((B, 1, 128), F32),
        grid=(B,),
        in_specs=[pl.BlockSpec((1, 1, 28 * 28), lambda i: (i, 0, 0))]
                 + [_full_spec(w) for w in weights],
        out_specs=pl.BlockSpec((1, 1, 128), lambda i: (i, 0, 0)),
        compiler_params=pltpu.CompilerParams(dimension_semantics=("parallel",)),
    )(xf, *weights)
    return out[:, 0, :10]


# ---------------------------------------------------------------------------
# parameter handling: PyTorch-layout params -> kernel layout (done once, outside
# the kernel: tap-major conv weights, transposed + 128-padded FC weight)
# ---------------------------------------------------------------------------
def prepare_params(p):
    def conv_cf(w):                     # (O, I, K, K) -> (K*K, O, I), tap-major
        o, i, k, _ = w.shape
        return jnp.transpose(w, (2, 3, 0, 1)).reshape(k * k, o, i)

    kp = {
        "w1": p["conv1_w"].reshape(16, 25),                 # Cin == 1
        "b1": p["conv1_b"].reshape(16, 1),
        "rb1_wa": conv_cf(p["rb1_w1"]), "rb1_ba": p["rb1_b1"].reshape(16, 1),
        "rb1_wb": conv_cf(p["rb1_w2"]), "rb1_bb": p["rb1_b2"].reshape(16, 1),
        "w2": conv_cf(p["conv2_w"]),    "b2": p["conv2_b"].reshape(32, 1),
        "rb2_wa": conv_cf(p["rb2_w1"]), "rb2_ba": p["rb2_b1"].reshape(32, 1),
        "rb2_wb": conv_cf(p["rb2_w2"]), "rb2_bb": p["rb2_b2"].reshape(32, 1),
        "fc_w": jnp.pad(p["fc_w"].T, ((0, 0), (0, 118))),   # (512, 128)
        "fc_b": jnp.pad(p["fc_b"], (0, 118)).reshape(1, 128),
    }
    return jax.tree_util.tree_map(lambda a: a.astype(F32), kp)


def init_params(key):
    ks = jax.random.split(key, 14)

    def conv_p(kw_key, kb_key, cout, cin, k):
        fan_in = cin * k * k
        w = jax.random.normal(kw_key, (cout, cin, k, k), F32) / jnp.sqrt(fan_in)
        b = jax.random.normal(kb_key, (cout,), F32) * 0.01
        return w, b

    conv1_w, conv1_b = conv_p(ks[0], ks[1], 16, 1, 5)
    conv2_w, conv2_b = conv_p(ks[2], ks[3], 32, 16, 5)
    rb1_w1, rb1_b1 = conv_p(ks[4], ks[5], 16, 16, 3)
    rb1_w2, rb1_b2 = conv_p(ks[6], ks[7], 16, 16, 3)
    rb2_w1, rb2_b1 = conv_p(ks[8], ks[9], 32, 32, 3)
    rb2_w2, rb2_b2 = conv_p(ks[10], ks[11], 32, 32, 3)
    fc_w = jax.random.normal(ks[12], (10, 512), F32) / jnp.sqrt(512.0)
    fc_b = jax.random.normal(ks[13], (10,), F32) * 0.01
    return dict(conv1_w=conv1_w, conv1_b=conv1_b, conv2_w=conv2_w, conv2_b=conv2_b,
                rb1_w1=rb1_w1, rb1_b1=rb1_b1, rb1_w2=rb1_w2, rb1_b2=rb1_b2,
                rb2_w1=rb2_w1, rb2_b1=rb2_b1, rb2_w2=rb2_w2, rb2_b2=rb2_b2,
                fc_w=fc_w, fc_b=fc_b)


# ---------------------------------------------------------------------------
# pure-JAX reference (same intended forward) for a sanity check
# ---------------------------------------------------------------------------
def reference_forward(x, p):
    dn = ("NCHW", "OIHW", "NCHW")
    hp = lax.Precision.HIGHEST

    def conv(t, w, b, padding):
        out = lax.conv_general_dilated(t, w, (1, 1), padding,
                                       dimension_numbers=dn, precision=hp)
        return out + b.reshape(1, -1, 1, 1)

    def pool(t):
        return lax.reduce_window(t, -jnp.inf, lax.max,
                                 (1, 1, 2, 2), (1, 1, 2, 2), "VALID")

    def rb(t, w1, b1, w2, b2):
        a = jnp.maximum(conv(t, w1, b1, [(1, 1), (1, 1)]), 0.0)
        y = conv(a, w2, b2, [(1, 1), (1, 1)])
        return jnp.maximum(a + y, 0.0)

    z = jnp.maximum(conv(x, p["conv1_w"], p["conv1_b"], "VALID"), 0.0)
    z = pool(z)
    z = rb(z, p["rb1_w1"], p["rb1_b1"], p["rb1_w2"], p["rb1_b2"])
    z = jnp.maximum(conv(z, p["conv2_w"], p["conv2_b"], "VALID"), 0.0)
    z = pool(z)
    z = rb(z, p["rb2_w1"], p["rb2_b1"], p["rb2_w2"], p["rb2_b2"])
    z = z.reshape(x.shape[0], -1)
    return jnp.dot(z, p["fc_w"].T, precision=hp) + p["fc_b"]


if __name__ == "__main__":
    key = jax.random.PRNGKey(0)
    pkey, xkey = jax.random.split(key)
    params = init_params(pkey)
    kparams = prepare_params(params)
    # batch=2, single channel, 28x28 (the only spatial size consistent with fc(512, 10))
    x = jax.random.normal(xkey, (2, 1, 28, 28), F32)

    out = residual_net_forward(x, kparams)
    out = jax.block_until_ready(out)
    assert out.shape == (2, 10) and out.dtype == F32

    ref = jax.block_until_ready(reference_forward(x, params))
    err = float(jnp.max(jnp.abs(out - ref)))
    assert err < 1e-1, f"kernel/reference mismatch: max abs diff = {err}"

    print("KERNEL_OK")
</pallas_src>

<mosaic_0001>
module attributes {stable_mosaic.version = 11 : i64} {
  func.func @_residual_net_kernel(%arg0: i32, %arg1: memref<1x1x784xf32, #tpu.memory_space<vmem>>, %arg2: memref<16x25xf32, #tpu.memory_space<vmem>>, %arg3: memref<16x1xf32, #tpu.memory_space<vmem>>, %arg4: memref<9x16x16xf32, #tpu.memory_space<vmem>>, %arg5: memref<16x1xf32, #tpu.memory_space<vmem>>, %arg6: memref<9x16x16xf32, #tpu.memory_space<vmem>>, %arg7: memref<16x1xf32, #tpu.memory_space<vmem>>, %arg8: memref<25x32x16xf32, #tpu.memory_space<vmem>>, %arg9: memref<32x1xf32, #tpu.memory_space<vmem>>, %arg10: memref<9x32x32xf32, #tpu.memory_space<vmem>>, %arg11: memref<32x1xf32, #tpu.memory_space<vmem>>, %arg12: memref<9x32x32xf32, #tpu.memory_space<vmem>>, %arg13: memref<32x1xf32, #tpu.memory_space<vmem>>, %arg14: memref<512x128xf32, #tpu.memory_space<vmem>>, %arg15: memref<1x128xf32, #tpu.memory_space<vmem>>, %arg16: memref<1x1x128xf32, #tpu.memory_space<vmem>>) attributes {dimension_semantics = [#tpu.dimension_semantics<parallel>], iteration_bounds = array<i64: 2>, scalar_prefetch = 0 : i64, scratch_operands = 0 : i64, tpu.core_type = #tpu.core_type<tc>, window_params = [{transform_indices = @transform_0, window_bounds = array<i64: 1, 1, 784>}, {pipeline_mode = #tpu.pipeline_mode<synchronous>, transform_indices = @transform_1, window_bounds = array<i64: 16, 25>}, {pipeline_mode = #tpu.pipeline_mode<synchronous>, transform_indices = @transform_2, window_bounds = array<i64: 16, 1>}, {pipeline_mode = #tpu.pipeline_mode<synchronous>, transform_indices = @transform_3, window_bounds = array<i64: 9, 16, 16>}, {pipeline_mode = #tpu.pipeline_mode<synchronous>, transform_indices = @transform_4, window_bounds = array<i64: 16, 1>}, {pipeline_mode = #tpu.pipeline_mode<synchronous>, transform_indices = @transform_5, window_bounds = array<i64: 9, 16, 16>}, {pipeline_mode = #tpu.pipeline_mode<synchronous>, transform_indices = @transform_6, window_bounds = array<i64: 16, 1>}, {pipeline_mode = #tpu.pipeline_mode<synchronous>, transform_indices = @transform_7, window_bounds = array<i64: 25, 32, 16>}, {pipeline_mode = #tpu.pipeline_mode<synchronous>, transform_indices = @transform_8, window_bounds = array<i64: 32, 1>}, {pipeline_mode = #tpu.pipeline_mode<synchronous>, transform_indices = @transform_9, window_bounds = array<i64: 9, 32, 32>}, {pipeline_mode = #tpu.pipeline_mode<synchronous>, transform_indices = @transform_10, window_bounds = array<i64: 32, 1>}, {pipeline_mode = #tpu.pipeline_mode<synchronous>, transform_indices = @transform_11, window_bounds = array<i64: 9, 32, 32>}, {pipeline_mode = #tpu.pipeline_mode<synchronous>, transform_indices = @transform_12, window_bounds = array<i64: 32, 1>}, {pipeline_mode = #tpu.pipeline_mode<synchronous>, transform_indices = @transform_13, window_bounds = array<i64: 512, 128>}, {pipeline_mode = #tpu.pipeline_mode<synchronous>, transform_indices = @transform_14, window_bounds = array<i64: 1, 128>}, {transform_indices = @transform_15, window_bounds = array<i64: 1, 1, 128>}]} {
    %c0 = arith.constant 0 : index
    %c0_0 = arith.constant 0 : index
    %c0_1 = arith.constant 0 : index
    %0 = vector.load %arg1[%c0, %c0_0, %c0_1] : memref<1x1x784xf32, #tpu.memory_space<vmem>>, vector<1x1x784xf32>
    %1 = vector.shape_cast %0 : vector<1x1x784xf32> to vector<1x784xf32>
    %2 = vector.extract_strided_slice %1 {offsets = [0, 0], sizes = [1, 668], strides = [1, 1]} : vector<1x784xf32> to vector<1x668xf32>
    %3 = vector.extract_strided_slice %1 {offsets = [0, 1], sizes = [1, 668], strides = [1, 1]} : vector<1x784xf32> to vector<1x668xf32>
    %4 = vector.extract_strided_slice %1 {offsets = [0, 2], sizes = [1, 668], strides = [1, 1]} : vector<1x784xf32> to vector<1x668xf32>
    %5 = vector.extract_strided_slice %1 {offsets = [0, 3], sizes = [1, 668], strides = [1, 1]} : vector<1x784xf32> to vector<1x668xf32>
    %6 = vector.extract_strided_slice %1 {offsets = [0, 4], sizes = [1, 668], strides = [1, 1]} : vector<1x784xf32> to vector<1x668xf32>
    %7 = vector.extract_strided_slice %1 {offsets = [0, 28], sizes = [1, 668], strides = [1, 1]} : vector<1x784xf32> to vector<1x668xf32>
    %8 = vector.extract_strided_slice %1 {offsets = [0, 29], sizes = [1, 668], strides = [1, 1]} : vector<1x784xf32> to vector<1x668xf32>
    %9 = vector.extract_strided_slice %1 {offsets = [0, 30], sizes = [1, 668], strides = [1, 1]} : vector<1x784xf32> to vector<1x668xf32>
    %10 = vector.extract_strided_slice %1 {offsets = [0, 31], sizes = [1, 668], strides = [1, 1]} : vector<1x784xf32> to vector<1x668xf32>
    %11 = vector.extract_strided_slice %1 {offsets = [0, 32], sizes = [1, 668], strides = [1, 1]} : vector<1x784xf32> to vector<1x668xf32>
    %12 = vector.extract_strided_slice %1 {offsets = [0, 56], sizes = [1, 668], strides = [1, 1]} : vector<1x784xf32> to vector<1x668xf32>
    %13 = vector.extract_strided_slice %1 {offsets = [0, 57], sizes = [1, 668], strides = [1, 1]} : vector<1x784xf32> to vector<1x668xf32>
    %14 = vector.extract_strided_slice %1 {offsets = [0, 58], sizes = [1, 668], strides = [1, 1]} : vector<1x784xf32> to vector<1x668xf32>
    %15 = vector.extract_strided_slice %1 {offsets = [0, 59], sizes = [1, 668], strides = [1, 1]} : vector<1x784xf32> to vector<1x668xf32>
    %16 = vector.extract_strided_slice %1 {offsets = [0, 60], sizes = [1, 668], strides = [1, 1]} : vector<1x784xf32> to vector<1x668xf32>
    %17 = vector.extract_strided_slice %1 {offsets = [0, 84], sizes = [1, 668], strides = [1, 1]} : vector<1x784xf32> to vector<1x668xf32>
    %18 = vector.extract_strided_slice %1 {offsets = [0, 85], sizes = [1, 668], strides = [1, 1]} : vector<1x784xf32> to vector<1x668xf32>
    %19 = vector.extract_strided_slice %1 {offsets = [0, 86], sizes = [1, 668], strides = [1, 1]} : vector<1x784xf32> to vector<1x668xf32>
    %20 = vector.extract_strided_slice %1 {offsets = [0, 87], sizes = [1, 668], strides = [1, 1]} : vector<1x784xf32> to vector<1x668xf32>
    %21 = vector.extract_strided_slice %1 {offsets = [0, 88], sizes = [1, 668], strides = [1, 1]} : vector<1x784xf32> to vector<1x668xf32>
    %22 = vector.extract_strided_slice %1 {offsets = [0, 112], sizes = [1, 668], strides = [1, 1]} : vector<1x784xf32> to vector<1x668xf32>
    %23 = vector.extract_strided_slice %1 {offsets = [0, 113], sizes = [1, 668], strides = [1, 1]} : vector<1x784xf32> to vector<1x668xf32>
    %24 = vector.extract_strided_slice %1 {offsets = [0, 114], sizes = [1, 668], strides = [1, 1]} : vector<1x784xf32> to vector<1x668xf32>
    %25 = vector.extract_strided_slice %1 {offsets = [0, 115], sizes = [1, 668], strides = [1, 1]} : vector<1x784xf32> to vector<1x668xf32>
    %26 = vector.extract_strided_slice %1 {offsets = [0, 116], sizes = [1, 668], strides = [1, 1]} : vector<1x784xf32> to vector<1x668xf32>
    %27 = tpu.concatenate %2, %3, %4, %5, %6, %7, %8, %9, %10, %11, %12, %13, %14, %15, %16, %17 in 0 : vector<1x668xf32>, vector<1x668xf32>, vector<1x668xf32>, vector<1x668xf32>, vector<1x668xf32>, vector<1x668xf32>, vector<1x668xf32>, vector<1x668xf32>, vector<1x668xf32>, vector<1x668xf32>, vector<1x668xf32>, vector<1x668xf32>, vector<1x668xf32>, vector<1x668xf32>, vector<1x668xf32>, vector<1x668xf32> -> vector<16x668xf32>
    %28 = tpu.concatenate %18, %19, %20, %21, %22, %23, %24, %25, %26 in 0 : vector<1x668xf32>, vector<1x668xf32>, vector<1x668xf32>, vector<1x668xf32>, vector<1x668xf32>, vector<1x668xf32>, vector<1x668xf32>, vector<1x668xf32>, vector<1x668xf32> -> vector<9x668xf32>
    %29 = tpu.concatenate %27, %28 in 0 : vector<16x668xf32>, vector<9x668xf32> -> vector<25x668xf32>
    %c0_2 = arith.constant 0 : index
    %c0_3 = arith.constant 0 : index
    %30 = vector.load %arg2[%c0_2, %c0_3] : memref<16x25xf32, #tpu.memory_space<vmem>>, vector<16x25xf32>
    %cst = arith.constant dense<0.000000e+00> : vector<16x668xf32>
    %31 = tpu.matmul %30, %29, %cst {dimension_numbers = #tpu.dot_dimension_numbers<[1], [0], [0], [1], [0, 0, 1, 1], [], []>} : vector<16x25xf32>, vector<25x668xf32>, vector<16x668xf32> -> vector<16x668xf32>
    %c0_4 = arith.constant 0 : index
    %c0_5 = arith.constant 0 : index
    %32 = vector.load %arg3[%c0_4, %c0_5] : memref<16x1xf32, #tpu.memory_space<vmem>>, vector<16x1xf32>
    %33 = vector.broadcast %32 : vector<16x1xf32> to vector<16x668xf32>
    %34 = arith.addf %31, %33 : vector<16x668xf32>
    %cst_6 = arith.constant 0.000000e+00 : f32
    %35 = vector.broadcast %cst_6 : f32 to vector<16x668xf32>
    %36 = arith.maximumf %34, %35 : vector<16x668xf32>
    %cst_7 = arith.constant 0.000000e+00 : f32
    %37 = vector.broadcast %cst_7 : f32 to vector<16x1xf32>
    %cst_8 = arith.constant 0.000000e+00 : f32
    %38 = vector.broadcast %cst_8 : f32 to vector<16x14xf32>
    %39 = vector.extract_strided_slice %36 {offsets = [0, 0], sizes = [16, 24], strides = [1, 1]} : vector<16x668xf32> to vector<16x24xf32>
    %40 = vector.extract_strided_slice %36 {offsets = [0, 28], sizes = [16, 24], strides = [1, 1]} : vector<16x668xf32> to vector<16x24xf32>
    %41 = arith.maximumf %39, %40 : vector<16x24xf32>
    %42 = vector.extract_strided_slice %41 {offsets = [0, 0], sizes = [16, 1], strides = [1, 1]} : vector<16x24xf32> to vector<16x1xf32>
    %43 = vector.extract_strided_slice %41 {offsets = [0, 1], sizes = [16, 1], strides = [1, 1]} : vector<16x24xf32> to vector<16x1xf32>
    %44 = arith.maximumf %42, %43 : vector<16x1xf32>
    %45 = vector.extract_strided_slice %41 {offsets = [0, 2], sizes = [16, 1], strides = [1, 1]} : vector<16x24xf32> to vector<16x1xf32>
    %46 = vector.extract_strided_slice %41 {offsets = [0, 3], sizes = [16, 1], strides = [1, 1]} : vector<16x24xf32> to vector<16x1xf32>
    %47 = arith.maximumf %45, %46 : vector<16x1xf32>
    %48 = vector.extract_strided_slice %41 {offsets = [0, 4], sizes = [16, 1], strides = [1, 1]} : vector<16x24xf32> to vector<16x1xf32>
    %49 = vector.extract_strided_slice %41 {offsets = [0, 5], sizes = [16, 1], strides = [1, 1]} : vector<16x24xf32> to vector<16x1xf32>
    %50 = arith.maximumf %48, %49 : vector<16x1xf32>
    %51 = vector.extract_strided_slice %41 {offsets = [0, 6], sizes = [16, 1], strides = [1, 1]} : vector<16x24xf32> to vector<16x1xf32>
    %52 = vector.extract_strided_slice %41 {offsets = [0, 7], sizes = [16, 1], strides = [1, 1]} : vector<16x24xf32> to vector<16x1xf32>
    %53 = arith.maximumf %51, %52 : vector<16x1xf32>
    %54 = vector.extract_strided_slice %41 {offsets = [0, 8], sizes = [16, 1], strides = [1, 1]} : vector<16x24xf32> to vector<16x1xf32>
    %55 = vector.extract_strided_slice %41 {offsets = [0, 9], sizes = [16, 1], strides = [1, 1]} : vector<16x24xf32> to vector<16x1xf32>
    %56 = arith.maximumf %54, %55 : vector<16x1xf32>
    %57 = vector.extract_strided_slice %41 {offsets = [0, 10], sizes = [16, 1], strides = [1, 1]} : vector<16x24xf32> to vector<16x1xf32>
    %58 = vector.extract_strided_slice %41 {offsets = [0, 11], sizes = [16, 1], strides = [1, 1]} : vector<16x24xf32> to vector<16x1xf32>
    %59 = arith.maximumf %57, %58 : vector<16x1xf32>
    %60 = vector.extract_strided_slice %41 {offsets = [0, 12], sizes = [16, 1], strides = [1, 1]} : vector<16x24xf32> to vector<16x1xf32>
    %61 = vector.extract_strided_slice %41 {offsets = [0, 13], sizes = [16, 1], strides = [1, 1]} : vector<16x24xf32> to vector<16x1xf32>
    %62 = arith.maximumf %60, %61 : vector<16x1xf32>
    %63 = vector.extract_strided_slice %41 {offsets = [0, 14], sizes = [16, 1], strides = [1, 1]} : vector<16x24xf32> to vector<16x1xf32>
    %64 = vector.extract_strided_slice %41 {offsets = [0, 15], sizes = [16, 1], strides = [1, 1]} : vector<16x24xf32> to vector<16x1xf32>
    %65 = arith.maximumf %63, %64 : vector<16x1xf32>
    %66 = vector.extract_strided_slice %41 {offsets = [0, 16], sizes = [16, 1], strides = [1, 1]} : vector<16x24xf32> to vector<16x1xf32>
    %67 = vector.extract_strided_slice %41 {offsets = [0, 17], sizes = [16, 1], strides = [1, 1]} : vector<16x24xf32> to vector<16x1xf32>
    %68 = arith.maximumf %66, %67 : vector<16x1xf32>
    %69 = vector.extract_strided_slice %41 {offsets = [0, 18], sizes = [16, 1], strides = [1, 1]} : vector<16x24xf32> to vector<16x1xf32>
    %70 = vector.extract_strided_slice %41 {offsets = [0, 19], sizes = [16, 1], strides = [1, 1]} : vector<16x24xf32> to vector<16x1xf32>
    %71 = arith.maximumf %69, %70 : vector<16x1xf32>
    %72 = vector.extract_strided_slice %41 {offsets = [0, 20], sizes = [16, 1], strides = [1, 1]} : vector<16x24xf32> to vector<16x1xf32>
    %73 = vector.extract_strided_slice %41 {offsets = [0, 21], sizes = [16, 1], strides = [1, 1]} : vector<16x24xf32> to vector<16x1xf32>
    %74 = arith.maximumf %72, %73 : vector<16x1xf32>
    %75 = vector.extract_strided_slice %41 {offsets = [0, 22], sizes = [16, 1], strides = [1, 1]} : vector<16x24xf32> to vector<16x1xf32>
    %76 = vector.extract_strided_slice %41 {offsets = [0, 23], sizes = [16, 1], strides = [1, 1]} : vector<16x24xf32> to vector<16x1xf32>
    %77 = arith.maximumf %75, %76 : vector<16x1xf32>
    %78 = tpu.concatenate %37, %44, %47, %50, %53, %56, %59, %62, %65, %68, %71, %74, %77, %37 in 1 : vector<16x1xf32>, vector<16x1xf32>, vector<16x1xf32>, vector<16x1xf32>, vector<16x1xf32>, vector<16x1xf32>, vector<16x1xf32>, vector<16x1xf32>, vector<16x1xf32>, vector<16x1xf32>, vector<16x1xf32>, vector<16x1xf32>, vector<16x1xf32>, vector<16x1xf32> -> vector<16x14xf32>
    %79 = vector.extract_strided_slice %36 {offsets = [0, 56], sizes = [16, 24], strides = [1, 1]} : vector<16x668xf32> to vector<16x24xf32>
    %80 = vector.extract_strided_slice %36 {offsets = [0, 84], sizes = [16, 24], strides = [1, 1]} : vector<16x668xf32> to vector<16x24xf32>
    %81 = arith.maximumf %79, %80 : vector<16x24xf32>
    %82 = vector.extract_strided_slice %81 {offsets = [0, 0], sizes = [16, 1], strides = [1, 1]} : vector<16x24xf32> to vector<16x1xf32>
    %83 = vector.extract_strided_slice %81 {offsets = [0, 1], sizes = [16, 1], strides = [1, 1]} : vector<16x24xf32> to vector<16x1xf32>
    %84 = arith.maximumf %82, %83 : vector<16x1xf32>
    %85 = vector.extract_strided_slice %81 {offsets = [0, 2], sizes = [16, 1], strides = [1, 1]} : vector<16x24xf32> to vector<16x1xf32>
    %86 = vector.extract_strided_slice %81 {offsets = [0, 3], sizes = [16, 1], strides = [1, 1]} : vector<16x24xf32> to vector<16x1xf32>
    %87 = arith.maximumf %85, %86 : vector<16x1xf32>
    %88 = vector.extract_strided_slice %81 {offsets = [0, 4], sizes = [16, 1], strides = [1, 1]} : vector<16x24xf32> to vector<16x1xf32>
    %89 = vector.extract_strided_slice %81 {offsets = [0, 5], sizes = [16, 1], strides = [1, 1]} : vector<16x24xf32> to vector<16x1xf32>
    %90 = arith.maximumf %88, %89 : vector<16x1xf32>
    %91 = vector.extract_strided_slice %81 {offsets = [0, 6], sizes = [16, 1], strides = [1, 1]} : vector<16x24xf32> to vector<16x1xf32>
    %92 = vector.extract_strided_slice %81 {offsets = [0, 7], sizes = [16, 1], strides = [1, 1]} : vector<16x24xf32> to vector<16x1xf32>
    %93 = arith.maximumf %91, %92 : vector<16x1xf32>
    %94 = vector.extract_strided_slice %81 {offsets = [0, 8], sizes = [16, 1], strides = [1, 1]} : vector<16x24xf32> to vector<16x1xf32>
    %95 = vector.extract_strided_slice %81 {offsets = [0, 9], sizes = [16, 1], strides = [1, 1]} : vector<16x24xf32> to vector<16x1xf32>
    %96 = arith.maximumf %94, %95 : vector<16x1xf32>
    %97 = vector.extract_strided_slice %81 {offsets = [0, 10], sizes = [16, 1], strides = [1, 1]} : vector<16x24xf32> to vector<16x1xf32>
    %98 = vector.extract_strided_slice %81 {offsets = [0, 11], sizes = [16, 1], strides = [1, 1]} : vector<16x24xf32> to vector<16x1xf32>
    %99 = arith.maximumf %97, %98 : vector<16x1xf32>
    %100 = vector.extract_strided_slice %81 {offsets = [0, 12], sizes = [16, 1], strides = [1, 1]} : vector<16x24xf32> to vector<16x1xf32>
    %101 = vector.extract_strided_slice %81 {offsets = [0, 13], sizes = [16, 1], strides = [1, 1]} : vector<16x24xf32> to vector<16x1xf32>
    %102 = arith.maximumf %100, %101 : vector<16x1xf32>
    %103 = vector.extract_strided_slice %81 {offsets = [0, 14], sizes = [16, 1], strides = [1, 1]} : vector<16x24xf32> to vector<16x1xf32>
    %104 = vector.extract_strided_slice %81 {offsets = [0, 15], sizes = [16, 1], strides = [1, 1]} : vector<16x24xf32> to vector<16x1xf32>
    %105 = arith.maximumf %103, %104 : vector<16x1xf32>
    %106 = vector.extract_strided_slice %81 {offsets = [0, 16], sizes = [16, 1], strides = [1, 1]} : vector<16x24xf32> to vector<16x1xf32>
    %107 = vector.extract_strided_slice %81 {offsets = [0, 17], sizes = [16, 1], strides = [1, 1]} : vector<16x24xf32> to vector<16x1xf32>
    %108 = arith.maximumf %106, %107 : vector<16x1xf32>
    %109 = vector.extract_strided_slice %81 {offsets = [0, 18], sizes = [16, 1], strides = [1, 1]} : vector<16x24xf32> to vector<16x1xf32>
    %110 = vector.extract_strided_slice %81 {offsets = [0, 19], sizes = [16, 1], strides = [1, 1]} : vector<16x24xf32> to vector<16x1xf32>
    %111 = arith.maximumf %109, %110 : vector<16x1xf32>
    %112 = vector.extract_strided_slice %81 {offsets = [0, 20], sizes = [16, 1], strides = [1, 1]} : vector<16x24xf32> to vector<16x1xf32>
    %113 = vector.extract_strided_slice %81 {offsets = [0, 21], sizes = [16, 1], strides = [1, 1]} : vector<16x24xf32> to vector<16x1xf32>
    %114 = arith.maximumf %112, %113 : vector<16x1xf32>
    %115 = vector.extract_strided_slice %81 {offsets = [0, 22], sizes = [16, 1], strides = [1, 1]} : vector<16x24xf32> to vector<16x1xf32>
    %116 = vector.extract_strided_slice %81 {offsets = [0, 23], sizes = [16, 1], strides = [1, 1]} : vector<16x24xf32> to vector<16x1xf32>
    %117 = arith.maximumf %115, %116 : vector<16x1xf32>
    %118 = tpu.concatenate %37, %84, %87, %90, %93, %96, %99, %102, %105, %108, %111, %114, %117, %37 in 1 : vector<16x1xf32>, vector<16x1xf32>, vector<16x1xf32>, vector<16x1xf32>, vector<16x1xf32>, vector<16x1xf32>, vector<16x1xf32>, vector<16x1xf32>, vector<16x1xf32>, vector<16x1xf32>, vector<16x1xf32>, vector<16x1xf32>, vector<16x1xf32>, vector<16x1xf32> -> vector<16x14xf32>
    %119 = vector.extract_strided_slice %36 {offsets = [0, 112], sizes = [16, 24], strides = [1, 1]} : vector<16x668xf32> to vector<16x24xf32>
    %120 = vector.extract_strided_slice %36 {offsets = [0, 140], sizes = [16, 24], strides = [1, 1]} : vector<16x668xf32> to vector<16x24xf32>
    %121 = arith.maximumf %119, %120 : vector<16x24xf32>
    %122 = vector.extract_strided_slice %121 {offsets = [0, 0], sizes = [16, 1], strides = [1, 1]} : vector<16x24xf32> to vector<16x1xf32>
    %123 = vector.extract_strided_slice %121 {offsets = [0, 1], sizes = [16, 1], strides = [1, 1]} : vector<16x24xf32> to vector<16x1xf32>
    %124 = arith.maximumf %122, %123 : vector<16x1xf32>
    %125 = vector.extract_strided_slice %121 {offsets = [0, 2], sizes = [16, 1], strides = [1, 1]} : vector<16x24xf32> to vector<16x1xf32>
    %126 = vector.extract_strided_slice %121 {offsets = [0, 3], sizes = [16, 1], strides = [1, 1]} : vector<16x24xf32> to vector<16x1xf32>
    %127 = arith.maximumf %125, %126 : vector<16x1xf32>
    %128 = vector.extract_strided_slice %121 {offsets = [0, 4], sizes = [16, 1], strides = [1, 1]} : vector<16x24xf32> to vector<16x1xf32>
    %129 = vector.extract_strided_slice %121 {offsets = [0, 5], sizes = [16, 1], strides = [1, 1]} : vector<16x24xf32> to vector<16x1xf32>
    %130 = arith.maximumf %128, %129 : vector<16x1xf32>
    %131 = vector.extract_strided_slice %121 {offsets = [0, 6], sizes = [16, 1], strides = [1, 1]} : vector<16x24xf32> to vector<16x1xf32>
    %132 = vector.extract_strided_slice %121 {offsets = [0, 7], sizes = [16, 1], strides = [1, 1]} : vector<16x24xf32> to vector<16x1xf32>
    %133 = arith.maximumf %131, %132 : vector<16x1xf32>
    %134 = vector.extract_strided_slice %121 {offsets = [0, 8], sizes = [16, 1], strides = [1, 1]} : vector<16x24xf32> to vector<16x1xf32>
    %135 = vector.extract_strided_slice %121 {offsets = [0, 9], sizes = [16, 1], strides = [1, 1]} : vector<16x24xf32> to vector<16x1xf32>
    %136 = arith.maximumf %134, %135 : vector<16x1xf32>
    %137 = vector.extract_strided_slice %121 {offsets = [0, 10], sizes = [16, 1], strides = [1, 1]} : vector<16x24xf32> to vector<16x1xf32>
    %138 = vector.extract_strided_slice %121 {offsets = [0, 11], sizes = [16, 1], strides = [1, 1]} : vector<16x24xf32> to vector<16x1xf32>
    %139 = arith.maximumf %137, %138 : vector<16x1xf32>
    %140 = vector.extract_strided_slice %121 {offsets = [0, 12], sizes = [16, 1], strides = [1, 1]} : vector<16x24xf32> to vector<16x1xf32>
    %141 = vector.extract_strided_slice %121 {offsets = [0, 13], sizes = [16, 1], strides = [1, 1]} : vector<16x24xf32> to vector<16x1xf32>
    %142 = arith.maximumf %140, %141 : vector<16x1xf32>
    %143 = vector.extract_strided_slice %121 {offsets = [0, 14], sizes = [16, 1], strides = [1, 1]} : vector<16x24xf32> to vector<16x1xf32>
    %144 = vector.extract_strided_slice %121 {offsets = [0, 15], sizes = [16, 1], strides = [1, 1]} : vector<16x24xf32> to vector<16x1xf32>
    %145 = arith.maximumf %143, %144 : vector<16x1xf32>
    %146 = vector.extract_strided_slice %121 {offsets = [0, 16], sizes = [16, 1], strides = [1, 1]} : vector<16x24xf32> to vector<16x1xf32>
    %147 = vector.extract_strided_slice %121 {offsets = [0, 17], sizes = [16, 1], strides = [1, 1]} : vector<16x24xf32> to vector<16x1xf32>
    %148 = arith.maximumf %146, %147 : vector<16x1xf32>
    %149 = vector.extract_strided_slice %121 {offsets = [0, 18], sizes = [16, 1], strides = [1, 1]} : vector<16x24xf32> to vector<16x1xf32>
    %150 = vector.extract_strided_slice %121 {offsets = [0, 19], sizes = [16, 1], strides = [1, 1]} : vector<16x24xf32> to vector<16x1xf32>
    %151 = arith.maximumf %149, %150 : vector<16x1xf32>
    %152 = vector.extract_strided_slice %121 {offsets = [0, 20], sizes = [16, 1], strides = [1, 1]} : vector<16x24xf32> to vector<16x1xf32>
    %153 = vector.extract_strided_slice %121 {offsets = [0, 21], sizes = [16, 1], strides = [1, 1]} : vector<16x24xf32> to vector<16x1xf32>
    %154 = arith.maximumf %152, %153 : vector<16x1xf32>
    %155 = vector.extract_strided_slice %121 {offsets = [0, 22], sizes = [16, 1], strides = [1, 1]} : vector<16x24xf32> to vector<16x1xf32>
    %156 = vector.extract_strided_slice %121 {offsets = [0, 23], sizes = [16, 1], strides = [1, 1]} : vector<16x24xf32> to vector<16x1xf32>
    %157 = arith.maximumf %155, %156 : vector<16x1xf32>
    %158 = tpu.concatenate %37, %124, %127, %130, %133, %136, %139, %142, %145, %148, %151, %154, %157, %37 in 1 : vector<16x1xf32>, vector<16x1xf32>, vector<16x1xf32>, vector<16x1xf32>, vector<16x1xf32>, vector<16x1xf32>, vector<16x1xf32>, vector<16x1xf32>, vector<16x1xf32>, vector<16x1xf32>, vector<16x1xf32>, vector<16x1xf32>, vector<16x1xf32>, vector<16x1xf32> -> vector<16x14xf32>
    %159 = vector.extract_strided_slice %36 {offsets = [0, 168], sizes = [16, 24], strides = [1, 1]} : vector<16x668xf32> to vector<16x24xf32>
    %160 = vector.extract_strided_slice %36 {offsets = [0, 196], sizes = [16, 24], strides = [1, 1]} : vector<16x668xf32> to vector<16x24xf32>
    %161 = arith.maximumf %159, %160 : vector<16x24xf32>
    %162 = vector.extract_strided_slice %161 {offsets = [0, 0], sizes = [16, 1], strides = [1, 1]} : vector<16x24xf32> to vector<16x1xf32>
    %163 = vector.extract_strided_slice %161 {offsets = [0, 1], sizes = [16, 1], strides = [1, 1]} : vector<16x24xf32> to vector<16x1xf32>
    %164 = arith.maximumf %162, %163 : vector<16x1xf32>
    %165 = vector.extract_strided_slice %161 {offsets = [0, 2], sizes = [16, 1], strides = [1, 1]} : vector<16x24xf32> to vector<16x1xf32>
    %166 = vector.extract_strided_slice %161 {offsets = [0, 3], sizes = [16, 1], strides = [1, 1]} : vector<16x24xf32> to vector<16x1xf32>
    %167 = arith.maximumf %165, %166 : vector<16x1xf32>
    %168 = vector.extract_strided_slice %161 {offsets = [0, 4], sizes = [16, 1], strides = [1, 1]} : vector<16x24xf32> to vector<16x1xf32>
    %169 = vector.extract_strided_slice %161 {offsets = [0, 5], sizes = [16, 1], strides = [1, 1]} : vector<16x24xf32> to vector<16x1xf32>
    %170 = arith.maximumf %168, %169 : vector<16x1xf32>
    %171 = vector.extract_strided_slice %161 {offsets = [0, 6], sizes = [16, 1], strides = [1, 1]} : vector<16x24xf32> to vector<16x1xf32>
    %172 = vector.extract_strided_slice %161 {offsets = [0, 7], sizes = [16, 1], strides = [1, 1]} : vector<16x24xf32> to vector<16x1xf32>
    %173 = arith.maximumf %171, %172 : vector<16x1xf32>
    %174 = vector.extract_strided_slice %161 {offsets = [0, 8], sizes = [16, 1], strides = [1, 1]} : vector<16x24xf32> to vector<16x1xf32>
    %175 = vector.extract_strided_slice %161 {offsets = [0, 9], sizes = [16, 1], strides = [1, 1]} : vector<16x24xf32> to vector<16x1xf32>
    %176 = arith.maximumf %174, %175 : vector<16x1xf32>
    %177 = vector.extract_strided_slice %161 {offsets = [0, 10], sizes = [16, 1], strides = [1, 1]} : vector<16x24xf32> to vector<16x1xf32>
    %178 = vector.extract_strided_slice %161 {offsets = [0, 11], sizes = [16, 1], strides = [1, 1]} : vector<16x24xf32> to vector<16x1xf32>
    %179 = arith.maximumf %177, %178 : vector<16x1xf32>
    %180 = vector.extract_strided_slice %161 {offsets = [0, 12], sizes = [16, 1], strides = [1, 1]} : vector<16x24xf32> to vector<16x1xf32>
    %181 = vector.extract_strided_slice %161 {offsets = [0, 13], sizes = [16, 1], strides = [1, 1]} : vector<16x24xf32> to vector<16x1xf32>
    %182 = arith.maximumf %180, %181 : vector<16x1xf32>
    %183 = vector.extract_strided_slice %161 {offsets = [0, 14], sizes = [16, 1], strides = [1, 1]} : vector<16x24xf32> to vector<16x1xf32>
    %184 = vector.extract_strided_slice %161 {offsets = [0, 15], sizes = [16, 1], strides = [1, 1]} : vector<16x24xf32> to vector<16x1xf32>
    %185 = arith.maximumf %183, %184 : vector<16x1xf32>
    %186 = vector.extract_strided_slice %161 {offsets = [0, 16], sizes = [16, 1], strides = [1, 1]} : vector<16x24xf32> to vector<16x1xf32>
    %187 = vector.extract_strided_slice %161 {offsets = [0, 17], sizes = [16, 1], strides = [1, 1]} : vector<16x24xf32> to vector<16x1xf32>
    %188 = arith.maximumf %186, %187 : vector<16x1xf32>
    %189 = vector.extract_strided_slice %161 {offsets = [0, 18], sizes = [16, 1], strides = [1, 1]} : vector<16x24xf32> to vector<16x1xf32>
    %190 = vector.extract_strided_slice %161 {offsets = [0, 19], sizes = [16, 1], strides = [1, 1]} : vector<16x24xf32> to vector<16x1xf32>
    %191 = arith.maximumf %189, %190 : vector<16x1xf32>
    %192 = vector.extract_strided_slice %161 {offsets = [0, 20], sizes = [16, 1], strides = [1, 1]} : vector<16x24xf32> to vector<16x1xf32>
    %193 = vector.extract_strided_slice %161 {offsets = [0, 21], sizes = [16, 1], strides = [1, 1]} : vector<16x24xf32> to vector<16x1xf32>
    %194 = arith.maximumf %192, %193 : vector<16x1xf32>
    %195 = vector.extract_strided_slice %161 {offsets = [0, 22], sizes = [16, 1], strides = [1, 1]} : vector<16x24xf32> to vector<16x1xf32>
    %196 = vector.extract_strided_slice %161 {offsets = [0, 23], sizes = [16, 1], strides = [1, 1]} : vector<16x24xf32> to vector<16x1xf32>
    %197 = arith.maximumf %195, %196 : vector<16x1xf32>
    %198 = tpu.concatenate %37, %164, %167, %170, %173, %176, %179, %182, %185, %188, %191, %194, %197, %37 in 1 : vector<16x1xf32>, vector<16x1xf32>, vector<16x1xf32>, vector<16x1xf32>, vector<16x1xf32>, vector<16x1xf32>, vector<16x1xf32>, vector<16x1xf32>, vector<16x1xf32>, vector<16x1xf32>, vector<16x1xf32>, vector<16x1xf32>, vector<16x1xf32>, vector<16x1xf32> -> vector<16x14xf32>
    %199 = vector.extract_strided_slice %36 {offsets = [0, 224], sizes = [16, 24], strides = [1, 1]} : vector<16x668xf32> to vector<16x24xf32>
    %200 = vector.extract_strided_slice %36 {offsets = [0, 252], sizes = [16, 24], strides = [1, 1]} : vector<16x668xf32> to vector<16x24xf32>
    %201 = arith.maximumf %199, %200 : vector<16x24xf32>
    %202 = vector.extract_strided_slice %201 {offsets = [0, 0], sizes = [16, 1], strides = [1, 1]} : vector<16x24xf32> to vector<16x1xf32>
    %203 = vector.extract_strided_slice %201 {offsets = [0, 1], sizes = [16, 1], strides = [1, 1]} : vector<16x24xf32> to vector<16x1xf32>
    %204 = arith.maximumf %202, %203 : vector<16x1xf32>
    %205 = vector.extract_strided_slice %201 {offsets = [0, 2], sizes = [16, 1], strides = [1, 1]} : vector<16x24xf32> to vector<16x1xf32>
    %206 = vector.extract_strided_slice %201 {offsets = [0, 3], sizes = [16, 1], strides = [1, 1]} : vector<16x24xf32> to vector<16x1xf32>
    %207 = arith.maximumf %205, %206 : vector<16x1xf32>
    %208 = vector.extract_strided_slice %201 {offsets = [0, 4], sizes = [16, 1], strides = [1, 1]} : vector<16x24xf32> to vector<16x1xf32>
    %209 = vector.extract_strided_slice %201 {offsets = [0, 5], sizes = [16, 1], strides = [1, 1]} : vector<16x24xf32> to vector<16x1xf32>
    %210 = arith.maximumf %208, %209 : vector<16x1xf32>
    %211 = vector.extract_strided_slice %201 {offsets = [0, 6], sizes = [16, 1], strides = [1, 1]} : vector<16x24xf32> to vector<16x1xf32>
    %212 = vector.extract_strided_slice %201 {offsets = [0, 7], sizes = [16, 1], strides = [1, 1]} : vector<16x24xf32> to vector<16x1xf32>
    %213 = arith.maximumf %211, %212 : vector<16x1xf32>
    %214 = vector.extract_strided_slice %201 {offsets = [0, 8], sizes = [16, 1], strides = [1, 1]} : vector<16x24xf32> to vector<16x1xf32>
    %215 = vector.extract_strided_slice %201 {offsets = [0, 9], sizes = [16, 1], strides = [1, 1]} : vector<16x24xf32> to vector<16x1xf32>
    %216 = arith.maximumf %214, %215 : vector<16x1xf32>
    %217 = vector.extract_strided_slice %201 {offsets = [0, 10], sizes = [16, 1], strides = [1, 1]} : vector<16x24xf32> to vector<16x1xf32>
    %218 = vector.extract_strided_slice %201 {offsets = [0, 11], sizes = [16, 1], strides = [1, 1]} : vector<16x24xf32> to vector<16x1xf32>
    %219 = arith.maximumf %217, %218 : vector<16x1xf32>
    %220 = vector.extract_strided_slice %201 {offsets = [0, 12], sizes = [16, 1], strides = [1, 1]} : vector<16x24xf32> to vector<16x1xf32>
    %221 = vector.extract_strided_slice %201 {offsets = [0, 13], sizes = [16, 1], strides = [1, 1]} : vector<16x24xf32> to vector<16x1xf32>
    %222 = arith.maximumf %220, %221 : vector<16x1xf32>
    %223 = vector.extract_strided_slice %201 {offsets = [0, 14], sizes = [16, 1], strides = [1, 1]} : vector<16x24xf32> to vector<16x1xf32>
    %224 = vector.extract_strided_slice %201 {offsets = [0, 15], sizes = [16, 1], strides = [1, 1]} : vector<16x24xf32> to vector<16x1xf32>
    %225 = arith.maximumf %223, %224 : vector<16x1xf32>
    %226 = vector.extract_strided_slice %201 {offsets = [0, 16], sizes = [16, 1], strides = [1, 1]} : vector<16x24xf32> to vector<16x1xf32>
    %227 = vector.extract_strided_slice %201 {offsets = [0, 17], sizes = [16, 1], strides = [1, 1]} : vector<16x24xf32> to vector<16x1xf32>
    %228 = arith.maximumf %226, %227 : vector<16x1xf32>
    %229 = vector.extract_strided_slice %201 {offsets = [0, 18], sizes = [16, 1], strides = [1, 1]} : vector<16x24xf32> to vector<16x1xf32>
    %230 = vector.extract_strided_slice %201 {offsets = [0, 19], sizes = [16, 1], strides = [1, 1]} : vector<16x24xf32> to vector<16x1xf32>
    %231 = arith.maximumf %229, %230 : vector<16x1xf32>
    %232 = vector.extract_strided_slice %201 {offsets = [0, 20], sizes = [16, 1], strides = [1, 1]} : vector<16x24xf32> to vector<16x1xf32>
    %233 = vector.extract_strided_slice %201 {offsets = [0, 21], sizes = [16, 1], strides = [1, 1]} : vector<16x24xf32> to vector<16x1xf32>
    %234 = arith.maximumf %232, %233 : vector<16x1xf32>
    %235 = vector.extract_strided_slice %201 {offsets = [0, 22], sizes = [16, 1], strides = [1, 1]} : vector<16x24xf32> to vector<16x1xf32>
    %236 = vector.extract_strided_slice %201 {offsets = [0, 23], sizes = [16, 1], strides = [1, 1]} : vector<16x24xf32> to vector<16x1xf32>
    %237 = arith.maximumf %235, %236 : vector<16x1xf32>
    %238 = tpu.concatenate %37, %204, %207, %210, %213, %216, %219, %222, %225, %228, %231, %234, %237, %37 in 1 : vector<16x1xf32>, vector<16x1xf32>, vector<16x1xf32>, vector<16x1xf32>, vector<16x1xf32>, vector<16x1xf32>, vector<16x1xf32>, vector<16x1xf32>, vector<16x1xf32>, vector<16x1xf32>, vector<16x1xf32>, vector<16x1xf32>, vector<16x1xf32>, vector<16x1xf32> -> vector<16x14xf32>
    %239 = vector.extract_strided_slice %36 {offsets = [0, 280], sizes = [16, 24], strides = [1, 1]} : vector<16x668xf32> to vector<16x24xf32>
    %240 = vector.extract_strided_slice %36 {offsets = [0, 308], sizes = [16, 24], strides = [1, 1]} : vector<16x668xf32> to vector<16x24xf32>
    %241 = arith.maximumf %239, %240 : vector<16x24xf32>
    %242 = vector.extract_strided_slice %241 {offsets = [0, 0], sizes = [16, 1], strides = [1, 1]} : vector<16x24xf32> to vector<16x1xf32>
    %243 = vector.extract_strided_slice %241 {offsets = [0, 1], sizes = [16, 1], strides = [1, 1]} : vector<16x24xf32> to vector<16x1xf32>
    %244 = arith.maximumf %242, %243 : vector<16x1xf32>
    %245 = vector.extract_strided_slice %241 {offsets = [0, 2], sizes = [16, 1], strides = [1, 1]} : vector<16x24xf32> to vector<16x1xf32>
    %246 = vector.extract_strided_slice %241 {offsets = [0, 3], sizes = [16, 1], strides = [1, 1]} : vector<16x24xf32> to vector<16x1xf32>
    %247 = arith.maximumf %245, %246 : vector<16x1xf32>
    %248 = vector.extract_strided_slice %241 {offsets = [0, 4], sizes = [16, 1], strides = [1, 1]} : vector<16x24xf32> to vector<16x1xf32>
    %249 = vector.extract_strided_slice %241 {offsets = [0, 5], sizes = [16, 1], strides = [1, 1]} : vector<16x24xf32> to vector<16x1xf32>
    %250 = arith.maximumf %248, %249 : vector<16x1xf32>
    %251 = vector.extract_strided_slice %241 {offsets = [0, 6], sizes = [16, 1], strides = [1, 1]} : vector<16x24xf32> to vector<16x1xf32>
    %252 = vector.extract_strided_slice %241 {offsets = [0, 7], sizes = [16, 1], strides = [1, 1]} : vector<16x24xf32> to vector<16x1xf32>
    %253 = arith.maximumf %251, %252 : vector<16x1xf32>
    %254 = vector.extract_strided_slice %241 {offsets = [0, 8], sizes = [16, 1], strides = [1, 1]} : vector<16x24xf32> to vector<16x1xf32>
    %255 = vector.extract_strided_slice %241 {offsets = [0, 9], sizes = [16, 1], strides = [1, 1]} : vector<16x24xf32> to vector<16x1xf32>
    %256 = arith.maximumf %254, %255 : vector<16x1xf32>
    %257 = vector.extract_strided_slice %241 {offsets = [0, 10], sizes = [16, 1], strides = [1, 1]} : vector<16x24xf32> to vector<16x1xf32>
    %258 = vector.extract_strided_slice %241 {offsets = [0, 11], sizes = [16, 1], strides = [1, 1]} : vector<16x24xf32> to vector<16x1xf32>
    %259 = arith.maximumf %257, %258 : vector<16x1xf32>
    %260 = vector.extract_strided_slice %241 {offsets = [0, 12], sizes = [16, 1], strides = [1, 1]} : vector<16x24xf32> to vector<16x1xf32>
    %261 = vector.extract_strided_slice %241 {offsets = [0, 13], sizes = [16, 1], strides = [1, 1]} : vector<16x24xf32> to vector<16x1xf32>
    %262 = arith.maximumf %260, %261 : vector<16x1xf32>
    %263 = vector.extract_strided_slice %241 {offsets = [0, 14], sizes = [16, 1], strides = [1, 1]} : vector<16x24xf32> to vector<16x1xf32>
    %264 = vector.extract_strided_slice %241 {offsets = [0, 15], sizes = [16, 1], strides = [1, 1]} : vector<16x24xf32> to vector<16x1xf32>
    %265 = arith.maximumf %263, %264 : vector<16x1xf32>
    %266 = vector.extract_strided_slice %241 {offsets = [0, 16], sizes = [16, 1], strides = [1, 1]} : vector<16x24xf32> to vector<16x1xf32>
    %267 = vector.extract_strided_slice %241 {offsets = [0, 17], sizes = [16, 1], strides = [1, 1]} : vector<16x24xf32> to vector<16x1xf32>
    %268 = arith.maximumf %266, %267 : vector<16x1xf32>
    %269 = vector.extract_strided_slice %241 {offsets = [0, 18], sizes = [16, 1], strides = [1, 1]} : vector<16x24xf32> to vector<16x1xf32>
    %270 = vector.extract_strided_slice %241 {offsets = [0, 19], sizes = [16, 1], strides = [1, 1]} : vector<16x24xf32> to vector<16x1xf32>
    %271 = arith.maximumf %269, %270 : vector<16x1xf32>
    %272 = vector.extract_strided_slice %241 {offsets = [0, 20], sizes = [16, 1], strides = [1, 1]} : vector<16x24xf32> to vector<16x1xf32>
    %273 = vector.extract_strided_slice %241 {offsets = [0, 21], sizes = [16, 1], strides = [1, 1]} : vector<16x24xf32> to vector<16x1xf32>
    %274 = arith.maximumf %272, %273 : vector<16x1xf32>
    %275 = vector.extract_strided_slice %241 {offsets = [0, 22], sizes = [16, 1], strides = [1, 1]} : vector<16x24xf32> to vector<16x1xf32>
    %276 = vector.extract_strided_slice %241 {offsets = [0, 23], sizes = [16, 1], strides = [1, 1]} : vector<16x24xf32> to vector<16x1xf32>
    %277 = arith.maximumf %275, %276 : vector<16x1xf32>
    %278 = tpu.concatenate %37, %244, %247, %250, %253, %256, %259, %262, %265, %268, %271, %274, %277, %37 in 1 : vector<16x1xf32>, vector<16x1xf32>, vector<16x1xf32>, vector<16x1xf32>, vector<16x1xf32>, vector<16x1xf32>, vector<16x1xf32>, vector<16x1xf32>, vector<16x1xf32>, vector<16x1xf32>, vector<16x1xf32>, vector<16x1xf32>, vector<16x1xf32>, vector<16x1xf32> -> vector<16x14xf32>
    %279 = vector.extract_strided_slice %36 {offsets = [0, 336], sizes = [16, 24], strides = [1, 1]} : vector<16x668xf32> to vector<16x24xf32>
    %280 = vector.extract_strided_slice %36 {offsets = [0, 364], sizes = [16, 24], strides = [1, 1]} : vector<16x668xf32> to vector<16x24xf32>
    %281 = arith.maximumf %279, %280 : vector<16x24xf32>
    %282 = vector.extract_strided_slice %281 {offsets = [0, 0], sizes = [16, 1], strides = [1, 1]} : vector<16x24xf32> to vector<16x1xf32>
    %283 = vector.extract_strided_slice %281 {offsets = [0, 1], sizes = [16, 1], strides = [1, 1]} : vector<16x24xf32> to vector<16x1xf32>
    %284 = arith.maximumf %282, %283 : vector<16x1xf32>
    %285 = vector.extract_strided_slice %281 {offsets = [0, 2], sizes = [16, 1], strides = [1, 1]} : vector<16x24xf32> to vector<16x1xf32>
    %286 = vector.extract_strided_slice %281 {offsets = [0, 3], sizes = [16, 1], strides = [1, 1]} : vector<16x24xf32> to vector<16x1xf32>
    %287 = arith.maximumf %285, %286 : vector<16x1xf32>
    %288 = vector.extract_strided_slice %281 {offsets = [0, 4], sizes = [16, 1], strides = [1, 1]} : vector<16x24xf32> to vector<16x1xf32>
    %289 = vector.extract_strided_slice %281 {offsets = [0, 5], sizes = [16, 1], strides = [1, 1]} : vector<16x24xf32> to vector<16x1xf32>
    %290 = arith.maximumf %288, %289 : vector<16x1xf32>
    %291 = vector.extract_strided_slice %281 {offsets = [0, 6], sizes = [16, 1], strides = [1, 1]} : vector<16x24xf32> to vector<16x1xf32>
    %292 = vector.extract_strided_slice %281 {offsets = [0, 7], sizes = [16, 1], strides = [1, 1]} : vector<16x24xf32> to vector<16x1xf32>
    %293 = arith.maximumf %291, %292 : vector<16x1xf32>
    %294 = vector.extract_strided_slice %281 {offsets = [0, 8], sizes = [16, 1], strides = [1, 1]} : vector<16x24xf32> to vector<16x1xf32>
    %295 = vector.extract_strided_slice %281 {offsets = [0, 9], sizes = [16, 1], strides = [1, 1]} : vector<16x24xf32> to vector<16x1xf32>
    %296 = arith.maximumf %294, %295 : vector<16x1xf32>
    %297 = vector.extract_strided_slice %281 {offsets = [0, 10], sizes = [16, 1], strides = [1, 1]} : vector<16x24xf32> to vector<16x1xf32>
    %298 = vector.extract_strided_slice %281 {offsets = [0, 11], sizes = [16, 1], strides = [1, 1]} : vector<16x24xf32> to vector<16x1xf32>
    %299 = arith.maximumf %297, %298 : vector<16x1xf32>
    %300 = vector.extract_strided_slice %281 {offsets = [0, 12], sizes = [16, 1], strides = [1, 1]} : vector<16x24xf32> to vector<16x1xf32>
    %301 = vector.extract_strided_slice %281 {offsets = [0, 13], sizes = [16, 1], strides = [1, 1]} : vector<16x24xf32> to vector<16x1xf32>
    %302 = arith.maximumf %300, %301 : vector<16x1xf32>
    %303 = vector.extract_strided_slice %281 {offsets = [0, 14], sizes = [16, 1], strides = [1, 1]} : vector<16x24xf32> to vector<16x1xf32>
    %304 = vector.extract_strided_slice %281 {offsets = [0, 15], sizes = [16, 1], strides = [1, 1]} : vector<16x24xf32> to vector<16x1xf32>
    %305 = arith.maximumf %303, %304 : vector<16x1xf32>
    %306 = vector.extract_strided_slice %281 {offsets = [0, 16], sizes = [16, 1], strides = [1, 1]} : vector<16x24xf32> to vector<16x1xf32>
    %307 = vector.extract_strided_slice %281 {offsets = [0, 17], sizes = [16, 1], strides = [1, 1]} : vector<16x24xf32> to vector<16x1xf32>
    %308 = arith.maximumf %306, %307 : vector<16x1xf32>
    %309 = vector.extract_strided_slice %281 {offsets = [0, 18], sizes = [16, 1], strides = [1, 1]} : vector<16x24xf32> to vector<16x1xf32>
    %310 = vector.extract_strided_slice %281 {offsets = [0, 19], sizes = [16, 1], strides = [1, 1]} : vector<16x24xf32> to vector<16x1xf32>
    %311 = arith.maximumf %309, %310 : vector<16x1xf32>
    %312 = vector.extract_strided_slice %281 {offsets = [0, 20], sizes = [16, 1], strides = [1, 1]} : vector<16x24xf32> to vector<16x1xf32>
    %313 = vector.extract_strided_slice %281 {offsets = [0, 21], sizes = [16, 1], strides = [1, 1]} : vector<16x24xf32> to vector<16x1xf32>
    %314 = arith.maximumf %312, %313 : vector<16x1xf32>
    %315 = vector.extract_strided_slice %281 {offsets = [0, 22], sizes = [16, 1], strides = [1, 1]} : vector<16x24xf32> to vector<16x1xf32>
    %316 = vector.extract_strided_slice %281 {offsets = [0, 23], sizes = [16, 1], strides = [1, 1]} : vector<16x24xf32> to vector<16x1xf32>
    %317 = arith.maximumf %315, %316 : vector<16x1xf32>
    %318 = tpu.concatenate %37, %284, %287, %290, %293, %296, %299, %302, %305, %308, %311, %314, %317, %37 in 1 : vector<16x1xf32>, vector<16x1xf32>, vector<16x1xf32>, vector<16x1xf32>, vector<16x1xf32>, vector<16x1xf32>, vector<16x1xf32>, vector<16x1xf32>, vector<16x1xf32>, vector<16x1xf32>, vector<16x1xf32>, vector<16x1xf32>, vector<16x1xf32>, vector<16x1xf32> -> vector<16x14xf32>
    %319 = vector.extract_strided_slice %36 {offsets = [0, 392], sizes = [16, 24], strides = [1, 1]} : vector<16x668xf32> to vector<16x24xf32>
    %320 = vector.extract_strided_slice %36 {offsets = [0, 420], sizes = [16, 24], strides = [1, 1]} : vector<16x668xf32> to vector<16x24xf32>
    %321 = arith.maximumf %319, %320 : vector<16x24xf32>
    %322 = vector.extract_strided_slice %321 {offsets = [0, 0], sizes = [16, 1], strides = [1, 1]} : vector<16x24xf32> to vector<16x1xf32>
    %323 = vector.extract_strided_slice %321 {offsets = [0, 1], sizes = [16, 1], strides = [1, 1]} : vector<16x24xf32> to vector<16x1xf32>
    %324 = arith.maximumf %322, %323 : vector<16x1xf32>
    %325 = vector.extract_strided_slice %321 {offsets = [0, 2], sizes = [16, 1], strides = [1, 1]} : vector<16x24xf32> to vector<16x1xf32>
    %326 = vector.extract_strided_slice %321 {offsets = [0, 3], sizes = [16, 1], strides = [1, 1]} : vector<16x24xf32> to vector<16x1xf32>
    %327 = arith.maximumf %325, %326 : vector<16x1xf32>
    %328 = vector.extract_strided_slice %321 {offsets = [0, 4], sizes = [16, 1], strides = [1, 1]} : vector<16x24xf32> to vector<16x1xf32>
    %329 = vector.extract_strided_slice %321 {offsets = [0, 5], sizes = [16, 1], strides = [1, 1]} : vector<16x24xf32> to vector<16x1xf32>
    %330 = arith.maximumf %328, %329 : vector<16x1xf32>
    %331 = vector.extract_strided_slice %321 {offsets = [0, 6], sizes = [16, 1], strides = [1, 1]} : vector<16x24xf32> to vector<16x1xf32>
    %332 = vector.extract_strided_slice %321 {offsets = [0, 7], sizes = [16, 1], strides = [1, 1]} : vector<16x24xf32> to vector<16x1xf32>
    %333 = arith.maximumf %331, %332 : vector<16x1xf32>
    %334 = vector.extract_strided_slice %321 {offsets = [0, 8], sizes = [16, 1], strides = [1, 1]} : vector<16x24xf32> to vector<16x1xf32>
    %335 = vector.extract_strided_slice %321 {offsets = [0, 9], sizes = [16, 1], strides = [1, 1]} : vector<16x24xf32> to vector<16x1xf32>
    %336 = arith.maximumf %334, %335 : vector<16x1xf32>
    %337 = vector.extract_strided_slice %321 {offsets = [0, 10], sizes = [16, 1], strides = [1, 1]} : vector<16x24xf32> to vector<16x1xf32>
    %338 = vector.extract_strided_slice %321 {offsets = [0, 11], sizes = [16, 1], strides = [1, 1]} : vector<16x24xf32> to vector<16x1xf32>
    %339 = arith.maximumf %337, %338 : vector<16x1xf32>
    %340 = vector.extract_strided_slice %321 {offsets = [0, 12], sizes = [16, 1], strides = [1, 1]} : vector<16x24xf32> to vector<16x1xf32>
    %341 = vector.extract_strided_slice %321 {offsets = [0, 13], sizes = [16, 1], strides = [1, 1]} : vector<16x24xf32> to vector<16x1xf32>
    %342 = arith.maximumf %340, %341 : vector<16x1xf32>
    %343 = vector.extract_strided_slice %321 {offsets = [0, 14], sizes = [16, 1], strides = [1, 1]} : vector<16x24xf32> to vector<16x1xf32>
    %344 = vector.extract_strided_slice %321 {offsets = [0, 15], sizes = [16, 1], strides = [1, 1]} : vector<16x24xf32> to vector<16x1xf32>
    %345 = arith.maximumf %343, %344 : vector<16x1xf32>
    %346 = vector.extract_strided_slice %321 {offsets = [0, 16], sizes = [16, 1], strides = [1, 1]} : vector<16x24xf32> to vector<16x1xf32>
    %347 = vector.extract_strided_slice %321 {offsets = [0, 17], sizes = [16, 1], strides = [1, 1]} : vector<16x24xf32> to vector<16x1xf32>
    %348 = arith.maximumf %346, %347 : vector<16x1xf32>
    %349 = vector.extract_strided_slice %321 {offsets = [0, 18], sizes = [16, 1], strides = [1, 1]} : vector<16x24xf32> to vector<16x1xf32>
    %350 = vector.extract_strided_slice %321 {offsets = [0, 19], sizes = [16, 1], strides = [1, 1]} : vector<16x24xf32> to vector<16x1xf32>
    %351 = arith.maximumf %349, %350 : vector<16x1xf32>
    %352 = vector.extract_strided_slice %321 {offsets = [0, 20], sizes = [16, 1], strides = [1, 1]} : vector<16x24xf32> to vector<16x1xf32>
    %353 = vector.extract_strided_slice %321 {offsets = [0, 21], sizes = [16, 1], strides = [1, 1]} : vector<16x24xf32> to vector<16x1xf32>
    %354 = arith.maximumf %352, %353 : vector<16x1xf32>
    %355 = vector.extract_strided_slice %321 {offsets = [0, 22], sizes = [16, 1], strides = [1, 1]} : vector<16x24xf32> to vector<16x1xf32>
    %356 = vector.extract_strided_slice %321 {offsets = [0, 23], sizes = [16, 1], strides = [1, 1]} : vector<16x24xf32> to vector<16x1xf32>
    %357 = arith.maximumf %355, %356 : vector<16x1xf32>
    %358 = tpu.concatenate %37, %324, %327, %330, %333, %336, %339, %342, %345, %348, %351, %354, %357, %37 in 1 : vector<16x1xf32>, vector<16x1xf32>, vector<16x1xf32>, vector<16x1xf32>, vector<16x1xf32>, vector<16x1xf32>, vector<16x1xf32>, vector<16x1xf32>, vector<16x1xf32>, vector<16x1xf32>, vector<16x1xf32>, vector<16x1xf32>, vector<16x1xf32>, vector<16x1xf32> -> vector<16x14xf32>
    %359 = vector.extract_strided_slice %36 {offsets = [0, 448], sizes = [16, 24], strides = [1, 1]} : vector<16x668xf32> to vector<16x24xf32>
    %360 = vector.extract_strided_slice %36 {offsets = [0, 476], sizes = [16, 24], strides = [1, 1]} : vector<16x668xf32> to vector<16x24xf32>
    %361 = arith.maximumf %359, %360 : vector<16x24xf32>
    %362 = vector.extract_strided_slice %361 {offsets = [0, 0], sizes = [16, 1], strides = [1, 1]} : vector<16x24xf32> to vector<16x1xf32>
    %363 = vector.extract_strided_slice %361 {offsets = [0, 1], sizes = [16, 1], strides = [1, 1]} : vector<16x24xf32> to vector<16x1xf32>
    %364 = arith.maximumf %362, %363 : vector<16x1xf32>
    %365 = vector.extract_strided_slice %361 {offsets = [0, 2], sizes = [16, 1], strides = [1, 1]} : vector<16x24xf32> to vector<16x1xf32>
    %366 = vector.extract_strided_slice %361 {offsets = [0, 3], sizes = [16, 1], strides = [1, 1]} : vector<16x24xf32> to vector<16x1xf32>
    %367 = arith.maximumf %365, %366 : vector<16x1xf32>
    %368 = vector.extract_strided_slice %361 {offsets = [0, 4], sizes = [16, 1], strides = [1, 1]} : vector<16x24xf32> to vector<16x1xf32>
    %369 = vector.extract_strided_slice %361 {offsets = [0, 5], sizes = [16, 1], strides = [1, 1]} : vector<16x24xf32> to vector<16x1xf32>
    %370 = arith.maximumf %368, %369 : vector<16x1xf32>
    %371 = vector.extract_strided_slice %361 {offsets = [0, 6], sizes = [16, 1], strides = [1, 1]} : vector<16x24xf32> to vector<16x1xf32>
    %372 = vector.extract_strided_slice %361 {offsets = [0, 7], sizes = [16, 1], strides = [1, 1]} : vector<16x24xf32> to vector<16x1xf32>
    %373 = arith.maximumf %371, %372 : vector<16x1xf32>
    %374 = vector.extract_strided_slice %361 {offsets = [0, 8], sizes = [16, 1], strides = [1, 1]} : vector<16x24xf32> to vector<16x1xf32>
    %375 = vector.extract_strided_slice %361 {offsets = [0, 9], sizes = [16, 1], strides = [1, 1]} : vector<16x24xf32> to vector<16x1xf32>
    %376 = arith.maximumf %374, %375 : vector<16x1xf32>
    %377 = vector.extract_strided_slice %361 {offsets = [0, 10], sizes = [16, 1], strides = [1, 1]} : vector<16x24xf32> to vector<16x1xf32>
    %378 = vector.extract_strided_slice %361 {offsets = [0, 11], sizes = [16, 1], strides = [1, 1]} : vector<16x24xf32> to vector<16x1xf32>
    %379 = arith.maximumf %377, %378 : vector<16x1xf32>
    %380 = vector.extract_strided_slice %361 {offsets = [0, 12], sizes = [16, 1], strides = [1, 1]} : vector<16x24xf32> to vector<16x1xf32>
    %381 = vector.extract_strided_slice %361 {offsets = [0, 13], sizes = [16, 1], strides = [1, 1]} : vector<16x24xf32> to vector<16x1xf32>
    %382 = arith.maximumf %380, %381 : vector<16x1xf32>
    %383 = vector.extract_strided_slice %361 {offsets = [0, 14], sizes = [16, 1], strides = [1, 1]} : vector<16x24xf32> to vector<16x1xf32>
    %384 = vector.extract_strided_slice %361 {offsets = [0, 15], sizes = [16, 1], strides = [1, 1]} : vector<16x24xf32> to vector<16x1xf32>
    %385 = arith.maximumf %383, %384 : vector<16x1xf32>
    %386 = vector.extract_strided_slice %361 {offsets = [0, 16], sizes = [16, 1], strides = [1, 1]} : vector<16x24xf32> to vector<16x1xf32>
    %387 = vector.extract_strided_slice %361 {offsets = [0, 17], sizes = [16, 1], strides = [1, 1]} : vector<16x24xf32> to vector<16x1xf32>
    %388 = arith.maximumf %386, %387 : vector<16x1xf32>
    %389 = vector.extract_strided_slice %361 {offsets = [0, 18], sizes = [16, 1], strides = [1, 1]} : vector<16x24xf32> to vector<16x1xf32>
    %390 = vector.extract_strided_slice %361 {offsets = [0, 19], sizes = [16, 1], strides = [1, 1]} : vector<16x24xf32> to vector<16x1xf32>
    %391 = arith.maximumf %389, %390 : vector<16x1xf32>
    %392 = vector.extract_strided_slice %361 {offsets = [0, 20], sizes = [16, 1], strides = [1, 1]} : vector<16x24xf32> to vector<16x1xf32>
    %393 = vector.extract_strided_slice %361 {offsets = [0, 21], sizes = [16, 1], strides = [1, 1]} : vector<16x24xf32> to vector<16x1xf32>
    %394 = arith.maximumf %392, %393 : vector<16x1xf32>
    %395 = vector.extract_strided_slice %361 {offsets = [0, 22], sizes = [16, 1], strides = [1, 1]} : vector<16x24xf32> to vector<16x1xf32>
    %396 = vector.extract_strided_slice %361 {offsets = [0, 23], sizes = [16, 1], strides = [1, 1]} : vector<16x24xf32> to vector<16x1xf32>
    %397 = arith.maximumf %395, %396 : vector<16x1xf32>
    %398 = tpu.concatenate %37, %364, %367, %370, %373, %376, %379, %382, %385, %388, %391, %394, %397, %37 in 1 : vector<16x1xf32>, vector<16x1xf32>, vector<16x1xf32>, vector<16x1xf32>, vector<16x1xf32>, vector<16x1xf32>, vector<16x1xf32>, vector<16x1xf32>, vector<16x1xf32>, vector<16x1xf32>, vector<16x1xf32>, vector<16x1xf32>, vector<16x1xf32>, vector<16x1xf32> -> vector<16x14xf32>
    %399 = vector.extract_strided_slice %36 {offsets = [0, 504], sizes = [16, 24], strides = [1, 1]} : vector<16x668xf32> to vector<16x24xf32>
    %400 = vector.extract_strided_slice %36 {offsets = [0, 532], sizes = [16, 24], strides = [1, 1]} : vector<16x668xf32> to vector<16x24xf32>
    %401 = arith.maximumf %399, %400 : vector<16x24xf32>
    %402 = vector.extract_strided_slice %401 {offsets = [0, 0], sizes = [16, 1], strides = [1, 1]} : vector<16x24xf32> to vector<16x1xf32>
    %403 = vector.extract_strided_slice %401 {offsets = [0, 1], sizes = [16, 1], strides = [1, 1]} : vector<16x24xf32> to vector<16x1xf32>
    %404 = arith.maximumf %402, %403 : vector<16x1xf32>
    %405 = vector.extract_strided_slice %401 {offsets = [0, 2], sizes = [16, 1], strides = [1, 1]} : vector<16x24xf32> to vector<16x1xf32>
    %406 = vector.extract_strided_slice %401 {offsets = [0, 3], sizes = [16, 1], strides = [1, 1]} : vector<16x24xf32> to vector<16x1xf32>
    %407 = arith.maximumf %405, %406 : vector<16x1xf32>
    %408 = vector.extract_strided_slice %401 {offsets = [0, 4], sizes = [16, 1], strides = [1, 1]} : vector<16x24xf32> to vector<16x1xf32>
    %409 = vector.extract_strided_slice %401 {offsets = [0, 5], sizes = [16, 1], strides = [1, 1]} : vector<16x24xf32> to vector<16x1xf32>
    %410 = arith.maximumf %408, %409 : vector<16x1xf32>
    %411 = vector.extract_strided_slice %401 {offsets = [0, 6], sizes = [16, 1], strides = [1, 1]} : vector<16x24xf32> to vector<16x1xf32>
    %412 = vector.extract_strided_slice %401 {offsets = [0, 7], sizes = [16, 1], strides = [1, 1]} : vector<16x24xf32> to vector<16x1xf32>
    %413 = arith.maximumf %411, %412 : vector<16x1xf32>
    %414 = vector.extract_strided_slice %401 {offsets = [0, 8], sizes = [16, 1], strides = [1, 1]} : vector<16x24xf32> to vector<16x1xf32>
    %415 = vector.extract_strided_slice %401 {offsets = [0, 9], sizes = [16, 1], strides = [1, 1]} : vector<16x24xf32> to vector<16x1xf32>
    %416 = arith.maximumf %414, %415 : vector<16x1xf32>
    %417 = vector.extract_strided_slice %401 {offsets = [0, 10], sizes = [16, 1], strides = [1, 1]} : vector<16x24xf32> to vector<16x1xf32>
    %418 = vector.extract_strided_slice %401 {offsets = [0, 11], sizes = [16, 1], strides = [1, 1]} : vector<16x24xf32> to vector<16x1xf32>
    %419 = arith.maximumf %417, %418 : vector<16x1xf32>
    %420 = vector.extract_strided_slice %401 {offsets = [0, 12], sizes = [16, 1], strides = [1, 1]} : vector<16x24xf32> to vector<16x1xf32>
    %421 = vector.extract_strided_slice %401 {offsets = [0, 13], sizes = [16, 1], strides = [1, 1]} : vector<16x24xf32> to vector<16x1xf32>
    %422 = arith.maximumf %420, %421 : vector<16x1xf32>
    %423 = vector.extract_strided_slice %401 {offsets = [0, 14], sizes = [16, 1], strides = [1, 1]} : vector<16x24xf32> to vector<16x1xf32>
    %424 = vector.extract_strided_slice %401 {offsets = [0, 15], sizes = [16, 1], strides = [1, 1]} : vector<16x24xf32> to vector<16x1xf32>
    %425 = arith.maximumf %423, %424 : vector<16x1xf32>
    %426 = vector.extract_strided_slice %401 {offsets = [0, 16], sizes = [16, 1], strides = [1, 1]} : vector<16x24xf32> to vector<16x1xf32>
    %427 = vector.extract_strided_slice %401 {offsets = [0, 17], sizes = [16, 1], strides = [1, 1]} : vector<16x24xf32> to vector<16x1xf32>
    %428 = arith.maximumf %426, %427 : vector<16x1xf32>
    %429 = vector.extract_strided_slice %401 {offsets = [0, 18], sizes = [16, 1], strides = [1, 1]} : vector<16x24xf32> to vector<16x1xf32>
    %430 = vector.extract_strided_slice %401 {offsets = [0, 19], sizes = [16, 1], strides = [1, 1]} : vector<16x24xf32> to vector<16x1xf32>
    %431 = arith.maximumf %429, %430 : vector<16x1xf32>
    %432 = vector.extract_strided_slice %401 {offsets = [0, 20], sizes = [16, 1], strides = [1, 1]} : vector<16x24xf32> to vector<16x1xf32>
    %433 = vector.extract_strided_slice %401 {offsets = [0, 21], sizes = [16, 1], strides = [1, 1]} : vector<16x24xf32> to vector<16x1xf32>
    %434 = arith.maximumf %432, %433 : vector<16x1xf32>
    %435 = vector.extract_strided_slice %401 {offsets = [0, 22], sizes = [16, 1], strides = [1, 1]} : vector<16x24xf32> to vector<16x1xf32>
    %436 = vector.extract_strided_slice %401 {offsets = [0, 23], sizes = [16, 1], strides = [1, 1]} : vector<16x24xf32> to vector<16x1xf32>
    %437 = arith.maximumf %435, %436 : vector<16x1xf32>
    %438 = tpu.concatenate %37, %404, %407, %410, %413, %416, %419, %422, %425, %428, %431, %434, %437, %37 in 1 : vector<16x1xf32>, vector<16x1xf32>, vector<16x1xf32>, vector<16x1xf32>, vector<16x1xf32>, vector<16x1xf32>, vector<16x1xf32>, vector<16x1xf32>, vector<16x1xf32>, vector<16x1xf32>, vector<16x1xf32>, vector<16x1xf32>, vector<16x1xf32>, vector<16x1xf32> -> vector<16x14xf32>
    %439 = vector.extract_strided_slice %36 {offsets = [0, 560], sizes = [16, 24], strides = [1, 1]} : vector<16x668xf32> to vector<16x24xf32>
    %440 = vector.extract_strided_slice %36 {offsets = [0, 588], sizes = [16, 24], strides = [1, 1]} : vector<16x668xf32> to vector<16x24xf32>
    %441 = arith.maximumf %439, %440 : vector<16x24xf32>
    %442 = vector.extract_strided_slice %441 {offsets = [0, 0], sizes = [16, 1], strides = [1, 1]} : vector<16x24xf32> to vector<16x1xf32>
    %443 = vector.extract_strided_slice %441 {offsets = [0, 1], sizes = [16, 1], strides = [1, 1]} : vector<16x24xf32> to vector<16x1xf32>
    %444 = arith.maximumf %442, %443 : vector<16x1xf32>
    %445 = vector.extract_strided_slice %441 {offsets = [0, 2], sizes = [16, 1], strides = [1, 1]} : vector<16x24xf32> to vector<16x1xf32>
    %446 = vector.extract_strided_slice %441 {offsets = [0, 3], sizes = [16, 1], strides = [1, 1]} : vector<16x24xf32> to vector<16x1xf32>
    %447 = arith.maximumf %445, %446 : vector<16x1xf32>
    %448 = vector.extract_strided_slice %441 {offsets = [0, 4], sizes = [16, 1], strides = [1, 1]} : vector<16x24xf32> to vector<16x1xf32>
    %449 = vector.extract_strided_slice %441 {offsets = [0, 5], sizes = [16, 1], strides = [1, 1]} : vector<16x24xf32> to vector<16x1xf32>
    %450 = arith.maximumf %448, %449 : vector<16x1xf32>
    %451 = vector.extract_strided_slice %441 {offsets = [0, 6], sizes = [16, 1], strides = [1, 1]} : vector<16x24xf32> to vector<16x1xf32>
    %452 = vector.extract_strided_slice %441 {offsets = [0, 7], sizes = [16, 1], strides = [1, 1]} : vector<16x24xf32> to vector<16x1xf32>
    %453 = arith.maximumf %451, %452 : vector<16x1xf32>
    %454 = vector.extract_strided_slice %441 {offsets = [0, 8], sizes = [16, 1], strides = [1, 1]} : vector<16x24xf32> to vector<16x1xf32>
    %455 = vector.extract_strided_slice %441 {offsets = [0, 9], sizes = [16, 1], strides = [1, 1]} : vector<16x24xf32> to vector<16x1xf32>
    %456 = arith.maximumf %454, %455 : vector<16x1xf32>
    %457 = vector.extract_strided_slice %441 {offsets = [0, 10], sizes = [16, 1], strides = [1, 1]} : vector<16x24xf32> to vector<16x1xf32>
    %458 = vector.extract_strided_slice %441 {offsets = [0, 11], sizes = [16, 1], strides = [1, 1]} : vector<16x24xf32> to vector<16x1xf32>
    %459 = arith.maximumf %457, %458 : vector<16x1xf32>
    %460 = vector.extract_strided_slice %441 {offsets = [0, 12], sizes = [16, 1], strides = [1, 1]} : vector<16x24xf32> to vector<16x1xf32>
    %461 = vector.extract_strided_slice %441 {offsets = [0, 13], sizes = [16, 1], strides = [1, 1]} : vector<16x24xf32> to vector<16x1xf32>
    %462 = arith.maximumf %460, %461 : vector<16x1xf32>
    %463 = vector.extract_strided_slice %441 {offsets = [0, 14], sizes = [16, 1], strides = [1, 1]} : vector<16x24xf32> to vector<16x1xf32>
    %464 = vector.extract_strided_slice %441 {offsets = [0, 15], sizes = [16, 1], strides = [1, 1]} : vector<16x24xf32> to vector<16x1xf32>
    %465 = arith.maximumf %463, %464 : vector<16x1xf32>
    %466 = vector.extract_strided_slice %441 {offsets = [0, 16], sizes = [16, 1], strides = [1, 1]} : vector<16x24xf32> to vector<16x1xf32>
    %467 = vector.extract_strided_slice %441 {offsets = [0, 17], sizes = [16, 1], strides = [1, 1]} : vector<16x24xf32> to vector<16x1xf32>
    %468 = arith.maximumf %466, %467 : vector<16x1xf32>
    %469 = vector.extract_strided_slice %441 {offsets = [0, 18], sizes = [16, 1], strides = [1, 1]} : vector<16x24xf32> to vector<16x1xf32>
    %470 = vector.extract_strided_slice %441 {offsets = [0, 19], sizes = [16, 1], strides = [1, 1]} : vector<16x24xf32> to vector<16x1xf32>
    %471 = arith.maximumf %469, %470 : vector<16x1xf32>
    %472 = vector.extract_strided_slice %441 {offsets = [0, 20], sizes = [16, 1], strides = [1, 1]} : vector<16x24xf32> to vector<16x1xf32>
    %473 = vector.extract_strided_slice %441 {offsets = [0, 21], sizes = [16, 1], strides = [1, 1]} : vector<16x24xf32> to vector<16x1xf32>
    %474 = arith.maximumf %472, %473 : vector<16x1xf32>
    %475 = vector.extract_strided_slice %441 {offsets = [0, 22], sizes = [16, 1], strides = [1, 1]} : vector<16x24xf32> to vector<16x1xf32>
    %476 = vector.extract_strided_slice %441 {offsets = [0, 23], sizes = [16, 1], strides = [1, 1]} : vector<16x24xf32> to vector<16x1xf32>
    %477 = arith.maximumf %475, %476 : vector<16x1xf32>
    %478 = tpu.concatenate %37, %444, %447, %450, %453, %456, %459, %462, %465, %468, %471, %474, %477, %37 in 1 : vector<16x1xf32>, vector<16x1xf32>, vector<16x1xf32>, vector<16x1xf32>, vector<16x1xf32>, vector<16x1xf32>, vector<16x1xf32>, vector<16x1xf32>, vector<16x1xf32>, vector<16x1xf32>, vector<16x1xf32>, vector<16x1xf32>, vector<16x1xf32>, vector<16x1xf32> -> vector<16x14xf32>
    %479 = vector.extract_strided_slice %36 {offsets = [0, 616], sizes = [16, 24], strides = [1, 1]} : vector<16x668xf32> to vector<16x24xf32>
    %480 = vector.extract_strided_slice %36 {offsets = [0, 644], sizes = [16, 24], strides = [1, 1]} : vector<16x668xf32> to vector<16x24xf32>
    %481 = arith.maximumf %479, %480 : vector<16x24xf32>
    %482 = vector.extract_strided_slice %481 {offsets = [0, 0], sizes = [16, 1], strides = [1, 1]} : vector<16x24xf32> to vector<16x1xf32>
    %483 = vector.extract_strided_slice %481 {offsets = [0, 1], sizes = [16, 1], strides = [1, 1]} : vector<16x24xf32> to vector<16x1xf32>
    %484 = arith.maximumf %482, %483 : vector<16x1xf32>
    %485 = vector.extract_strided_slice %481 {offsets = [0, 2], sizes = [16, 1], strides = [1, 1]} : vector<16x24xf32> to vector<16x1xf32>
    %486 = vector.extract_strided_slice %481 {offsets = [0, 3], sizes = [16, 1], strides = [1, 1]} : vector<16x24xf32> to vector<16x1xf32>
    %487 = arith.maximumf %485, %486 : vector<16x1xf32>
    %488 = vector.extract_strided_slice %481 {offsets = [0, 4], sizes = [16, 1], strides = [1, 1]} : vector<16x24xf32> to vector<16x1xf32>
    %489 = vector.extract_strided_slice %481 {offsets = [0, 5], sizes = [16, 1], strides = [1, 1]} : vector<16x24xf32> to vector<16x1xf32>
    %490 = arith.maximumf %488, %489 : vector<16x1xf32>
    %491 = vector.extract_strided_slice %481 {offsets = [0, 6], sizes = [16, 1], strides = [1, 1]} : vector<16x24xf32> to vector<16x1xf32>
    %492 = vector.extract_strided_slice %481 {offsets = [0, 7], sizes = [16, 1], strides = [1, 1]} : vector<16x24xf32> to vector<16x1xf32>
    %493 = arith.maximumf %491, %492 : vector<16x1xf32>
    %494 = vector.extract_strided_slice %481 {offsets = [0, 8], sizes = [16, 1], strides = [1, 1]} : vector<16x24xf32> to vector<16x1xf32>
    %495 = vector.extract_strided_slice %481 {offsets = [0, 9], sizes = [16, 1], strides = [1, 1]} : vector<16x24xf32> to vector<16x1xf32>
    %496 = arith.maximumf %494, %495 : vector<16x1xf32>
    %497 = vector.extract_strided_slice %481 {offsets = [0, 10], sizes = [16, 1], strides = [1, 1]} : vector<16x24xf32> to vector<16x1xf32>
    %498 = vector.extract_strided_slice %481 {offsets = [0, 11], sizes = [16, 1], strides = [1, 1]} : vector<16x24xf32> to vector<16x1xf32>
    %499 = arith.maximumf %497, %498 : vector<16x1xf32>
    %500 = vector.extract_strided_slice %481 {offsets = [0, 12], sizes = [16, 1], strides = [1, 1]} : vector<16x24xf32> to vector<16x1xf32>
    %501 = vector.extract_strided_slice %481 {offsets = [0, 13], sizes = [16, 1], strides = [1, 1]} : vector<16x24xf32> to vector<16x1xf32>
    %502 = arith.maximumf %500, %501 : vector<16x1xf32>
    %503 = vector.extract_strided_slice %481 {offsets = [0, 14], sizes = [16, 1], strides = [1, 1]} : vector<16x24xf32> to vector<16x1xf32>
    %504 = vector.extract_strided_slice %481 {offsets = [0, 15], sizes = [16, 1], strides = [1, 1]} : vector<16x24xf32> to vector<16x1xf32>
    %505 = arith.maximumf %503, %504 : vector<16x1xf32>
    %506 = vector.extract_strided_slice %481 {offsets = [0, 16], sizes = [16, 1], strides = [1, 1]} : vector<16x24xf32> to vector<16x1xf32>
    %507 = vector.extract_strided_slice %481 {offsets = [0, 17], sizes = [16, 1], strides = [1, 1]} : vector<16x24xf32> to vector<16x1xf32>
    %508 = arith.maximumf %506, %507 : vector<16x1xf32>
    %509 = vector.extract_strided_slice %481 {offsets = [0, 18], sizes = [16, 1], strides = [1, 1]} : vector<16x24xf32> to vector<16x1xf32>
    %510 = vector.extract_strided_slice %481 {offsets = [0, 19], sizes = [16, 1], strides = [1, 1]} : vector<16x24xf32> to vector<16x1xf32>
    %511 = arith.maximumf %509, %510 : vector<16x1xf32>
    %512 = vector.extract_strided_slice %481 {offsets = [0, 20], sizes = [16, 1], strides = [1, 1]} : vector<16x24xf32> to vector<16x1xf32>
    %513 = vector.extract_strided_slice %481 {offsets = [0, 21], sizes = [16, 1], strides = [1, 1]} : vector<16x24xf32> to vector<16x1xf32>
    %514 = arith.maximumf %512, %513 : vector<16x1xf32>
    %515 = vector.extract_strided_slice %481 {offsets = [0, 22], sizes = [16, 1], strides = [1, 1]} : vector<16x24xf32> to vector<16x1xf32>
    %516 = vector.extract_strided_slice %481 {offsets = [0, 23], sizes = [16, 1], strides = [1, 1]} : vector<16x24xf32> to vector<16x1xf32>
    %517 = arith.maximumf %515, %516 : vector<16x1xf32>
    %518 = tpu.concatenate %37, %484, %487, %490, %493, %496, %499, %502, %505, %508, %511, %514, %517, %37 in 1 : vector<16x1xf32>, vector<16x1xf32>, vector<16x1xf32>, vector<16x1xf32>, vector<16x1xf32>, vector<16x1xf32>, vector<16x1xf32>, vector<16x1xf32>, vector<16x1xf32>, vector<16x1xf32>, vector<16x1xf32>, vector<16x1xf32>, vector<16x1xf32>, vector<16x1xf32> -> vector<16x14xf32>
    %519 = tpu.concatenate %38, %78, %118, %158, %198, %238, %278, %318, %358, %398, %438, %478, %518, %38 in 1 : vector<16x14xf32>, vector<16x14xf32>, vector<16x14xf32>, vector<16x14xf32>, vector<16x14xf32>, vector<16x14xf32>, vector<16x14xf32>, vector<16x14xf32>, vector<16x14xf32>, vector<16x14xf32>, vector<16x14xf32>, vector<16x14xf32>, vector<16x14xf32>, vector<16x14xf32> -> vector<16x196xf32>
    %cst_9 = arith.constant 1.000000e+00 : f32
    %520 = vector.broadcast %cst_9 : f32 to vector<1x12xf32>
    %cst_10 = arith.constant 0.000000e+00 : f32
    %521 = vector.broadcast %cst_10 : f32 to vector<1x2xf32>
    %522 = tpu.concatenate %520, %521 in 1 : vector<1x12xf32>, vector<1x2xf32> -> vector<1x14xf32>
    %523 = tpu.concatenate %522, %522, %522, %522, %522, %522, %522, %522, %522, %522, %522, %522 in 1 : vector<1x14xf32>, vector<1x14xf32>, vector<1x14xf32>, vector<1x14xf32>, vector<1x14xf32>, vector<1x14xf32>, vector<1x14xf32>, vector<1x14xf32>, vector<1x14xf32>, vector<1x14xf32>, vector<1x14xf32>, vector<1x14xf32> -> vector<1x168xf32>
    %524 = vector.extract_strided_slice %523 {offsets = [0, 0], sizes = [1, 166], strides = [1, 1]} : vector<1x168xf32> to vector<1x166xf32>
    %525 = vector.extract_strided_slice %519 {offsets = [0, 0], sizes = [16, 166], strides = [1, 1]} : vector<16x196xf32> to vector<16x166xf32>
    %c0_11 = arith.constant 0 : index
    %c0_12 = arith.constant 0 : index
    %c0_13 = arith.constant 0 : index
    %526 = vector.load %arg4[%c0_11, %c0_12, %c0_13] : memref<9x16x16xf32, #tpu.memory_space<vmem>>, vector<1x16x16xf32>
    %527 = vector.shape_cast %526 : vector<1x16x16xf32> to vector<16x16xf32>
    %cst_14 = arith.constant dense<0.000000e+00> : vector<16x166xf32>
    %528 = tpu.matmul %527, %525, %cst_14 {dimension_numbers = #tpu.dot_dimension_numbers<[1], [0], [0], [1], [0, 0, 1, 1], [], []>} : vector<16x16xf32>, vector<16x166xf32>, vector<16x166xf32> -> vector<16x166xf32>
    %529 = vector.extract_strided_slice %519 {offsets = [0, 1], sizes = [16, 166], strides = [1, 1]} : vector<16x196xf32> to vector<16x166xf32>
    %c1 = arith.constant 1 : index
    %c0_15 = arith.constant 0 : index
    %c0_16 = arith.constant 0 : index
    %530 = vector.load %arg4[%c1, %c0_15, %c0_16] : memref<9x16x16xf32, #tpu.memory_space<vmem>>, vector<1x16x16xf32>
    %531 = vector.shape_cast %530 : vector<1x16x16xf32> to vector<16x16xf32>
    %cst_17 = arith.constant dense<0.000000e+00> : vector<16x166xf32>
    %532 = tpu.matmul %531, %529, %cst_17 {dimension_numbers = #tpu.dot_dimension_numbers<[1], [0], [0], [1], [0, 0, 1, 1], [], []>} : vector<16x16xf32>, vector<16x166xf32>, vector<16x166xf32> -> vector<16x166xf32>
    %533 = arith.addf %528, %532 : vector<16x166xf32>
    %534 = vector.extract_strided_slice %519 {offsets = [0, 2], sizes = [16, 166], strides = [1, 1]} : vector<16x196xf32> to vector<16x166xf32>
    %c2 = arith.constant 2 : index
    %c0_18 = arith.constant 0 : index
    %c0_19 = arith.constant 0 : index
    %535 = vector.load %arg4[%c2, %c0_18, %c0_19] : memref<9x16x16xf32, #tpu.memory_space<vmem>>, vector<1x16x16xf32>
    %536 = vector.shape_cast %535 : vector<1x16x16xf32> to vector<16x16xf32>
    %cst_20 = arith.constant dense<0.000000e+00> : vector<16x166xf32>
    %537 = tpu.matmul %536, %534, %cst_20 {dimension_numbers = #tpu.dot_dimension_numbers<[1], [0], [0], [1], [0, 0, 1, 1], [], []>} : vector<16x16xf32>, vector<16x166xf32>, vector<16x166xf32> -> vector<16x166xf32>
    %538 = arith.addf %533, %537 : vector<16x166xf32>
    %539 = vector.extract_strided_slice %519 {offsets = [0, 14], sizes = [16, 166], strides = [1, 1]} : vector<16x196xf32> to vector<16x166xf32>
    %c3 = arith.constant 3 : index
    %c0_21 = arith.constant 0 : index
    %c0_22 = arith.constant 0 : index
    %540 = vector.load %arg4[%c3, %c0_21, %c0_22] : memref<9x16x16xf32, #tpu.memory_space<vmem>>, vector<1x16x16xf32>
    %541 = vector.shape_cast %540 : vector<1x16x16xf32> to vector<16x16xf32>
    %cst_23 = arith.constant dense<0.000000e+00> : vector<16x166xf32>
    %542 = tpu.matmul %541, %539, %cst_23 {dimension_numbers = #tpu.dot_dimension_numbers<[1], [0], [0], [1], [0, 0, 1, 1], [], []>} : vector<16x16xf32>, vector<16x166xf32>, vector<16x166xf32> -> vector<16x166xf32>
    %543 = arith.addf %538, %542 : vector<16x166xf32>
    %544 = vector.extract_strided_slice %519 {offsets = [0, 15], sizes = [16, 166], strides = [1, 1]} : vector<16x196xf32> to vector<16x166xf32>
    %c4 = arith.constant 4 : index
    %c0_24 = arith.constant 0 : index
    %c0_25 = arith.constant 0 : index
    %545 = vector.load %arg4[%c4, %c0_24, %c0_25] : memref<9x16x16xf32, #tpu.memory_space<vmem>>, vector<1x16x16xf32>
    %546 = vector.shape_cast %545 : vector<1x16x16xf32> to vector<16x16xf32>
    %cst_26 = arith.constant dense<0.000000e+00> : vector<16x166xf32>
    %547 = tpu.matmul %546, %544, %cst_26 {dimension_numbers = #tpu.dot_dimension_numbers<[1], [0], [0], [1], [0, 0, 1, 1], [], []>} : vector<16x16xf32>, vector<16x166xf32>, vector<16x166xf32> -> vector<16x166xf32>
    %548 = arith.addf %543, %547 : vector<16x166xf32>
    %549 = vector.extract_strided_slice %519 {offsets = [0, 16], sizes = [16, 166], strides = [1, 1]} : vector<16x196xf32> to vector<16x166xf32>
    %c5 = arith.constant 5 : index
    %c0_27 = arith.constant 0 : index
    %c0_28 = arith.constant 0 : index
    %550 = vector.load %arg4[%c5, %c0_27, %c0_28] : memref<9x16x16xf32, #tpu.memory_space<vmem>>, vector<1x16x16xf32>
    %551 = vector.shape_cast %550 : vector<1x16x16xf32> to vector<16x16xf32>
    %cst_29 = arith.constant dense<0.000000e+00> : vector<16x166xf32>
    %552 = tpu.matmul %551, %549, %cst_29 {dimension_numbers = #tpu.dot_dimension_numbers<[1], [0], [0], [1], [0, 0, 1, 1], [], []>} : vector<16x16xf32>, vector<16x166xf32>, vector<16x166xf32> -> vector<16x166xf32>
    %553 = arith.addf %548, %552 : vector<16x166xf32>
    %554 = vector.extract_strided_slice %519 {offsets = [0, 28], sizes = [16, 166], strides = [1, 1]} : vector<16x196xf32> to vector<16x166xf32>
    %c6 = arith.constant 6 : index
    %c0_30 = arith.constant 0 : index
    %c0_31 = arith.constant 0 : index
    %555 = vector.load %arg4[%c6, %c0_30, %c0_31] : memref<9x16x16xf32, #tpu.memory_space<vmem>>, vector<1x16x16xf32>
    %556 = vector.shape_cast %555 : vector<1x16x16xf32> to vector<16x16xf32>
    %cst_32 = arith.constant dense<0.000000e+00> : vector<16x166xf32>
    %557 = tpu.matmul %556, %554, %cst_32 {dimension_numbers = #tpu.dot_dimension_numbers<[1], [0], [0], [1], [0, 0, 1, 1], [], []>} : vector<16x16xf32>, vector<16x166xf32>, vector<16x166xf32> -> vector<16x166xf32>
    %558 = arith.addf %553, %557 : vector<16x166xf32>
    %559 = vector.extract_strided_slice %519 {offsets = [0, 29], sizes = [16, 166], strides = [1, 1]} : vector<16x196xf32> to vector<16x166xf32>
    %c7 = arith.constant 7 : index
    %c0_33 = arith.constant 0 : index
    %c0_34 = arith.constant 0 : index
    %560 = vector.load %arg4[%c7, %c0_33, %c0_34] : memref<9x16x16xf32, #tpu.memory_space<vmem>>, vector<1x16x16xf32>
    %561 = vector.shape_cast %560 : vector<1x16x16xf32> to vector<16x16xf32>
    %cst_35 = arith.constant dense<0.000000e+00> : vector<16x166xf32>
    %562 = tpu.matmul %561, %559, %cst_35 {dimension_numbers = #tpu.dot_dimension_numbers<[1], [0], [0], [1], [0, 0, 1, 1], [], []>} : vector<16x16xf32>, vector<16x166xf32>, vector<16x166xf32> -> vector<16x166xf32>
    %563 = arith.addf %558, %562 : vector<16x166xf32>
    %564 = vector.extract_strided_slice %519 {offsets = [0, 30], sizes = [16, 166], strides = [1, 1]} : vector<16x196xf32> to vector<16x166xf32>
    %c8 = arith.constant 8 : index
    %c0_36 = arith.constant 0 : index
    %c0_37 = arith.constant 0 : index
    %565 = vector.load %arg4[%c8, %c0_36, %c0_37] : memref<9x16x16xf32, #tpu.memory_space<vmem>>, vector<1x16x16xf32>
    %566 = vector.shape_cast %565 : vector<1x16x16xf32> to vector<16x16xf32>
    %cst_38 = arith.constant dense<0.000000e+00> : vector<16x166xf32>
    %567 = tpu.matmul %566, %564, %cst_38 {dimension_numbers = #tpu.dot_dimension_numbers<[1], [0], [0], [1], [0, 0, 1, 1], [], []>} : vector<16x16xf32>, vector<16x166xf32>, vector<16x166xf32> -> vector<16x166xf32>
    %568 = arith.addf %563, %567 : vector<16x166xf32>
    %c0_39 = arith.constant 0 : index
    %c0_40 = arith.constant 0 : index
    %569 = vector.load %arg5[%c0_39, %c0_40] : memref<16x1xf32, #tpu.memory_space<vmem>>, vector<16x1xf32>
    %570 = vector.broadcast %569 : vector<16x1xf32> to vector<16x166xf32>
    %571 = arith.addf %568, %570 : vector<16x166xf32>
    %cst_41 = arith.constant 0.000000e+00 : f32
    %572 = vector.broadcast %cst_41 : f32 to vector<16x166xf32>
    %573 = arith.maximumf %571, %572 : vector<16x166xf32>
    %574 = vector.broadcast %524 : vector<1x166xf32> to vector<16x166xf32>
    %575 = arith.mulf %573, %574 : vector<16x166xf32>
    %cst_42 = arith.constant 0.000000e+00 : f32
    %576 = vector.broadcast %cst_42 : f32 to vector<16x15xf32>
    %cst_43 = arith.constant 0.000000e+00 : f32
    %577 = vector.broadcast %cst_43 : f32 to vector<16x15xf32>
    %578 = tpu.concatenate %576, %575, %577 in 1 : vector<16x15xf32>, vector<16x166xf32>, vector<16x15xf32> -> vector<16x196xf32>
    %579 = vector.extract_strided_slice %578 {offsets = [0, 0], sizes = [16, 166], strides = [1, 1]} : vector<16x196xf32> to vector<16x166xf32>
    %c0_44 = arith.constant 0 : index
    %c0_45 = arith.constant 0 : index
    %c0_46 = arith.constant 0 : index
    %580 = vector.load %arg6[%c0_44, %c0_45, %c0_46] : memref<9x16x16xf32, #tpu.memory_space<vmem>>, vector<1x16x16xf32>
    %581 = vector.shape_cast %580 : vector<1x16x16xf32> to vector<16x16xf32>
    %cst_47 = arith.constant dense<0.000000e+00> : vector<16x166xf32>
    %582 = tpu.matmul %581, %579, %cst_47 {dimension_numbers = #tpu.dot_dimension_numbers<[1], [0], [0], [1], [0, 0, 1, 1], [], []>} : vector<16x16xf32>, vector<16x166xf32>, vector<16x166xf32> -> vector<16x166xf32>
    %583 = vector.extract_strided_slice %578 {offsets = [0, 1], sizes = [16, 166], strides = [1, 1]} : vector<16x196xf32> to vector<16x166xf32>
    %c1_48 = arith.constant 1 : index
    %c0_49 = arith.constant 0 : index
    %c0_50 = arith.constant 0 : index
    %584 = vector.load %arg6[%c1_48, %c0_49, %c0_50] : memref<9x16x16xf32, #tpu.memory_space<vmem>>, vector<1x16x16xf32>
    %585 = vector.shape_cast %584 : vector<1x16x16xf32> to vector<16x16xf32>
    %cst_51 = arith.constant dense<0.000000e+00> : vector<16x166xf32>
    %586 = tpu.matmul %585, %583, %cst_51 {dimension_numbers = #tpu.dot_dimension_numbers<[1], [0], [0], [1], [0, 0, 1, 1], [], []>} : vector<16x16xf32>, vector<16x166xf32>, vector<16x166xf32> -> vector<16x166xf32>
    %587 = arith.addf %582, %586 : vector<16x166xf32>
    %588 = vector.extract_strided_slice %578 {offsets = [0, 2], sizes = [16, 166], strides = [1, 1]} : vector<16x196xf32> to vector<16x166xf32>
    %c2_52 = arith.constant 2 : index
    %c0_53 = arith.constant 0 : index
    %c0_54 = arith.constant 0 : index
    %589 = vector.load %arg6[%c2_52, %c0_53, %c0_54] : memref<9x16x16xf32, #tpu.memory_space<vmem>>, vector<1x16x16xf32>
    %590 = vector.shape_cast %589 : vector<1x16x16xf32> to vector<16x16xf32>
    %cst_55 = arith.constant dense<0.000000e+00> : vector<16x166xf32>
    %591 = tpu.matmul %590, %588, %cst_55 {dimension_numbers = #tpu.dot_dimension_numbers<[1], [0], [0], [1], [0, 0, 1, 1], [], []>} : vector<16x16xf32>, vector<16x166xf32>, vector<16x166xf32> -> vector<16x166xf32>
    %592 = arith.addf %587, %591 : vector<16x166xf32>
    %593 = vector.extract_strided_slice %578 {offsets = [0, 14], sizes = [16, 166], strides = [1, 1]} : vector<16x196xf32> to vector<16x166xf32>
    %c3_56 = arith.constant 3 : index
    %c0_57 = arith.constant 0 : index
    %c0_58 = arith.constant 0 : index
    %594 = vector.load %arg6[%c3_56, %c0_57, %c0_58] : memref<9x16x16xf32, #tpu.memory_space<vmem>>, vector<1x16x16xf32>
    %595 = vector.shape_cast %594 : vector<1x16x16xf32> to vector<16x16xf32>
    %cst_59 = arith.constant dense<0.000000e+00> : vector<16x166xf32>
    %596 = tpu.matmul %595, %593, %cst_59 {dimension_numbers = #tpu.dot_dimension_numbers<[1], [0], [0], [1], [0, 0, 1, 1], [], []>} : vector<16x16xf32>, vector<16x166xf32>, vector<16x166xf32> -> vector<16x166xf32>
    %597 = arith.addf %592, %596 : vector<16x166xf32>
    %598 = vector.extract_strided_slice %578 {offsets = [0, 15], sizes = [16, 166], strides = [1, 1]} : vector<16x196xf32> to vector<16x166xf32>
    %c4_60 = arith.constant 4 : index
    %c0_61 = arith.constant 0 : index
    %c0_62 = arith.constant 0 : index
    %599 = vector.load %arg6[%c4_60, %c0_61, %c0_62] : memref<9x16x16xf32, #tpu.memory_space<vmem>>, vector<1x16x16xf32>
    %600 = vector.shape_cast %599 : vector<1x16x16xf32> to vector<16x16xf32>
    %cst_63 = arith.constant dense<0.000000e+00> : vector<16x166xf32>
    %601 = tpu.matmul %600, %598, %cst_63 {dimension_numbers = #tpu.dot_dimension_numbers<[1], [0], [0], [1], [0, 0, 1, 1], [], []>} : vector<16x16xf32>, vector<16x166xf32>, vector<16x166xf32> -> vector<16x166xf32>
    %602 = arith.addf %597, %601 : vector<16x166xf32>
    %603 = vector.extract_strided_slice %578 {offsets = [0, 16], sizes = [16, 166], strides = [1, 1]} : vector<16x196xf32> to vector<16x166xf32>
    %c5_64 = arith.constant 5 : index
    %c0_65 = arith.constant 0 : index
    %c0_66 = arith.constant 0 : index
    %604 = vector.load %arg6[%c5_64, %c0_65, %c0_66] : memref<9x16x16xf32, #tpu.memory_space<vmem>>, vector<1x16x16xf32>
    %605 = vector.shape_cast %604 : vector<1x16x16xf32> to vector<16x16xf32>
    %cst_67 = arith.constant dense<0.000000e+00> : vector<16x166xf32>
    %606 = tpu.matmul %605, %603, %cst_67 {dimension_numbers = #tpu.dot_dimension_numbers<[1], [0], [0], [1], [0, 0, 1, 1], [], []>} : vector<16x16xf32>, vector<16x166xf32>, vector<16x166xf32> -> vector<16x166xf32>
    %607 = arith.addf %602, %606 : vector<16x166xf32>
    %608 = vector.extract_strided_slice %578 {offsets = [0, 28], sizes = [16, 166], strides = [1, 1]} : vector<16x196xf32> to vector<16x166xf32>
    %c6_68 = arith.constant 6 : index
    %c0_69 = arith.constant 0 : index
    %c0_70 = arith.constant 0 : index
    %609 = vector.load %arg6[%c6_68, %c0_69, %c0_70] : memref<9x16x16xf32, #tpu.memory_space<vmem>>, vector<1x16x16xf32>
    %610 = vector.shape_cast %609 : vector<1x16x16xf32> to vector<16x16xf32>
    %cst_71 = arith.constant dense<0.000000e+00> : vector<16x166xf32>
    %611 = tpu.matmul %610, %608, %cst_71 {dimension_numbers = #tpu.dot_dimension_numbers<[1], [0], [0], [1], [0, 0, 1, 1], [], []>} : vector<16x16xf32>, vector<16x166xf32>, vector<16x166xf32> -> vector<16x166xf32>
    %612 = arith.addf %607, %611 : vector<16x166xf32>
    %613 = vector.extract_strided_slice %578 {offsets = [0, 29], sizes = [16, 166], strides = [1, 1]} : vector<16x196xf32> to vector<16x166xf32>
    %c7_72 = arith.constant 7 : index
    %c0_73 = arith.constant 0 : index
    %c0_74 = arith.constant 0 : index
    %614 = vector.load %arg6[%c7_72, %c0_73, %c0_74] : memref<9x16x16xf32, #tpu.memory_space<vmem>>, vector<1x16x16xf32>
    %615 = vector.shape_cast %614 : vector<1x16x16xf32> to vector<16x16xf32>
    %cst_75 = arith.constant dense<0.000000e+00> : vector<16x166xf32>
    %616 = tpu.matmul %615, %613, %cst_75 {dimension_numbers = #tpu.dot_dimension_numbers<[1], [0], [0], [1], [0, 0, 1, 1], [], []>} : vector<16x16xf32>, vector<16x166xf32>, vector<16x166xf32> -> vector<16x166xf32>
    %617 = arith.addf %612, %616 : vector<16x166xf32>
    %618 = vector.extract_strided_slice %578 {offsets = [0, 30], sizes = [16, 166], strides = [1, 1]} : vector<16x196xf32> to vector<16x166xf32>
    %c8_76 = arith.constant 8 : index
    %c0_77 = arith.constant 0 : index
    %c0_78 = arith.constant 0 : index
    %619 = vector.load %arg6[%c8_76, %c0_77, %c0_78] : memref<9x16x16xf32, #tpu.memory_space<vmem>>, vector<1x16x16xf32>
    %620 = vector.shape_cast %619 : vector<1x16x16xf32> to vector<16x16xf32>
    %cst_79 = arith.constant dense<0.000000e+00> : vector<16x166xf32>
    %621 = tpu.matmul %620, %618, %cst_79 {dimension_numbers = #tpu.dot_dimension_numbers<[1], [0], [0], [1], [0, 0, 1, 1], [], []>} : vector<16x16xf32>, vector<16x166xf32>, vector<16x166xf32> -> vector<16x166xf32>
    %622 = arith.addf %617, %621 : vector<16x166xf32>
    %c0_80 = arith.constant 0 : index
    %c0_81 = arith.constant 0 : index
    %623 = vector.load %arg7[%c0_80, %c0_81] : memref<16x1xf32, #tpu.memory_space<vmem>>, vector<16x1xf32>
    %624 = vector.broadcast %623 : vector<16x1xf32> to vector<16x166xf32>
    %625 = arith.addf %622, %624 : vector<16x166xf32>
    %626 = arith.addf %575, %625 : vector<16x166xf32>
    %cst_82 = arith.constant 0.000000e+00 : f32
    %627 = vector.broadcast %cst_82 : f32 to vector<16x166xf32>
    %628 = arith.maximumf %626, %627 : vector<16x166xf32>
    %629 = vector.extract_strided_slice %628 {offsets = [0, 0], sizes = [16, 106], strides = [1, 1]} : vector<16x166xf32> to vector<16x106xf32>
    %c0_83 = arith.constant 0 : index
    %c0_84 = arith.constant 0 : index
    %c0_85 = arith.constant 0 : index
    %630 = vector.load %arg8[%c0_83, %c0_84, %c0_85] : memref<25x32x16xf32, #tpu.memory_space<vmem>>, vector<1x32x16xf32>
    %631 = vector.shape_cast %630 : vector<1x32x16xf32> to vector<32x16xf32>
    %cst_86 = arith.constant dense<0.000000e+00> : vector<32x106xf32>
    %632 = tpu.matmul %631, %629, %cst_86 {dimension_numbers = #tpu.dot_dimension_numbers<[1], [0], [0], [1], [0, 0, 1, 1], [], []>} : vector<32x16xf32>, vector<16x106xf32>, vector<32x106xf32> -> vector<32x106xf32>
    %633 = vector.extract_strided_slice %628 {offsets = [0, 1], sizes = [16, 106], strides = [1, 1]} : vector<16x166xf32> to vector<16x106xf32>
    %c1_87 = arith.constant 1 : index
    %c0_88 = arith.constant 0 : index
    %c0_89 = arith.constant 0 : index
    %634 = vector.load %arg8[%c1_87, %c0_88, %c0_89] : memref<25x32x16xf32, #tpu.memory_space<vmem>>, vector<1x32x16xf32>
    %635 = vector.shape_cast %634 : vector<1x32x16xf32> to vector<32x16xf32>
    %cst_90 = arith.constant dense<0.000000e+00> : vector<32x106xf32>
    %636 = tpu.matmul %635, %633, %cst_90 {dimension_numbers = #tpu.dot_dimension_numbers<[1], [0], [0], [1], [0, 0, 1, 1], [], []>} : vector<32x16xf32>, vector<16x106xf32>, vector<32x106xf32> -> vector<32x106xf32>
    %637 = arith.addf %632, %636 : vector<32x106xf32>
    %638 = vector.extract_strided_slice %628 {offsets = [0, 2], sizes = [16, 106], strides = [1, 1]} : vector<16x166xf32> to vector<16x106xf32>
    %c2_91 = arith.constant 2 : index
    %c0_92 = arith.constant 0 : index
    %c0_93 = arith.constant 0 : index
    %639 = vector.load %arg8[%c2_91, %c0_92, %c0_93] : memref<25x32x16xf32, #tpu.memory_space<vmem>>, vector<1x32x16xf32>
    %640 = vector.shape_cast %639 : vector<1x32x16xf32> to vector<32x16xf32>
    %cst_94 = arith.constant dense<0.000000e+00> : vector<32x106xf32>
    %641 = tpu.matmul %640, %638, %cst_94 {dimension_numbers = #tpu.dot_dimension_numbers<[1], [0], [0], [1], [0, 0, 1, 1], [], []>} : vector<32x16xf32>, vector<16x106xf32>, vector<32x106xf32> -> vector<32x106xf32>
    %642 = arith.addf %637, %641 : vector<32x106xf32>
    %643 = vector.extract_strided_slice %628 {offsets = [0, 3], sizes = [16, 106], strides = [1, 1]} : vector<16x166xf32> to vector<16x106xf32>
    %c3_95 = arith.constant 3 : index
    %c0_96 = arith.constant 0 : index
    %c0_97 = arith.constant 0 : index
    %644 = vector.load %arg8[%c3_95, %c0_96, %c0_97] : memref<25x32x16xf32, #tpu.memory_space<vmem>>, vector<1x32x16xf32>
    %645 = vector.shape_cast %644 : vector<1x32x16xf32> to vector<32x16xf32>
    %cst_98 = arith.constant dense<0.000000e+00> : vector<32x106xf32>
    %646 = tpu.matmul %645, %643, %cst_98 {dimension_numbers = #tpu.dot_dimension_numbers<[1], [0], [0], [1], [0, 0, 1, 1], [], []>} : vector<32x16xf32>, vector<16x106xf32>, vector<32x106xf32> -> vector<32x106xf32>
    %647 = arith.addf %642, %646 : vector<32x106xf32>
    %648 = vector.extract_strided_slice %628 {offsets = [0, 4], sizes = [16, 106], strides = [1, 1]} : vector<16x166xf32> to vector<16x106xf32>
    %c4_99 = arith.constant 4 : index
    %c0_100 = arith.constant 0 : index
    %c0_101 = arith.constant 0 : index
    %649 = vector.load %arg8[%c4_99, %c0_100, %c0_101] : memref<25x32x16xf32, #tpu.memory_space<vmem>>, vector<1x32x16xf32>
    %650 = vector.shape_cast %649 : vector<1x32x16xf32> to vector<32x16xf32>
    %cst_102 = arith.constant dense<0.000000e+00> : vector<32x106xf32>
    %651 = tpu.matmul %650, %648, %cst_102 {dimension_numbers = #tpu.dot_dimension_numbers<[1], [0], [0], [1], [0, 0, 1, 1], [], []>} : vector<32x16xf32>, vector<16x106xf32>, vector<32x106xf32> -> vector<32x106xf32>
    %652 = arith.addf %647, %651 : vector<32x106xf32>
    %653 = vector.extract_strided_slice %628 {offsets = [0, 14], sizes = [16, 106], strides = [1, 1]} : vector<16x166xf32> to vector<16x106xf32>
    %c5_103 = arith.constant 5 : index
    %c0_104 = arith.constant 0 : index
    %c0_105 = arith.constant 0 : index
    %654 = vector.load %arg8[%c5_103, %c0_104, %c0_105] : memref<25x32x16xf32, #tpu.memory_space<vmem>>, vector<1x32x16xf32>
    %655 = vector.shape_cast %654 : vector<1x32x16xf32> to vector<32x16xf32>
    %cst_106 = arith.constant dense<0.000000e+00> : vector<32x106xf32>
    %656 = tpu.matmul %655, %653, %cst_106 {dimension_numbers = #tpu.dot_dimension_numbers<[1], [0], [0], [1], [0, 0, 1, 1], [], []>} : vector<32x16xf32>, vector<16x106xf32>, vector<32x106xf32> -> vector<32x106xf32>
    %657 = arith.addf %652, %656 : vector<32x106xf32>
    %658 = vector.extract_strided_slice %628 {offsets = [0, 15], sizes = [16, 106], strides = [1, 1]} : vector<16x166xf32> to vector<16x106xf32>
    %c6_107 = arith.constant 6 : index
    %c0_108 = arith.constant 0 : index
    %c0_109 = arith.constant 0 : index
    %659 = vector.load %arg8[%c6_107, %c0_108, %c0_109] : memref<25x32x16xf32, #tpu.memory_space<vmem>>, vector<1x32x16xf32>
    %660 = vector.shape_cast %659 : vector<1x32x16xf32> to vector<32x16xf32>
    %cst_110 = arith.constant dense<0.000000e+00> : vector<32x106xf32>
    %661 = tpu.matmul %660, %658, %cst_110 {dimension_numbers = #tpu.dot_dimension_numbers<[1], [0], [0], [1], [0, 0, 1, 1], [], []>} : vector<32x16xf32>, vector<16x106xf32>, vector<32x106xf32> -> vector<32x106xf32>
    %662 = arith.addf %657, %661 : vector<32x106xf32>
    %663 = vector.extract_strided_slice %628 {offsets = [0, 16], sizes = [16, 106], strides = [1, 1]} : vector<16x166xf32> to vector<16x106xf32>
    %c7_111 = arith.constant 7 : index
    %c0_112 = arith.constant 0 : index
    %c0_113 = arith.constant 0 : index
    %664 = vector.load %arg8[%c7_111, %c0_112, %c0_113] : memref<25x32x16xf32, #tpu.memory_space<vmem>>, vector<1x32x16xf32>
    %665 = vector.shape_cast %664 : vector<1x32x16xf32> to vector<32x16xf32>
    %cst_114 = arith.constant dense<0.000000e+00> : vector<32x106xf32>
    %666 = tpu.matmul %665, %663, %cst_114 {dimension_numbers = #tpu.dot_dimension_numbers<[1], [0], [0], [1], [0, 0, 1, 1], [], []>} : vector<32x16xf32>, vector<16x106xf32>, vector<32x106xf32> -> vector<32x106xf32>
    %667 = arith.addf %662, %666 : vector<32x106xf32>
    %668 = vector.extract_strided_slice %628 {offsets = [0, 17], sizes = [16, 106], strides = [1, 1]} : vector<16x166xf32> to vector<16x106xf32>
    %c8_115 = arith.constant 8 : index
    %c0_116 = arith.constant 0 : index
    %c0_117 = arith.constant 0 : index
    %669 = vector.load %arg8[%c8_115, %c0_116, %c0_117] : memref<25x32x16xf32, #tpu.memory_space<vmem>>, vector<1x32x16xf32>
    %670 = vector.shape_cast %669 : vector<1x32x16xf32> to vector<32x16xf32>
    %cst_118 = arith.constant dense<0.000000e+00> : vector<32x106xf32>
    %671 = tpu.matmul %670, %668, %cst_118 {dimension_numbers = #tpu.dot_dimension_numbers<[1], [0], [0], [1], [0, 0, 1, 1], [], []>} : vector<32x16xf32>, vector<16x106xf32>, vector<32x106xf32> -> vector<32x106xf32>
    %672 = arith.addf %667, %671 : vector<32x106xf32>
    %673 = vector.extract_strided_slice %628 {offsets = [0, 18], sizes = [16, 106], strides = [1, 1]} : vector<16x166xf32> to vector<16x106xf32>
    %c9 = arith.constant 9 : index
    %c0_119 = arith.constant 0 : index
    %c0_120 = arith.constant 0 : index
    %674 = vector.load %arg8[%c9, %c0_119, %c0_120] : memref<25x32x16xf32, #tpu.memory_space<vmem>>, vector<1x32x16xf32>
    %675 = vector.shape_cast %674 : vector<1x32x16xf32> to vector<32x16xf32>
    %cst_121 = arith.constant dense<0.000000e+00> : vector<32x106xf32>
    %676 = tpu.matmul %675, %673, %cst_121 {dimension_numbers = #tpu.dot_dimension_numbers<[1], [0], [0], [1], [0, 0, 1, 1], [], []>} : vector<32x16xf32>, vector<16x106xf32>, vector<32x106xf32> -> vector<32x106xf32>
    %677 = arith.addf %672, %676 : vector<32x106xf32>
    %678 = vector.extract_strided_slice %628 {offsets = [0, 28], sizes = [16, 106], strides = [1, 1]} : vector<16x166xf32> to vector<16x106xf32>
    %c10 = arith.constant 10 : index
    %c0_122 = arith.constant 0 : index
    %c0_123 = arith.constant 0 : index
    %679 = vector.load %arg8[%c10, %c0_122, %c0_123] : memref<25x32x16xf32, #tpu.memory_space<vmem>>, vector<1x32x16xf32>
    %680 = vector.shape_cast %679 : vector<1x32x16xf32> to vector<32x16xf32>
    %cst_124 = arith.constant dense<0.000000e+00> : vector<32x106xf32>
    %681 = tpu.matmul %680, %678, %cst_124 {dimension_numbers = #tpu.dot_dimension_numbers<[1], [0], [0], [1], [0, 0, 1, 1], [], []>} : vector<32x16xf32>, vector<16x106xf32>, vector<32x106xf32> -> vector<32x106xf32>
    %682 = arith.addf %677, %681 : vector<32x106xf32>
    %683 = vector.extract_strided_slice %628 {offsets = [0, 29], sizes = [16, 106], strides = [1, 1]} : vector<16x166xf32> to vector<16x106xf32>
    %c11 = arith.constant 11 : index
    %c0_125 = arith.constant 0 : index
    %c0_126 = arith.constant 0 : index
    %684 = vector.load %arg8[%c11, %c0_125, %c0_126] : memref<25x32x16xf32, #tpu.memory_space<vmem>>, vector<1x32x16xf32>
    %685 = vector.shape_cast %684 : vector<1x32x16xf32> to vector<32x16xf32>
    %cst_127 = arith.constant dense<0.000000e+00> : vector<32x106xf32>
    %686 = tpu.matmul %685, %683, %cst_127 {dimension_numbers = #tpu.dot_dimension_numbers<[1], [0], [0], [1], [0, 0, 1, 1], [], []>} : vector<32x16xf32>, vector<16x106xf32>, vector<32x106xf32> -> vector<32x106xf32>
    %687 = arith.addf %682, %686 : vector<32x106xf32>
    %688 = vector.extract_strided_slice %628 {offsets = [0, 30], sizes = [16, 106], strides = [1, 1]} : vector<16x166xf32> to vector<16x106xf32>
    %c12 = arith.constant 12 : index
    %c0_128 = arith.constant 0 : index
    %c0_129 = arith.constant 0 : index
    %689 = vector.load %arg8[%c12, %c0_128, %c0_129] : memref<25x32x16xf32, #tpu.memory_space<vmem>>, vector<1x32x16xf32>
    %690 = vector.shape_cast %689 : vector<1x32x16xf32> to vector<32x16xf32>
    %cst_130 = arith.constant dense<0.000000e+00> : vector<32x106xf32>
    %691 = tpu.matmul %690, %688, %cst_130 {dimension_numbers = #tpu.dot_dimension_numbers<[1], [0], [0], [1], [0, 0, 1, 1], [], []>} : vector<32x16xf32>, vector<16x106xf32>, vector<32x106xf32> -> vector<32x106xf32>
    %692 = arith.addf %687, %691 : vector<32x106xf32>
    %693 = vector.extract_strided_slice %628 {offsets = [0, 31], sizes = [16, 106], strides = [1, 1]} : vector<16x166xf32> to vector<16x106xf32>
    %c13 = arith.constant 13 : index
    %c0_131 = arith.constant 0 : index
    %c0_132 = arith.constant 0 : index
    %694 = vector.load %arg8[%c13, %c0_131, %c0_132] : memref<25x32x16xf32, #tpu.memory_space<vmem>>, vector<1x32x16xf32>
    %695 = vector.shape_cast %694 : vector<1x32x16xf32> to vector<32x16xf32>
    %cst_133 = arith.constant dense<0.000000e+00> : vector<32x106xf32>
    %696 = tpu.matmul %695, %693, %cst_133 {dimension_numbers = #tpu.dot_dimension_numbers<[1], [0], [0], [1], [0, 0, 1, 1], [], []>} : vector<32x16xf32>, vector<16x106xf32>, vector<32x106xf32> -> vector<32x106xf32>
    %697 = arith.addf %692, %696 : vector<32x106xf32>
    %698 = vector.extract_strided_slice %628 {offsets = [0, 32], sizes = [16, 106], strides = [1, 1]} : vector<16x166xf32> to vector<16x106xf32>
    %c14 = arith.constant 14 : index
    %c0_134 = arith.constant 0 : index
    %c0_135 = arith.constant 0 : index
    %699 = vector.load %arg8[%c14, %c0_134, %c0_135] : memref<25x32x16xf32, #tpu.memory_space<vmem>>, vector<1x32x16xf32>
    %700 = vector.shape_cast %699 : vector<1x32x16xf32> to vector<32x16xf32>
    %cst_136 = arith.constant dense<0.000000e+00> : vector<32x106xf32>
    %701 = tpu.matmul %700, %698, %cst_136 {dimension_numbers = #tpu.dot_dimension_numbers<[1], [0], [0], [1], [0, 0, 1, 1], [], []>} : vector<32x16xf32>, vector<16x106xf32>, vector<32x106xf32> -> vector<32x106xf32>
    %702 = arith.addf %697, %701 : vector<32x106xf32>
    %703 = vector.extract_strided_slice %628 {offsets = [0, 42], sizes = [16, 106], strides = [1, 1]} : vector<16x166xf32> to vector<16x106xf32>
    %c15 = arith.constant 15 : index
    %c0_137 = arith.constant 0 : index
    %c0_138 = arith.constant 0 : index
    %704 = vector.load %arg8[%c15, %c0_137, %c0_138] : memref<25x32x16xf32, #tpu.memory_space<vmem>>, vector<1x32x16xf32>
    %705 = vector.shape_cast %704 : vector<1x32x16xf32> to vector<32x16xf32>
    %cst_139 = arith.constant dense<0.000000e+00> : vector<32x106xf32>
    %706 = tpu.matmul %705, %703, %cst_139 {dimension_numbers = #tpu.dot_dimension_numbers<[1], [0], [0], [1], [0, 0, 1, 1], [], []>} : vector<32x16xf32>, vector<16x106xf32>, vector<32x106xf32> -> vector<32x106xf32>
    %707 = arith.addf %702, %706 : vector<32x106xf32>
    %708 = vector.extract_strided_slice %628 {offsets = [0, 43], sizes = [16, 106], strides = [1, 1]} : vector<16x166xf32> to vector<16x106xf32>
    %c16 = arith.constant 16 : index
    %c0_140 = arith.constant 0 : index
    %c0_141 = arith.constant 0 : index
    %709 = vector.load %arg8[%c16, %c0_140, %c0_141] : memref<25x32x16xf32, #tpu.memory_space<vmem>>, vector<1x32x16xf32>
    %710 = vector.shape_cast %709 : vector<1x32x16xf32> to vector<32x16xf32>
    %cst_142 = arith.constant dense<0.000000e+00> : vector<32x106xf32>
    %711 = tpu.matmul %710, %708, %cst_142 {dimension_numbers = #tpu.dot_dimension_numbers<[1], [0], [0], [1], [0, 0, 1, 1], [], []>} : vector<32x16xf32>, vector<16x106xf32>, vector<32x106xf32> -> vector<32x106xf32>
    %712 = arith.addf %707, %711 : vector<32x106xf32>
    %713 = vector.extract_strided_slice %628 {offsets = [0, 44], sizes = [16, 106], strides = [1, 1]} : vector<16x166xf32> to vector<16x106xf32>
    %c17 = arith.constant 17 : index
    %c0_143 = arith.constant 0 : index
    %c0_144 = arith.constant 0 : index
    %714 = vector.load %arg8[%c17, %c0_143, %c0_144] : memref<25x32x16xf32, #tpu.memory_space<vmem>>, vector<1x32x16xf32>
    %715 = vector.shape_cast %714 : vector<1x32x16xf32> to vector<32x16xf32>
    %cst_145 = arith.constant dense<0.000000e+00> : vector<32x106xf32>
    %716 = tpu.matmul %715, %713, %cst_145 {dimension_numbers = #tpu.dot_dimension_numbers<[1], [0], [0], [1], [0, 0, 1, 1], [], []>} : vector<32x16xf32>, vector<16x106xf32>, vector<32x106xf32> -> vector<32x106xf32>
    %717 = arith.addf %712, %716 : vector<32x106xf32>
    %718 = vector.extract_strided_slice %628 {offsets = [0, 45], sizes = [16, 106], strides = [1, 1]} : vector<16x166xf32> to vector<16x106xf32>
    %c18 = arith.constant 18 : index
    %c0_146 = arith.constant 0 : index
    %c0_147 = arith.constant 0 : index
    %719 = vector.load %arg8[%c18, %c0_146, %c0_147] : memref<25x32x16xf32, #tpu.memory_space<vmem>>, vector<1x32x16xf32>
    %720 = vector.shape_cast %719 : vector<1x32x16xf32> to vector<32x16xf32>
    %cst_148 = arith.constant dense<0.000000e+00> : vector<32x106xf32>
    %721 = tpu.matmul %720, %718, %cst_148 {dimension_numbers = #tpu.dot_dimension_numbers<[1], [0], [0], [1], [0, 0, 1, 1], [], []>} : vector<32x16xf32>, vector<16x106xf32>, vector<32x106xf32> -> vector<32x106xf32>
    %722 = arith.addf %717, %721 : vector<32x106xf32>
    %723 = vector.extract_strided_slice %628 {offsets = [0, 46], sizes = [16, 106], strides = [1, 1]} : vector<16x166xf32> to vector<16x106xf32>
    %c19 = arith.constant 19 : index
    %c0_149 = arith.constant 0 : index
    %c0_150 = arith.constant 0 : index
    %724 = vector.load %arg8[%c19, %c0_149, %c0_150] : memref<25x32x16xf32, #tpu.memory_space<vmem>>, vector<1x32x16xf32>
    %725 = vector.shape_cast %724 : vector<1x32x16xf32> to vector<32x16xf32>
    %cst_151 = arith.constant dense<0.000000e+00> : vector<32x106xf32>
    %726 = tpu.matmul %725, %723, %cst_151 {dimension_numbers = #tpu.dot_dimension_numbers<[1], [0], [0], [1], [0, 0, 1, 1], [], []>} : vector<32x16xf32>, vector<16x106xf32>, vector<32x106xf32> -> vector<32x106xf32>
    %727 = arith.addf %722, %726 : vector<32x106xf32>
    %728 = vector.extract_strided_slice %628 {offsets = [0, 56], sizes = [16, 106], strides = [1, 1]} : vector<16x166xf32> to vector<16x106xf32>
    %c20 = arith.constant 20 : index
    %c0_152 = arith.constant 0 : index
    %c0_153 = arith.constant 0 : index
    %729 = vector.load %arg8[%c20, %c0_152, %c0_153] : memref<25x32x16xf32, #tpu.memory_space<vmem>>, vector<1x32x16xf32>
    %730 = vector.shape_cast %729 : vector<1x32x16xf32> to vector<32x16xf32>
    %cst_154 = arith.constant dense<0.000000e+00> : vector<32x106xf32>
    %731 = tpu.matmul %730, %728, %cst_154 {dimension_numbers = #tpu.dot_dimension_numbers<[1], [0], [0], [1], [0, 0, 1, 1], [], []>} : vector<32x16xf32>, vector<16x106xf32>, vector<32x106xf32> -> vector<32x106xf32>
    %732 = arith.addf %727, %731 : vector<32x106xf32>
    %733 = vector.extract_strided_slice %628 {offsets = [0, 57], sizes = [16, 106], strides = [1, 1]} : vector<16x166xf32> to vector<16x106xf32>
    %c21 = arith.constant 21 : index
    %c0_155 = arith.constant 0 : index
    %c0_156 = arith.constant 0 : index
    %734 = vector.load %arg8[%c21, %c0_155, %c0_156] : memref<25x32x16xf32, #tpu.memory_space<vmem>>, vector<1x32x16xf32>
    %735 = vector.shape_cast %734 : vector<1x32x16xf32> to vector<32x16xf32>
    %cst_157 = arith.constant dense<0.000000e+00> : vector<32x106xf32>
    %736 = tpu.matmul %735, %733, %cst_157 {dimension_numbers = #tpu.dot_dimension_numbers<[1], [0], [0], [1], [0, 0, 1, 1], [], []>} : vector<32x16xf32>, vector<16x106xf32>, vector<32x106xf32> -> vector<32x106xf32>
    %737 = arith.addf %732, %736 : vector<32x106xf32>
    %738 = vector.extract_strided_slice %628 {offsets = [0, 58], sizes = [16, 106], strides = [1, 1]} : vector<16x166xf32> to vector<16x106xf32>
    %c22 = arith.constant 22 : index
    %c0_158 = arith.constant 0 : index
    %c0_159 = arith.constant 0 : index
    %739 = vector.load %arg8[%c22, %c0_158, %c0_159] : memref<25x32x16xf32, #tpu.memory_space<vmem>>, vector<1x32x16xf32>
    %740 = vector.shape_cast %739 : vector<1x32x16xf32> to vector<32x16xf32>
    %cst_160 = arith.constant dense<0.000000e+00> : vector<32x106xf32>
    %741 = tpu.matmul %740, %738, %cst_160 {dimension_numbers = #tpu.dot_dimension_numbers<[1], [0], [0], [1], [0, 0, 1, 1], [], []>} : vector<32x16xf32>, vector<16x106xf32>, vector<32x106xf32> -> vector<32x106xf32>
    %742 = arith.addf %737, %741 : vector<32x106xf32>
    %743 = vector.extract_strided_slice %628 {offsets = [0, 59], sizes = [16, 106], strides = [1, 1]} : vector<16x166xf32> to vector<16x106xf32>
    %c23 = arith.constant 23 : index
    %c0_161 = arith.constant 0 : index
    %c0_162 = arith.constant 0 : index
    %744 = vector.load %arg8[%c23, %c0_161, %c0_162] : memref<25x32x16xf32, #tpu.memory_space<vmem>>, vector<1x32x16xf32>
    %745 = vector.shape_cast %744 : vector<1x32x16xf32> to vector<32x16xf32>
    %cst_163 = arith.constant dense<0.000000e+00> : vector<32x106xf32>
    %746 = tpu.matmul %745, %743, %cst_163 {dimension_numbers = #tpu.dot_dimension_numbers<[1], [0], [0], [1], [0, 0, 1, 1], [], []>} : vector<32x16xf32>, vector<16x106xf32>, vector<32x106xf32> -> vector<32x106xf32>
    %747 = arith.addf %742, %746 : vector<32x106xf32>
    %748 = vector.extract_strided_slice %628 {offsets = [0, 60], sizes = [16, 106], strides = [1, 1]} : vector<16x166xf32> to vector<16x106xf32>
    %c24 = arith.constant 24 : index
    %c0_164 = arith.constant 0 : index
    %c0_165 = arith.constant 0 : index
    %749 = vector.load %arg8[%c24, %c0_164, %c0_165] : memref<25x32x16xf32, #tpu.memory_space<vmem>>, vector<1x32x16xf32>
    %750 = vector.shape_cast %749 : vector<1x32x16xf32> to vector<32x16xf32>
    %cst_166 = arith.constant dense<0.000000e+00> : vector<32x106xf32>
    %751 = tpu.matmul %750, %748, %cst_166 {dimension_numbers = #tpu.dot_dimension_numbers<[1], [0], [0], [1], [0, 0, 1, 1], [], []>} : vector<32x16xf32>, vector<16x106xf32>, vector<32x106xf32> -> vector<32x106xf32>
    %752 = arith.addf %747, %751 : vector<32x106xf32>
    %c0_167 = arith.constant 0 : index
    %c0_168 = arith.constant 0 : index
    %753 = vector.load %arg9[%c0_167, %c0_168] : memref<32x1xf32, #tpu.memory_space<vmem>>, vector<32x1xf32>
    %754 = vector.broadcast %753 : vector<32x1xf32> to vector<32x106xf32>
    %755 = arith.addf %752, %754 : vector<32x106xf32>
    %cst_169 = arith.constant 0.000000e+00 : f32
    %756 = vector.broadcast %cst_169 : f32 to vector<32x106xf32>
    %757 = arith.maximumf %755, %756 : vector<32x106xf32>
    %cst_170 = arith.constant 0.000000e+00 : f32
    %758 = vector.broadcast %cst_170 : f32 to vector<32x1xf32>
    %cst_171 = arith.constant 0.000000e+00 : f32
    %759 = vector.broadcast %cst_171 : f32 to vector<32x6xf32>
    %760 = vector.extract_strided_slice %757 {offsets = [0, 0], sizes = [32, 8], strides = [1, 1]} : vector<32x106xf32> to vector<32x8xf32>
    %761 = vector.extract_strided_slice %757 {offsets = [0, 14], sizes = [32, 8], strides = [1, 1]} : vector<32x106xf32> to vector<32x8xf32>
    %762 = arith.maximumf %760, %761 : vector<32x8xf32>
    %763 = vector.extract_strided_slice %762 {offsets = [0, 0], sizes = [32, 1], strides = [1, 1]} : vector<32x8xf32> to vector<32x1xf32>
    %764 = vector.extract_strided_slice %762 {offsets = [0, 1], sizes = [32, 1], strides = [1, 1]} : vector<32x8xf32> to vector<32x1xf32>
    %765 = arith.maximumf %763, %764 : vector<32x1xf32>
    %766 = vector.extract_strided_slice %762 {offsets = [0, 2], sizes = [32, 1], strides = [1, 1]} : vector<32x8xf32> to vector<32x1xf32>
    %767 = vector.extract_strided_slice %762 {offsets = [0, 3], sizes = [32, 1], strides = [1, 1]} : vector<32x8xf32> to vector<32x1xf32>
    %768 = arith.maximumf %766, %767 : vector<32x1xf32>
    %769 = vector.extract_strided_slice %762 {offsets = [0, 4], sizes = [32, 1], strides = [1, 1]} : vector<32x8xf32> to vector<32x1xf32>
    %770 = vector.extract_strided_slice %762 {offsets = [0, 5], sizes = [32, 1], strides = [1, 1]} : vector<32x8xf32> to vector<32x1xf32>
    %771 = arith.maximumf %769, %770 : vector<32x1xf32>
    %772 = vector.extract_strided_slice %762 {offsets = [0, 6], sizes = [32, 1], strides = [1, 1]} : vector<32x8xf32> to vector<32x1xf32>
    %773 = vector.extract_strided_slice %762 {offsets = [0, 7], sizes = [32, 1], strides = [1, 1]} : vector<32x8xf32> to vector<32x1xf32>
    %774 = arith.maximumf %772, %773 : vector<32x1xf32>
    %775 = tpu.concatenate %758, %765, %768, %771, %774, %758 in 1 : vector<32x1xf32>, vector<32x1xf32>, vector<32x1xf32>, vector<32x1xf32>, vector<32x1xf32>, vector<32x1xf32> -> vector<32x6xf32>
    %776 = vector.extract_strided_slice %757 {offsets = [0, 28], sizes = [32, 8], strides = [1, 1]} : vector<32x106xf32> to vector<32x8xf32>
    %777 = vector.extract_strided_slice %757 {offsets = [0, 42], sizes = [32, 8], strides = [1, 1]} : vector<32x106xf32> to vector<32x8xf32>
    %778 = arith.maximumf %776, %777 : vector<32x8xf32>
    %779 = vector.extract_strided_slice %778 {offsets = [0, 0], sizes = [32, 1], strides = [1, 1]} : vector<32x8xf32> to vector<32x1xf32>
    %780 = vector.extract_strided_slice %778 {offsets = [0, 1], sizes = [32, 1], strides = [1, 1]} : vector<32x8xf32> to vector<32x1xf32>
    %781 = arith.maximumf %779, %780 : vector<32x1xf32>
    %782 = vector.extract_strided_slice %778 {offsets = [0, 2], sizes = [32, 1], strides = [1, 1]} : vector<32x8xf32> to vector<32x1xf32>
    %783 = vector.extract_strided_slice %778 {offsets = [0, 3], sizes = [32, 1], strides = [1, 1]} : vector<32x8xf32> to vector<32x1xf32>
    %784 = arith.maximumf %782, %783 : vector<32x1xf32>
    %785 = vector.extract_strided_slice %778 {offsets = [0, 4], sizes = [32, 1], strides = [1, 1]} : vector<32x8xf32> to vector<32x1xf32>
    %786 = vector.extract_strided_slice %778 {offsets = [0, 5], sizes = [32, 1], strides = [1, 1]} : vector<32x8xf32> to vector<32x1xf32>
    %787 = arith.maximumf %785, %786 : vector<32x1xf32>
    %788 = vector.extract_strided_slice %778 {offsets = [0, 6], sizes = [32, 1], strides = [1, 1]} : vector<32x8xf32> to vector<32x1xf32>
    %789 = vector.extract_strided_slice %778 {offsets = [0, 7], sizes = [32, 1], strides = [1, 1]} : vector<32x8xf32> to vector<32x1xf32>
    %790 = arith.maximumf %788, %789 : vector<32x1xf32>
    %791 = tpu.concatenate %758, %781, %784, %787, %790, %758 in 1 : vector<32x1xf32>, vector<32x1xf32>, vector<32x1xf32>, vector<32x1xf32>, vector<32x1xf32>, vector<32x1xf32> -> vector<32x6xf32>
    %792 = vector.extract_strided_slice %757 {offsets = [0, 56], sizes = [32, 8], strides = [1, 1]} : vector<32x106xf32> to vector<32x8xf32>
    %793 = vector.extract_strided_slice %757 {offsets = [0, 70], sizes = [32, 8], strides = [1, 1]} : vector<32x106xf32> to vector<32x8xf32>
    %794 = arith.maximumf %792, %793 : vector<32x8xf32>
    %795 = vector.extract_strided_slice %794 {offsets = [0, 0], sizes = [32, 1], strides = [1, 1]} : vector<32x8xf32> to vector<32x1xf32>
    %796 = vector.extract_strided_slice %794 {offsets = [0, 1], sizes = [32, 1], strides = [1, 1]} : vector<32x8xf32> to vector<32x1xf32>
    %797 = arith.maximumf %795, %796 : vector<32x1xf32>
    %798 = vector.extract_strided_slice %794 {offsets = [0, 2], sizes = [32, 1], strides = [1, 1]} : vector<32x8xf32> to vector<32x1xf32>
    %799 = vector.extract_strided_slice %794 {offsets = [0, 3], sizes = [32, 1], strides = [1, 1]} : vector<32x8xf32> to vector<32x1xf32>
    %800 = arith.maximumf %798, %799 : vector<32x1xf32>
    %801 = vector.extract_strided_slice %794 {offsets = [0, 4], sizes = [32, 1], strides = [1, 1]} : vector<32x8xf32> to vector<32x1xf32>
    %802 = vector.extract_strided_slice %794 {offsets = [0, 5], sizes = [32, 1], strides = [1, 1]} : vector<32x8xf32> to vector<32x1xf32>
    %803 = arith.maximumf %801, %802 : vector<32x1xf32>
    %804 = vector.extract_strided_slice %794 {offsets = [0, 6], sizes = [32, 1], strides = [1, 1]} : vector<32x8xf32> to vector<32x1xf32>
    %805 = vector.extract_strided_slice %794 {offsets = [0, 7], sizes = [32, 1], strides = [1, 1]} : vector<32x8xf32> to vector<32x1xf32>
    %806 = arith.maximumf %804, %805 : vector<32x1xf32>
    %807 = tpu.concatenate %758, %797, %800, %803, %806, %758 in 1 : vector<32x1xf32>, vector<32x1xf32>, vector<32x1xf32>, vector<32x1xf32>, vector<32x1xf32>, vector<32x1xf32> -> vector<32x6xf32>
    %808 = vector.extract_strided_slice %757 {offsets = [0, 84], sizes = [32, 8], strides = [1, 1]} : vector<32x106xf32> to vector<32x8xf32>
    %809 = vector.extract_strided_slice %757 {offsets = [0, 98], sizes = [32, 8], strides = [1, 1]} : vector<32x106xf32> to vector<32x8xf32>
    %810 = arith.maximumf %808, %809 : vector<32x8xf32>
    %811 = vector.extract_strided_slice %810 {offsets = [0, 0], sizes = [32, 1], strides = [1, 1]} : vector<32x8xf32> to vector<32x1xf32>
    %812 = vector.extract_strided_slice %810 {offsets = [0, 1], sizes = [32, 1], strides = [1, 1]} : vector<32x8xf32> to vector<32x1xf32>
    %813 = arith.maximumf %811, %812 : vector<32x1xf32>
    %814 = vector.extract_strided_slice %810 {offsets = [0, 2], sizes = [32, 1], strides = [1, 1]} : vector<32x8xf32> to vector<32x1xf32>
    %815 = vector.extract_strided_slice %810 {offsets = [0, 3], sizes = [32, 1], strides = [1, 1]} : vector<32x8xf32> to vector<32x1xf32>
    %816 = arith.maximumf %814, %815 : vector<32x1xf32>
    %817 = vector.extract_strided_slice %810 {offsets = [0, 4], sizes = [32, 1], strides = [1, 1]} : vector<32x8xf32> to vector<32x1xf32>
    %818 = vector.extract_strided_slice %810 {offsets = [0, 5], sizes = [32, 1], strides = [1, 1]} : vector<32x8xf32> to vector<32x1xf32>
    %819 = arith.maximumf %817, %818 : vector<32x1xf32>
    %820 = vector.extract_strided_slice %810 {offsets = [0, 6], sizes = [32, 1], strides = [1, 1]} : vector<32x8xf32> to vector<32x1xf32>
    %821 = vector.extract_strided_slice %810 {offsets = [0, 7], sizes = [32, 1], strides = [1, 1]} : vector<32x8xf32> to vector<32x1xf32>
    %822 = arith.maximumf %820, %821 : vector<32x1xf32>
    %823 = tpu.concatenate %758, %813, %816, %819, %822, %758 in 1 : vector<32x1xf32>, vector<32x1xf32>, vector<32x1xf32>, vector<32x1xf32>, vector<32x1xf32>, vector<32x1xf32> -> vector<32x6xf32>
    %824 = tpu.concatenate %759, %775, %791, %807, %823, %759 in 1 : vector<32x6xf32>, vector<32x6xf32>, vector<32x6xf32>, vector<32x6xf32>, vector<32x6xf32>, vector<32x6xf32> -> vector<32x36xf32>
    %cst_172 = arith.constant 1.000000e+00 : f32
    %825 = vector.broadcast %cst_172 : f32 to vector<1x4xf32>
    %cst_173 = arith.constant 0.000000e+00 : f32
    %826 = vector.broadcast %cst_173 : f32 to vector<1x2xf32>
    %827 = tpu.concatenate %825, %826 in 1 : vector<1x4xf32>, vector<1x2xf32> -> vector<1x6xf32>
    %828 = tpu.concatenate %827, %827, %827, %827 in 1 : vector<1x6xf32>, vector<1x6xf32>, vector<1x6xf32>, vector<1x6xf32> -> vector<1x24xf32>
    %829 = vector.extract_strided_slice %828 {offsets = [0, 0], sizes = [1, 22], strides = [1, 1]} : vector<1x24xf32> to vector<1x22xf32>
    %830 = vector.extract_strided_slice %824 {offsets = [0, 0], sizes = [32, 22], strides = [1, 1]} : vector<32x36xf32> to vector<32x22xf32>
    %c0_174 = arith.constant 0 : index
    %c0_175 = arith.constant 0 : index
    %c0_176 = arith.constant 0 : index
    %831 = vector.load %arg10[%c0_174, %c0_175, %c0_176] : memref<9x32x32xf32, #tpu.memory_space<vmem>>, vector<1x32x32xf32>
    %832 = vector.shape_cast %831 : vector<1x32x32xf32> to vector<32x32xf32>
    %cst_177 = arith.constant dense<0.000000e+00> : vector<32x22xf32>
    %833 = tpu.matmul %832, %830, %cst_177 {dimension_numbers = #tpu.dot_dimension_numbers<[1], [0], [0], [1], [0, 0, 1, 1], [], []>} : vector<32x32xf32>, vector<32x22xf32>, vector<32x22xf32> -> vector<32x22xf32>
    %834 = vector.extract_strided_slice %824 {offsets = [0, 1], sizes = [32, 22], strides = [1, 1]} : vector<32x36xf32> to vector<32x22xf32>
    %c1_178 = arith.constant 1 : index
    %c0_179 = arith.constant 0 : index
    %c0_180 = arith.constant 0 : index
    %835 = vector.load %arg10[%c1_178, %c0_179, %c0_180] : memref<9x32x32xf32, #tpu.memory_space<vmem>>, vector<1x32x32xf32>
    %836 = vector.shape_cast %835 : vector<1x32x32xf32> to vector<32x32xf32>
    %cst_181 = arith.constant dense<0.000000e+00> : vector<32x22xf32>
    %837 = tpu.matmul %836, %834, %cst_181 {dimension_numbers = #tpu.dot_dimension_numbers<[1], [0], [0], [1], [0, 0, 1, 1], [], []>} : vector<32x32xf32>, vector<32x22xf32>, vector<32x22xf32> -> vector<32x22xf32>
    %838 = arith.addf %833, %837 : vector<32x22xf32>
    %839 = vector.extract_strided_slice %824 {offsets = [0, 2], sizes = [32, 22], strides = [1, 1]} : vector<32x36xf32> to vector<32x22xf32>
    %c2_182 = arith.constant 2 : index
    %c0_183 = arith.constant 0 : index
    %c0_184 = arith.constant 0 : index
    %840 = vector.load %arg10[%c2_182, %c0_183, %c0_184] : memref<9x32x32xf32, #tpu.memory_space<vmem>>, vector<1x32x32xf32>
    %841 = vector.shape_cast %840 : vector<1x32x32xf32> to vector<32x32xf32>
    %cst_185 = arith.constant dense<0.000000e+00> : vector<32x22xf32>
    %842 = tpu.matmul %841, %839, %cst_185 {dimension_numbers = #tpu.dot_dimension_numbers<[1], [0], [0], [1], [0, 0, 1, 1], [], []>} : vector<32x32xf32>, vector<32x22xf32>, vector<32x22xf32> -> vector<32x22xf32>
    %843 = arith.addf %838, %842 : vector<32x22xf32>
    %844 = vector.extract_strided_slice %824 {offsets = [0, 6], sizes = [32, 22], strides = [1, 1]} : vector<32x36xf32> to vector<32x22xf32>
    %c3_186 = arith.constant 3 : index
    %c0_187 = arith.constant 0 : index
    %c0_188 = arith.constant 0 : index
    %845 = vector.load %arg10[%c3_186, %c0_187, %c0_188] : memref<9x32x32xf32, #tpu.memory_space<vmem>>, vector<1x32x32xf32>
    %846 = vector.shape_cast %845 : vector<1x32x32xf32> to vector<32x32xf32>
    %cst_189 = arith.constant dense<0.000000e+00> : vector<32x22xf32>
    %847 = tpu.matmul %846, %844, %cst_189 {dimension_numbers = #tpu.dot_dimension_numbers<[1], [0], [0], [1], [0, 0, 1, 1], [], []>} : vector<32x32xf32>, vector<32x22xf32>, vector<32x22xf32> -> vector<32x22xf32>
    %848 = arith.addf %843, %847 : vector<32x22xf32>
    %849 = vector.extract_strided_slice %824 {offsets = [0, 7], sizes = [32, 22], strides = [1, 1]} : vector<32x36xf32> to vector<32x22xf32>
    %c4_190 = arith.constant 4 : index
    %c0_191 = arith.constant 0 : index
    %c0_192 = arith.constant 0 : index
    %850 = vector.load %arg10[%c4_190, %c0_191, %c0_192] : memref<9x32x32xf32, #tpu.memory_space<vmem>>, vector<1x32x32xf32>
    %851 = vector.shape_cast %850 : vector<1x32x32xf32> to vector<32x32xf32>
    %cst_193 = arith.constant dense<0.000000e+00> : vector<32x22xf32>
    %852 = tpu.matmul %851, %849, %cst_193 {dimension_numbers = #tpu.dot_dimension_numbers<[1], [0], [0], [1], [0, 0, 1, 1], [], []>} : vector<32x32xf32>, vector<32x22xf32>, vector<32x22xf32> -> vector<32x22xf32>
    %853 = arith.addf %848, %852 : vector<32x22xf32>
    %854 = vector.extract_strided_slice %824 {offsets = [0, 8], sizes = [32, 22], strides = [1, 1]} : vector<32x36xf32> to vector<32x22xf32>
    %c5_194 = arith.constant 5 : index
    %c0_195 = arith.constant 0 : index
    %c0_196 = arith.constant 0 : index
    %855 = vector.load %arg10[%c5_194, %c0_195, %c0_196] : memref<9x32x32xf32, #tpu.memory_space<vmem>>, vector<1x32x32xf32>
    %856 = vector.shape_cast %855 : vector<1x32x32xf32> to vector<32x32xf32>
    %cst_197 = arith.constant dense<0.000000e+00> : vector<32x22xf32>
    %857 = tpu.matmul %856, %854, %cst_197 {dimension_numbers = #tpu.dot_dimension_numbers<[1], [0], [0], [1], [0, 0, 1, 1], [], []>} : vector<32x32xf32>, vector<32x22xf32>, vector<32x22xf32> -> vector<32x22xf32>
    %858 = arith.addf %853, %857 : vector<32x22xf32>
    %859 = vector.extract_strided_slice %824 {offsets = [0, 12], sizes = [32, 22], strides = [1, 1]} : vector<32x36xf32> to vector<32x22xf32>
    %c6_198 = arith.constant 6 : index
    %c0_199 = arith.constant 0 : index
    %c0_200 = arith.constant 0 : index
    %860 = vector.load %arg10[%c6_198, %c0_199, %c0_200] : memref<9x32x32xf32, #tpu.memory_space<vmem>>, vector<1x32x32xf32>
    %861 = vector.shape_cast %860 : vector<1x32x32xf32> to vector<32x32xf32>
    %cst_201 = arith.constant dense<0.000000e+00> : vector<32x22xf32>
    %862 = tpu.matmul %861, %859, %cst_201 {dimension_numbers = #tpu.dot_dimension_numbers<[1], [0], [0], [1], [0, 0, 1, 1], [], []>} : vector<32x32xf32>, vector<32x22xf32>, vector<32x22xf32> -> vector<32x22xf32>
    %863 = arith.addf %858, %862 : vector<32x22xf32>
    %864 = vector.extract_strided_slice %824 {offsets = [0, 13], sizes = [32, 22], strides = [1, 1]} : vector<32x36xf32> to vector<32x22xf32>
    %c7_202 = arith.constant 7 : index
    %c0_203 = arith.constant 0 : index
    %c0_204 = arith.constant 0 : index
    %865 = vector.load %arg10[%c7_202, %c0_203, %c0_204] : memref<9x32x32xf32, #tpu.memory_space<vmem>>, vector<1x32x32xf32>
    %866 = vector.shape_cast %865 : vector<1x32x32xf32> to vector<32x32xf32>
    %cst_205 = arith.constant dense<0.000000e+00> : vector<32x22xf32>
    %867 = tpu.matmul %866, %864, %cst_205 {dimension_numbers = #tpu.dot_dimension_numbers<[1], [0], [0], [1], [0, 0, 1, 1], [], []>} : vector<32x32xf32>, vector<32x22xf32>, vector<32x22xf32> -> vector<32x22xf32>
    %868 = arith.addf %863, %867 : vector<32x22xf32>
    %869 = vector.extract_strided_slice %824 {offsets = [0, 14], sizes = [32, 22], strides = [1, 1]} : vector<32x36xf32> to vector<32x22xf32>
    %c8_206 = arith.constant 8 : index
    %c0_207 = arith.constant 0 : index
    %c0_208 = arith.constant 0 : index
    %870 = vector.load %arg10[%c8_206, %c0_207, %c0_208] : memref<9x32x32xf32, #tpu.memory_space<vmem>>, vector<1x32x32xf32>
    %871 = vector.shape_cast %870 : vector<1x32x32xf32> to vector<32x32xf32>
    %cst_209 = arith.constant dense<0.000000e+00> : vector<32x22xf32>
    %872 = tpu.matmul %871, %869, %cst_209 {dimension_numbers = #tpu.dot_dimension_numbers<[1], [0], [0], [1], [0, 0, 1, 1], [], []>} : vector<32x32xf32>, vector<32x22xf32>, vector<32x22xf32> -> vector<32x22xf32>
    %873 = arith.addf %868, %872 : vector<32x22xf32>
    %c0_210 = arith.constant 0 : index
    %c0_211 = arith.constant 0 : index
    %874 = vector.load %arg11[%c0_210, %c0_211] : memref<32x1xf32, #tpu.memory_space<vmem>>, vector<32x1xf32>
    %875 = vector.broadcast %874 : vector<32x1xf32> to vector<32x22xf32>
    %876 = arith.addf %873, %875 : vector<32x22xf32>
    %cst_212 = arith.constant 0.000000e+00 : f32
    %877 = vector.broadcast %cst_212 : f32 to vector<32x22xf32>
    %878 = arith.maximumf %876, %877 : vector<32x22xf32>
    %879 = vector.broadcast %829 : vector<1x22xf32> to vector<32x22xf32>
    %880 = arith.mulf %878, %879 : vector<32x22xf32>
    %cst_213 = arith.constant 0.000000e+00 : f32
    %881 = vector.broadcast %cst_213 : f32 to vector<32x7xf32>
    %cst_214 = arith.constant 0.000000e+00 : f32
    %882 = vector.broadcast %cst_214 : f32 to vector<32x7xf32>
    %883 = tpu.concatenate %881, %880, %882 in 1 : vector<32x7xf32>, vector<32x22xf32>, vector<32x7xf32> -> vector<32x36xf32>
    %884 = vector.extract_strided_slice %883 {offsets = [0, 0], sizes = [32, 22], strides = [1, 1]} : vector<32x36xf32> to vector<32x22xf32>
    %c0_215 = arith.constant 0 : index
    %c0_216 = arith.constant 0 : index
    %c0_217 = arith.constant 0 : index
    %885 = vector.load %arg12[%c0_215, %c0_216, %c0_217] : memref<9x32x32xf32, #tpu.memory_space<vmem>>, vector<1x32x32xf32>
    %886 = vector.shape_cast %885 : vector<1x32x32xf32> to vector<32x32xf32>
    %cst_218 = arith.constant dense<0.000000e+00> : vector<32x22xf32>
    %887 = tpu.matmul %886, %884, %cst_218 {dimension_numbers = #tpu.dot_dimension_numbers<[1], [0], [0], [1], [0, 0, 1, 1], [], []>} : vector<32x32xf32>, vector<32x22xf32>, vector<32x22xf32> -> vector<32x22xf32>
    %888 = vector.extract_strided_slice %883 {offsets = [0, 1], sizes = [32, 22], strides = [1, 1]} : vector<32x36xf32> to vector<32x22xf32>
    %c1_219 = arith.constant 1 : index
    %c0_220 = arith.constant 0 : index
    %c0_221 = arith.constant 0 : index
    %889 = vector.load %arg12[%c1_219, %c0_220, %c0_221] : memref<9x32x32xf32, #tpu.memory_space<vmem>>, vector<1x32x32xf32>
    %890 = vector.shape_cast %889 : vector<1x32x32xf32> to vector<32x32xf32>
    %cst_222 = arith.constant dense<0.000000e+00> : vector<32x22xf32>
    %891 = tpu.matmul %890, %888, %cst_222 {dimension_numbers = #tpu.dot_dimension_numbers<[1], [0], [0], [1], [0, 0, 1, 1], [], []>} : vector<32x32xf32>, vector<32x22xf32>, vector<32x22xf32> -> vector<32x22xf32>
    %892 = arith.addf %887, %891 : vector<32x22xf32>
    %893 = vector.extract_strided_slice %883 {offsets = [0, 2], sizes = [32, 22], strides = [1, 1]} : vector<32x36xf32> to vector<32x22xf32>
    %c2_223 = arith.constant 2 : index
    %c0_224 = arith.constant 0 : index
    %c0_225 = arith.constant 0 : index
    %894 = vector.load %arg12[%c2_223, %c0_224, %c0_225] : memref<9x32x32xf32, #tpu.memory_space<vmem>>, vector<1x32x32xf32>
    %895 = vector.shape_cast %894 : vector<1x32x32xf32> to vector<32x32xf32>
    %cst_226 = arith.constant dense<0.000000e+00> : vector<32x22xf32>
    %896 = tpu.matmul %895, %893, %cst_226 {dimension_numbers = #tpu.dot_dimension_numbers<[1], [0], [0], [1], [0, 0, 1, 1], [], []>} : vector<32x32xf32>, vector<32x22xf32>, vector<32x22xf32> -> vector<32x22xf32>
    %897 = arith.addf %892, %896 : vector<32x22xf32>
    %898 = vector.extract_strided_slice %883 {offsets = [0, 6], sizes = [32, 22], strides = [1, 1]} : vector<32x36xf32> to vector<32x22xf32>
    %c3_227 = arith.constant 3 : index
    %c0_228 = arith.constant 0 : index
    %c0_229 = arith.constant 0 : index
    %899 = vector.load %arg12[%c3_227, %c0_228, %c0_229] : memref<9x32x32xf32, #tpu.memory_space<vmem>>, vector<1x32x32xf32>
    %900 = vector.shape_cast %899 : vector<1x32x32xf32> to vector<32x32xf32>
    %cst_230 = arith.constant dense<0.000000e+00> : vector<32x22xf32>
    %901 = tpu.matmul %900, %898, %cst_230 {dimension_numbers = #tpu.dot_dimension_numbers<[1], [0], [0], [1], [0, 0, 1, 1], [], []>} : vector<32x32xf32>, vector<32x22xf32>, vector<32x22xf32> -> vector<32x22xf32>
    %902 = arith.addf %897, %901 : vector<32x22xf32>
    %903 = vector.extract_strided_slice %883 {offsets = [0, 7], sizes = [32, 22], strides = [1, 1]} : vector<32x36xf32> to vector<32x22xf32>
    %c4_231 = arith.constant 4 : index
    %c0_232 = arith.constant 0 : index
    %c0_233 = arith.constant 0 : index
    %904 = vector.load %arg12[%c4_231, %c0_232, %c0_233] : memref<9x32x32xf32, #tpu.memory_space<vmem>>, vector<1x32x32xf32>
    %905 = vector.shape_cast %904 : vector<1x32x32xf32> to vector<32x32xf32>
    %cst_234 = arith.constant dense<0.000000e+00> : vector<32x22xf32>
    %906 = tpu.matmul %905, %903, %cst_234 {dimension_numbers = #tpu.dot_dimension_numbers<[1], [0], [0], [1], [0, 0, 1, 1], [], []>} : vector<32x32xf32>, vector<32x22xf32>, vector<32x22xf32> -> vector<32x22xf32>
    %907 = arith.addf %902, %906 : vector<32x22xf32>
    %908 = vector.extract_strided_slice %883 {offsets = [0, 8], sizes = [32, 22], strides = [1, 1]} : vector<32x36xf32> to vector<32x22xf32>
    %c5_235 = arith.constant 5 : index
    %c0_236 = arith.constant 0 : index
    %c0_237 = arith.constant 0 : index
    %909 = vector.load %arg12[%c5_235, %c0_236, %c0_237] : memref<9x32x32xf32, #tpu.memory_space<vmem>>, vector<1x32x32xf32>
    %910 = vector.shape_cast %909 : vector<1x32x32xf32> to vector<32x32xf32>
    %cst_238 = arith.constant dense<0.000000e+00> : vector<32x22xf32>
    %911 = tpu.matmul %910, %908, %cst_238 {dimension_numbers = #tpu.dot_dimension_numbers<[1], [0], [0], [1], [0, 0, 1, 1], [], []>} : vector<32x32xf32>, vector<32x22xf32>, vector<32x22xf32> -> vector<32x22xf32>
    %912 = arith.addf %907, %911 : vector<32x22xf32>
    %913 = vector.extract_strided_slice %883 {offsets = [0, 12], sizes = [32, 22], strides = [1, 1]} : vector<32x36xf32> to vector<32x22xf32>
    %c6_239 = arith.constant 6 : index
    %c0_240 = arith.constant 0 : index
    %c0_241 = arith.constant 0 : index
    %914 = vector.load %arg12[%c6_239, %c0_240, %c0_241] : memref<9x32x32xf32, #tpu.memory_space<vmem>>, vector<1x32x32xf32>
    %915 = vector.shape_cast %914 : vector<1x32x32xf32> to vector<32x32xf32>
    %cst_242 = arith.constant dense<0.000000e+00> : vector<32x22xf32>
    %916 = tpu.matmul %915, %913, %cst_242 {dimension_numbers = #tpu.dot_dimension_numbers<[1], [0], [0], [1], [0, 0, 1, 1], [], []>} : vector<32x32xf32>, vector<32x22xf32>, vector<32x22xf32> -> vector<32x22xf32>
    %917 = arith.addf %912, %916 : vector<32x22xf32>
    %918 = vector.extract_strided_slice %883 {offsets = [0, 13], sizes = [32, 22], strides = [1, 1]} : vector<32x36xf32> to vector<32x22xf32>
    %c7_243 = arith.constant 7 : index
    %c0_244 = arith.constant 0 : index
    %c0_245 = arith.constant 0 : index
    %919 = vector.load %arg12[%c7_243, %c0_244, %c0_245] : memref<9x32x32xf32, #tpu.memory_space<vmem>>, vector<1x32x32xf32>
    %920 = vector.shape_cast %919 : vector<1x32x32xf32> to vector<32x32xf32>
    %cst_246 = arith.constant dense<0.000000e+00> : vector<32x22xf32>
    %921 = tpu.matmul %920, %918, %cst_246 {dimension_numbers = #tpu.dot_dimension_numbers<[1], [0], [0], [1], [0, 0, 1, 1], [], []>} : vector<32x32xf32>, vector<32x22xf32>, vector<32x22xf32> -> vector<32x22xf32>
    %922 = arith.addf %917, %921 : vector<32x22xf32>
    %923 = vector.extract_strided_slice %883 {offsets = [0, 14], sizes = [32, 22], strides = [1, 1]} : vector<32x36xf32> to vector<32x22xf32>
    %c8_247 = arith.constant 8 : index
    %c0_248 = arith.constant 0 : index
    %c0_249 = arith.constant 0 : index
    %924 = vector.load %arg12[%c8_247, %c0_248, %c0_249] : memref<9x32x32xf32, #tpu.memory_space<vmem>>, vector<1x32x32xf32>
    %925 = vector.shape_cast %924 : vector<1x32x32xf32> to vector<32x32xf32>
    %cst_250 = arith.constant dense<0.000000e+00> : vector<32x22xf32>
    %926 = tpu.matmul %925, %923, %cst_250 {dimension_numbers = #tpu.dot_dimension_numbers<[1], [0], [0], [1], [0, 0, 1, 1], [], []>} : vector<32x32xf32>, vector<32x22xf32>, vector<32x22xf32> -> vector<32x22xf32>
    %927 = arith.addf %922, %926 : vector<32x22xf32>
    %c0_251 = arith.constant 0 : index
    %c0_252 = arith.constant 0 : index
    %928 = vector.load %arg13[%c0_251, %c0_252] : memref<32x1xf32, #tpu.memory_space<vmem>>, vector<32x1xf32>
    %929 = vector.broadcast %928 : vector<32x1xf32> to vector<32x22xf32>
    %930 = arith.addf %927, %929 : vector<32x22xf32>
    %931 = arith.addf %880, %930 : vector<32x22xf32>
    %cst_253 = arith.constant 0.000000e+00 : f32
    %932 = vector.broadcast %cst_253 : f32 to vector<32x22xf32>
    %933 = arith.maximumf %931, %932 : vector<32x22xf32>
    %934 = vector.extract_strided_slice %933 {offsets = [0, 0], sizes = [32, 4], strides = [1, 1]} : vector<32x22xf32> to vector<32x4xf32>
    %935 = vector.extract_strided_slice %933 {offsets = [0, 6], sizes = [32, 4], strides = [1, 1]} : vector<32x22xf32> to vector<32x4xf32>
    %936 = vector.extract_strided_slice %933 {offsets = [0, 12], sizes = [32, 4], strides = [1, 1]} : vector<32x22xf32> to vector<32x4xf32>
    %937 = vector.extract_strided_slice %933 {offsets = [0, 18], sizes = [32, 4], strides = [1, 1]} : vector<32x22xf32> to vector<32x4xf32>
    %938 = tpu.concatenate %934, %935, %936, %937 in 1 : vector<32x4xf32>, vector<32x4xf32>, vector<32x4xf32>, vector<32x4xf32> -> vector<32x16xf32>
    %939 = vector.extract_strided_slice %938 {offsets = [0, 0], sizes = [1, 16], strides = [1, 1]} : vector<32x16xf32> to vector<1x16xf32>
    %940 = vector.extract_strided_slice %938 {offsets = [1, 0], sizes = [1, 16], strides = [1, 1]} : vector<32x16xf32> to vector<1x16xf32>
    %941 = vector.extract_strided_slice %938 {offsets = [2, 0], sizes = [1, 16], strides = [1, 1]} : vector<32x16xf32> to vector<1x16xf32>
    %942 = vector.extract_strided_slice %938 {offsets = [3, 0], sizes = [1, 16], strides = [1, 1]} : vector<32x16xf32> to vector<1x16xf32>
    %943 = vector.extract_strided_slice %938 {offsets = [4, 0], sizes = [1, 16], strides = [1, 1]} : vector<32x16xf32> to vector<1x16xf32>
    %944 = vector.extract_strided_slice %938 {offsets = [5, 0], sizes = [1, 16], strides = [1, 1]} : vector<32x16xf32> to vector<1x16xf32>
    %945 = vector.extract_strided_slice %938 {offsets = [6, 0], sizes = [1, 16], strides = [1, 1]} : vector<32x16xf32> to vector<1x16xf32>
    %946 = vector.extract_strided_slice %938 {offsets = [7, 0], sizes = [1, 16], strides = [1, 1]} : vector<32x16xf32> to vector<1x16xf32>
    %947 = vector.extract_strided_slice %938 {offsets = [8, 0], sizes = [1, 16], strides = [1, 1]} : vector<32x16xf32> to vector<1x16xf32>
    %948 = vector.extract_strided_slice %938 {offsets = [9, 0], sizes = [1, 16], strides = [1, 1]} : vector<32x16xf32> to vector<1x16xf32>
    %949 = vector.extract_strided_slice %938 {offsets = [10, 0], sizes = [1, 16], strides = [1, 1]} : vector<32x16xf32> to vector<1x16xf32>
    %950 = vector.extract_strided_slice %938 {offsets = [11, 0], sizes = [1, 16], strides = [1, 1]} : vector<32x16xf32> to vector<1x16xf32>
    %951 = vector.extract_strided_slice %938 {offsets = [12, 0], sizes = [1, 16], strides = [1, 1]} : vector<32x16xf32> to vector<1x16xf32>
    %952 = vector.extract_strided_slice %938 {offsets = [13, 0], sizes = [1, 16], strides = [1, 1]} : vector<32x16xf32> to vector<1x16xf32>
    %953 = vector.extract_strided_slice %938 {offsets = [14, 0], sizes = [1, 16], strides = [1, 1]} : vector<32x16xf32> to vector<1x16xf32>
    %954 = vector.extract_strided_slice %938 {offsets = [15, 0], sizes = [1, 16], strides = [1, 1]} : vector<32x16xf32> to vector<1x16xf32>
    %955 = vector.extract_strided_slice %938 {offsets = [16, 0], sizes = [1, 16], strides = [1, 1]} : vector<32x16xf32> to vector<1x16xf32>
    %956 = vector.extract_strided_slice %938 {offsets = [17, 0], sizes = [1, 16], strides = [1, 1]} : vector<32x16xf32> to vector<1x16xf32>
    %957 = vector.extract_strided_slice %938 {offsets = [18, 0], sizes = [1, 16], strides = [1, 1]} : vector<32x16xf32> to vector<1x16xf32>
    %958 = vector.extract_strided_slice %938 {offsets = [19, 0], sizes = [1, 16], strides = [1, 1]} : vector<32x16xf32> to vector<1x16xf32>
    %959 = vector.extract_strided_slice %938 {offsets = [20, 0], sizes = [1, 16], strides = [1, 1]} : vector<32x16xf32> to vector<1x16xf32>
    %960 = vector.extract_strided_slice %938 {offsets = [21, 0], sizes = [1, 16], strides = [1, 1]} : vector<32x16xf32> to vector<1x16xf32>
    %961 = vector.extract_strided_slice %938 {offsets = [22, 0], sizes = [1, 16], strides = [1, 1]} : vector<32x16xf32> to vector<1x16xf32>
    %962 = vector.extract_strided_slice %938 {offsets = [23, 0], sizes = [1, 16], strides = [1, 1]} : vector<32x16xf32> to vector<1x16xf32>
    %963 = vector.extract_strided_slice %938 {offsets = [24, 0], sizes = [1, 16], strides = [1, 1]} : vector<32x16xf32> to vector<1x16xf32>
    %964 = vector.extract_strided_slice %938 {offsets = [25, 0], sizes = [1, 16], strides = [1, 1]} : vector<32x16xf32> to vector<1x16xf32>
    %965 = vector.extract_strided_slice %938 {offsets = [26, 0], sizes = [1, 16], strides = [1, 1]} : vector<32x16xf32> to vector<1x16xf32>
    %966 = vector.extract_strided_slice %938 {offsets = [27, 0], sizes = [1, 16], strides = [1, 1]} : vector<32x16xf32> to vector<1x16xf32>
    %967 = vector.extract_strided_slice %938 {offsets = [28, 0], sizes = [1, 16], strides = [1, 1]} : vector<32x16xf32> to vector<1x16xf32>
    %968 = vector.extract_strided_slice %938 {offsets = [29, 0], sizes = [1, 16], strides = [1, 1]} : vector<32x16xf32> to vector<1x16xf32>
    %969 = vector.extract_strided_slice %938 {offsets = [30, 0], sizes = [1, 16], strides = [1, 1]} : vector<32x16xf32> to vector<1x16xf32>
    %970 = vector.extract_strided_slice %938 {offsets = [31, 0], sizes = [1, 16], strides = [1, 1]} : vector<32x16xf32> to vector<1x16xf32>
    %971 = tpu.concatenate %939, %940, %941, %942, %943, %944, %945, %946, %947, %948, %949, %950, %951, %952, %953, %954 in 1 : vector<1x16xf32>, vector<1x16xf32>, vector<1x16xf32>, vector<1x16xf32>, vector<1x16xf32>, vector<1x16xf32>, vector<1x16xf32>, vector<1x16xf32>, vector<1x16xf32>, vector<1x16xf32>, vector<1x16xf32>, vector<1x16xf32>, vector<1x16xf32>, vector<1x16xf32>, vector<1x16xf32>, vector<1x16xf32> -> vector<1x256xf32>
    %972 = tpu.concatenate %955, %956, %957, %958, %959, %960, %961, %962, %963, %964, %965, %966, %967, %968, %969, %970 in 1 : vector<1x16xf32>, vector<1x16xf32>, vector<1x16xf32>, vector<1x16xf32>, vector<1x16xf32>, vector<1x16xf32>, vector<1x16xf32>, vector<1x16xf32>, vector<1x16xf32>, vector<1x16xf32>, vector<1x16xf32>, vector<1x16xf32>, vector<1x16xf32>, vector<1x16xf32>, vector<1x16xf32>, vector<1x16xf32> -> vector<1x256xf32>
    %973 = tpu.concatenate %971, %972 in 1 : vector<1x256xf32>, vector<1x256xf32> -> vector<1x512xf32>
    %c0_254 = arith.constant 0 : index
    %c0_255 = arith.constant 0 : index
    %974 = vector.load %arg14[%c0_254, %c0_255] : memref<512x128xf32, #tpu.memory_space<vmem>>, vector<512x128xf32>
    %cst_256 = arith.constant dense<0.000000e+00> : vector<1x128xf32>
    %975 = tpu.matmul %973, %974, %cst_256 {dimension_numbers = #tpu.dot_dimension_numbers<[1], [0], [0], [1], [0, 0, 1, 1], [], []>} : vector<1x512xf32>, vector<512x128xf32>, vector<1x128xf32> -> vector<1x128xf32>
    %c0_257 = arith.constant 0 : index
    %c0_258 = arith.constant 0 : index
    %976 = vector.load %arg15[%c0_257, %c0_258] : memref<1x128xf32, #tpu.memory_space<vmem>>, vector<1x128xf32>
    %977 = arith.addf %975, %976 : vector<1x128xf32>
    %c0_259 = arith.constant 0 : index
    %c0_260 = arith.constant 0 : index
    %c0_261 = arith.constant 0 : index
    %978 = vector.load %arg16[%c0_259, %c0_260, %c0_261] : memref<1x1x128xf32, #tpu.memory_space<vmem>>, vector<1x1x128xf32>
    %979 = vector.shape_cast %978 : vector<1x1x128xf32> to vector<1x128xf32>
    %980 = vector.shape_cast %977 : vector<1x128xf32> to vector<1x1x128xf32>
    tpu.vector_store %arg16[%c0_259, %c0_260, %c0_261], %980 {strides = array<i32>} : memref<1x1x128xf32, #tpu.memory_space<vmem>>, vector<1x1x128xf32>,
    return
  }
  func.func @transform_0(%arg0: i32) -> (i32, i32, i32) {
    %c0_i32 = arith.constant 0 : i32
    %c0_i32_0 = arith.constant 0 : i32
    %c0_i32_1 = arith.constant 0 : i32
    return %arg0, %c0_i32, %c0_i32_0 : i32, i32, i32
  }
  func.func @transform_1(%arg0: i32) -> (i32, i32) {
    %c0_i32 = arith.constant 0 : i32
    %c0_i32_0 = arith.constant 0 : i32
    %c0_i32_1 = arith.constant 0 : i32
    return %c0_i32, %c0_i32_0 : i32, i32
  }
  func.func @transform_2(%arg0: i32) -> (i32, i32) {
    %c0_i32 = arith.constant 0 : i32
    %c0_i32_0 = arith.constant 0 : i32
    %c0_i32_1 = arith.constant 0 : i32
    return %c0_i32, %c0_i32_0 : i32, i32
  }
  func.func @transform_3(%arg0: i32) -> (i32, i32, i32) {
    %c0_i32 = arith.constant 0 : i32
    %c0_i32_0 = arith.constant 0 : i32
    %c0_i32_1 = arith.constant 0 : i32
    %c0_i32_2 = arith.constant 0 : i32
    return %c0_i32, %c0_i32_0, %c0_i32_1 : i32, i32, i32
  }
  func.func @transform_4(%arg0: i32) -> (i32, i32) {
    %c0_i32 = arith.constant 0 : i32
    %c0_i32_0 = arith.constant 0 : i32
    %c0_i32_1 = arith.constant 0 : i32
    return %c0_i32, %c0_i32_0 : i32, i32
  }
  func.func @transform_5(%arg0: i32) -> (i32, i32, i32) {
    %c0_i32 = arith.constant 0 : i32
    %c0_i32_0 = arith.constant 0 : i32
    %c0_i32_1 = arith.constant 0 : i32
    %c0_i32_2 = arith.constant 0 : i32
    return %c0_i32, %c0_i32_0, %c0_i32_1 : i32, i32, i32
  }
  func.func @transform_6(%arg0: i32) -> (i32, i32) {
    %c0_i32 = arith.constant 0 : i32
    %c0_i32_0 = arith.constant 0 : i32
    %c0_i32_1 = arith.constant 0 : i32
    return %c0_i32, %c0_i32_0 : i32, i32
  }
  func.func @transform_7(%arg0: i32) -> (i32, i32, i32) {
    %c0_i32 = arith.constant 0 : i32
    %c0_i32_0 = arith.constant 0 : i32
    %c0_i32_1 = arith.constant 0 : i32
    %c0_i32_2 = arith.constant 0 : i32
    return %c0_i32, %c0_i32_0, %c0_i32_1 : i32, i32, i32
  }
  func.func @transform_8(%arg0: i32) -> (i32, i32) {
    %c0_i32 = arith.constant 0 : i32
    %c0_i32_0 = arith.constant 0 : i32
    %c0_i32_1 = arith.constant 0 : i32
    return %c0_i32, %c0_i32_0 : i32, i32
  }
  func.func @transform_9(%arg0: i32) -> (i32, i32, i32) {
    %c0_i32 = arith.constant 0 : i32
    %c0_i32_0 = arith.constant 0 : i32
    %c0_i32_1 = arith.constant 0 : i32
    %c0_i32_2 = arith.constant 0 : i32
    return %c0_i32, %c0_i32_0, %c0_i32_1 : i32, i32, i32
  }
  func.func @transform_10(%arg0: i32) -> (i32, i32) {
    %c0_i32 = arith.constant 0 : i32
    %c0_i32_0 = arith.constant 0 : i32
    %c0_i32_1 = arith.constant 0 : i32
    return %c0_i32, %c0_i32_0 : i32, i32
  }
  func.func @transform_11(%arg0: i32) -> (i32, i32, i32) {
    %c0_i32 = arith.constant 0 : i32
    %c0_i32_0 = arith.constant 0 : i32
    %c0_i32_1 = arith.constant 0 : i32
    %c0_i32_2 = arith.constant 0 : i32
    return %c0_i32, %c0_i32_0, %c0_i32_1 : i32, i32, i32
  }
  func.func @transform_12(%arg0: i32) -> (i32, i32) {
    %c0_i32 = arith.constant 0 : i32
    %c0_i32_0 = arith.constant 0 : i32
    %c0_i32_1 = arith.constant 0 : i32
    return %c0_i32, %c0_i32_0 : i32, i32
  }
  func.func @transform_13(%arg0: i32) -> (i32, i32) {
    %c0_i32 = arith.constant 0 : i32
    %c0_i32_0 = arith.constant 0 : i32
    %c0_i32_1 = arith.constant 0 : i32
    return %c0_i32, %c0_i32_0 : i32, i32
  }
  func.func @transform_14(%arg0: i32) -> (i32, i32) {
    %c0_i32 = arith.constant 0 : i32
    %c0_i32_0 = arith.constant 0 : i32
    %c0_i32_1 = arith.constant 0 : i32
    return %c0_i32, %c0_i32_0 : i32, i32
  }
  func.func @transform_15(%arg0: i32) -> (i32, i32, i32) {
    %c0_i32 = arith.constant 0 : i32
    %c0_i32_0 = arith.constant 0 : i32
    %c0_i32_1 = arith.constant 0 : i32
    return %arg0, %c0_i32, %c0_i32_0 : i32, i32, i32
  }
}

</mosaic_0001>

<llo_original>
// kernel: residual_net_forward.1
$region0: #{residual_net_forward.1}
  #allocation0 [shape = 'u32[]', space=smem, size = 0x4, offset = 0x4, fixed_abs, tag = 'smem constant byte address 0x4 - core index']
  #allocation1 [shape = 'u32[72,128]{1,0:T(1,128)}', space=vmem, size = 0x9000, scoped, tag = 'internal scratch']
  %s0 = inlined_call_operand.vmem [shape: f32[2,1,784], index: 0, kind: input, shape index: {}]
  %s1 = inlined_call_operand.vmem [shape: f32[16,25], index: 1, kind: input, shape index: {}]
  %s2 = inlined_call_operand.vmem [shape: f32[16,1], index: 2, kind: input, shape index: {}]
  %s3 = inlined_call_operand.vmem [shape: f32[9,16,16], index: 3, kind: input, shape index: {}]
  %s4 = inlined_call_operand.vmem [shape: f32[16,1], index: 4, kind: input, shape index: {}]
  %s5 = inlined_call_operand.vmem [shape: f32[9,16,16], index: 5, kind: input, shape index: {}]
  %s6 = inlined_call_operand.vmem [shape: f32[16,1], index: 6, kind: input, shape index: {}]
  %s7 = inlined_call_operand.vmem [shape: f32[25,32,16], index: 7, kind: input, shape index: {}]
  %s8 = inlined_call_operand.vmem [shape: f32[32,1], index: 8, kind: input, shape index: {}]
  %s9 = inlined_call_operand.vmem [shape: f32[9,32,32], index: 9, kind: input, shape index: {}]
  %s10 = inlined_call_operand.vmem [shape: f32[32,1], index: 10, kind: input, shape index: {}]
  %s11 = inlined_call_operand.vmem [shape: f32[9,32,32], index: 11, kind: input, shape index: {}]
  %s12 = inlined_call_operand.vmem [shape: f32[32,1], index: 12, kind: input, shape index: {}]
  %s13 = inlined_call_operand.vmem [shape: f32[512,128], index: 13, kind: input, shape index: {}]
  %s14 = inlined_call_operand.vmem [shape: f32[1,128], index: 14, kind: input, shape index: {}]
  %s15 = inlined_call_operand.hbm [shape: f32[2,1,128], index: 15, kind: output, shape index: {}]
  %s16 = sld [smem:[#allocation0]]
  $region93: #{residual_net_forward.1} parent=0
    _
  %s18 = ssub.s32 1, %s16
  %s19 = scalar_select 0, %s18, %s16
  $region1: #{residual_net_forward.1} parent=0
    #allocation2 [shape = 'u8[1024]{0}', space=vmem, size = 0x400, scoped, tag = 'output window, operand 0']
    #allocation3 [shape = 's32[2]{0}', space=sflag, size = 0x8, scoped, tag = 'scoped memory for residual_net_forward.1']
    %20 = vsyncpa [#allocation3], 0
    %s21 = scalar_lea.sflag [#allocation3], 1
    %22 = vsyncpa %s21, 0
    loop: start=0, step=1, limit=4
    $region2: #{residual_net_forward.1} parent=1 // loop_pre_header
      _
    $region3: #{residual_net_forward.1} parent=1 // loop_header
      %s24 = sphi 0, %s28
      %p25 = scmp.ge.s32.totalorder %s24, 4
      %s34 = sphi 0, %s36
      %s37 = sphi 0, %s34
      %s38 = sphi 0, %s37
      %s54 = sphi 0, %s38
      %s58 = sphi 0, %s58
      %s60 = sphi 0, %s58
      %s61 = sphi 0, %s60
      %s75 = sphi 0, %s61
      %s79 = sphi 0, %s79
      %s81 = sphi 0, %s79
      %s82 = sphi 0, %s81
      %s96 = sphi 0, %s82
      %s100 = sphi 0, %s100
      %s102 = sphi 0, %s100
      %s103 = sphi 0, %s102
      %s117 = sphi 0, %s103
      %s121 = sphi 0, %s121
      %s123 = sphi 0, %s121
      %s124 = sphi 0, %s123
      %s138 = sphi 0, %s124
      %s142 = sphi 0, %s142
      %s144 = sphi 0, %s142
      %s145 = sphi 0, %s144
      %s159 = sphi 0, %s145
      %s163 = sphi 0, %s163
      %s165 = sphi 0, %s163
      %s166 = sphi 0, %s165
      %s180 = sphi 0, %s166
      %s184 = sphi 0, %s184
      %s186 = sphi 0, %s184
      %s187 = sphi 0, %s186
      %s201 = sphi 0, %s187
      %s205 = sphi 0, %s205
      %s207 = sphi 0, %s205
      %s208 = sphi 0, %s207
      %s222 = sphi 0, %s208
      %s226 = sphi 0, %s226
      %s228 = sphi 0, %s226
      %s229 = sphi 0, %s228
      %s243 = sphi 0, %s229
      %s247 = sphi 0, %s247
      %s249 = sphi 0, %s247
      %s250 = sphi 0, %s249
      %s264 = sphi 0, %s250
      %s268 = sphi 0, %s268
      %s270 = sphi 0, %s268
      %s271 = sphi 0, %s270
      %s285 = sphi 0, %s271
      %s289 = sphi 0, %s289
      %s291 = sphi 0, %s289
      %s292 = sphi 0, %s291
      %s306 = sphi 0, %s292
      %s310 = sphi 0, %s310
      %s312 = sphi 0, %s310
      %s313 = sphi 0, %s312
      %s327 = sphi 0, %s313
      %s331 = sphi 0, %s331
      %s333 = sphi 0, %s331
      %s334 = sphi 0, %s333
      %s348 = sphi 0, %s334
      %s354 = sphi 0, %s356
      %s357 = sphi 0, %s354
      %s358 = sphi 0, %s357
      %s374 = sphi 0, %s358
    $region4: #{residual_net_forward.1} parent=1 // loop_header_branch
      %27 = sbr.rel (%p25) target = $region8
    $region5: #{residual_net_forward.1} parent=1 // loop_body
      %s29 = ssub.s32 %s24, 1
      %s30 = ssub.s32 %s24, 2
      %s31 = sadd.s32 %s24, 1
      %s32 = ssub.s32 %s24, %s31
      %p33 = scmp.eq.s32.totalorder %s32, 0
      %s35 = sadd.s32 %s34, 1
      %s36 = scalar_select %p33, %s34, %s35
      %p39 = pneg %p33
      %p40 = scmp.eq.s32.totalorder %s24, 1
      %p41 = por %p39, %p40
      %p42 = scmp.ne.s32.totalorder %s34, %s37
      %p43 = scmp.eq.s32.totalorder %s24, 0
      %p44 = por %p42, %p43
      %p45 = scmp.ne.s32.totalorder %s34, %s37
      %p46 = scmp.eq.s32.totalorder %s29, 1
      %p47 = por %p45, %p46
      %p48 = scmp.ne.s32.totalorder %s37, %s38
      %p49 = scmp.eq.s32.totalorder %s29, 0
      %p50 = por %p48, %p49
      %p51 = scmp.ne.s32.totalorder %s37, %s38
      %p52 = scmp.eq.s32.totalorder %s30, 1
      %p53 = por %p51, %p52
      %p55 = scmp.ne.s32.totalorder %s38, %s54
      %p56 = scmp.eq.s32.totalorder %s30, 0
      %p57 = por %p55, %p56
      %s59 = sadd.s32 %s58, 1
      %p62 = scmp.eq.s32.totalorder %s24, 1
      %p63 = scmp.ne.s32.totalorder %s58, %s60
      %p64 = scmp.eq.s32.totalorder %s24, 0
      %p65 = por %p63, %p64
      %p66 = scmp.ne.s32.totalorder %s58, %s60
      %p67 = scmp.eq.s32.totalorder %s29, 1
      %p68 = por %p66, %p67
      %p69 = scmp.ne.s32.totalorder %s60, %s61
      %p70 = scmp.eq.s32.totalorder %s29, 0
      %p71 = por %p69, %p70
      %p72 = scmp.ne.s32.totalorder %s60, %s61
      %p73 = scmp.eq.s32.totalorder %s30, 1
      %p74 = por %p72, %p73
      %p76 = scmp.ne.s32.totalorder %s61, %s75
      %p77 = scmp.eq.s32.totalorder %s30, 0
      %p78 = por %p76, %p77
      %s80 = sadd.s32 %s79, 1
      %p83 = scmp.eq.s32.totalorder %s24, 1
      %p84 = scmp.ne.s32.totalorder %s79, %s81
      %p85 = scmp.eq.s32.totalorder %s24, 0
      %p86 = por %p84, %p85
      %p87 = scmp.ne.s32.totalorder %s79, %s81
      %p88 = scmp.eq.s32.totalorder %s29, 1
      %p89 = por %p87, %p88
      %p90 = scmp.ne.s32.totalorder %s81, %s82
      %p91 = scmp.eq.s32.totalorder %s29, 0
      %p92 = por %p90, %p91
      %p93 = scmp.ne.s32.totalorder %s81, %s82
      %p94 = scmp.eq.s32.totalorder %s30, 1
      %p95 = por %p93, %p94
      %p97 = scmp.ne.s32.totalorder %s82, %s96
      %p98 = scmp.eq.s32.totalorder %s30, 0
      %p99 = por %p97, %p98
      %s101 = sadd.s32 %s100, 1
      %p104 = scmp.eq.s32.totalorder %s24, 1
      %p105 = scmp.ne.s32.totalorder %s100, %s102
      %p106 = scmp.eq.s32.totalorder %s24, 0
      %p107 = por %p105, %p106
      %p108 = scmp.ne.s32.totalorder %s100, %s102
      %p109 = scmp.eq.s32.totalorder %s29, 1
      %p110 = por %p108, %p109
      %p111 = scmp.ne.s32.totalorder %s102, %s103
      %p112 = scmp.eq.s32.totalorder %s29, 0
      %p113 = por %p111, %p112
      %p114 = scmp.ne.s32.totalorder %s102, %s103
      %p115 = scmp.eq.s32.totalorder %s30, 1
      %p116 = por %p114, %p115
      %p118 = scmp.ne.s32.totalorder %s103, %s117
      %p119 = scmp.eq.s32.totalorder %s30, 0
      %p120 = por %p118, %p119
      %s122 = sadd.s32 %s121, 1
      %p125 = scmp.eq.s32.totalorder %s24, 1
      %p126 = scmp.ne.s32.totalorder %s121, %s123
      %p127 = scmp.eq.s32.totalorder %s24, 0
      %p128 = por %p126, %p127
      %p129 = scmp.ne.s32.totalorder %s121, %s123
      %p130 = scmp.eq.s32.totalorder %s29, 1
      %p131 = por %p129, %p130
      %p132 = scmp.ne.s32.totalorder %s123, %s124
      %p133 = scmp.eq.s32.totalorder %s29, 0
      %p134 = por %p132, %p133
      %p135 = scmp.ne.s32.totalorder %s123, %s124
      %p136 = scmp.eq.s32.totalorder %s30, 1
      %p137 = por %p135, %p136
      %p139 = scmp.ne.s32.totalorder %s124, %s138
      %p140 = scmp.eq.s32.totalorder %s30, 0
      %p141 = por %p139, %p140
      %s143 = sadd.s32 %s142, 1
      %p146 = scmp.eq.s32.totalorder %s24, 1
      %p147 = scmp.ne.s32.totalorder %s142, %s144
      %p148 = scmp.eq.s32.totalorder %s24, 0
      %p149 = por %p147, %p148
      %p150 = scmp.ne.s32.totalorder %s142, %s144
      %p151 = scmp.eq.s32.totalorder %s29, 1
      %p152 = por %p150, %p151
      %p153 = scmp.ne.s32.totalorder %s144, %s145
      %p154 = scmp.eq.s32.totalorder %s29, 0
      %p155 = por %p153, %p154
      %p156 = scmp.ne.s32.totalorder %s144, %s145
      %p157 = scmp.eq.s32.totalorder %s30, 1
      %p158 = por %p156, %p157
      %p160 = scmp.ne.s32.totalorder %s145, %s159
      %p161 = scmp.eq.s32.totalorder %s30, 0
      %p162 = por %p160, %p161
      %s164 = sadd.s32 %s163, 1
      %p167 = scmp.eq.s32.totalorder %s24, 1
      %p168 = scmp.ne.s32.totalorder %s163, %s165
      %p169 = scmp.eq.s32.totalorder %s24, 0
      %p170 = por %p168, %p169
      %p171 = scmp.ne.s32.totalorder %s163, %s165
      %p172 = scmp.eq.s32.totalorder %s29, 1
      %p173 = por %p171, %p172
      %p174 = scmp.ne.s32.totalorder %s165, %s166
      %p175 = scmp.eq.s32.totalorder %s29, 0
      %p176 = por %p174, %p175
      %p177 = scmp.ne.s32.totalorder %s165, %s166
      %p178 = scmp.eq.s32.totalorder %s30, 1
      %p179 = por %p177, %p178
      %p181 = scmp.ne.s32.totalorder %s166, %s180
      %p182 = scmp.eq.s32.totalorder %s30, 0
      %p183 = por %p181, %p182
      %s185 = sadd.s32 %s184, 1
      %p188 = scmp.eq.s32.totalorder %s24, 1
      %p189 = scmp.ne.s32.totalorder %s184, %s186
      %p190 = scmp.eq.s32.totalorder %s24, 0
      %p191 = por %p189, %p190
      %p192 = scmp.ne.s32.totalorder %s184, %s186
      %p193 = scmp.eq.s32.totalorder %s29, 1
      %p194 = por %p192, %p193
      %p195 = scmp.ne.s32.totalorder %s186, %s187
      %p196 = scmp.eq.s32.totalorder %s29, 0
      %p197 = por %p195, %p196
      %p198 = scmp.ne.s32.totalorder %s186, %s187
      %p199 = scmp.eq.s32.totalorder %s30, 1
      %p200 = por %p198, %p199
      %p202 = scmp.ne.s32.totalorder %s187, %s201
      %p203 = scmp.eq.s32.totalorder %s30, 0
      %p204 = por %p202, %p203
      %s206 = sadd.s32 %s205, 1
      %p209 = scmp.eq.s32.totalorder %s24, 1
      %p210 = scmp.ne.s32.totalorder %s205, %s207
      %p211 = scmp.eq.s32.totalorder %s24, 0
      %p212 = por %p210, %p211
      %p213 = scmp.ne.s32.totalorder %s205, %s207
      %p214 = scmp.eq.s32.totalorder %s29, 1
      %p215 = por %p213, %p214
      %p216 = scmp.ne.s32.totalorder %s207, %s208
      %p217 = scmp.eq.s32.totalorder %s29, 0
      %p218 = por %p216, %p217
      %p219 = scmp.ne.s32.totalorder %s207, %s208
      %p220 = scmp.eq.s32.totalorder %s30, 1
      %p221 = por %p219, %p220
      %p223 = scmp.ne.s32.totalorder %s208, %s222
      %p224 = scmp.eq.s32.totalorder %s30, 0
      %p225 = por %p223, %p224
      %s227 = sadd.s32 %s226, 1
      %p230 = scmp.eq.s32.totalorder %s24, 1
      %p231 = scmp.ne.s32.totalorder %s226, %s228
      %p232 = scmp.eq.s32.totalorder %s24, 0
      %p233 = por %p231, %p232
      %p234 = scmp.ne.s32.totalorder %s226, %s228
      %p235 = scmp.eq.s32.totalorder %s29, 1
      %p236 = por %p234, %p235
      %p237 = scmp.ne.s32.totalorder %s228, %s229
      %p238 = scmp.eq.s32.totalorder %s29, 0
      %p239 = por %p237, %p238
      %p240 = scmp.ne.s32.totalorder %s228, %s229
      %p241 = scmp.eq.s32.totalorder %s30, 1
      %p242 = por %p240, %p241
      %p244 = scmp.ne.s32.totalorder %s229, %s243
      %p245 = scmp.eq.s32.totalorder %s30, 0
      %p246 = por %p244, %p245
      %s248 = sadd.s32 %s247, 1
      %p251 = scmp.eq.s32.totalorder %s24, 1
      %p252 = scmp.ne.s32.totalorder %s247, %s249
      %p253 = scmp.eq.s32.totalorder %s24, 0
      %p254 = por %p252, %p253
      %p255 = scmp.ne.s32.totalorder %s247, %s249
      %p256 = scmp.eq.s32.totalorder %s29, 1
      %p257 = por %p255, %p256
      %p258 = scmp.ne.s32.totalorder %s249, %s250
      %p259 = scmp.eq.s32.totalorder %s29, 0
      %p260 = por %p258, %p259
      %p261 = scmp.ne.s32.totalorder %s249, %s250
      %p262 = scmp.eq.s32.totalorder %s30, 1
      %p263 = por %p261, %p262
      %p265 = scmp.ne.s32.totalorder %s250, %s264
      %p266 = scmp.eq.s32.totalorder %s30, 0
      %p267 = por %p265, %p266
      %s269 = sadd.s32 %s268, 1
      %p272 = scmp.eq.s32.totalorder %s24, 1
      %p273 = scmp.ne.s32.totalorder %s268, %s270
      %p274 = scmp.eq.s32.totalorder %s24, 0
      %p275 = por %p273, %p274
      %p276 = scmp.ne.s32.totalorder %s268, %s270
      %p277 = scmp.eq.s32.totalorder %s29, 1
      %p278 = por %p276, %p277
      %p279 = scmp.ne.s32.totalorder %s270, %s271
      %p280 = scmp.eq.s32.totalorder %s29, 0
      %p281 = por %p279, %p280
      %p282 = scmp.ne.s32.totalorder %s270, %s271
      %p283 = scmp.eq.s32.totalorder %s30, 1
      %p284 = por %p282, %p283
      %p286 = scmp.ne.s32.totalorder %s271, %s285
      %p287 = scmp.eq.s32.totalorder %s30, 0
      %p288 = por %p286, %p287
      %s290 = sadd.s32 %s289, 1
      %p293 = scmp.eq.s32.totalorder %s24, 1
      %p294 = scmp.ne.s32.totalorder %s289, %s291
      %p295 = scmp.eq.s32.totalorder %s24, 0
      %p296 = por %p294, %p295
      %p297 = scmp.ne.s32.totalorder %s289, %s291
      %p298 = scmp.eq.s32.totalorder %s29, 1
      %p299 = por %p297, %p298
      %p300 = scmp.ne.s32.totalorder %s291, %s292
      %p301 = scmp.eq.s32.totalorder %s29, 0
      %p302 = por %p300, %p301
      %p303 = scmp.ne.s32.totalorder %s291, %s292
      %p304 = scmp.eq.s32.totalorder %s30, 1
      %p305 = por %p303, %p304
      %p307 = scmp.ne.s32.totalorder %s292, %s306
      %p308 = scmp.eq.s32.totalorder %s30, 0
      %p309 = por %p307, %p308
      %s311 = sadd.s32 %s310, 1
      %p314 = scmp.eq.s32.totalorder %s24, 1
      %p315 = scmp.ne.s32.totalorder %s310, %s312
      %p316 = scmp.eq.s32.totalorder %s24, 0
      %p317 = por %p315, %p316
      %p318 = scmp.ne.s32.totalorder %s310, %s312
      %p319 = scmp.eq.s32.totalorder %s29, 1
      %p320 = por %p318, %p319
      %p321 = scmp.ne.s32.totalorder %s312, %s313
      %p322 = scmp.eq.s32.totalorder %s29, 0
      %p323 = por %p321, %p322
      %p324 = scmp.ne.s32.totalorder %s312, %s313
      %p325 = scmp.eq.s32.totalorder %s30, 1
      %p326 = por %p324, %p325
      %p328 = scmp.ne.s32.totalorder %s313, %s327
      %p329 = scmp.eq.s32.totalorder %s30, 0
      %p330 = por %p328, %p329
      %s332 = sadd.s32 %s331, 1
      %p335 = scmp.eq.s32.totalorder %s24, 1
      %p336 = scmp.ne.s32.totalorder %s331, %s333
      %p337 = scmp.eq.s32.totalorder %s24, 0
      %p338 = por %p336, %p337
      %p339 = scmp.ne.s32.totalorder %s331, %s333
      %p340 = scmp.eq.s32.totalorder %s29, 1
      %p341 = por %p339, %p340
      %p342 = scmp.ne.s32.totalorder %s333, %s334
      %p343 = scmp.eq.s32.totalorder %s29, 0
      %p344 = por %p342, %p343
      %p345 = scmp.ne.s32.totalorder %s333, %s334
      %p346 = scmp.eq.s32.totalorder %s30, 1
      %p347 = por %p345, %p346
      %p349 = scmp.ne.s32.totalorder %s334, %s348
      %p350 = scmp.eq.s32.totalorder %s30, 0
      %p351 = por %p349, %p350
      %s352 = ssub.s32 %s24, %s31
      %p353 = scmp.eq.s32.totalorder %s352, 0
      %s355 = sadd.s32 %s354, 1
      %s356 = scalar_select %p353, %s354, %s355
      %p359 = pneg %p353
      %p360 = scmp.eq.s32.totalorder %s24, 1
      %p361 = por %p359, %p360
      %p362 = scmp.ne.s32.totalorder %s354, %s357
      %p363 = scmp.eq.s32.totalorder %s24, 0
      %p364 = por %p362, %p363
      %p365 = scmp.ne.s32.totalorder %s354, %s357
      %p366 = scmp.eq.s32.totalorder %s29, 1
      %p367 = por %p365, %p366
      %p368 = scmp.ne.s32.totalorder %s357, %s358
      %p369 = scmp.eq.s32.totalorder %s29, 0
      %p370 = por %p368, %p369
      %p371 = scmp.ne.s32.totalorder %s357, %s358
      %p372 = scmp.eq.s32.totalorder %s30, 1
      %p373 = por %p371, %p372
      %p375 = scmp.ne.s32.totalorder %s358, %s374
      %p376 = scmp.eq.s32.totalorder %s30, 0
      %p377 = por %p375, %p376
      %p378 = scmp.le.s32.totalorder 1, %s24
      %p379 = scmp.lt.s32.totalorder %s24, 3
      %p380 = pnand %p378, %p379
      %p381 = pneg %p380
      // Predicated region
      $region9: #{residual_net_forward.1} parent=5 // pred_check
        _
      $region10: #{residual_net_forward.1} parent=5 // pred_check_branch
        %383 = sbr.rel (%p380) target = $region12
      $region11: #{residual_net_forward.1} parent=5 // pred_region
        %s384 = ssub.s32 %s24, 1
        // Predicated region
        $region13: #{residual_net_forward.1} parent=11 // pred_check
          %p385 = pneg %p71
        $region14: #{residual_net_forward.1} parent=11 // pred_check_branch
          %387 = sbr.rel (%p385) target = $region16
        $region15: #{residual_net_forward.1} parent=11 // pred_region
          _
        $region16: #{residual_net_forward.1} parent=11 // pred_fallthru
          _
        // Predicated region
        $region17: #{residual_net_forward.1} parent=11 // pred_check
          %p388 = pneg %p92
        $region18: #{residual_net_forward.1} parent=11 // pred_check_branch
          %390 = sbr.rel (%p388) target = $region20
        $region19: #{residual_net_forward.1} parent=11 // pred_region
          _
        $region20: #{residual_net_forward.1} parent=11 // pred_fallthru
          _
        // Predicated region
        $region21: #{residual_net_forward.1} parent=11 // pred_check
          %p391 = pneg %p113
        $region22: #{residual_net_forward.1} parent=11 // pred_check_branch
          %393 = sbr.rel (%p391) target = $region24
        $region23: #{residual_net_forward.1} parent=11 // pred_region
          _
        $region24: #{residual_net_forward.1} parent=11 // pred_fallthru
          _
        // Predicated region
        $region25: #{residual_net_forward.1} parent=11 // pred_check
          %p394 = pneg %p134
        $region26: #{residual_net_forward.1} parent=11 // pred_check_branch
          %396 = sbr.rel (%p394) target = $region28
        $region27: #{residual_net_forward.1} parent=11 // pred_region
          _
        $region28: #{residual_net_forward.1} parent=11 // pred_fallthru
          _
        // Predicated region
        $region29: #{residual_net_forward.1} parent=11 // pred_check
          %p397 = pneg %p155
        $region30: #{residual_net_forward.1} parent=11 // pred_check_branch
          %399 = sbr.rel (%p397) target = $region32
        $region31: #{residual_net_forward.1} parent=11 // pred_region
          _
        $region32: #{residual_net_forward.1} parent=11 // pred_fallthru
          _
        // Predicated region
        $region33: #{residual_net_forward.1} parent=11 // pred_check
          %p400 = pneg %p176
        $region34: #{residual_net_forward.1} parent=11 // pred_check_branch
          %402 = sbr.rel (%p400) target = $region36
        $region35: #{residual_net_forward.1} parent=11 // pred_region
          _
        $region36: #{residual_net_forward.1} parent=11 // pred_fallthru
          _
        // Predicated region
        $region37: #{residual_net_forward.1} parent=11 // pred_check
          %p403 = pneg %p197
        $region38: #{residual_net_forward.1} parent=11 // pred_check_branch
          %405 = sbr.rel (%p403) target = $region40
        $region39: #{residual_net_forward.1} parent=11 // pred_region
          _
        $region40: #{residual_net_forward.1} parent=11 // pred_fallthru
          _
        // Predicated region
        $region41: #{residual_net_forward.1} parent=11 // pred_check
          %p406 = pneg %p218
        $region42: #{residual_net_forward.1} parent=11 // pred_check_branch
          %408 = sbr.rel (%p406) target = $region44
        $region43: #{residual_net_forward.1} parent=11 // pred_region
          _
        $region44: #{residual_net_forward.1} parent=11 // pred_fallthru
          _
        // Predicated region
        $region45: #{residual_net_forward.1} parent=11 // pred_check
          %p409 = pneg %p239
        $region46: #{residual_net_forward.1} parent=11 // pred_check_branch
          %411 = sbr.rel (%p409) target = $region48
        $region47: #{residual_net_forward.1} parent=11 // pred_region
          _
        $region48: #{residual_net_forward.1} parent=11 // pred_fallthru
          _
        // Predicated region
        $region49: #{residual_net_forward.1} parent=11 // pred_check
          %p412 = pneg %p260
        $region50: #{residual_net_forward.1} parent=11 // pred_check_branch
          %414 = sbr.rel (%p412) target = $region52
        $region51: #{residual_net_forward.1} parent=11 // pred_region
          _
        $region52: #{residual_net_forward.1} parent=11 // pred_fallthru
          _
        // Predicated region
        $region53: #{residual_net_forward.1} parent=11 // pred_check
          %p415 = pneg %p281
        $region54: #{residual_net_forward.1} parent=11 // pred_check_branch
          %417 = sbr.rel (%p415) target = $region56
        $region55: #{residual_net_forward.1} parent=11 // pred_region
          _
        $region56: #{residual_net_forward.1} parent=11 // pred_fallthru
          _
        // Predicated region
        $region57: #{residual_net_forward.1} parent=11 // pred_check
          %p418 = pneg %p302
        $region58: #{residual_net_forward.1} parent=11 // pred_check_branch
          %420 = sbr.rel (%p418) target = $region60
        $region59: #{residual_net_forward.1} parent=11 // pred_region
          _
        $region60: #{residual_net_forward.1} parent=11 // pred_fallthru
          _
        // Predicated region
        $region61: #{residual_net_forward.1} parent=11 // pred_check
          %p421 = pneg %p323
        $region62: #{residual_net_forward.1} parent=11 // pred_check_branch
          %423 = sbr.rel (%p421) target = $region64
        $region63: #{residual_net_forward.1} parent=11 // pred_region
          _
        $region64: #{residual_net_forward.1} parent=11 // pred_fallthru
          _
        // Predicated region
        $region65: #{residual_net_forward.1} parent=11 // pred_check
          %p424 = pneg %p344
        $region66: #{residual_net_forward.1} parent=11 // pred_check_branch
          %426 = sbr.rel (%p424) target = $region68
        $region67: #{residual_net_forward.1} parent=11 // pred_region
          _
        $region68: #{residual_net_forward.1} parent=11 // pred_fallthru
          _
      $region12: #{residual_net_forward.1} parent=5 // pred_fallthru
        _
      %p427 = scmp.lt.s32.totalorder %s24, 2
      // Predicated region
      $region69: #{residual_net_forward.1} parent=5 // pred_check
        %p428 = pneg %p427
      $region70: #{residual_net_forward.1} parent=5 // pred_check_branch
        %430 = sbr.rel (%p428) target = $region72
      $region71: #{residual_net_forward.1} parent=5 // pred_region
        // Predicated region
        $region73: #{residual_net_forward.1} parent=71 // pred_check
          %p431 = pneg %p44
        $region74: #{residual_net_forward.1} parent=71 // pred_check_branch
          %433 = sbr.rel (%p431) target = $region76
        $region75: #{residual_net_forward.1} parent=71 // pred_region
          %p434 = scmp.lt.s32.totalorder %s24, 1
          %s435 = scalar_select %p434, %s24, 1
          %s436 = smul.addr %s435, 7
          %s437 = scalar_lea.vmem %s0, %s436
        $region76: #{residual_net_forward.1} parent=71 // pred_fallthru
          _
      $region72: #{residual_net_forward.1} parent=5 // pred_fallthru
        _
      %p438 = scmp.le.s32.totalorder 1, %s24
      %p439 = scmp.lt.s32.totalorder %s24, 3
      %p440 = pnand %p438, %p439
      %p441 = pneg %p440
      // Predicated region
      $region77: #{residual_net_forward.1} parent=5 // pred_check
        _
      $region78: #{residual_net_forward.1} parent=5 // pred_check_branch
        %443 = sbr.rel (%p440) target = $region80
      $region79: #{residual_net_forward.1} parent=5 // pred_region
        %s444 = ssub.s32 %s24, 1
        %p445 = scmp.lt.s32.totalorder %s29, 1
        %s446 = scalar_select %p445, %s29, 1
        %s447 = smul.addr %s446, 7
        %s448 = scalar_lea.vmem %s0, %s447
        %p449 = pneg %p50
        %p450 = pneg %p47
        %p451 = pneg %p71
        %p452 = pneg %p68
        %p453 = pneg %p92
        %p454 = pneg %p89
        %p455 = pneg %p113
        %p456 = pneg %p110
        %p457 = pneg %p134
        %p458 = pneg %p131
        %p459 = pneg %p155
        %p460 = pneg %p152
        %p461 = pneg %p176
        %p462 = pneg %p173
        %p463 = pneg %p197
        %p464 = pneg %p194
        %p465 = pneg %p218
        %p466 = pneg %p215
        %p467 = pneg %p239
        %p468 = pneg %p236
        %p469 = pneg %p260
        %p470 = pneg %p257
        %p471 = pneg %p281
        %p472 = pneg %p278
        %p473 = pneg %p302
        %p474 = pneg %p299
        %p475 = pneg %p323
        %p476 = pneg %p320
        %p477 = pneg %p344
        %p478 = pneg %p341
        %p479 = pneg %p370
        %p480 = pneg %p367
        %s481 = sand.u32 %s357, 1
        %s482 = scalar_lea.sflag [#allocation3], %s481
        %s483 = sand.u32 %s357, 1
        %s484 = scalar_lea.vmem [#allocation2], %s483
        %p485 = scmp.lt.s32.totalorder %s29, 1
        %s486 = scalar_select %p485, %s29, 1
        %s487 = smul.addr %s486, 7
        %s488 = scalar_lea.vmem %s0, %s487
        %v489 = vld [vmem:[%s488] sm:$0x7f]
        %v491 = vperm.slane %v489, 0
        %v492 = vperm.slane %v489, 1
        %v493 = vperm.slane %v489, 2
        %v494 = vperm.slane %v489, 3
        %v495 = vperm.slane %v489, 4
        %v496 = vperm.slane %v489, 5
        %503 = vrot.lane.b32.xlu0 %v491, 127
        %v504 = vpop.permute.xlu0 %503
        %505 = vrot.lane.b32.xlu0 %v492, 127
        %v506 = vpop.permute.xlu0 %505
        %507 = vrot.lane.b32.xlu0 %v493, 127
        %v508 = vpop.permute.xlu0 %507
        %509 = vrot.lane.b32.xlu0 %v494, 127
        %v510 = vpop.permute.xlu0 %509
        %511 = vrot.lane.b32.xlu0 %v495, 127
        %v512 = vpop.permute.xlu0 %511
        %513 = vrot.lane.b32.xlu0 %v496, 127
        %v514 = vpop.permute.xlu0 %513
        %vm515 = vcmask 1039360
        %v516 = vsel %vm515, %v504, %v506
        %v517 = vsel %vm515, %v506, %v508
        %v518 = vsel %vm515, %v508, %v510
        %v519 = vsel %vm515, %v510, %v512
        %v520 = vsel %vm515, %v512, %v514
        %527 = vrot.lane.b32.xlu0 %v491, 126
        %v528 = vpop.permute.xlu0 %527
        %529 = vrot.lane.b32.xlu0 %v492, 126
        %v530 = vpop.permute.xlu0 %529
        %531 = vrot.lane.b32.xlu0 %v493, 126
        %v532 = vpop.permute.xlu0 %531
        %533 = vrot.lane.b32.xlu0 %v494, 126
        %v534 = vpop.permute.xlu0 %533
        %535 = vrot.lane.b32.xlu0 %v495, 126
        %v536 = vpop.permute.xlu0 %535
        %537 = vrot.lane.b32.xlu0 %v496, 126
        %v538 = vpop.permute.xlu0 %537
        %vm539 = vcmask 1031168
        %v540 = vsel %vm539, %v528, %v530
        %v541 = vsel %vm539, %v530, %v532
        %v542 = vsel %vm539, %v532, %v534
        %v543 = vsel %vm539, %v534, %v536
        %v544 = vsel %vm539, %v536, %v538
        %551 = vrot.lane.b32.xlu0 %v491, 125
        %v552 = vpop.permute.xlu0 %551
        %553 = vrot.lane.b32.xlu0 %v492, 125
        %v554 = vpop.permute.xlu0 %553
        %555 = vrot.lane.b32.xlu0 %v493, 125
        %v556 = vpop.permute.xlu0 %555
        %557 = vrot.lane.b32.xlu0 %v494, 125
        %v558 = vpop.permute.xlu0 %557
        %559 = vrot.lane.b32.xlu0 %v495, 125
        %v560 = vpop.permute.xlu0 %559
        %561 = vrot.lane.b32.xlu0 %v496, 125
        %v562 = vpop.permute.xlu0 %561
        %vm563 = vcmask 1022976
        %v564 = vsel %vm563, %v552, %v554
        %v565 = vsel %vm563, %v554, %v556
        %v566 = vsel %vm563, %v556, %v558
        %v567 = vsel %vm563, %v558, %v560
        %v568 = vsel %vm563, %v560, %v562
        %575 = vrot.lane.b32.xlu0 %v491, 124
        %v576 = vpop.permute.xlu0 %575
        %577 = vrot.lane.b32.xlu0 %v492, 124
        %v578 = vpop.permute.xlu0 %577
        %579 = vrot.lane.b32.xlu0 %v493, 124
        %v580 = vpop.permute.xlu0 %579
        %581 = vrot.lane.b32.xlu0 %v494, 124
        %v582 = vpop.permute.xlu0 %581
        %583 = vrot.lane.b32.xlu0 %v495, 124
        %v584 = vpop.permute.xlu0 %583
        %585 = vrot.lane.b32.xlu0 %v496, 124
        %v586 = vpop.permute.xlu0 %585
        %vm587 = vcmask 1014784
        %v588 = vsel %vm587, %v576, %v578
        %v589 = vsel %vm587, %v578, %v580
        %v590 = vsel %vm587, %v580, %v582
        %v591 = vsel %vm587, %v582, %v584
        %v592 = vsel %vm587, %v584, %v586
        %599 = vrot.lane.b32.xlu0 %v491, 100
        %v600 = vpop.permute.xlu0 %599
        %601 = vrot.lane.b32.xlu0 %v492, 100
        %v602 = vpop.permute.xlu0 %601
        %603 = vrot.lane.b32.xlu0 %v493, 100
        %v604 = vpop.permute.xlu0 %603
        %605 = vrot.lane.b32.xlu0 %v494, 100
        %v606 = vpop.permute.xlu0 %605
        %607 = vrot.lane.b32.xlu0 %v495, 100
        %v608 = vpop.permute.xlu0 %607
        %609 = vrot.lane.b32.xlu0 %v496, 100
        %v610 = vpop.permute.xlu0 %609
        %vm611 = vcmask 818176
        %v612 = vsel %vm611, %v600, %v602
        %v613 = vsel %vm611, %v602, %v604
        %v614 = vsel %vm611, %v604, %v606
        %v615 = vsel %vm611, %v606, %v608
        %v616 = vsel %vm611, %v608, %v610
        %623 = vrot.lane.b32.xlu0 %v491, 99
        %v624 = vpop.permute.xlu0 %623
        %625 = vrot.lane.b32.xlu0 %v492, 99
        %v626 = vpop.permute.xlu0 %625
        %627 = vrot.lane.b32.xlu0 %v493, 99
        %v628 = vpop.permute.xlu0 %627
        %629 = vrot.lane.b32.xlu0 %v494, 99
        %v630 = vpop.permute.xlu0 %629
        %631 = vrot.lane.b32.xlu0 %v495, 99
        %v632 = vpop.permute.xlu0 %631
        %633 = vrot.lane.b32.xlu0 %v496, 99
        %v634 = vpop.permute.xlu0 %633
        %vm635 = vcmask 809984
        %v636 = vsel %vm635, %v624, %v626
        %v637 = vsel %vm635, %v626, %v628
        %v638 = vsel %vm635, %v628, %v630
        %v639 = vsel %vm635, %v630, %v632
        %v640 = vsel %vm635, %v632, %v634
        %647 = vrot.lane.b32.xlu0 %v491, 98
        %v648 = vpop.permute.xlu0 %647
        %649 = vrot.lane.b32.xlu0 %v492, 98
        %v650 = vpop.permute.xlu0 %649
        %651 = vrot.lane.b32.xlu0 %v493, 98
        %v652 = vpop.permute.xlu0 %651
        %653 = vrot.lane.b32.xlu0 %v494, 98
        %v654 = vpop.permute.xlu0 %653
        %655 = vrot.lane.b32.xlu0 %v495, 98
        %v656 = vpop.permute.xlu0 %655
        %657 = vrot.lane.b32.xlu0 %v496, 98
        %v658 = vpop.permute.xlu0 %657
        %vm659 = vcmask 801792
        %v660 = vsel %vm659, %v648, %v650
        %v661 = vsel %vm659, %v650, %v652
        %v662 = vsel %vm659, %v652, %v654
        %v663 = vsel %vm659, %v654, %v656
        %v664 = vsel %vm659, %v656, %v658
        %671 = vrot.lane.b32.xlu0 %v491, 97
        %v672 = vpop.permute.xlu0 %671
        %673 = vrot.lane.b32.xlu0 %v492, 97
        %v674 = vpop.permute.xlu0 %673
        %675 = vrot.lane.b32.xlu0 %v493, 97
        %v676 = vpop.permute.xlu0 %675
        %677 = vrot.lane.b32.xlu0 %v494, 97
        %v678 = vpop.permute.xlu0 %677
        %679 = vrot.lane.b32.xlu0 %v495, 97
        %v680 = vpop.permute.xlu0 %679
        %681 = vrot.lane.b32.xlu0 %v496, 97
        %v682 = vpop.permute.xlu0 %681
        %vm683 = vcmask 793600
        %v684 = vsel %vm683, %v672, %v674
        %v685 = vsel %vm683, %v674, %v676
        %v686 = vsel %vm683, %v676, %v678
        %v687 = vsel %vm683, %v678, %v680
        %v688 = vsel %vm683, %v680, %v682
        %695 = vrot.lane.b32.xlu0 %v491, 96
        %v696 = vpop.permute.xlu0 %695
        %697 = vrot.lane.b32.xlu0 %v492, 96
        %v698 = vpop.permute.xlu0 %697
        %699 = vrot.lane.b32.xlu0 %v493, 96
        %v700 = vpop.permute.xlu0 %699
        %701 = vrot.lane.b32.xlu0 %v494, 96
        %v702 = vpop.permute.xlu0 %701
        %703 = vrot.lane.b32.xlu0 %v495, 96
        %v704 = vpop.permute.xlu0 %703
        %705 = vrot.lane.b32.xlu0 %v496, 96
        %v706 = vpop.permute.xlu0 %705
        %vm707 = vcmask 785408
        %v708 = vsel %vm707, %v696, %v698
        %v709 = vsel %vm707, %v698, %v700
        %v710 = vsel %vm707, %v700, %v702
        %v711 = vsel %vm707, %v702, %v704
        %v712 = vsel %vm707, %v704, %v706
        %719 = vrot.lane.b32.xlu0 %v491, 72
        %v720 = vpop.permute.xlu0 %719
        %721 = vrot.lane.b32.xlu0 %v492, 72
        %v722 = vpop.permute.xlu0 %721
        %723 = vrot.lane.b32.xlu0 %v493, 72
        %v724 = vpop.permute.xlu0 %723
        %725 = vrot.lane.b32.xlu0 %v494, 72
        %v726 = vpop.permute.xlu0 %725
        %727 = vrot.lane.b32.xlu0 %v495, 72
        %v728 = vpop.permute.xlu0 %727
        %729 = vrot.lane.b32.xlu0 %v496, 72
        %v730 = vpop.permute.xlu0 %729
        %vm731 = vcmask 588800
        %v732 = vsel %vm731, %v720, %v722
        %v733 = vsel %vm731, %v722, %v724
        %v734 = vsel %vm731, %v724, %v726
        %v735 = vsel %vm731, %v726, %v728
        %v736 = vsel %vm731, %v728, %v730
        %743 = vrot.lane.b32.xlu0 %v491, 71
        %v744 = vpop.permute.xlu0 %743
        %745 = vrot.lane.b32.xlu0 %v492, 71
        %v746 = vpop.permute.xlu0 %745
        %747 = vrot.lane.b32.xlu0 %v493, 71
        %v748 = vpop.permute.xlu0 %747
        %749 = vrot.lane.b32.xlu0 %v494, 71
        %v750 = vpop.permute.xlu0 %749
        %751 = vrot.lane.b32.xlu0 %v495, 71
        %v752 = vpop.permute.xlu0 %751
        %753 = vrot.lane.b32.xlu0 %v496, 71
        %v754 = vpop.permute.xlu0 %753
        %vm755 = vcmask 580608
        %v756 = vsel %vm755, %v744, %v746
        %v757 = vsel %vm755, %v746, %v748
        %v758 = vsel %vm755, %v748, %v750
        %v759 = vsel %vm755, %v750, %v752
        %v760 = vsel %vm755, %v752, %v754
        %767 = vrot.lane.b32.xlu0 %v491, 70
        %v768 = vpop.permute.xlu0 %767
        %769 = vrot.lane.b32.xlu0 %v492, 70
        %v770 = vpop.permute.xlu0 %769
        %771 = vrot.lane.b32.xlu0 %v493, 70
        %v772 = vpop.permute.xlu0 %771
        %773 = vrot.lane.b32.xlu0 %v494, 70
        %v774 = vpop.permute.xlu0 %773
        %775 = vrot.lane.b32.xlu0 %v495, 70
        %v776 = vpop.permute.xlu0 %775
        %777 = vrot.lane.b32.xlu0 %v496, 70
        %v778 = vpop.permute.xlu0 %777
        %vm779 = vcmask 572416
        %v780 = vsel %vm779, %v768, %v770
        %v781 = vsel %vm779, %v770, %v772
        %v782 = vsel %vm779, %v772, %v774
        %v783 = vsel %vm779, %v774, %v776
        %v784 = vsel %vm779, %v776, %v778
        %791 = vrot.lane.b32.xlu0 %v491, 69
        %v792 = vpop.permute.xlu0 %791
        %793 = vrot.lane.b32.xlu0 %v492, 69
        %v794 = vpop.permute.xlu0 %793
        %795 = vrot.lane.b32.xlu0 %v493, 69
        %v796 = vpop.permute.xlu0 %795
        %797 = vrot.lane.b32.xlu0 %v494, 69
        %v798 = vpop.permute.xlu0 %797
        %799 = vrot.lane.b32.xlu0 %v495, 69
        %v800 = vpop.permute.xlu0 %799
        %801 = vrot.lane.b32.xlu0 %v496, 69
        %v802 = vpop.permute.xlu0 %801
        %vm803 = vcmask 564224
        %v804 = vsel %vm803, %v792, %v794
        %v805 = vsel %vm803, %v794, %v796
        %v806 = vsel %vm803, %v796, %v798
        %v807 = vsel %vm803, %v798, %v800
        %v808 = vsel %vm803, %v800, %v802
        %815 = vrot.lane.b32.xlu0 %v491, 68
        %v816 = vpop.permute.xlu0 %815
        %817 = vrot.lane.b32.xlu0 %v492, 68
        %v818 = vpop.permute.xlu0 %817
        %819 = vrot.lane.b32.xlu0 %v493, 68
        %v820 = vpop.permute.xlu0 %819
        %821 = vrot.lane.b32.xlu0 %v494, 68
        %v822 = vpop.permute.xlu0 %821
        %823 = vrot.lane.b32.xlu0 %v495, 68
        %v824 = vpop.permute.xlu0 %823
        %825 = vrot.lane.b32.xlu0 %v496, 68
        %v826 = vpop.permute.xlu0 %825
        %vm827 = vcmask 556032
        %v828 = vsel %vm827, %v816, %v818
        %v829 = vsel %vm827, %v818, %v820
        %v830 = vsel %vm827, %v820, %v822
        %v831 = vsel %vm827, %v822, %v824
        %v832 = vsel %vm827, %v824, %v826
        %839 = vrot.lane.b32.xlu0 %v491, 44
        %v840 = vpop.permute.xlu0 %839
        %841 = vrot.lane.b32.xlu0 %v492, 44
        %v842 = vpop.permute.xlu0 %841
        %843 = vrot.lane.b32.xlu0 %v493, 44
        %v844 = vpop.permute.xlu0 %843
        %845 = vrot.lane.b32.xlu0 %v494, 44
        %v846 = vpop.permute.xlu0 %845
        %847 = vrot.lane.b32.xlu0 %v495, 44
        %v848 = vpop.permute.xlu0 %847
        %849 = vrot.lane.b32.xlu0 %v496, 44
        %v850 = vpop.permute.xlu0 %849
        %vm851 = vcmask 359424
        %v852 = vsel %vm851, %v840, %v842
        %v853 = vsel %vm851, %v842, %v844
        %v854 = vsel %vm851, %v844, %v846
        %v855 = vsel %vm851, %v846, %v848
        %v856 = vsel %vm851, %v848, %v850
        %vm863 = vcmask 1040384
        %v864 = vsel %vm863, %v491, %v516
        %v865 = vsel %vm863, %v492, %v517
        %v866 = vsel %vm863, %v493, %v518
        %v867 = vsel %vm863, %v494, %v519
        %v868 = vsel %vm863, %v495, %v520
        %v869 = vsel %vm863, %v496, %v514
        %vm870 = vcmask 1041408
        %v871 = vsel %vm870, %v864, %v540
        %v872 = vsel %vm870, %v865, %v541
        %v873 = vsel %vm870, %v866, %v542
        %v874 = vsel %vm870, %v867, %v543
        %v875 = vsel %vm870, %v868, %v544
        %v876 = vsel %vm870, %v869, %v538
        %vm877 = vcmask 1042432
        %v878 = vsel %vm877, %v871, %v564
        %v879 = vsel %vm877, %v872, %v565
        %v880 = vsel %vm877, %v873, %v566
        %v881 = vsel %vm877, %v874, %v567
        %v882 = vsel %vm877, %v875, %v568
        %v883 = vsel %vm877, %v876, %v562
        %vm884 = vcmask 1043456
        %v885 = vsel %vm884, %v878, %v588
        %v886 = vsel %vm884, %v879, %v589
        %v887 = vsel %vm884, %v880, %v590
        %v888 = vsel %vm884, %v881, %v591
        %v889 = vsel %vm884, %v882, %v592
        %v890 = vsel %vm884, %v883, %v586
        %vm891 = vcmask 1044480
        %v892 = vsel %vm891, %v885, %v612
        %v893 = vsel %vm891, %v886, %v613
        %v894 = vsel %vm891, %v887, %v614
        %v895 = vsel %vm891, %v888, %v615
        %v896 = vsel %vm891, %v889, %v616
        %v897 = vsel %vm891, %v890, %v610
        %vm898 = vcmask 1045504
        %v899 = vsel %vm898, %v892, %v636
        %v900 = vsel %vm898, %v893, %v637
        %v901 = vsel %vm898, %v894, %v638
        %v902 = vsel %vm898, %v895, %v639
        %v903 = vsel %vm898, %v896, %v640
        %v904 = vsel %vm898, %v897, %v634
        %vm905 = vcmask 1046528
        %v906 = vsel %vm905, %v899, %v660
        %v907 = vsel %vm905, %v900, %v661
        %v908 = vsel %vm905, %v901, %v662
        %v909 = vsel %vm905, %v902, %v663
        %v910 = vsel %vm905, %v903, %v664
        %v911 = vsel %vm905, %v904, %v658
        %v912 = vsel %vm863, %v684, %v708
        %v913 = vsel %vm863, %v685, %v709
        %v914 = vsel %vm863, %v686, %v710
        %v915 = vsel %vm863, %v687, %v711
        %v916 = vsel %vm863, %v688, %v712
        %v917 = vsel %vm863, %v682, %v706
        %v918 = vsel %vm870, %v912, %v732
        %v919 = vsel %vm870, %v913, %v733
        %v920 = vsel %vm870, %v914, %v734
        %v921 = vsel %vm870, %v915, %v735
        %v922 = vsel %vm870, %v916, %v736
        %v923 = vsel %vm870, %v917, %v730
        %v924 = vsel %vm877, %v918, %v756
        %v925 = vsel %vm877, %v919, %v757
        %v926 = vsel %vm877, %v920, %v758
        %v927 = vsel %vm877, %v921, %v759
        %v928 = vsel %vm877, %v922, %v760
        %v929 = vsel %vm877, %v923, %v754
        %v930 = vsel %vm884, %v924, %v780
        %v931 = vsel %vm884, %v925, %v781
        %v932 = vsel %vm884, %v926, %v782
        %v933 = vsel %vm884, %v927, %v783
        %v934 = vsel %vm884, %v928, %v784
        %v935 = vsel %vm884, %v929, %v778
        %v936 = vsel %vm891, %v930, %v804
        %v937 = vsel %vm891, %v931, %v805
        %v938 = vsel %vm891, %v932, %v806
        %v939 = vsel %vm891, %v933, %v807
        %v940 = vsel %vm891, %v934, %v808
        %v941 = vsel %vm891, %v935, %v802
        %v942 = vsel %vm898, %v936, %v828
        %v943 = vsel %vm898, %v937, %v829
        %v944 = vsel %vm898, %v938, %v830
        %v945 = vsel %vm898, %v939, %v831
        %v946 = vsel %vm898, %v940, %v832
        %v947 = vsel %vm898, %v941, %v826
        %v948 = vsel %vm905, %v942, %v852
        %v949 = vsel %vm905, %v943, %v853
        %v950 = vsel %vm905, %v944, %v854
        %v951 = vsel %vm905, %v945, %v855
        %v952 = vsel %vm905, %v946, %v856
        %v953 = vsel %vm905, %v947, %v850
        %v954 = vperm.slane %v489, 6
        %955 = vrot.lane.b32.xlu0 %v491, 101
        %v956 = vpop.permute.xlu0 %955
        %957 = vrot.lane.b32.xlu0 %v492, 101
        %v958 = vpop.permute.xlu0 %957
        %959 = vrot.lane.b32.xlu0 %v493, 101
        %v960 = vpop.permute.xlu0 %959
        %961 = vrot.lane.b32.xlu0 %v494, 101
        %v962 = vpop.permute.xlu0 %961
        %963 = vrot.lane.b32.xlu0 %v495, 101
        %v964 = vpop.permute.xlu0 %963
        %965 = vrot.lane.b32.xlu0 %v496, 101
        %v966 = vpop.permute.xlu0 %965
        %967 = vrot.lane.b32.xlu0 %v954, 101
        %v968 = vpop.permute.xlu0 %967
        %vm969 = vcmask 826368
        %v970 = vsel %vm969, %v956, %v958
        %v971 = vsel %vm969, %v958, %v960
        %v972 = vsel %vm969, %v960, %v962
        %v973 = vsel %vm969, %v962, %v964
        %v974 = vsel %vm969, %v964, %v966
        %v975 = vsel %vm969, %v966, %v968
        %982 = vrot.lane.b32.xlu0 %v954, 100
        %v983 = vpop.permute.xlu0 %982
        %v984 = vsel %vm611, %v610, %v983
        %986 = vrot.lane.b32.xlu0 %v954, 99
        %v987 = vpop.permute.xlu0 %986
        %v988 = vsel %vm635, %v634, %v987
        %990 = vrot.lane.b32.xlu0 %v954, 98
        %v991 = vpop.permute.xlu0 %990
        %v992 = vsel %vm659, %v658, %v991
        %994 = vrot.lane.b32.xlu0 %v954, 97
        %v995 = vpop.permute.xlu0 %994
        %v996 = vsel %vm683, %v682, %v995
        %v997 = vsel %vm884, %v878, %v970
        %v998 = vsel %vm884, %v879, %v971
        %v999 = vsel %vm884, %v880, %v972
        %v1000 = vsel %vm884, %v881, %v973
        %v1001 = vsel %vm884, %v882, %v974
        %v1002 = vsel %vm884, %v883, %v975
        %v1003 = vsel %vm891, %v997, %v612
        %v1004 = vsel %vm891, %v998, %v613
        %v1005 = vsel %vm891, %v999, %v614
        %v1006 = vsel %vm891, %v1000, %v615
        %v1007 = vsel %vm891, %v1001, %v616
        %v1008 = vsel %vm891, %v1002, %v984
        %v1009 = vsel %vm898, %v1003, %v636
        %v1010 = vsel %vm898, %v1004, %v637
        %v1011 = vsel %vm898, %v1005, %v638
        %v1012 = vsel %vm898, %v1006, %v639
        %v1013 = vsel %vm898, %v1007, %v640
        %v1014 = vsel %vm898, %v1008, %v988
        %v1015 = vsel %vm905, %v1009, %v660
        %v1016 = vsel %vm905, %v1010, %v661
        %v1017 = vsel %vm905, %v1011, %v662
        %v1018 = vsel %vm905, %v1012, %v663
        %v1019 = vsel %vm905, %v1013, %v664
        %v1020 = vsel %vm905, %v1014, %v992
        %1027 = vrot.lane.b32.xlu0 %v1015, 43
        %v1028 = vpop.permute.xlu0 %1027
        %1029 = vrot.lane.b32.xlu0 %v1016, 43
        %v1030 = vpop.permute.xlu0 %1029
        %1031 = vrot.lane.b32.xlu0 %v1017, 43
        %v1032 = vpop.permute.xlu0 %1031
        %1033 = vrot.lane.b32.xlu0 %v1018, 43
        %v1034 = vpop.permute.xlu0 %1033
        %1035 = vrot.lane.b32.xlu0 %v1019, 43
        %v1036 = vpop.permute.xlu0 %1035
        %1037 = vrot.lane.b32.xlu0 %v1020, 43
        %v1038 = vpop.permute.xlu0 %1037
        %1039 = vrot.lane.b32.xlu0 %v684, 43
        %v1040 = vpop.permute.xlu0 %1039
        %1041 = vrot.lane.b32.xlu0 %v685, 43
        %v1042 = vpop.permute.xlu0 %1041
        %1043 = vrot.lane.b32.xlu0 %v686, 43
        %v1044 = vpop.permute.xlu0 %1043
        %1045 = vrot.lane.b32.xlu0 %v687, 43
        %v1046 = vpop.permute.xlu0 %1045
        %1047 = vrot.lane.b32.xlu0 %v688, 43
        %v1048 = vpop.permute.xlu0 %1047
        %1049 = vrot.lane.b32.xlu0 %v996, 43
        %v1050 = vpop.permute.xlu0 %1049
        %vm1051 = vcmask 351232
        %v1052 = vsel %vm1051, %v1028, %v1030
        %v1053 = vsel %vm1051, %v1030, %v1032
        %v1054 = vsel %vm1051, %v1032, %v1034
        %v1055 = vsel %vm1051, %v1034, %v1036
        %v1056 = vsel %vm1051, %v1036, %v1038
        %v1057 = vsel %vm1051, %v1040, %v1042
        %v1058 = vsel %vm1051, %v1042, %v1044
        %v1059 = vsel %vm1051, %v1044, %v1046
        %v1060 = vsel %vm1051, %v1046, %v1048
        %v1061 = vsel %vm1051, %v1048, %v1050
        %v1068 = vld [vmem:[%s1] sm:$0xff]
        %v1069 = vld [vmem:[%s1 + $0x8] sm:$0xff]
        %v1070 = vld [vmem:[%s2] sm:$0xff]
        %v1071 = vld [vmem:[%s2 + $0x8] sm:$0xff]
        %1073 = vset.pattern.permute.xlu0 0
        %1074 = vperm.xlu0 %1073, %v1070
        %v1075 = vpop.permute.xlu0 %1074
        %1078 = vset.pattern.permute.xlu0 0
        %1079 = vperm.xlu0 %1078, %v1071
        %v1080 = vpop.permute.xlu0 %1079
        %vm1082 = vcmask 203776
        %v1084 = vsel %vm1082, %v1068, 0
        %v1087 = vsel %vm1082, %v1069, 0
        %v1089 = vsel %vm863, %v1057, 0
        %v1091 = vsel %vm863, %v1058, 0
        %v1093 = vsel %vm863, %v1059, 0
        %v1095 = vsel %vm863, %v1060, 0
        %v1097 = vsel %vm863, %v1061, 0
        %v1099 = vsel %vm863, %v1050, 0
        %1101 = vmatpush.msra.mxu0 0.0
        %1102 = vmatpush.msra.mxu0 0.0
        %1103 = vmatpush.msra.mxu0 0.0
        %1104 = vmatpush.msra.mxu0 0.0
        %1105 = vmatpush.msra.mxu0 0.0
        %1106 = vmatpush.msra.mxu0 0.0
        %1107 = vmatpush.msra.mxu0 0.0
        %1108 = vmatpush.msra.mxu0 0.0
        %1109 = vmatpush.msra.mxu0 0.0
        %1110 = vmatpush.msra.mxu0 0.0
        %1111 = vmatpush.msra.mxu0 0.0
        %1112 = vmatpush.msra.mxu0 0.0
        %1113 = vmatpush.msra.mxu0 %v1089
        %1114 = vmatpush.msra.mxu0 %v1052
        %1115 = vmatpush.msra.mxu0 %v948
        %1116 = vmatpush.msra.mxu0 %v906
        %1117 = vmatmul.f32.gmra.mxu0 %v1084
        %v1118 = vpop.f32.mrf.mxu0
        %v1119 = vadd.f32 %v1075, %v1118
        %1120 = vmatmul.f32.gmra.mxu0 %v1087
        %v1121 = vpop.f32.mrf.mxu0
        %v1122 = vadd.f32 %v1080, %v1121
        %1123 = vdwg.mxu0
        %1124 = vmatpush.msra.mxu0 0.0
        %1125 = vmatpush.msra.mxu0 0.0
        %1126 = vmatpush.msra.mxu0 0.0
        %1127 = vmatpush.msra.mxu0 0.0
        %1128 = vmatpush.msra.mxu0 0.0
        %1129 = vmatpush.msra.mxu0 0.0
        %1130 = vmatpush.msra.mxu0 0.0
        %1131 = vmatpush.msra.mxu0 0.0
        %1132 = vmatpush.msra.mxu0 0.0
        %1133 = vmatpush.msra.mxu0 0.0
        %1134 = vmatpush.msra.mxu0 0.0
        %1135 = vmatpush.msra.mxu0 0.0
        %1136 = vmatpush.msra.mxu0 %v1091
        %1137 = vmatpush.msra.mxu0 %v1053
        %1138 = vmatpush.msra.mxu0 %v949
        %1139 = vmatpush.msra.mxu0 %v907
        %1140 = vmatmul.f32.gmra.mxu0 %v1084
        %v1141 = vpop.f32.mrf.mxu0
        %v1142 = vadd.f32 %v1075, %v1141
        %1143 = vmatmul.f32.gmra.mxu0 %v1087
        %v1144 = vpop.f32.mrf.mxu0
        %v1145 = vadd.f32 %v1080, %v1144
        %1146 = vdwg.mxu0
        %1147 = vmatpush.msra.mxu0 0.0
        %1148 = vmatpush.msra.mxu0 0.0
        %1149 = vmatpush.msra.mxu0 0.0
        %1150 = vmatpush.msra.mxu0 0.0
        %1151 = vmatpush.msra.mxu0 0.0
        %1152 = vmatpush.msra.mxu0 0.0
        %1153 = vmatpush.msra.mxu0 0.0
        %1154 = vmatpush.msra.mxu0 0.0
        %1155 = vmatpush.msra.mxu0 0.0
        %1156 = vmatpush.msra.mxu0 0.0
        %1157 = vmatpush.msra.mxu0 0.0
        %1158 = vmatpush.msra.mxu0 0.0
        %1159 = vmatpush.msra.mxu0 %v1093
        %1160 = vmatpush.msra.mxu0 %v1054
        %1161 = vmatpush.msra.mxu0 %v950
        %1162 = vmatpush.msra.mxu0 %v908
        %1163 = vmatmul.f32.gmra.mxu0 %v1084
        %v1164 = vpop.f32.mrf.mxu0
        %v1165 = vadd.f32 %v1075, %v1164
        %1166 = vmatmul.f32.gmra.mxu0 %v1087
        %v1167 = vpop.f32.mrf.mxu0
        %v1168 = vadd.f32 %v1080, %v1167
        %1169 = vdwg.mxu0
        %1170 = vmatpush.msra.mxu0 0.0
        %1171 = vmatpush.msra.mxu0 0.0
        %1172 = vmatpush.msra.mxu0 0.0
        %1173 = vmatpush.msra.mxu0 0.0
        %1174 = vmatpush.msra.mxu0 0.0
        %1175 = vmatpush.msra.mxu0 0.0
        %1176 = vmatpush.msra.mxu0 0.0
        %1177 = vmatpush.msra.mxu0 0.0
        %1178 = vmatpush.msra.mxu0 0.0
        %1179 = vmatpush.msra.mxu0 0.0
        %1180 = vmatpush.msra.mxu0 0.0
        %1181 = vmatpush.msra.mxu0 0.0
        %1182 = vmatpush.msra.mxu0 %v1095
        %1183 = vmatpush.msra.mxu0 %v1055
        %1184 = vmatpush.msra.mxu0 %v951
        %1185 = vmatpush.msra.mxu0 %v909
        %1186 = vmatmul.f32.gmra.mxu0 %v1084
        %v1187 = vpop.f32.mrf.mxu0
        %v1188 = vadd.f32 %v1075, %v1187
        %1189 = vmatmul.f32.gmra.mxu0 %v1087
        %v1190 = vpop.f32.mrf.mxu0
        %v1191 = vadd.f32 %v1080, %v1190
        %1192 = vdwg.mxu0
        %1193 = vmatpush.msra.mxu0 0.0
        %1194 = vmatpush.msra.mxu0 0.0
        %1195 = vmatpush.msra.mxu0 0.0
        %1196 = vmatpush.msra.mxu0 0.0
        %1197 = vmatpush.msra.mxu0 0.0
        %1198 = vmatpush.msra.mxu0 0.0
        %1199 = vmatpush.msra.mxu0 0.0
        %1200 = vmatpush.msra.mxu0 0.0
        %1201 = vmatpush.msra.mxu0 0.0
        %1202 = vmatpush.msra.mxu0 0.0
        %1203 = vmatpush.msra.mxu0 0.0
        %1204 = vmatpush.msra.mxu0 0.0
        %1205 = vmatpush.msra.mxu0 %v1097
        %1206 = vmatpush.msra.mxu0 %v1056
        %1207 = vmatpush.msra.mxu0 %v952
        %1208 = vmatpush.msra.mxu0 %v910
        %1209 = vmatmul.f32.gmra.mxu0 %v1084
        %v1210 = vpop.f32.mrf.mxu0
        %v1211 = vadd.f32 %v1075, %v1210
        %1212 = vmatmul.f32.gmra.mxu0 %v1087
        %v1213 = vpop.f32.mrf.mxu0
        %v1214 = vadd.f32 %v1080, %v1213
        %1215 = vdwg.mxu0
        %1216 = vmatpush.msra.mxu0 0.0
        %1217 = vmatpush.msra.mxu0 0.0
        %1218 = vmatpush.msra.mxu0 0.0
        %1219 = vmatpush.msra.mxu0 0.0
        %1220 = vmatpush.msra.mxu0 0.0
        %1221 = vmatpush.msra.mxu0 0.0
        %1222 = vmatpush.msra.mxu0 0.0
        %1223 = vmatpush.msra.mxu0 0.0
        %1224 = vmatpush.msra.mxu0 0.0
        %1225 = vmatpush.msra.mxu0 0.0
        %1226 = vmatpush.msra.mxu0 0.0
        %1227 = vmatpush.msra.mxu0 0.0
        %1228 = vmatpush.msra.mxu0 %v1099
        %1229 = vmatpush.msra.mxu0 %v1038
        %1230 = vmatpush.msra.mxu0 %v953
        %1231 = vmatpush.msra.mxu0 %v911
        %1232 = vmatmul.f32.gmra.mxu0 %v1084
        %v1233 = vpop.f32.mrf.mxu0
        %v1234 = vadd.f32 %v1075, %v1233
        %1235 = vmatmul.f32.gmra.mxu0 %v1087
        %v1236 = vpop.f32.mrf.mxu0
        %v1237 = vadd.f32 %v1080, %v1236
        %1238 = vdwg.mxu0
        %v1239 = vmax.f32 %v1119, 0.0
        %v1240 = vmax.f32 %v1142, 0.0
        %v1241 = vmax.f32 %v1165, 0.0
        %v1242 = vmax.f32 %v1188, 0.0
        %v1243 = vmax.f32 %v1211, 0.0
        %v1244 = vmax.f32 %v1234, 0.0
        %v1245 = vmax.f32 %v1122, 0.0
        %v1246 = vmax.f32 %v1145, 0.0
        %v1247 = vmax.f32 %v1168, 0.0
        %v1248 = vmax.f32 %v1191, 0.0
        %v1249 = vmax.f32 %v1214, 0.0
        %v1250 = vmax.f32 %v1237, 0.0
        %1253 = vrot.lane.b32.xlu0 %v1239, 100
        %v1254 = vpop.permute.xlu0 %1253
        %1255 = vrot.lane.b32.xlu0 %v1245, 100
        %v1256 = vpop.permute.xlu0 %1255
        %v1259 = vmax.f32 %v1239, %v1254
        %v1260 = vmax.f32 %v1245, %v1256
        %1263 = vrot.lane.b32.xlu0 %v1259, 127
        %v1264 = vpop.permute.xlu0 %1263
        %1265 = vrot.lane.b32.xlu0 %v1260, 127
        %v1266 = vpop.permute.xlu0 %1265
        %v1269 = vmax.f32 %v1259, %v1264
        %v1270 = vmax.f32 %v1260, %v1266
        %1273 = vrot.lane.b32.xlu0 %v1269, 1
        %v1274 = vpop.permute.xlu0 %1273
        %1275 = vrot.lane.b32.xlu0 %v1270, 1
        %v1276 = vpop.permute.xlu0 %1275
        %1279 = vrot.lane.b32.xlu0 %v1269, 127
        %v1280 = vpop.permute.xlu0 %1279
        %1281 = vrot.lane.b32.xlu0 %v1270, 127
        %v1282 = vpop.permute.xlu0 %1281
        %1285 = vrot.lane.b32.xlu0 %v1269, 126
        %v1286 = vpop.permute.xlu0 %1285
        %1287 = vrot.lane.b32.xlu0 %v1270, 126
        %v1288 = vpop.permute.xlu0 %1287
        %1291 = vrot.lane.b32.xlu0 %v1269, 125
        %v1292 = vpop.permute.xlu0 %1291
        %1293 = vrot.lane.b32.xlu0 %v1270, 125
        %v1294 = vpop.permute.xlu0 %1293
        %1297 = vrot.lane.b32.xlu0 %v1269, 124
        %v1298 = vpop.permute.xlu0 %1297
        %1299 = vrot.lane.b32.xlu0 %v1270, 124
        %v1300 = vpop.permute.xlu0 %1299
        %1303 = vrot.lane.b32.xlu0 %v1269, 123
        %v1304 = vpop.permute.xlu0 %1303
        %1305 = vrot.lane.b32.xlu0 %v1270, 123
        %v1306 = vpop.permute.xlu0 %1305
        %1309 = vrot.lane.b32.xlu0 %v1269, 122
        %v1310 = vpop.permute.xlu0 %1309
        %1311 = vrot.lane.b32.xlu0 %v1270, 122
        %v1312 = vpop.permute.xlu0 %1311
        %1315 = vrot.lane.b32.xlu0 %v1269, 121
        %v1316 = vpop.permute.xlu0 %1315
        %1317 = vrot.lane.b32.xlu0 %v1270, 121
        %v1318 = vpop.permute.xlu0 %1317
        %1321 = vrot.lane.b32.xlu0 %v1269, 120
        %v1322 = vpop.permute.xlu0 %1321
        %1323 = vrot.lane.b32.xlu0 %v1270, 120
        %v1324 = vpop.permute.xlu0 %1323
        %1327 = vrot.lane.b32.xlu0 %v1269, 119
        %v1328 = vpop.permute.xlu0 %1327
        %1329 = vrot.lane.b32.xlu0 %v1270, 119
        %v1330 = vpop.permute.xlu0 %1329
        %1333 = vrot.lane.b32.xlu0 %v1269, 118
        %v1334 = vpop.permute.xlu0 %1333
        %1335 = vrot.lane.b32.xlu0 %v1270, 118
        %v1336 = vpop.permute.xlu0 %1335
        %vm1339 = vcmask 7168
        %v1340 = vsel %vm1339, 0.0, %v1274
        %v1341 = vsel %vm1339, 0.0, %v1276
        %vm1342 = vcmask 15360
        %v1343 = vsel %vm1342, %v1340, %v1269
        %v1344 = vsel %vm1342, %v1341, %v1270
        %vm1345 = vcmask 23552
        %v1346 = vsel %vm1345, %v1343, %v1280
        %v1347 = vsel %vm1345, %v1344, %v1282
        %vm1348 = vcmask 31744
        %v1349 = vsel %vm1348, %v1346, %v1286
        %v1350 = vsel %vm1348, %v1347, %v1288
        %vm1351 = vcmask 39936
        %v1352 = vsel %vm1351, %v1349, %v1292
        %v1353 = vsel %vm1351, %v1350, %v1294
        %vm1354 = vcmask 48128
        %v1355 = vsel %vm1354, %v1352, %v1298
        %v1356 = vsel %vm1354, %v1353, %v1300
        %vm1357 = vcmask 56320
        %v1358 = vsel %vm1357, %v1355, %v1304
        %v1359 = vsel %vm1357, %v1356, %v1306
        %vm1360 = vcmask 64512
        %v1361 = vsel %vm1360, %v1358, %v1310
        %v1362 = vsel %vm1360, %v1359, %v1312
        %vm1363 = vcmask 72704
        %v1364 = vsel %vm1363, %v1361, %v1316
        %v1365 = vsel %vm1363, %v1362, %v1318
        %vm1366 = vcmask 80896
        %v1367 = vsel %vm1366, %v1364, %v1322
        %v1368 = vsel %vm1366, %v1365, %v1324
        %vm1369 = vcmask 89088
        %v1370 = vsel %vm1369, %v1367, %v1328
        %v1371 = vsel %vm1369, %v1368, %v1330
        %vm1372 = vcmask 97280
        %v1373 = vsel %vm1372, %v1370, %v1334
        %v1374 = vsel %vm1372, %v1371, %v1336
        %vm1375 = vcmask 105472
        %v1376 = vsel %vm1375, %v1373, 0.0
        %v1377 = vsel %vm1375, %v1374, 0.0
        %1378 = vrot.lane.b32.xlu0 %v1269, 73
        %v1379 = vpop.permute.xlu0 %1378
        %1380 = vrot.lane.b32.xlu0 %v1270, 73
        %v1381 = vpop.permute.xlu0 %1380
        %1384 = vrot.lane.b32.xlu0 %v1269, 72
        %v1385 = vpop.permute.xlu0 %1384
        %1386 = vrot.lane.b32.xlu0 %v1270, 72
        %v1387 = vpop.permute.xlu0 %1386
        %1390 = vrot.lane.b32.xlu0 %v1269, 71
        %v1391 = vpop.permute.xlu0 %1390
        %1392 = vrot.lane.b32.xlu0 %v1270, 71
        %v1393 = vpop.permute.xlu0 %1392
        %1396 = vrot.lane.b32.xlu0 %v1269, 70
        %v1397 = vpop.permute.xlu0 %1396
        %1398 = vrot.lane.b32.xlu0 %v1270, 70
        %v1399 = vpop.permute.xlu0 %1398
        %1402 = vrot.lane.b32.xlu0 %v1269, 69
        %v1403 = vpop.permute.xlu0 %1402
        %1404 = vrot.lane.b32.xlu0 %v1270, 69
        %v1405 = vpop.permute.xlu0 %1404
        %1408 = vrot.lane.b32.xlu0 %v1269, 68
        %v1409 = vpop.permute.xlu0 %1408
        %1410 = vrot.lane.b32.xlu0 %v1270, 68
        %v1411 = vpop.permute.xlu0 %1410
        %1414 = vrot.lane.b32.xlu0 %v1269, 67
        %v1415 = vpop.permute.xlu0 %1414
        %1416 = vrot.lane.b32.xlu0 %v1270, 67
        %v1417 = vpop.permute.xlu0 %1416
        %1420 = vrot.lane.b32.xlu0 %v1269, 66
        %v1421 = vpop.permute.xlu0 %1420
        %1422 = vrot.lane.b32.xlu0 %v1270, 66
        %v1423 = vpop.permute.xlu0 %1422
        %1426 = vrot.lane.b32.xlu0 %v1269, 65
        %v1427 = vpop.permute.xlu0 %1426
        %1428 = vrot.lane.b32.xlu0 %v1270, 65
        %v1429 = vpop.permute.xlu0 %1428
        %1432 = vrot.lane.b32.xlu0 %v1269, 64
        %v1433 = vpop.permute.xlu0 %1432
        %1434 = vrot.lane.b32.xlu0 %v1270, 64
        %v1435 = vpop.permute.xlu0 %1434
        %1438 = vrot.lane.b32.xlu0 %v1269, 63
        %v1439 = vpop.permute.xlu0 %1438
        %1440 = vrot.lane.b32.xlu0 %v1270, 63
        %v1441 = vpop.permute.xlu0 %1440
        %1444 = vrot.lane.b32.xlu0 %v1269, 62
        %v1445 = vpop.permute.xlu0 %1444
        %1446 = vrot.lane.b32.xlu0 %v1270, 62
        %v1447 = vpop.permute.xlu0 %1446
        %v1450 = vsel %vm1339, 0.0, %v1379
        %v1451 = vsel %vm1339, 0.0, %v1381
        %v1452 = vsel %vm1342, %v1450, %v1385
        %v1453 = vsel %vm1342, %v1451, %v1387
        %v1454 = vsel %vm1345, %v1452, %v1391
        %v1455 = vsel %vm1345, %v1453, %v1393
        %v1456 = vsel %vm1348, %v1454, %v1397
        %v1457 = vsel %vm1348, %v1455, %v1399
        %v1458 = vsel %vm1351, %v1456, %v1403
        %v1459 = vsel %vm1351, %v1457, %v1405
        %v1460 = vsel %vm1354, %v1458, %v1409
        %v1461 = vsel %vm1354, %v1459, %v1411
        %v1462 = vsel %vm1357, %v1460, %v1415
        %v1463 = vsel %vm1357, %v1461, %v1417
        %v1464 = vsel %vm1360, %v1462, %v1421
        %v1465 = vsel %vm1360, %v1463, %v1423
        %v1466 = vsel %vm1363, %v1464, %v1427
        %v1467 = vsel %vm1363, %v1465, %v1429
        %v1468 = vsel %vm1366, %v1466, %v1433
        %v1469 = vsel %vm1366, %v1467, %v1435
        %v1470 = vsel %vm1369, %v1468, %v1439
        %v1471 = vsel %vm1369, %v1469, %v1441
        %v1472 = vsel %vm1372, %v1470, %v1445
        %v1473 = vsel %vm1372, %v1471, %v1447
        %v1474 = vsel %vm1375, %v1472, 0.0
        %v1475 = vsel %vm1375, %v1473, 0.0
        %1478 = vrot.lane.b32.xlu0 %v1240, 100
        %v1479 = vpop.permute.xlu0 %1478
        %1480 = vrot.lane.b32.xlu0 %v1246, 100
        %v1481 = vpop.permute.xlu0 %1480
        %v1484 = vmax.f32 %v1239, %v1479
        %v1485 = vmax.f32 %v1240, %v1479
        %v1486 = vmax.f32 %v1245, %v1481
        %v1487 = vmax.f32 %v1246, %v1481
        %1490 = vrot.lane.b32.xlu0 %v1484, 127
        %v1491 = vpop.permute.xlu0 %1490
        %1492 = vrot.lane.b32.xlu0 %v1486, 127
        %v1493 = vpop.permute.xlu0 %1492
        %v1496 = vmax.f32 %v1484, %v1491
        %v1497 = vmax.f32 %v1486, %v1493
        %1500 = vrot.lane.b32.xlu0 %v1485, 127
        %v1501 = vpop.permute.xlu0 %1500
        %1502 = vrot.lane.b32.xlu0 %v1487, 127
        %v1503 = vpop.permute.xlu0 %1502
        %v1506 = vmax.f32 %v1485, %v1501
        %v1507 = vmax.f32 %v1487, %v1503
        %1510 = vrot.lane.b32.xlu0 %v1496, 17
        %v1511 = vpop.permute.xlu0 %1510
        %1512 = vrot.lane.b32.xlu0 %v1497, 17
        %v1513 = vpop.permute.xlu0 %1512
        %1516 = vrot.lane.b32.xlu0 %v1496, 16
        %v1517 = vpop.permute.xlu0 %1516
        %1518 = vrot.lane.b32.xlu0 %v1497, 16
        %v1519 = vpop.permute.xlu0 %1518
        %1522 = vrot.lane.b32.xlu0 %v1496, 15
        %v1523 = vpop.permute.xlu0 %1522
        %1524 = vrot.lane.b32.xlu0 %v1497, 15
        %v1525 = vpop.permute.xlu0 %1524
        %1528 = vrot.lane.b32.xlu0 %v1496, 14
        %v1529 = vpop.permute.xlu0 %1528
        %1530 = vrot.lane.b32.xlu0 %v1497, 14
        %v1531 = vpop.permute.xlu0 %1530
        %1534 = vrot.lane.b32.xlu0 %v1496, 13
        %v1535 = vpop.permute.xlu0 %1534
        %1536 = vrot.lane.b32.xlu0 %v1497, 13
        %v1537 = vpop.permute.xlu0 %1536
        %1540 = vrot.lane.b32.xlu0 %v1496, 12
        %v1541 = vpop.permute.xlu0 %1540
        %1542 = vrot.lane.b32.xlu0 %v1497, 12
        %v1543 = vpop.permute.xlu0 %1542
        %1546 = vrot.lane.b32.xlu0 %v1496, 11
        %v1547 = vpop.permute.xlu0 %1546
        %1548 = vrot.lane.b32.xlu0 %v1497, 11
        %v1549 = vpop.permute.xlu0 %1548
        %1552 = vrot.lane.b32.xlu0 %v1496, 10
        %v1553 = vpop.permute.xlu0 %1552
        %1554 = vrot.lane.b32.xlu0 %v1497, 10
        %v1555 = vpop.permute.xlu0 %1554
        %1560 = vrot.lane.b32.xlu0 %v1506, 9
        %v1561 = vpop.permute.xlu0 %1560
        %1562 = vrot.lane.b32.xlu0 %v1507, 9
        %v1563 = vpop.permute.xlu0 %1562
        %1566 = vrot.lane.b32.xlu0 %v1506, 8
        %v1567 = vpop.permute.xlu0 %1566
        %1568 = vrot.lane.b32.xlu0 %v1507, 8
        %v1569 = vpop.permute.xlu0 %1568
        %1572 = vrot.lane.b32.xlu0 %v1506, 7
        %v1573 = vpop.permute.xlu0 %1572
        %1574 = vrot.lane.b32.xlu0 %v1507, 7
        %v1575 = vpop.permute.xlu0 %1574
        %1578 = vrot.lane.b32.xlu0 %v1506, 6
        %v1579 = vpop.permute.xlu0 %1578
        %1580 = vrot.lane.b32.xlu0 %v1507, 6
        %v1581 = vpop.permute.xlu0 %1580
        %v1584 = vsel %vm1339, 0.0, %v1511
        %v1585 = vsel %vm1339, 0.0, %v1513
        %v1586 = vsel %vm1342, %v1584, %v1517
        %v1587 = vsel %vm1342, %v1585, %v1519
        %v1588 = vsel %vm1345, %v1586, %v1523
        %v1589 = vsel %vm1345, %v1587, %v1525
        %v1590 = vsel %vm1348, %v1588, %v1529
        %v1591 = vsel %vm1348, %v1589, %v1531
        %v1592 = vsel %vm1351, %v1590, %v1535
        %v1593 = vsel %vm1351, %v1591, %v1537
        %v1594 = vsel %vm1354, %v1592, %v1541
        %v1595 = vsel %vm1354, %v1593, %v1543
        %v1596 = vsel %vm1357, %v1594, %v1547
        %v1597 = vsel %vm1357, %v1595, %v1549
        %v1598 = vsel %vm1360, %v1596, %v1553
        %v1599 = vsel %vm1360, %v1597, %v1555
        %v1600 = vsel %vm1363, %v1598, %v1561
        %v1601 = vsel %vm1363, %v1599, %v1563
        %v1602 = vsel %vm1366, %v1600, %v1567
        %v1603 = vsel %vm1366, %v1601, %v1569
        %v1604 = vsel %vm1369, %v1602, %v1573
        %v1605 = vsel %vm1369, %v1603, %v1575
        %v1606 = vsel %vm1372, %v1604, %v1579
        %v1607 = vsel %vm1372, %v1605, %v1581
        %v1608 = vsel %vm1375, %v1606, 0.0
        %v1609 = vsel %vm1375, %v1607, 0.0
        %1610 = vrot.lane.b32.xlu0 %v1506, 89
        %v1611 = vpop.permute.xlu0 %1610
        %1612 = vrot.lane.b32.xlu0 %v1507, 89
        %v1613 = vpop.permute.xlu0 %1612
        %1616 = vrot.lane.b32.xlu0 %v1506, 88
        %v1617 = vpop.permute.xlu0 %1616
        %1618 = vrot.lane.b32.xlu0 %v1507, 88
        %v1619 = vpop.permute.xlu0 %1618
        %1622 = vrot.lane.b32.xlu0 %v1506, 87
        %v1623 = vpop.permute.xlu0 %1622
        %1624 = vrot.lane.b32.xlu0 %v1507, 87
        %v1625 = vpop.permute.xlu0 %1624
        %1628 = vrot.lane.b32.xlu0 %v1506, 86
        %v1629 = vpop.permute.xlu0 %1628
        %1630 = vrot.lane.b32.xlu0 %v1507, 86
        %v1631 = vpop.permute.xlu0 %1630
        %1634 = vrot.lane.b32.xlu0 %v1506, 85
        %v1635 = vpop.permute.xlu0 %1634
        %1636 = vrot.lane.b32.xlu0 %v1507, 85
        %v1637 = vpop.permute.xlu0 %1636
        %1640 = vrot.lane.b32.xlu0 %v1506, 84
        %v1641 = vpop.permute.xlu0 %1640
        %1642 = vrot.lane.b32.xlu0 %v1507, 84
        %v1643 = vpop.permute.xlu0 %1642
        %1646 = vrot.lane.b32.xlu0 %v1506, 83
        %v1647 = vpop.permute.xlu0 %1646
        %1648 = vrot.lane.b32.xlu0 %v1507, 83
        %v1649 = vpop.permute.xlu0 %1648
        %1652 = vrot.lane.b32.xlu0 %v1506, 82
        %v1653 = vpop.permute.xlu0 %1652
        %1654 = vrot.lane.b32.xlu0 %v1507, 82
        %v1655 = vpop.permute.xlu0 %1654
        %1658 = vrot.lane.b32.xlu0 %v1506, 81
        %v1659 = vpop.permute.xlu0 %1658
        %1660 = vrot.lane.b32.xlu0 %v1507, 81
        %v1661 = vpop.permute.xlu0 %1660
        %1664 = vrot.lane.b32.xlu0 %v1506, 80
        %v1665 = vpop.permute.xlu0 %1664
        %1666 = vrot.lane.b32.xlu0 %v1507, 80
        %v1667 = vpop.permute.xlu0 %1666
        %1670 = vrot.lane.b32.xlu0 %v1506, 79
        %v1671 = vpop.permute.xlu0 %1670
        %1672 = vrot.lane.b32.xlu0 %v1507, 79
        %v1673 = vpop.permute.xlu0 %1672
        %1676 = vrot.lane.b32.xlu0 %v1506, 78
        %v1677 = vpop.permute.xlu0 %1676
        %1678 = vrot.lane.b32.xlu0 %v1507, 78
        %v1679 = vpop.permute.xlu0 %1678
        %v1682 = vsel %vm1339, 0.0, %v1611
        %v1683 = vsel %vm1339, 0.0, %v1613
        %v1684 = vsel %vm1342, %v1682, %v1617
        %v1685 = vsel %vm1342, %v1683, %v1619
        %v1686 = vsel %vm1345, %v1684, %v1623
        %v1687 = vsel %vm1345, %v1685, %v1625
        %v1688 = vsel %vm1348, %v1686, %v1629
        %v1689 = vsel %vm1348, %v1687, %v1631
        %v1690 = vsel %vm1351, %v1688, %v1635
        %v1691 = vsel %vm1351, %v1689, %v1637
        %v1692 = vsel %vm1354, %v1690, %v1641
        %v1693 = vsel %vm1354, %v1691, %v1643
        %v1694 = vsel %vm1357, %v1692, %v1647
        %v1695 = vsel %vm1357, %v1693, %v1649
        %v1696 = vsel %vm1360, %v1694, %v1653
        %v1697 = vsel %vm1360, %v1695, %v1655
        %v1698 = vsel %vm1363, %v1696, %v1659
        %v1699 = vsel %vm1363, %v1697, %v1661
        %v1700 = vsel %vm1366, %v1698, %v1665
        %v1701 = vsel %vm1366, %v1699, %v1667
        %v1702 = vsel %vm1369, %v1700, %v1671
        %v1703 = vsel %vm1369, %v1701, %v1673
        %v1704 = vsel %vm1372, %v1702, %v1677
        %v1705 = vsel %vm1372, %v1703, %v1679
        %v1706 = vsel %vm1375, %v1704, 0.0
        %v1707 = vsel %vm1375, %v1705, 0.0
        %1710 = vrot.lane.b32.xlu0 %v1241, 100
        %v1711 = vpop.permute.xlu0 %1710
        %1712 = vrot.lane.b32.xlu0 %v1247, 100
        %v1713 = vpop.permute.xlu0 %1712
        %v1714 = vsel %vm611, %v1479, %v1711
        %v1715 = vsel %vm611, %v1481, %v1713
        %v1718 = vmax.f32 %v1240, %v1714
        %v1719 = vmax.f32 %v1246, %v1715
        %1722 = vrot.lane.b32.xlu0 %v1718, 127
        %v1723 = vpop.permute.xlu0 %1722
        %1724 = vrot.lane.b32.xlu0 %v1719, 127
        %v1725 = vpop.permute.xlu0 %1724
        %v1728 = vmax.f32 %v1718, %v1723
        %v1729 = vmax.f32 %v1719, %v1725
        %1732 = vrot.lane.b32.xlu0 %v1728, 33
        %v1733 = vpop.permute.xlu0 %1732
        %1734 = vrot.lane.b32.xlu0 %v1729, 33
        %v1735 = vpop.permute.xlu0 %1734
        %1738 = vrot.lane.b32.xlu0 %v1728, 32
        %v1739 = vpop.permute.xlu0 %1738
        %1740 = vrot.lane.b32.xlu0 %v1729, 32
        %v1741 = vpop.permute.xlu0 %1740
        %1744 = vrot.lane.b32.xlu0 %v1728, 31
        %v1745 = vpop.permute.xlu0 %1744
        %1746 = vrot.lane.b32.xlu0 %v1729, 31
        %v1747 = vpop.permute.xlu0 %1746
        %1750 = vrot.lane.b32.xlu0 %v1728, 30
        %v1751 = vpop.permute.xlu0 %1750
        %1752 = vrot.lane.b32.xlu0 %v1729, 30
        %v1753 = vpop.permute.xlu0 %1752
        %1756 = vrot.lane.b32.xlu0 %v1728, 29
        %v1757 = vpop.permute.xlu0 %1756
        %1758 = vrot.lane.b32.xlu0 %v1729, 29
        %v1759 = vpop.permute.xlu0 %1758
        %1762 = vrot.lane.b32.xlu0 %v1728, 28
        %v1763 = vpop.permute.xlu0 %1762
        %1764 = vrot.lane.b32.xlu0 %v1729, 28
        %v1765 = vpop.permute.xlu0 %1764
        %1768 = vrot.lane.b32.xlu0 %v1728, 27
        %v1769 = vpop.permute.xlu0 %1768
        %1770 = vrot.lane.b32.xlu0 %v1729, 27
        %v1771 = vpop.permute.xlu0 %1770
        %1774 = vrot.lane.b32.xlu0 %v1728, 26
        %v1775 = vpop.permute.xlu0 %1774
        %1776 = vrot.lane.b32.xlu0 %v1729, 26
        %v1777 = vpop.permute.xlu0 %1776
        %1780 = vrot.lane.b32.xlu0 %v1728, 25
        %v1781 = vpop.permute.xlu0 %1780
        %1782 = vrot.lane.b32.xlu0 %v1729, 25
        %v1783 = vpop.permute.xlu0 %1782
        %1786 = vrot.lane.b32.xlu0 %v1728, 24
        %v1787 = vpop.permute.xlu0 %1786
        %1788 = vrot.lane.b32.xlu0 %v1729, 24
        %v1789 = vpop.permute.xlu0 %1788
        %1792 = vrot.lane.b32.xlu0 %v1728, 23
        %v1793 = vpop.permute.xlu0 %1792
        %1794 = vrot.lane.b32.xlu0 %v1729, 23
        %v1795 = vpop.permute.xlu0 %1794
        %1798 = vrot.lane.b32.xlu0 %v1728, 22
        %v1799 = vpop.permute.xlu0 %1798
        %1800 = vrot.lane.b32.xlu0 %v1729, 22
        %v1801 = vpop.permute.xlu0 %1800
        %v1804 = vsel %vm1339, 0.0, %v1733
        %v1805 = vsel %vm1339, 0.0, %v1735
        %v1806 = vsel %vm1342, %v1804, %v1739
        %v1807 = vsel %vm1342, %v1805, %v1741
        %v1808 = vsel %vm1345, %v1806, %v1745
        %v1809 = vsel %vm1345, %v1807, %v1747
        %v1810 = vsel %vm1348, %v1808, %v1751
        %v1811 = vsel %vm1348, %v1809, %v1753
        %v1812 = vsel %vm1351, %v1810, %v1757
        %v1813 = vsel %vm1351, %v1811, %v1759
        %v1814 = vsel %vm1354, %v1812, %v1763
        %v1815 = vsel %vm1354, %v1813, %v1765
        %v1816 = vsel %vm1357, %v1814, %v1769
        %v1817 = vsel %vm1357, %v1815, %v1771
        %v1818 = vsel %vm1360, %v1816, %v1775
        %v1819 = vsel %vm1360, %v1817, %v1777
        %v1820 = vsel %vm1363, %v1818, %v1781
        %v1821 = vsel %vm1363, %v1819, %v1783
        %v1822 = vsel %vm1366, %v1820, %v1787
        %v1823 = vsel %vm1366, %v1821, %v1789
        %v1824 = vsel %vm1369, %v1822, %v1793
        %v1825 = vsel %vm1369, %v1823, %v1795
        %v1826 = vsel %vm1372, %v1824, %v1799
        %v1827 = vsel %vm1372, %v1825, %v1801
        %v1828 = vsel %vm1375, %v1826, 0.0
        %v1829 = vsel %vm1375, %v1827, 0.0
        %v1832 = vmax.f32 %v1241, %v1711
        %v1833 = vmax.f32 %v1247, %v1713
        %1836 = vrot.lane.b32.xlu0 %v1832, 127
        %v1837 = vpop.permute.xlu0 %1836
        %1838 = vrot.lane.b32.xlu0 %v1833, 127
        %v1839 = vpop.permute.xlu0 %1838
        %v1842 = vmax.f32 %v1832, %v1837
        %v1843 = vmax.f32 %v1833, %v1839
        %1846 = vrot.lane.b32.xlu0 %v1842, 105
        %v1847 = vpop.permute.xlu0 %1846
        %1848 = vrot.lane.b32.xlu0 %v1843, 105
        %v1849 = vpop.permute.xlu0 %1848
        %1852 = vrot.lane.b32.xlu0 %v1842, 104
        %v1853 = vpop.permute.xlu0 %1852
        %1854 = vrot.lane.b32.xlu0 %v1843, 104
        %v1855 = vpop.permute.xlu0 %1854
        %1858 = vrot.lane.b32.xlu0 %v1842, 103
        %v1859 = vpop.permute.xlu0 %1858
        %1860 = vrot.lane.b32.xlu0 %v1843, 103
        %v1861 = vpop.permute.xlu0 %1860
        %1864 = vrot.lane.b32.xlu0 %v1842, 102
        %v1865 = vpop.permute.xlu0 %1864
        %1866 = vrot.lane.b32.xlu0 %v1843, 102
        %v1867 = vpop.permute.xlu0 %1866
        %1870 = vrot.lane.b32.xlu0 %v1842, 101
        %v1871 = vpop.permute.xlu0 %1870
        %1872 = vrot.lane.b32.xlu0 %v1843, 101
        %v1873 = vpop.permute.xlu0 %1872
        %1876 = vrot.lane.b32.xlu0 %v1842, 100
        %v1877 = vpop.permute.xlu0 %1876
        %1878 = vrot.lane.b32.xlu0 %v1843, 100
        %v1879 = vpop.permute.xlu0 %1878
        %1882 = vrot.lane.b32.xlu0 %v1842, 99
        %v1883 = vpop.permute.xlu0 %1882
        %1884 = vrot.lane.b32.xlu0 %v1843, 99
        %v1885 = vpop.permute.xlu0 %1884
        %1888 = vrot.lane.b32.xlu0 %v1842, 98
        %v1889 = vpop.permute.xlu0 %1888
        %1890 = vrot.lane.b32.xlu0 %v1843, 98
        %v1891 = vpop.permute.xlu0 %1890
        %1894 = vrot.lane.b32.xlu0 %v1842, 97
        %v1895 = vpop.permute.xlu0 %1894
        %1896 = vrot.lane.b32.xlu0 %v1843, 97
        %v1897 = vpop.permute.xlu0 %1896
        %1900 = vrot.lane.b32.xlu0 %v1842, 96
        %v1901 = vpop.permute.xlu0 %1900
        %1902 = vrot.lane.b32.xlu0 %v1843, 96
        %v1903 = vpop.permute.xlu0 %1902
        %1906 = vrot.lane.b32.xlu0 %v1842, 95
        %v1907 = vpop.permute.xlu0 %1906
        %1908 = vrot.lane.b32.xlu0 %v1843, 95
        %v1909 = vpop.permute.xlu0 %1908
        %1912 = vrot.lane.b32.xlu0 %v1842, 94
        %v1913 = vpop.permute.xlu0 %1912
        %1914 = vrot.lane.b32.xlu0 %v1843, 94
        %v1915 = vpop.permute.xlu0 %1914
        %v1918 = vsel %vm1339, 0.0, %v1847
        %v1919 = vsel %vm1339, 0.0, %v1849
        %v1920 = vsel %vm1342, %v1918, %v1853
        %v1921 = vsel %vm1342, %v1919, %v1855
        %v1922 = vsel %vm1345, %v1920, %v1859
        %v1923 = vsel %vm1345, %v1921, %v1861
        %v1924 = vsel %vm1348, %v1922, %v1865
        %v1925 = vsel %vm1348, %v1923, %v1867
        %v1926 = vsel %vm1351, %v1924, %v1871
        %v1927 = vsel %vm1351, %v1925, %v1873
        %v1928 = vsel %vm1354, %v1926, %v1877
        %v1929 = vsel %vm1354, %v1927, %v1879
        %v1930 = vsel %vm1357, %v1928, %v1883
        %v1931 = vsel %vm1357, %v1929, %v1885
        %v1932 = vsel %vm1360, %v1930, %v1889
        %v1933 = vsel %vm1360, %v1931, %v1891
        %v1934 = vsel %vm1363, %v1932, %v1895
        %v1935 = vsel %vm1363, %v1933, %v1897
        %v1936 = vsel %vm1366, %v1934, %v1901
        %v1937 = vsel %vm1366, %v1935, %v1903
        %v1938 = vsel %vm1369, %v1936, %v1907
        %v1939 = vsel %vm1369, %v1937, %v1909
        %v1940 = vsel %vm1372, %v1938, %v1913
        %v1941 = vsel %vm1372, %v1939, %v1915
        %v1942 = vsel %vm1375, %v1940, 0.0
        %v1943 = vsel %vm1375, %v1941, 0.0
        %1946 = vrot.lane.b32.xlu0 %v1242, 100
        %v1947 = vpop.permute.xlu0 %1946
        %1948 = vrot.lane.b32.xlu0 %v1248, 100
        %v1949 = vpop.permute.xlu0 %1948
        %v1950 = vsel %vm611, %v1711, %v1947
        %v1951 = vsel %vm611, %v1713, %v1949
        %v1954 = vmax.f32 %v1241, %v1950
        %v1955 = vmax.f32 %v1247, %v1951
        %1958 = vrot.lane.b32.xlu0 %v1954, 127
        %v1959 = vpop.permute.xlu0 %1958
        %1960 = vrot.lane.b32.xlu0 %v1955, 127
        %v1961 = vpop.permute.xlu0 %1960
        %v1964 = vmax.f32 %v1954, %v1959
        %v1965 = vmax.f32 %v1955, %v1961
        %1968 = vrot.lane.b32.xlu0 %v1964, 49
        %v1969 = vpop.permute.xlu0 %1968
        %1970 = vrot.lane.b32.xlu0 %v1965, 49
        %v1971 = vpop.permute.xlu0 %1970
        %1974 = vrot.lane.b32.xlu0 %v1964, 48
        %v1975 = vpop.permute.xlu0 %1974
        %1976 = vrot.lane.b32.xlu0 %v1965, 48
        %v1977 = vpop.permute.xlu0 %1976
        %1980 = vrot.lane.b32.xlu0 %v1964, 47
        %v1981 = vpop.permute.xlu0 %1980
        %1982 = vrot.lane.b32.xlu0 %v1965, 47
        %v1983 = vpop.permute.xlu0 %1982
        %1986 = vrot.lane.b32.xlu0 %v1964, 46
        %v1987 = vpop.permute.xlu0 %1986
        %1988 = vrot.lane.b32.xlu0 %v1965, 46
        %v1989 = vpop.permute.xlu0 %1988
        %1992 = vrot.lane.b32.xlu0 %v1964, 45
        %v1993 = vpop.permute.xlu0 %1992
        %1994 = vrot.lane.b32.xlu0 %v1965, 45
        %v1995 = vpop.permute.xlu0 %1994
        %1998 = vrot.lane.b32.xlu0 %v1964, 44
        %v1999 = vpop.permute.xlu0 %1998
        %2000 = vrot.lane.b32.xlu0 %v1965, 44
        %v2001 = vpop.permute.xlu0 %2000
        %2004 = vrot.lane.b32.xlu0 %v1964, 43
        %v2005 = vpop.permute.xlu0 %2004
        %2006 = vrot.lane.b32.xlu0 %v1965, 43
        %v2007 = vpop.permute.xlu0 %2006
        %2010 = vrot.lane.b32.xlu0 %v1964, 42
        %v2011 = vpop.permute.xlu0 %2010
        %2012 = vrot.lane.b32.xlu0 %v1965, 42
        %v2013 = vpop.permute.xlu0 %2012
        %2016 = vrot.lane.b32.xlu0 %v1964, 41
        %v2017 = vpop.permute.xlu0 %2016
        %2018 = vrot.lane.b32.xlu0 %v1965, 41
        %v2019 = vpop.permute.xlu0 %2018
        %2022 = vrot.lane.b32.xlu0 %v1964, 40
        %v2023 = vpop.permute.xlu0 %2022
        %2024 = vrot.lane.b32.xlu0 %v1965, 40
        %v2025 = vpop.permute.xlu0 %2024
        %2028 = vrot.lane.b32.xlu0 %v1964, 39
        %v2029 = vpop.permute.xlu0 %2028
        %2030 = vrot.lane.b32.xlu0 %v1965, 39
        %v2031 = vpop.permute.xlu0 %2030
        %2034 = vrot.lane.b32.xlu0 %v1964, 38
        %v2035 = vpop.permute.xlu0 %2034
        %2036 = vrot.lane.b32.xlu0 %v1965, 38
        %v2037 = vpop.permute.xlu0 %2036
        %v2040 = vsel %vm1339, 0.0, %v1969
        %v2041 = vsel %vm1339, 0.0, %v1971
        %v2042 = vsel %vm1342, %v2040, %v1975
        %v2043 = vsel %vm1342, %v2041, %v1977
        %v2044 = vsel %vm1345, %v2042, %v1981
        %v2045 = vsel %vm1345, %v2043, %v1983
        %v2046 = vsel %vm1348, %v2044, %v1987
        %v2047 = vsel %vm1348, %v2045, %v1989
        %v2048 = vsel %vm1351, %v2046, %v1993
        %v2049 = vsel %vm1351, %v2047, %v1995
        %v2050 = vsel %vm1354, %v2048, %v1999
        %v2051 = vsel %vm1354, %v2049, %v2001
        %v2052 = vsel %vm1357, %v2050, %v2005
        %v2053 = vsel %vm1357, %v2051, %v2007
        %v2054 = vsel %vm1360, %v2052, %v2011
        %v2055 = vsel %vm1360, %v2053, %v2013
        %v2056 = vsel %vm1363, %v2054, %v2017
        %v2057 = vsel %vm1363, %v2055, %v2019
        %v2058 = vsel %vm1366, %v2056, %v2023
        %v2059 = vsel %vm1366, %v2057, %v2025
        %v2060 = vsel %vm1369, %v2058, %v2029
        %v2061 = vsel %vm1369, %v2059, %v2031
        %v2062 = vsel %vm1372, %v2060, %v2035
        %v2063 = vsel %vm1372, %v2061, %v2037
        %v2064 = vsel %vm1375, %v2062, 0.0
        %v2065 = vsel %vm1375, %v2063, 0.0
        %v2068 = vmax.f32 %v1242, %v1947
        %v2069 = vmax.f32 %v1248, %v1949
        %2072 = vrot.lane.b32.xlu0 %v2068, 127
        %v2073 = vpop.permute.xlu0 %2072
        %2074 = vrot.lane.b32.xlu0 %v2069, 127
        %v2075 = vpop.permute.xlu0 %2074
        %v2078 = vmax.f32 %v2068, %v2073
        %v2079 = vmax.f32 %v2069, %v2075
        %2082 = vrot.lane.b32.xlu0 %v2078, 121
        %v2083 = vpop.permute.xlu0 %2082
        %2084 = vrot.lane.b32.xlu0 %v2079, 121
        %v2085 = vpop.permute.xlu0 %2084
        %2088 = vrot.lane.b32.xlu0 %v2078, 120
        %v2089 = vpop.permute.xlu0 %2088
        %2090 = vrot.lane.b32.xlu0 %v2079, 120
        %v2091 = vpop.permute.xlu0 %2090
        %2094 = vrot.lane.b32.xlu0 %v2078, 119
        %v2095 = vpop.permute.xlu0 %2094
        %2096 = vrot.lane.b32.xlu0 %v2079, 119
        %v2097 = vpop.permute.xlu0 %2096
        %2100 = vrot.lane.b32.xlu0 %v2078, 118
        %v2101 = vpop.permute.xlu0 %2100
        %2102 = vrot.lane.b32.xlu0 %v2079, 118
        %v2103 = vpop.permute.xlu0 %2102
        %2106 = vrot.lane.b32.xlu0 %v2078, 117
        %v2107 = vpop.permute.xlu0 %2106
        %2108 = vrot.lane.b32.xlu0 %v2079, 117
        %v2109 = vpop.permute.xlu0 %2108
        %2112 = vrot.lane.b32.xlu0 %v2078, 116
        %v2113 = vpop.permute.xlu0 %2112
        %2114 = vrot.lane.b32.xlu0 %v2079, 116
        %v2115 = vpop.permute.xlu0 %2114
        %2118 = vrot.lane.b32.xlu0 %v2078, 115
        %v2119 = vpop.permute.xlu0 %2118
        %2120 = vrot.lane.b32.xlu0 %v2079, 115
        %v2121 = vpop.permute.xlu0 %2120
        %2124 = vrot.lane.b32.xlu0 %v2078, 114
        %v2125 = vpop.permute.xlu0 %2124
        %2126 = vrot.lane.b32.xlu0 %v2079, 114
        %v2127 = vpop.permute.xlu0 %2126
        %2130 = vrot.lane.b32.xlu0 %v2078, 113
        %v2131 = vpop.permute.xlu0 %2130
        %2132 = vrot.lane.b32.xlu0 %v2079, 113
        %v2133 = vpop.permute.xlu0 %2132
        %2136 = vrot.lane.b32.xlu0 %v2078, 112
        %v2137 = vpop.permute.xlu0 %2136
        %2138 = vrot.lane.b32.xlu0 %v2079, 112
        %v2139 = vpop.permute.xlu0 %2138
        %2142 = vrot.lane.b32.xlu0 %v2078, 111
        %v2143 = vpop.permute.xlu0 %2142
        %2144 = vrot.lane.b32.xlu0 %v2079, 111
        %v2145 = vpop.permute.xlu0 %2144
        %2148 = vrot.lane.b32.xlu0 %v2078, 110
        %v2149 = vpop.permute.xlu0 %2148
        %2150 = vrot.lane.b32.xlu0 %v2079, 110
        %v2151 = vpop.permute.xlu0 %2150
        %v2154 = vsel %vm1339, 0.0, %v2083
        %v2155 = vsel %vm1339, 0.0, %v2085
        %v2156 = vsel %vm1342, %v2154, %v2089
        %v2157 = vsel %vm1342, %v2155, %v2091
        %v2158 = vsel %vm1345, %v2156, %v2095
        %v2159 = vsel %vm1345, %v2157, %v2097
        %v2160 = vsel %vm1348, %v2158, %v2101
        %v2161 = vsel %vm1348, %v2159, %v2103
        %v2162 = vsel %vm1351, %v2160, %v2107
        %v2163 = vsel %vm1351, %v2161, %v2109
        %v2164 = vsel %vm1354, %v2162, %v2113
        %v2165 = vsel %vm1354, %v2163, %v2115
        %v2166 = vsel %vm1357, %v2164, %v2119
        %v2167 = vsel %vm1357, %v2165, %v2121
        %v2168 = vsel %vm1360, %v2166, %v2125
        %v2169 = vsel %vm1360, %v2167, %v2127
        %v2170 = vsel %vm1363, %v2168, %v2131
        %v2171 = vsel %vm1363, %v2169, %v2133
        %v2172 = vsel %vm1366, %v2170, %v2137
        %v2173 = vsel %vm1366, %v2171, %v2139
        %v2174 = vsel %vm1369, %v2172, %v2143
        %v2175 = vsel %vm1369, %v2173, %v2145
        %v2176 = vsel %vm1372, %v2174, %v2149
        %v2177 = vsel %vm1372, %v2175, %v2151
        %v2178 = vsel %vm1375, %v2176, 0.0
        %v2179 = vsel %vm1375, %v2177, 0.0
        %2180 = vrot.lane.b32.xlu0 %v2078, 65
        %v2181 = vpop.permute.xlu0 %2180
        %2182 = vrot.lane.b32.xlu0 %v2079, 65
        %v2183 = vpop.permute.xlu0 %2182
        %2186 = vrot.lane.b32.xlu0 %v2078, 64
        %v2187 = vpop.permute.xlu0 %2186
        %2188 = vrot.lane.b32.xlu0 %v2079, 64
        %v2189 = vpop.permute.xlu0 %2188
        %2192 = vrot.lane.b32.xlu0 %v2078, 63
        %v2193 = vpop.permute.xlu0 %2192
        %2194 = vrot.lane.b32.xlu0 %v2079, 63
        %v2195 = vpop.permute.xlu0 %2194
        %2198 = vrot.lane.b32.xlu0 %v2078, 62
        %v2199 = vpop.permute.xlu0 %2198
        %2200 = vrot.lane.b32.xlu0 %v2079, 62
        %v2201 = vpop.permute.xlu0 %2200
        %2204 = vrot.lane.b32.xlu0 %v2078, 61
        %v2205 = vpop.permute.xlu0 %2204
        %2206 = vrot.lane.b32.xlu0 %v2079, 61
        %v2207 = vpop.permute.xlu0 %2206
        %2210 = vrot.lane.b32.xlu0 %v2078, 60
        %v2211 = vpop.permute.xlu0 %2210
        %2212 = vrot.lane.b32.xlu0 %v2079, 60
        %v2213 = vpop.permute.xlu0 %2212
        %2216 = vrot.lane.b32.xlu0 %v2078, 59
        %v2217 = vpop.permute.xlu0 %2216
        %2218 = vrot.lane.b32.xlu0 %v2079, 59
        %v2219 = vpop.permute.xlu0 %2218
        %2222 = vrot.lane.b32.xlu0 %v2078, 58
        %v2223 = vpop.permute.xlu0 %2222
        %2224 = vrot.lane.b32.xlu0 %v2079, 58
        %v2225 = vpop.permute.xlu0 %2224
        %2228 = vrot.lane.b32.xlu0 %v2078, 57
        %v2229 = vpop.permute.xlu0 %2228
        %2230 = vrot.lane.b32.xlu0 %v2079, 57
        %v2231 = vpop.permute.xlu0 %2230
        %2234 = vrot.lane.b32.xlu0 %v2078, 56
        %v2235 = vpop.permute.xlu0 %2234
        %2236 = vrot.lane.b32.xlu0 %v2079, 56
        %v2237 = vpop.permute.xlu0 %2236
        %2240 = vrot.lane.b32.xlu0 %v2078, 55
        %v2241 = vpop.permute.xlu0 %2240
        %2242 = vrot.lane.b32.xlu0 %v2079, 55
        %v2243 = vpop.permute.xlu0 %2242
        %2246 = vrot.lane.b32.xlu0 %v2078, 54
        %v2247 = vpop.permute.xlu0 %2246
        %2248 = vrot.lane.b32.xlu0 %v2079, 54
        %v2249 = vpop.permute.xlu0 %2248
        %v2252 = vsel %vm1339, 0.0, %v2181
        %v2253 = vsel %vm1339, 0.0, %v2183
        %v2254 = vsel %vm1342, %v2252, %v2187
        %v2255 = vsel %vm1342, %v2253, %v2189
        %v2256 = vsel %vm1345, %v2254, %v2193
        %v2257 = vsel %vm1345, %v2255, %v2195
        %v2258 = vsel %vm1348, %v2256, %v2199
        %v2259 = vsel %vm1348, %v2257, %v2201
        %v2260 = vsel %vm1351, %v2258, %v2205
        %v2261 = vsel %vm1351, %v2259, %v2207
        %v2262 = vsel %vm1354, %v2260, %v2211
        %v2263 = vsel %vm1354, %v2261, %v2213
        %v2264 = vsel %vm1357, %v2262, %v2217
        %v2265 = vsel %vm1357, %v2263, %v2219
        %v2266 = vsel %vm1360, %v2264, %v2223
        %v2267 = vsel %vm1360, %v2265, %v2225
        %v2268 = vsel %vm1363, %v2266, %v2229
        %v2269 = vsel %vm1363, %v2267, %v2231
        %v2270 = vsel %vm1366, %v2268, %v2235
        %v2271 = vsel %vm1366, %v2269, %v2237
        %v2272 = vsel %vm1369, %v2270, %v2241
        %v2273 = vsel %vm1369, %v2271, %v2243
        %v2274 = vsel %vm1372, %v2272, %v2247
        %v2275 = vsel %vm1372, %v2273, %v2249
        %v2276 = vsel %vm1375, %v2274, 0.0
        %v2277 = vsel %vm1375, %v2275, 0.0
        %2280 = vrot.lane.b32.xlu0 %v1243, 100
        %v2281 = vpop.permute.xlu0 %2280
        %2282 = vrot.lane.b32.xlu0 %v1249, 100
        %v2283 = vpop.permute.xlu0 %2282
        %v2286 = vmax.f32 %v1242, %v2281
        %v2287 = vmax.f32 %v1243, %v2281
        %v2288 = vmax.f32 %v1248, %v2283
        %v2289 = vmax.f32 %v1249, %v2283
        %2292 = vrot.lane.b32.xlu0 %v2286, 127
        %v2293 = vpop.permute.xlu0 %2292
        %2294 = vrot.lane.b32.xlu0 %v2288, 127
        %v2295 = vpop.permute.xlu0 %2294
        %v2298 = vmax.f32 %v2286, %v2293
        %v2299 = vmax.f32 %v2288, %v2295
        %2302 = vrot.lane.b32.xlu0 %v2287, 127
        %v2303 = vpop.permute.xlu0 %2302
        %2304 = vrot.lane.b32.xlu0 %v2289, 127
        %v2305 = vpop.permute.xlu0 %2304
        %v2308 = vmax.f32 %v2287, %v2303
        %v2309 = vmax.f32 %v2289, %v2305
        %2312 = vrot.lane.b32.xlu0 %v2298, 9
        %v2313 = vpop.permute.xlu0 %2312
        %2314 = vrot.lane.b32.xlu0 %v2299, 9
        %v2315 = vpop.permute.xlu0 %2314
        %2318 = vrot.lane.b32.xlu0 %v2298, 8
        %v2319 = vpop.permute.xlu0 %2318
        %2320 = vrot.lane.b32.xlu0 %v2299, 8
        %v2321 = vpop.permute.xlu0 %2320
        %2324 = vrot.lane.b32.xlu0 %v2298, 7
        %v2325 = vpop.permute.xlu0 %2324
        %2326 = vrot.lane.b32.xlu0 %v2299, 7
        %v2327 = vpop.permute.xlu0 %2326
        %2330 = vrot.lane.b32.xlu0 %v2298, 6
        %v2331 = vpop.permute.xlu0 %2330
        %2332 = vrot.lane.b32.xlu0 %v2299, 6
        %v2333 = vpop.permute.xlu0 %2332
        %2338 = vrot.lane.b32.xlu0 %v2308, 5
        %v2339 = vpop.permute.xlu0 %2338
        %2340 = vrot.lane.b32.xlu0 %v2309, 5
        %v2341 = vpop.permute.xlu0 %2340
        %2344 = vrot.lane.b32.xlu0 %v2308, 4
        %v2345 = vpop.permute.xlu0 %2344
        %2346 = vrot.lane.b32.xlu0 %v2309, 4
        %v2347 = vpop.permute.xlu0 %2346
        %2350 = vrot.lane.b32.xlu0 %v2308, 3
        %v2351 = vpop.permute.xlu0 %2350
        %2352 = vrot.lane.b32.xlu0 %v2309, 3
        %v2353 = vpop.permute.xlu0 %2352
        %2356 = vrot.lane.b32.xlu0 %v2308, 2
        %v2357 = vpop.permute.xlu0 %2356
        %2358 = vrot.lane.b32.xlu0 %v2309, 2
        %v2359 = vpop.permute.xlu0 %2358
        %2362 = vrot.lane.b32.xlu0 %v2308, 1
        %v2363 = vpop.permute.xlu0 %2362
        %2364 = vrot.lane.b32.xlu0 %v2309, 1
        %v2365 = vpop.permute.xlu0 %2364
        %2368 = vrot.lane.b32.xlu0 %v2308, 127
        %v2369 = vpop.permute.xlu0 %2368
        %2370 = vrot.lane.b32.xlu0 %v2309, 127
        %v2371 = vpop.permute.xlu0 %2370
        %2374 = vrot.lane.b32.xlu0 %v2308, 126
        %v2375 = vpop.permute.xlu0 %2374
        %2376 = vrot.lane.b32.xlu0 %v2309, 126
        %v2377 = vpop.permute.xlu0 %2376
        %v2380 = vsel %vm1339, 0.0, %v2313
        %v2381 = vsel %vm1339, 0.0, %v2315
        %v2382 = vsel %vm1342, %v2380, %v2319
        %v2383 = vsel %vm1342, %v2381, %v2321
        %v2384 = vsel %vm1345, %v2382, %v2325
        %v2385 = vsel %vm1345, %v2383, %v2327
        %v2386 = vsel %vm1348, %v2384, %v2331
        %v2387 = vsel %vm1348, %v2385, %v2333
        %v2388 = vsel %vm1351, %v2386, %v2339
        %v2389 = vsel %vm1351, %v2387, %v2341
        %v2390 = vsel %vm1354, %v2388, %v2345
        %v2391 = vsel %vm1354, %v2389, %v2347
        %v2392 = vsel %vm1357, %v2390, %v2351
        %v2393 = vsel %vm1357, %v2391, %v2353
        %v2394 = vsel %vm1360, %v2392, %v2357
        %v2395 = vsel %vm1360, %v2393, %v2359
        %v2396 = vsel %vm1363, %v2394, %v2363
        %v2397 = vsel %vm1363, %v2395, %v2365
        %v2398 = vsel %vm1366, %v2396, %v2308
        %v2399 = vsel %vm1366, %v2397, %v2309
        %v2400 = vsel %vm1369, %v2398, %v2369
        %v2401 = vsel %vm1369, %v2399, %v2371
        %v2402 = vsel %vm1372, %v2400, %v2375
        %v2403 = vsel %vm1372, %v2401, %v2377
        %v2404 = vsel %vm1375, %v2402, 0.0
        %v2405 = vsel %vm1375, %v2403, 0.0
        %2406 = vrot.lane.b32.xlu0 %v2308, 81
        %v2407 = vpop.permute.xlu0 %2406
        %2408 = vrot.lane.b32.xlu0 %v2309, 81
        %v2409 = vpop.permute.xlu0 %2408
        %2412 = vrot.lane.b32.xlu0 %v2308, 80
        %v2413 = vpop.permute.xlu0 %2412
        %2414 = vrot.lane.b32.xlu0 %v2309, 80
        %v2415 = vpop.permute.xlu0 %2414
        %2418 = vrot.lane.b32.xlu0 %v2308, 79
        %v2419 = vpop.permute.xlu0 %2418
        %2420 = vrot.lane.b32.xlu0 %v2309, 79
        %v2421 = vpop.permute.xlu0 %2420
        %2424 = vrot.lane.b32.xlu0 %v2308, 78
        %v2425 = vpop.permute.xlu0 %2424
        %2426 = vrot.lane.b32.xlu0 %v2309, 78
        %v2427 = vpop.permute.xlu0 %2426
        %2430 = vrot.lane.b32.xlu0 %v2308, 77
        %v2431 = vpop.permute.xlu0 %2430
        %2432 = vrot.lane.b32.xlu0 %v2309, 77
        %v2433 = vpop.permute.xlu0 %2432
        %2436 = vrot.lane.b32.xlu0 %v2308, 76
        %v2437 = vpop.permute.xlu0 %2436
        %2438 = vrot.lane.b32.xlu0 %v2309, 76
        %v2439 = vpop.permute.xlu0 %2438
        %2442 = vrot.lane.b32.xlu0 %v2308, 75
        %v2443 = vpop.permute.xlu0 %2442
        %2444 = vrot.lane.b32.xlu0 %v2309, 75
        %v2445 = vpop.permute.xlu0 %2444
        %2448 = vrot.lane.b32.xlu0 %v2308, 74
        %v2449 = vpop.permute.xlu0 %2448
        %2450 = vrot.lane.b32.xlu0 %v2309, 74
        %v2451 = vpop.permute.xlu0 %2450
        %2454 = vrot.lane.b32.xlu0 %v2308, 73
        %v2455 = vpop.permute.xlu0 %2454
        %2456 = vrot.lane.b32.xlu0 %v2309, 73
        %v2457 = vpop.permute.xlu0 %2456
        %2460 = vrot.lane.b32.xlu0 %v2308, 72
        %v2461 = vpop.permute.xlu0 %2460
        %2462 = vrot.lane.b32.xlu0 %v2309, 72
        %v2463 = vpop.permute.xlu0 %2462
        %2466 = vrot.lane.b32.xlu0 %v2308, 71
        %v2467 = vpop.permute.xlu0 %2466
        %2468 = vrot.lane.b32.xlu0 %v2309, 71
        %v2469 = vpop.permute.xlu0 %2468
        %2472 = vrot.lane.b32.xlu0 %v2308, 70
        %v2473 = vpop.permute.xlu0 %2472
        %2474 = vrot.lane.b32.xlu0 %v2309, 70
        %v2475 = vpop.permute.xlu0 %2474
        %v2478 = vsel %vm1339, 0.0, %v2407
        %v2479 = vsel %vm1339, 0.0, %v2409
        %v2480 = vsel %vm1342, %v2478, %v2413
        %v2481 = vsel %vm1342, %v2479, %v2415
        %v2482 = vsel %vm1345, %v2480, %v2419
        %v2483 = vsel %vm1345, %v2481, %v2421
        %v2484 = vsel %vm1348, %v2482, %v2425
        %v2485 = vsel %vm1348, %v2483, %v2427
        %v2486 = vsel %vm1351, %v2484, %v2431
        %v2487 = vsel %vm1351, %v2485, %v2433
        %v2488 = vsel %vm1354, %v2486, %v2437
        %v2489 = vsel %vm1354, %v2487, %v2439
        %v2490 = vsel %vm1357, %v2488, %v2443
        %v2491 = vsel %vm1357, %v2489, %v2445
        %v2492 = vsel %vm1360, %v2490, %v2449
        %v2493 = vsel %vm1360, %v2491, %v2451
        %v2494 = vsel %vm1363, %v2492, %v2455
        %v2495 = vsel %vm1363, %v2493, %v2457
        %v2496 = vsel %vm1366, %v2494, %v2461
        %v2497 = vsel %vm1366, %v2495, %v2463
        %v2498 = vsel %vm1369, %v2496, %v2467
        %v2499 = vsel %vm1369, %v2497, %v2469
        %v2500 = vsel %vm1372, %v2498, %v2473
        %v2501 = vsel %vm1372, %v2499, %v2475
        %v2502 = vsel %vm1375, %v2500, 0.0
        %v2503 = vsel %vm1375, %v2501, 0.0
        %2506 = vrot.lane.b32.xlu0 %v1244, 100
        %v2507 = vpop.permute.xlu0 %2506
        %2508 = vrot.lane.b32.xlu0 %v1250, 100
        %v2509 = vpop.permute.xlu0 %2508
        %v2512 = vmax.f32 %v1243, %v2507
        %v2513 = vmax.f32 %v1249, %v2509
        %2516 = vrot.lane.b32.xlu0 %v2512, 127
        %v2517 = vpop.permute.xlu0 %2516
        %2518 = vrot.lane.b32.xlu0 %v2513, 127
        %v2519 = vpop.permute.xlu0 %2518
        %v2522 = vmax.f32 %v2512, %v2517
        %v2523 = vmax.f32 %v2513, %v2519
        %2526 = vrot.lane.b32.xlu0 %v2522, 25
        %v2527 = vpop.permute.xlu0 %2526
        %2528 = vrot.lane.b32.xlu0 %v2523, 25
        %v2529 = vpop.permute.xlu0 %2528
        %2532 = vrot.lane.b32.xlu0 %v2522, 24
        %v2533 = vpop.permute.xlu0 %2532
        %2534 = vrot.lane.b32.xlu0 %v2523, 24
        %v2535 = vpop.permute.xlu0 %2534
        %2538 = vrot.lane.b32.xlu0 %v2522, 23
        %v2539 = vpop.permute.xlu0 %2538
        %2540 = vrot.lane.b32.xlu0 %v2523, 23
        %v2541 = vpop.permute.xlu0 %2540
        %2544 = vrot.lane.b32.xlu0 %v2522, 22
        %v2545 = vpop.permute.xlu0 %2544
        %2546 = vrot.lane.b32.xlu0 %v2523, 22
        %v2547 = vpop.permute.xlu0 %2546
        %2550 = vrot.lane.b32.xlu0 %v2522, 21
        %v2551 = vpop.permute.xlu0 %2550
        %2552 = vrot.lane.b32.xlu0 %v2523, 21
        %v2553 = vpop.permute.xlu0 %2552
        %2556 = vrot.lane.b32.xlu0 %v2522, 20
        %v2557 = vpop.permute.xlu0 %2556
        %2558 = vrot.lane.b32.xlu0 %v2523, 20
        %v2559 = vpop.permute.xlu0 %2558
        %2562 = vrot.lane.b32.xlu0 %v2522, 19
        %v2563 = vpop.permute.xlu0 %2562
        %2564 = vrot.lane.b32.xlu0 %v2523, 19
        %v2565 = vpop.permute.xlu0 %2564
        %2568 = vrot.lane.b32.xlu0 %v2522, 18
        %v2569 = vpop.permute.xlu0 %2568
        %2570 = vrot.lane.b32.xlu0 %v2523, 18
        %v2571 = vpop.permute.xlu0 %2570
        %2574 = vrot.lane.b32.xlu0 %v2522, 17
        %v2575 = vpop.permute.xlu0 %2574
        %2576 = vrot.lane.b32.xlu0 %v2523, 17
        %v2577 = vpop.permute.xlu0 %2576
        %2580 = vrot.lane.b32.xlu0 %v2522, 16
        %v2581 = vpop.permute.xlu0 %2580
        %2582 = vrot.lane.b32.xlu0 %v2523, 16
        %v2583 = vpop.permute.xlu0 %2582
        %2586 = vrot.lane.b32.xlu0 %v2522, 15
        %v2587 = vpop.permute.xlu0 %2586
        %2588 = vrot.lane.b32.xlu0 %v2523, 15
        %v2589 = vpop.permute.xlu0 %2588
        %2592 = vrot.lane.b32.xlu0 %v2522, 14
        %v2593 = vpop.permute.xlu0 %2592
        %2594 = vrot.lane.b32.xlu0 %v2523, 14
        %v2595 = vpop.permute.xlu0 %2594
        %v2598 = vsel %vm1339, 0.0, %v2527
        %v2599 = vsel %vm1339, 0.0, %v2529
        %v2600 = vsel %vm1342, %v2598, %v2533
        %v2601 = vsel %vm1342, %v2599, %v2535
        %v2602 = vsel %vm1345, %v2600, %v2539
        %v2603 = vsel %vm1345, %v2601, %v2541
        %v2604 = vsel %vm1348, %v2602, %v2545
        %v2605 = vsel %vm1348, %v2603, %v2547
        %v2606 = vsel %vm1351, %v2604, %v2551
        %v2607 = vsel %vm1351, %v2605, %v2553
        %v2608 = vsel %vm1354, %v2606, %v2557
        %v2609 = vsel %vm1354, %v2607, %v2559
        %v2610 = vsel %vm1357, %v2608, %v2563
        %v2611 = vsel %vm1357, %v2609, %v2565
        %v2612 = vsel %vm1360, %v2610, %v2569
        %v2613 = vsel %vm1360, %v2611, %v2571
        %v2614 = vsel %vm1363, %v2612, %v2575
        %v2615 = vsel %vm1363, %v2613, %v2577
        %v2616 = vsel %vm1366, %v2614, %v2581
        %v2617 = vsel %vm1366, %v2615, %v2583
        %v2618 = vsel %vm1369, %v2616, %v2587
        %v2619 = vsel %vm1369, %v2617, %v2589
        %v2620 = vsel %vm1372, %v2618, %v2593
        %v2621 = vsel %vm1372, %v2619, %v2595
        %v2622 = vsel %vm1375, %v2620, 0.0
        %v2623 = vsel %vm1375, %v2621, 0.0
        %2626 = vrot.lane.b32.xlu0 %v1376, 14
        %v2627 = vpop.permute.xlu0 %2626
        %2628 = vrot.lane.b32.xlu0 %v1377, 14
        %v2629 = vpop.permute.xlu0 %2628
        %2634 = vrot.lane.b32.xlu0 %v1474, 28
        %v2635 = vpop.permute.xlu0 %2634
        %2636 = vrot.lane.b32.xlu0 %v1475, 28
        %v2637 = vpop.permute.xlu0 %2636
        %2642 = vrot.lane.b32.xlu0 %v1608, 42
        %v2643 = vpop.permute.xlu0 %2642
        %2644 = vrot.lane.b32.xlu0 %v1609, 42
        %v2645 = vpop.permute.xlu0 %2644
        %2650 = vrot.lane.b32.xlu0 %v1706, 56
        %v2651 = vpop.permute.xlu0 %2650
        %2652 = vrot.lane.b32.xlu0 %v1707, 56
        %v2653 = vpop.permute.xlu0 %2652
        %2658 = vrot.lane.b32.xlu0 %v1828, 70
        %v2659 = vpop.permute.xlu0 %2658
        %2660 = vrot.lane.b32.xlu0 %v1829, 70
        %v2661 = vpop.permute.xlu0 %2660
        %2666 = vrot.lane.b32.xlu0 %v1942, 84
        %v2667 = vpop.permute.xlu0 %2666
        %2668 = vrot.lane.b32.xlu0 %v1943, 84
        %v2669 = vpop.permute.xlu0 %2668
        %2674 = vrot.lane.b32.xlu0 %v2064, 98
        %v2675 = vpop.permute.xlu0 %2674
        %2676 = vrot.lane.b32.xlu0 %v2065, 98
        %v2677 = vpop.permute.xlu0 %2676
        %2682 = vrot.lane.b32.xlu0 %v2178, 112
        %v2683 = vpop.permute.xlu0 %2682
        %2684 = vrot.lane.b32.xlu0 %v2179, 112
        %v2685 = vpop.permute.xlu0 %2684
        %2690 = vrot.lane.b32.xlu0 %v2276, 126
        %v2691 = vpop.permute.xlu0 %2690
        %2692 = vrot.lane.b32.xlu0 %v2277, 126
        %v2693 = vpop.permute.xlu0 %2692
        %2698 = vrot.lane.b32.xlu0 %v2404, 12
        %v2699 = vpop.permute.xlu0 %2698
        %2700 = vrot.lane.b32.xlu0 %v2405, 12
        %v2701 = vpop.permute.xlu0 %2700
        %2706 = vrot.lane.b32.xlu0 %v2502, 26
        %v2707 = vpop.permute.xlu0 %2706
        %2708 = vrot.lane.b32.xlu0 %v2503, 26
        %v2709 = vpop.permute.xlu0 %2708
        %2714 = vrot.lane.b32.xlu0 %v2622, 40
        %v2715 = vpop.permute.xlu0 %2714
        %2716 = vrot.lane.b32.xlu0 %v2623, 40
        %v2717 = vpop.permute.xlu0 %2716
        %vm2720 = vcmask 113664
        %v2721 = vsel %vm2720, 0.0, %v2627
        %v2722 = vsel %vm2720, 0.0, %v2629
        %vm2723 = vcmask 228352
        %v2724 = vsel %vm2723, %v2721, %v2635
        %v2725 = vsel %vm2723, %v2722, %v2637
        %vm2726 = vcmask 343040
        %v2727 = vsel %vm2726, %v2724, %v2643
        %v2728 = vsel %vm2726, %v2725, %v2645
        %vm2729 = vcmask 457728
        %v2730 = vsel %vm2729, %v2727, %v2651
        %v2731 = vsel %vm2729, %v2728, %v2653
        %v2732 = vsel %vm779, %v2730, %v2659
        %v2733 = vsel %vm779, %v2731, %v2661
        %vm2734 = vcmask 687104
        %v2735 = vsel %vm2734, %v2732, %v2667
        %v2736 = vsel %vm2734, %v2733, %v2669
        %v2737 = vsel %vm659, %v2735, %v2675
        %v2738 = vsel %vm659, %v2736, %v2677
        %vm2739 = vcmask 916480
        %v2740 = vsel %vm2739, %v2737, %v2683
        %v2741 = vsel %vm2739, %v2738, %v2685
        %v2742 = vsel %vm539, %v2740, %v2691
        %v2743 = vsel %vm539, %v2741, %v2693
        %v2744 = vsel %vm1372, %v2691, %v2699
        %v2745 = vsel %vm1372, %v2693, %v2701
        %vm2746 = vcmask 211968
        %v2747 = vsel %vm2746, %v2744, %v2707
        %v2748 = vsel %vm2746, %v2745, %v2709
        %vm2749 = vcmask 326656
        %v2750 = vsel %vm2749, %v2747, %v2715
        %v2751 = vsel %vm2749, %v2748, %v2717
        %vm2752 = vcmask 441344
        %v2753 = vsel %vm2752, %v2750, 0.0
        %v2754 = vsel %vm2752, %v2751, 0.0
        %v2755 = vsel %vm1372, 1.0, 0.0
        %2757 = vrot.lane.b32.xlu0 %v2755, 14
        %v2758 = vpop.permute.xlu0 %2757
        %2760 = vrot.lane.b32.xlu0 %v2755, 28
        %v2761 = vpop.permute.xlu0 %2760
        %2763 = vrot.lane.b32.xlu0 %v2755, 42
        %v2764 = vpop.permute.xlu0 %2763
        %2766 = vrot.lane.b32.xlu0 %v2755, 56
        %v2767 = vpop.permute.xlu0 %2766
        %2769 = vrot.lane.b32.xlu0 %v2755, 70
        %v2770 = vpop.permute.xlu0 %2769
        %2772 = vrot.lane.b32.xlu0 %v2755, 84
        %v2773 = vpop.permute.xlu0 %2772
        %2775 = vrot.lane.b32.xlu0 %v2755, 98
        %v2776 = vpop.permute.xlu0 %2775
        %2778 = vrot.lane.b32.xlu0 %v2755, 112
        %v2779 = vpop.permute.xlu0 %2778
        %2781 = vrot.lane.b32.xlu0 %v2755, 126
        %v2782 = vpop.permute.xlu0 %2781
        %2784 = vrot.lane.b32.xlu0 %v2755, 12
        %v2785 = vpop.permute.xlu0 %2784
        %2787 = vrot.lane.b32.xlu0 %v2755, 26
        %v2788 = vpop.permute.xlu0 %2787
        %v2790 = vsel %vm2720, %v2755, %v2758
        %v2791 = vsel %vm2723, %v2790, %v2761
        %v2792 = vsel %vm2726, %v2791, %v2764
        %v2793 = vsel %vm2729, %v2792, %v2767
        %v2794 = vsel %vm779, %v2793, %v2770
        %v2795 = vsel %vm2734, %v2794, %v2773
        %v2796 = vsel %vm659, %v2795, %v2776
        %v2797 = vsel %vm2739, %v2796, %v2779
        %v2798 = vsel %vm539, %v2797, %v2782
        %v2799 = vsel %vm1372, %v2782, %v2785
        %v2800 = vsel %vm2746, %v2799, %v2788
        %v2801 = vld [vmem:[%s3] sm:$0xff]
        %v2802 = vld [vmem:[%s3 + $0x8] sm:$0xff]
        %s2803 = scalar_lea.vmem %s3, 16
        %v2804 = vld [vmem:[%s2803] sm:$0xff]
        %v2805 = vld [vmem:[%s2803 + $0x8] sm:$0xff]
        %2810 = vrot.lane.b32.xlu0 %v2742, 127
        %v2811 = vpop.permute.xlu0 %2810
        %2812 = vrot.lane.b32.xlu0 %v2753, 127
        %v2813 = vpop.permute.xlu0 %2812
        %2814 = vrot.lane.b32.xlu0 %v2743, 127
        %v2815 = vpop.permute.xlu0 %2814
        %2816 = vrot.lane.b32.xlu0 %v2754, 127
        %v2817 = vpop.permute.xlu0 %2816
        %v2818 = vsel %vm515, %v2811, %v2813
        %v2819 = vsel %vm515, %v2815, %v2817
        %vm2824 = vcmask 130048
        %v2826 = vsel %vm2824, %v2804, 0
        %v2829 = vsel %vm2824, %v2805, 0
        %2831 = vmatpush.msra.mxu0 0.0
        %2832 = vmatpush.msra.mxu0 0.0
        %2833 = vmatpush.msra.mxu0 0.0
        %2834 = vmatpush.msra.mxu0 0.0
        %2835 = vmatpush.msra.mxu0 0.0
        %2836 = vmatpush.msra.mxu0 0.0
        %2837 = vmatpush.msra.mxu0 0.0
        %2838 = vmatpush.msra.mxu0 0.0
        %2839 = vmatpush.msra.mxu0 0.0
        %2840 = vmatpush.msra.mxu0 0.0
        %2841 = vmatpush.msra.mxu0 0.0
        %2842 = vmatpush.msra.mxu0 0.0
        %2843 = vmatpush.msra.mxu0 0.0
        %2844 = vmatpush.msra.mxu0 0.0
        %2845 = vmatpush.msra.mxu0 %v2819
        %2846 = vmatpush.msra.mxu0 %v2818
        %2847 = vmatmul.f32.gmra.mxu0 %v2826
        %v2848 = vpop.f32.mrf.mxu0
        %v2849 = vadd.f32 0.0, %v2848
        %2850 = vmatmul.f32.gmra.mxu0 %v2829
        %v2851 = vpop.f32.mrf.mxu0
        %v2852 = vadd.f32 0.0, %v2851
        %2853 = vdwg.mxu0
        %2854 = vmatpush.msra.mxu0 0.0
        %2855 = vmatpush.msra.mxu0 0.0
        %2856 = vmatpush.msra.mxu0 0.0
        %2857 = vmatpush.msra.mxu0 0.0
        %2858 = vmatpush.msra.mxu0 0.0
        %2859 = vmatpush.msra.mxu0 0.0
        %2860 = vmatpush.msra.mxu0 0.0
        %2861 = vmatpush.msra.mxu0 0.0
        %2862 = vmatpush.msra.mxu0 0.0
        %2863 = vmatpush.msra.mxu0 0.0
        %2864 = vmatpush.msra.mxu0 0.0
        %2865 = vmatpush.msra.mxu0 0.0
        %2866 = vmatpush.msra.mxu0 0.0
        %2867 = vmatpush.msra.mxu0 0.0
        %2868 = vmatpush.msra.mxu0 %v2817
        %2869 = vmatpush.msra.mxu0 %v2813
        %2870 = vmatmul.f32.gmra.mxu0 %v2826
        %v2871 = vpop.f32.mrf.mxu0
        %v2872 = vadd.f32 0.0, %v2871
        %2873 = vmatmul.f32.gmra.mxu0 %v2829
        %v2874 = vpop.f32.mrf.mxu0
        %v2875 = vadd.f32 0.0, %v2874
        %2876 = vdwg.mxu0
        %v2878 = vsel %vm2824, %v2801, 0
        %v2881 = vsel %vm2824, %v2802, 0
        %2883 = vmatpush.msra.mxu0 0.0
        %2884 = vmatpush.msra.mxu0 0.0
        %2885 = vmatpush.msra.mxu0 0.0
        %2886 = vmatpush.msra.mxu0 0.0
        %2887 = vmatpush.msra.mxu0 0.0
        %2888 = vmatpush.msra.mxu0 0.0
        %2889 = vmatpush.msra.mxu0 0.0
        %2890 = vmatpush.msra.mxu0 0.0
        %2891 = vmatpush.msra.mxu0 0.0
        %2892 = vmatpush.msra.mxu0 0.0
        %2893 = vmatpush.msra.mxu0 0.0
        %2894 = vmatpush.msra.mxu0 0.0
        %2895 = vmatpush.msra.mxu0 0.0
        %2896 = vmatpush.msra.mxu0 0.0
        %2897 = vmatpush.msra.mxu0 %v2743
        %2898 = vmatpush.msra.mxu0 %v2742
        %2899 = vmatmul.f32.gmra.mxu0 %v2878
        %v2900 = vpop.f32.mrf.mxu0
        %v2901 = vadd.f32 %v2849, %v2900
        %2902 = vmatmul.f32.gmra.mxu0 %v2881
        %v2903 = vpop.f32.mrf.mxu0
        %v2904 = vadd.f32 %v2852, %v2903
        %2905 = vdwg.mxu0
        %2906 = vmatpush.msra.mxu0 0.0
        %2907 = vmatpush.msra.mxu0 0.0
        %2908 = vmatpush.msra.mxu0 0.0
        %2909 = vmatpush.msra.mxu0 0.0
        %2910 = vmatpush.msra.mxu0 0.0
        %2911 = vmatpush.msra.mxu0 0.0
        %2912 = vmatpush.msra.mxu0 0.0
        %2913 = vmatpush.msra.mxu0 0.0
        %2914 = vmatpush.msra.mxu0 0.0
        %2915 = vmatpush.msra.mxu0 0.0
        %2916 = vmatpush.msra.mxu0 0.0
        %2917 = vmatpush.msra.mxu0 0.0
        %2918 = vmatpush.msra.mxu0 0.0
        %2919 = vmatpush.msra.mxu0 0.0
        %2920 = vmatpush.msra.mxu0 %v2754
        %2921 = vmatpush.msra.mxu0 %v2753
        %2922 = vmatmul.f32.gmra.mxu0 %v2878
        %v2923 = vpop.f32.mrf.mxu0
        %v2924 = vadd.f32 %v2872, %v2923
        %2925 = vmatmul.f32.gmra.mxu0 %v2881
        %v2926 = vpop.f32.mrf.mxu0
        %v2927 = vadd.f32 %v2875, %v2926
        %2928 = vdwg.mxu0
        %s2929 = scalar_lea.vmem %s3, 32
        %v2930 = vld [vmem:[%s2929] sm:$0xff]
        %v2931 = vld [vmem:[%s2929 + $0x8] sm:$0xff]
        %2932 = vrot.lane.b32.xlu0 %v2742, 126
        %v2933 = vpop.permute.xlu0 %2932
        %2934 = vrot.lane.b32.xlu0 %v2753, 126
        %v2935 = vpop.permute.xlu0 %2934
        %2936 = vrot.lane.b32.xlu0 %v2743, 126
        %v2937 = vpop.permute.xlu0 %2936
        %2938 = vrot.lane.b32.xlu0 %v2754, 126
        %v2939 = vpop.permute.xlu0 %2938
        %v2940 = vsel %vm539, %v2933, %v2935
        %v2941 = vsel %vm539, %v2937, %v2939
        %v2947 = vsel %vm2824, %v2930, 0
        %v2950 = vsel %vm2824, %v2931, 0
        %2952 = vmatpush.msra.mxu0 0.0
        %2953 = vmatpush.msra.mxu0 0.0
        %2954 = vmatpush.msra.mxu0 0.0
        %2955 = vmatpush.msra.mxu0 0.0
        %2956 = vmatpush.msra.mxu0 0.0
        %2957 = vmatpush.msra.mxu0 0.0
        %2958 = vmatpush.msra.mxu0 0.0
        %2959 = vmatpush.msra.mxu0 0.0
        %2960 = vmatpush.msra.mxu0 0.0
        %2961 = vmatpush.msra.mxu0 0.0
        %2962 = vmatpush.msra.mxu0 0.0
        %2963 = vmatpush.msra.mxu0 0.0
        %2964 = vmatpush.msra.mxu0 0.0
        %2965 = vmatpush.msra.mxu0 0.0
        %2966 = vmatpush.msra.mxu0 %v2941
        %2967 = vmatpush.msra.mxu0 %v2940
        %2968 = vmatmul.f32.gmra.mxu0 %v2947
        %v2969 = vpop.f32.mrf.mxu0
        %v2970 = vadd.f32 0.0, %v2969
        %2971 = vmatmul.f32.gmra.mxu0 %v2950
        %v2972 = vpop.f32.mrf.mxu0
        %v2973 = vadd.f32 0.0, %v2972
        %2974 = vdwg.mxu0
        %2975 = vmatpush.msra.mxu0 0.0
        %2976 = vmatpush.msra.mxu0 0.0
        %2977 = vmatpush.msra.mxu0 0.0
        %2978 = vmatpush.msra.mxu0 0.0
        %2979 = vmatpush.msra.mxu0 0.0
        %2980 = vmatpush.msra.mxu0 0.0
        %2981 = vmatpush.msra.mxu0 0.0
        %2982 = vmatpush.msra.mxu0 0.0
        %2983 = vmatpush.msra.mxu0 0.0
        %2984 = vmatpush.msra.mxu0 0.0
        %2985 = vmatpush.msra.mxu0 0.0
        %2986 = vmatpush.msra.mxu0 0.0
        %2987 = vmatpush.msra.mxu0 0.0
        %2988 = vmatpush.msra.mxu0 0.0
        %2989 = vmatpush.msra.mxu0 %v2939
        %2990 = vmatpush.msra.mxu0 %v2935
        %2991 = vmatmul.f32.gmra.mxu0 %v2947
        %v2992 = vpop.f32.mrf.mxu0
        %v2993 = vadd.f32 0.0, %v2992
        %2994 = vmatmul.f32.gmra.mxu0 %v2950
        %v2995 = vpop.f32.mrf.mxu0
        %v2996 = vadd.f32 0.0, %v2995
        %2997 = vdwg.mxu0
        %v2998 = vadd.f32 %v2901, %v2970
        %v2999 = vadd.f32 %v2924, %v2993
        %v3000 = vadd.f32 %v2904, %v2973
        %v3001 = vadd.f32 %v2927, %v2996
        %s3002 = scalar_lea.vmem %s3, 48
        %v3003 = vld [vmem:[%s3002] sm:$0xff]
        %v3004 = vld [vmem:[%s3002 + $0x8] sm:$0xff]
        %3005 = vrot.lane.b32.xlu0 %v2742, 114
        %v3006 = vpop.permute.xlu0 %3005
        %3007 = vrot.lane.b32.xlu0 %v2753, 114
        %v3008 = vpop.permute.xlu0 %3007
        %3009 = vrot.lane.b32.xlu0 %v2743, 114
        %v3010 = vpop.permute.xlu0 %3009
        %3011 = vrot.lane.b32.xlu0 %v2754, 114
        %v3012 = vpop.permute.xlu0 %3011
        %vm3013 = vcmask 932864
        %v3014 = vsel %vm3013, %v3006, %v3008
        %v3015 = vsel %vm3013, %v3010, %v3012
        %v3021 = vsel %vm2824, %v3003, 0
        %v3024 = vsel %vm2824, %v3004, 0
        %3026 = vmatpush.msra.mxu0 0.0
        %3027 = vmatpush.msra.mxu0 0.0
        %3028 = vmatpush.msra.mxu0 0.0
        %3029 = vmatpush.msra.mxu0 0.0
        %3030 = vmatpush.msra.mxu0 0.0
        %3031 = vmatpush.msra.mxu0 0.0
        %3032 = vmatpush.msra.mxu0 0.0
        %3033 = vmatpush.msra.mxu0 0.0
        %3034 = vmatpush.msra.mxu0 0.0
        %3035 = vmatpush.msra.mxu0 0.0
        %3036 = vmatpush.msra.mxu0 0.0
        %3037 = vmatpush.msra.mxu0 0.0
        %3038 = vmatpush.msra.mxu0 0.0
        %3039 = vmatpush.msra.mxu0 0.0
        %3040 = vmatpush.msra.mxu0 %v3015
        %3041 = vmatpush.msra.mxu0 %v3014
        %3042 = vmatmul.f32.gmra.mxu0 %v3021
        %v3043 = vpop.f32.mrf.mxu0
        %v3044 = vadd.f32 0.0, %v3043
        %3045 = vmatmul.f32.gmra.mxu0 %v3024
        %v3046 = vpop.f32.mrf.mxu0
        %v3047 = vadd.f32 0.0, %v3046
        %3048 = vdwg.mxu0
        %3049 = vmatpush.msra.mxu0 0.0
        %3050 = vmatpush.msra.mxu0 0.0
        %3051 = vmatpush.msra.mxu0 0.0
        %3052 = vmatpush.msra.mxu0 0.0
        %3053 = vmatpush.msra.mxu0 0.0
        %3054 = vmatpush.msra.mxu0 0.0
        %3055 = vmatpush.msra.mxu0 0.0
        %3056 = vmatpush.msra.mxu0 0.0
        %3057 = vmatpush.msra.mxu0 0.0
        %3058 = vmatpush.msra.mxu0 0.0
        %3059 = vmatpush.msra.mxu0 0.0
        %3060 = vmatpush.msra.mxu0 0.0
        %3061 = vmatpush.msra.mxu0 0.0
        %3062 = vmatpush.msra.mxu0 0.0
        %3063 = vmatpush.msra.mxu0 %v3012
        %3064 = vmatpush.msra.mxu0 %v3008
        %3065 = vmatmul.f32.gmra.mxu0 %v3021
        %v3066 = vpop.f32.mrf.mxu0
        %v3067 = vadd.f32 0.0, %v3066
        %3068 = vmatmul.f32.gmra.mxu0 %v3024
        %v3069 = vpop.f32.mrf.mxu0
        %v3070 = vadd.f32 0.0, %v3069
        %3071 = vdwg.mxu0
        %v3072 = vadd.f32 %v2998, %v3044
        %v3073 = vadd.f32 %v2999, %v3067
        %v3074 = vadd.f32 %v3000, %v3047
        %v3075 = vadd.f32 %v3001, %v3070
        %s3076 = scalar_lea.vmem %s3, 64
        %v3077 = vld [vmem:[%s3076] sm:$0xff]
        %v3078 = vld [vmem:[%s3076 + $0x8] sm:$0xff]
        %3079 = vrot.lane.b32.xlu0 %v2742, 113
        %v3080 = vpop.permute.xlu0 %3079
        %3081 = vrot.lane.b32.xlu0 %v2753, 113
        %v3082 = vpop.permute.xlu0 %3081
        %3083 = vrot.lane.b32.xlu0 %v2743, 113
        %v3084 = vpop.permute.xlu0 %3083
        %3085 = vrot.lane.b32.xlu0 %v2754, 113
        %v3086 = vpop.permute.xlu0 %3085
        %vm3087 = vcmask 924672
        %v3088 = vsel %vm3087, %v3080, %v3082
        %v3089 = vsel %vm3087, %v3084, %v3086
        %v3095 = vsel %vm2824, %v3077, 0
        %v3098 = vsel %vm2824, %v3078, 0
        %3100 = vmatpush.msra.mxu0 0.0
        %3101 = vmatpush.msra.mxu0 0.0
        %3102 = vmatpush.msra.mxu0 0.0
        %3103 = vmatpush.msra.mxu0 0.0
        %3104 = vmatpush.msra.mxu0 0.0
        %3105 = vmatpush.msra.mxu0 0.0
        %3106 = vmatpush.msra.mxu0 0.0
        %3107 = vmatpush.msra.mxu0 0.0
        %3108 = vmatpush.msra.mxu0 0.0
        %3109 = vmatpush.msra.mxu0 0.0
        %3110 = vmatpush.msra.mxu0 0.0
        %3111 = vmatpush.msra.mxu0 0.0
        %3112 = vmatpush.msra.mxu0 0.0
        %3113 = vmatpush.msra.mxu0 0.0
        %3114 = vmatpush.msra.mxu0 %v3089
        %3115 = vmatpush.msra.mxu0 %v3088
        %3116 = vmatmul.f32.gmra.mxu0 %v3095
        %v3117 = vpop.f32.mrf.mxu0
        %v3118 = vadd.f32 0.0, %v3117
        %3119 = vmatmul.f32.gmra.mxu0 %v3098
        %v3120 = vpop.f32.mrf.mxu0
        %v3121 = vadd.f32 0.0, %v3120
        %3122 = vdwg.mxu0
        %3123 = vmatpush.msra.mxu0 0.0
        %3124 = vmatpush.msra.mxu0 0.0
        %3125 = vmatpush.msra.mxu0 0.0
        %3126 = vmatpush.msra.mxu0 0.0
        %3127 = vmatpush.msra.mxu0 0.0
        %3128 = vmatpush.msra.mxu0 0.0
        %3129 = vmatpush.msra.mxu0 0.0
        %3130 = vmatpush.msra.mxu0 0.0
        %3131 = vmatpush.msra.mxu0 0.0
        %3132 = vmatpush.msra.mxu0 0.0
        %3133 = vmatpush.msra.mxu0 0.0
        %3134 = vmatpush.msra.mxu0 0.0
        %3135 = vmatpush.msra.mxu0 0.0
        %3136 = vmatpush.msra.mxu0 0.0
        %3137 = vmatpush.msra.mxu0 %v3086
        %3138 = vmatpush.msra.mxu0 %v3082
        %3139 = vmatmul.f32.gmra.mxu0 %v3095
        %v3140 = vpop.f32.mrf.mxu0
        %v3141 = vadd.f32 0.0, %v3140
        %3142 = vmatmul.f32.gmra.mxu0 %v3098
        %v3143 = vpop.f32.mrf.mxu0
        %v3144 = vadd.f32 0.0, %v3143
        %3145 = vdwg.mxu0
        %v3146 = vadd.f32 %v3072, %v3118
        %v3147 = vadd.f32 %v3073, %v3141
        %v3148 = vadd.f32 %v3074, %v3121
        %v3149 = vadd.f32 %v3075, %v3144
        %s3150 = scalar_lea.vmem %s3, 80
        %v3151 = vld [vmem:[%s3150] sm:$0xff]
        %v3152 = vld [vmem:[%s3150 + $0x8] sm:$0xff]
        %3153 = vrot.lane.b32.xlu0 %v2742, 112
        %v3154 = vpop.permute.xlu0 %3153
        %3155 = vrot.lane.b32.xlu0 %v2753, 112
        %v3156 = vpop.permute.xlu0 %3155
        %3157 = vrot.lane.b32.xlu0 %v2743, 112
        %v3158 = vpop.permute.xlu0 %3157
        %3159 = vrot.lane.b32.xlu0 %v2754, 112
        %v3160 = vpop.permute.xlu0 %3159
        %v3161 = vsel %vm2739, %v3154, %v3156
        %v3162 = vsel %vm2739, %v3158, %v3160
        %v3168 = vsel %vm2824, %v3151, 0
        %v3171 = vsel %vm2824, %v3152, 0
        %3173 = vmatpush.msra.mxu0 0.0
        %3174 = vmatpush.msra.mxu0 0.0
        %3175 = vmatpush.msra.mxu0 0.0
        %3176 = vmatpush.msra.mxu0 0.0
        %3177 = vmatpush.msra.mxu0 0.0
        %3178 = vmatpush.msra.mxu0 0.0
        %3179 = vmatpush.msra.mxu0 0.0
        %3180 = vmatpush.msra.mxu0 0.0
        %3181 = vmatpush.msra.mxu0 0.0
        %3182 = vmatpush.msra.mxu0 0.0
        %3183 = vmatpush.msra.mxu0 0.0
        %3184 = vmatpush.msra.mxu0 0.0
        %3185 = vmatpush.msra.mxu0 0.0
        %3186 = vmatpush.msra.mxu0 0.0
        %3187 = vmatpush.msra.mxu0 %v3162
        %3188 = vmatpush.msra.mxu0 %v3161
        %3189 = vmatmul.f32.gmra.mxu0 %v3168
        %v3190 = vpop.f32.mrf.mxu0
        %v3191 = vadd.f32 0.0, %v3190
        %3192 = vmatmul.f32.gmra.mxu0 %v3171
        %v3193 = vpop.f32.mrf.mxu0
        %v3194 = vadd.f32 0.0, %v3193
        %3195 = vdwg.mxu0
        %3196 = vmatpush.msra.mxu0 0.0
        %3197 = vmatpush.msra.mxu0 0.0
        %3198 = vmatpush.msra.mxu0 0.0
        %3199 = vmatpush.msra.mxu0 0.0
        %3200 = vmatpush.msra.mxu0 0.0
        %3201 = vmatpush.msra.mxu0 0.0
        %3202 = vmatpush.msra.mxu0 0.0
        %3203 = vmatpush.msra.mxu0 0.0
        %3204 = vmatpush.msra.mxu0 0.0
        %3205 = vmatpush.msra.mxu0 0.0
        %3206 = vmatpush.msra.mxu0 0.0
        %3207 = vmatpush.msra.mxu0 0.0
        %3208 = vmatpush.msra.mxu0 0.0
        %3209 = vmatpush.msra.mxu0 0.0
        %3210 = vmatpush.msra.mxu0 %v3160
        %3211 = vmatpush.msra.mxu0 %v3156
        %3212 = vmatmul.f32.gmra.mxu0 %v3168
        %v3213 = vpop.f32.mrf.mxu0
        %v3214 = vadd.f32 0.0, %v3213
        %3215 = vmatmul.f32.gmra.mxu0 %v3171
        %v3216 = vpop.f32.mrf.mxu0
        %v3217 = vadd.f32 0.0, %v3216
        %3218 = vdwg.mxu0
        %v3219 = vadd.f32 %v3146, %v3191
        %v3220 = vadd.f32 %v3147, %v3214
        %v3221 = vadd.f32 %v3148, %v3194
        %v3222 = vadd.f32 %v3149, %v3217
        %s3223 = scalar_lea.vmem %s3, 96
        %v3224 = vld [vmem:[%s3223] sm:$0xff]
        %v3225 = vld [vmem:[%s3223 + $0x8] sm:$0xff]
        %3226 = vrot.lane.b32.xlu0 %v2742, 100
        %v3227 = vpop.permute.xlu0 %3226
        %3228 = vrot.lane.b32.xlu0 %v2753, 100
        %v3229 = vpop.permute.xlu0 %3228
        %3230 = vrot.lane.b32.xlu0 %v2743, 100
        %v3231 = vpop.permute.xlu0 %3230
        %3232 = vrot.lane.b32.xlu0 %v2754, 100
        %v3233 = vpop.permute.xlu0 %3232
        %v3234 = vsel %vm611, %v3227, %v3229
        %v3235 = vsel %vm611, %v3231, %v3233
        %v3241 = vsel %vm2824, %v3224, 0
        %v3244 = vsel %vm2824, %v3225, 0
        %3246 = vmatpush.msra.mxu0 0.0
        %3247 = vmatpush.msra.mxu0 0.0
        %3248 = vmatpush.msra.mxu0 0.0
        %3249 = vmatpush.msra.mxu0 0.0
        %3250 = vmatpush.msra.mxu0 0.0
        %3251 = vmatpush.msra.mxu0 0.0
        %3252 = vmatpush.msra.mxu0 0.0
        %3253 = vmatpush.msra.mxu0 0.0
        %3254 = vmatpush.msra.mxu0 0.0
        %3255 = vmatpush.msra.mxu0 0.0
        %3256 = vmatpush.msra.mxu0 0.0
        %3257 = vmatpush.msra.mxu0 0.0
        %3258 = vmatpush.msra.mxu0 0.0
        %3259 = vmatpush.msra.mxu0 0.0
        %3260 = vmatpush.msra.mxu0 %v3235
        %3261 = vmatpush.msra.mxu0 %v3234
        %3262 = vmatmul.f32.gmra.mxu0 %v3241
        %v3263 = vpop.f32.mrf.mxu0
        %v3264 = vadd.f32 0.0, %v3263
        %3265 = vmatmul.f32.gmra.mxu0 %v3244
        %v3266 = vpop.f32.mrf.mxu0
        %v3267 = vadd.f32 0.0, %v3266
        %3268 = vdwg.mxu0
        %3269 = vmatpush.msra.mxu0 0.0
        %3270 = vmatpush.msra.mxu0 0.0
        %3271 = vmatpush.msra.mxu0 0.0
        %3272 = vmatpush.msra.mxu0 0.0
        %3273 = vmatpush.msra.mxu0 0.0
        %3274 = vmatpush.msra.mxu0 0.0
        %3275 = vmatpush.msra.mxu0 0.0
        %3276 = vmatpush.msra.mxu0 0.0
        %3277 = vmatpush.msra.mxu0 0.0
        %3278 = vmatpush.msra.mxu0 0.0
        %3279 = vmatpush.msra.mxu0 0.0
        %3280 = vmatpush.msra.mxu0 0.0
        %3281 = vmatpush.msra.mxu0 0.0
        %3282 = vmatpush.msra.mxu0 0.0
        %3283 = vmatpush.msra.mxu0 %v3233
        %3284 = vmatpush.msra.mxu0 %v3229
        %3285 = vmatmul.f32.gmra.mxu0 %v3241
        %v3286 = vpop.f32.mrf.mxu0
        %v3287 = vadd.f32 0.0, %v3286
        %3288 = vmatmul.f32.gmra.mxu0 %v3244
        %v3289 = vpop.f32.mrf.mxu0
        %v3290 = vadd.f32 0.0, %v3289
        %3291 = vdwg.mxu0
        %v3292 = vadd.f32 %v3219, %v3264
        %v3293 = vadd.f32 %v3220, %v3287
        %v3294 = vadd.f32 %v3221, %v3267
        %v3295 = vadd.f32 %v3222, %v3290
        %s3296 = scalar_lea.vmem %s3, 112
        %v3297 = vld [vmem:[%s3296] sm:$0xff]
        %v3298 = vld [vmem:[%s3296 + $0x8] sm:$0xff]
        %3299 = vrot.lane.b32.xlu0 %v2742, 99
        %v3300 = vpop.permute.xlu0 %3299
        %3301 = vrot.lane.b32.xlu0 %v2753, 99
        %v3302 = vpop.permute.xlu0 %3301
        %3303 = vrot.lane.b32.xlu0 %v2743, 99
        %v3304 = vpop.permute.xlu0 %3303
        %3305 = vrot.lane.b32.xlu0 %v2754, 99
        %v3306 = vpop.permute.xlu0 %3305
        %v3307 = vsel %vm635, %v3300, %v3302
        %v3308 = vsel %vm635, %v3304, %v3306
        %v3314 = vsel %vm2824, %v3297, 0
        %v3317 = vsel %vm2824, %v3298, 0
        %3319 = vmatpush.msra.mxu0 0.0
        %3320 = vmatpush.msra.mxu0 0.0
        %3321 = vmatpush.msra.mxu0 0.0
        %3322 = vmatpush.msra.mxu0 0.0
        %3323 = vmatpush.msra.mxu0 0.0
        %3324 = vmatpush.msra.mxu0 0.0
        %3325 = vmatpush.msra.mxu0 0.0
        %3326 = vmatpush.msra.mxu0 0.0
        %3327 = vmatpush.msra.mxu0 0.0
        %3328 = vmatpush.msra.mxu0 0.0
        %3329 = vmatpush.msra.mxu0 0.0
        %3330 = vmatpush.msra.mxu0 0.0
        %3331 = vmatpush.msra.mxu0 0.0
        %3332 = vmatpush.msra.mxu0 0.0
        %3333 = vmatpush.msra.mxu0 %v3308
        %3334 = vmatpush.msra.mxu0 %v3307
        %3335 = vmatmul.f32.gmra.mxu0 %v3314
        %v3336 = vpop.f32.mrf.mxu0
        %v3337 = vadd.f32 0.0, %v3336
        %3338 = vmatmul.f32.gmra.mxu0 %v3317
        %v3339 = vpop.f32.mrf.mxu0
        %v3340 = vadd.f32 0.0, %v3339
        %3341 = vdwg.mxu0
        %3342 = vmatpush.msra.mxu0 0.0
        %3343 = vmatpush.msra.mxu0 0.0
        %3344 = vmatpush.msra.mxu0 0.0
        %3345 = vmatpush.msra.mxu0 0.0
        %3346 = vmatpush.msra.mxu0 0.0
        %3347 = vmatpush.msra.mxu0 0.0
        %3348 = vmatpush.msra.mxu0 0.0
        %3349 = vmatpush.msra.mxu0 0.0
        %3350 = vmatpush.msra.mxu0 0.0
        %3351 = vmatpush.msra.mxu0 0.0
        %3352 = vmatpush.msra.mxu0 0.0
        %3353 = vmatpush.msra.mxu0 0.0
        %3354 = vmatpush.msra.mxu0 0.0
        %3355 = vmatpush.msra.mxu0 0.0
        %3356 = vmatpush.msra.mxu0 %v3306
        %3357 = vmatpush.msra.mxu0 %v3302
        %3358 = vmatmul.f32.gmra.mxu0 %v3314
        %v3359 = vpop.f32.mrf.mxu0
        %v3360 = vadd.f32 0.0, %v3359
        %3361 = vmatmul.f32.gmra.mxu0 %v3317
        %v3362 = vpop.f32.mrf.mxu0
        %v3363 = vadd.f32 0.0, %v3362
        %3364 = vdwg.mxu0
        %v3365 = vadd.f32 %v3292, %v3337
        %v3366 = vadd.f32 %v3293, %v3360
        %v3367 = vadd.f32 %v3294, %v3340
        %v3368 = vadd.f32 %v3295, %v3363
        %s3369 = scalar_lea.vmem %s3, 128
        %v3370 = vld [vmem:[%s3369] sm:$0xff]
        %v3371 = vld [vmem:[%s3369 + $0x8] sm:$0xff]
        %3372 = vrot.lane.b32.xlu0 %v2742, 98
        %v3373 = vpop.permute.xlu0 %3372
        %3374 = vrot.lane.b32.xlu0 %v2753, 98
        %v3375 = vpop.permute.xlu0 %3374
        %3376 = vrot.lane.b32.xlu0 %v2743, 98
        %v3377 = vpop.permute.xlu0 %3376
        %3378 = vrot.lane.b32.xlu0 %v2754, 98
        %v3379 = vpop.permute.xlu0 %3378
        %v3380 = vsel %vm659, %v3373, %v3375
        %v3381 = vsel %vm659, %v3377, %v3379
        %v3387 = vsel %vm2824, %v3370, 0
        %v3390 = vsel %vm2824, %v3371, 0
        %3392 = vmatpush.msra.mxu0 0.0
        %3393 = vmatpush.msra.mxu0 0.0
        %3394 = vmatpush.msra.mxu0 0.0
        %3395 = vmatpush.msra.mxu0 0.0
        %3396 = vmatpush.msra.mxu0 0.0
        %3397 = vmatpush.msra.mxu0 0.0
        %3398 = vmatpush.msra.mxu0 0.0
        %3399 = vmatpush.msra.mxu0 0.0
        %3400 = vmatpush.msra.mxu0 0.0
        %3401 = vmatpush.msra.mxu0 0.0
        %3402 = vmatpush.msra.mxu0 0.0
        %3403 = vmatpush.msra.mxu0 0.0
        %3404 = vmatpush.msra.mxu0 0.0
        %3405 = vmatpush.msra.mxu0 0.0
        %3406 = vmatpush.msra.mxu0 %v3381
        %3407 = vmatpush.msra.mxu0 %v3380
        %3408 = vmatmul.f32.gmra.mxu0 %v3387
        %v3409 = vpop.f32.mrf.mxu0
        %v3410 = vadd.f32 0.0, %v3409
        %3411 = vmatmul.f32.gmra.mxu0 %v3390
        %v3412 = vpop.f32.mrf.mxu0
        %v3413 = vadd.f32 0.0, %v3412
        %3414 = vdwg.mxu0
        %3415 = vmatpush.msra.mxu0 0.0
        %3416 = vmatpush.msra.mxu0 0.0
        %3417 = vmatpush.msra.mxu0 0.0
        %3418 = vmatpush.msra.mxu0 0.0
        %3419 = vmatpush.msra.mxu0 0.0
        %3420 = vmatpush.msra.mxu0 0.0
        %3421 = vmatpush.msra.mxu0 0.0
        %3422 = vmatpush.msra.mxu0 0.0
        %3423 = vmatpush.msra.mxu0 0.0
        %3424 = vmatpush.msra.mxu0 0.0
        %3425 = vmatpush.msra.mxu0 0.0
        %3426 = vmatpush.msra.mxu0 0.0
        %3427 = vmatpush.msra.mxu0 0.0
        %3428 = vmatpush.msra.mxu0 0.0
        %3429 = vmatpush.msra.mxu0 %v3379
        %3430 = vmatpush.msra.mxu0 %v3375
        %3431 = vmatmul.f32.gmra.mxu0 %v3387
        %v3432 = vpop.f32.mrf.mxu0
        %v3433 = vadd.f32 0.0, %v3432
        %3434 = vmatmul.f32.gmra.mxu0 %v3390
        %v3435 = vpop.f32.mrf.mxu0
        %v3436 = vadd.f32 0.0, %v3435
        %3437 = vdwg.mxu0
        %v3438 = vadd.f32 %v3365, %v3410
        %v3439 = vadd.f32 %v3366, %v3433
        %v3440 = vadd.f32 %v3367, %v3413
        %v3441 = vadd.f32 %v3368, %v3436
        %v3442 = vld [vmem:[%s4] sm:$0xff]
        %v3443 = vld [vmem:[%s4 + $0x8] sm:$0xff]
        %3445 = vset.pattern.permute.xlu0 0
        %3446 = vperm.xlu0 %3445, %v3442
        %v3447 = vpop.permute.xlu0 %3446
        %3450 = vset.pattern.permute.xlu0 0
        %3451 = vperm.xlu0 %3450, %v3443
        %v3452 = vpop.permute.xlu0 %3451
        %v3454 = vadd.f32 %v3438, %v3447
        %v3455 = vadd.f32 %v3439, %v3447
        %v3456 = vadd.f32 %v3440, %v3452
        %v3457 = vadd.f32 %v3441, %v3452
        %v3458 = vmax.f32 %v3454, 0.0
        %v3459 = vmax.f32 %v3455, 0.0
        %v3460 = vmax.f32 %v3456, 0.0
        %v3461 = vmax.f32 %v3457, 0.0
        %v3462 = vperm.slane %v2798, 0
        %v3463 = vperm.slane %v2800, 0
        %v3464 = vmul.f32 %v3458, %v3462
        %v3465 = vmul.f32 %v3459, %v3463
        %v3466 = vmul.f32 %v3460, %v3462
        %v3467 = vmul.f32 %v3461, %v3463
        %3472 = vrot.lane.b32.xlu0 %v3464, 15
        %v3473 = vpop.permute.xlu0 %3472
        %3474 = vrot.lane.b32.xlu0 %v3465, 15
        %v3475 = vpop.permute.xlu0 %3474
        %3476 = vrot.lane.b32.xlu0 %v3466, 15
        %v3477 = vpop.permute.xlu0 %3476
        %3478 = vrot.lane.b32.xlu0 %v3467, 15
        %v3479 = vpop.permute.xlu0 %3478
        %vm3480 = vcmask 121856
        %v3481 = vsel %vm3480, %v3473, %v3475
        %v3482 = vsel %vm3480, %v3477, %v3479
        %v3487 = vsel %vm3480, 0.0, %v3473
        %v3488 = vsel %vm3480, 0.0, %v3477
        %vm3489 = vcmask 433152
        %v3490 = vsel %vm3489, %v3481, 0.0
        %v3491 = vsel %vm3489, %v3482, 0.0
        %v3492 = vld [vmem:[%s5] sm:$0xff]
        %v3493 = vld [vmem:[%s5 + $0x8] sm:$0xff]
        %s3494 = scalar_lea.vmem %s5, 16
        %v3495 = vld [vmem:[%s3494] sm:$0xff]
        %v3496 = vld [vmem:[%s3494 + $0x8] sm:$0xff]
        %3501 = vrot.lane.b32.xlu0 %v3487, 127
        %v3502 = vpop.permute.xlu0 %3501
        %3503 = vrot.lane.b32.xlu0 %v3490, 127
        %v3504 = vpop.permute.xlu0 %3503
        %3505 = vrot.lane.b32.xlu0 %v3488, 127
        %v3506 = vpop.permute.xlu0 %3505
        %3507 = vrot.lane.b32.xlu0 %v3491, 127
        %v3508 = vpop.permute.xlu0 %3507
        %v3509 = vsel %vm515, %v3502, %v3504
        %v3510 = vsel %vm515, %v3506, %v3508
        %v3516 = vsel %vm2824, %v3495, 0
        %v3519 = vsel %vm2824, %v3496, 0
        %3521 = vmatpush.msra.mxu0 0.0
        %3522 = vmatpush.msra.mxu0 0.0
        %3523 = vmatpush.msra.mxu0 0.0
        %3524 = vmatpush.msra.mxu0 0.0
        %3525 = vmatpush.msra.mxu0 0.0
        %3526 = vmatpush.msra.mxu0 0.0
        %3527 = vmatpush.msra.mxu0 0.0
        %3528 = vmatpush.msra.mxu0 0.0
        %3529 = vmatpush.msra.mxu0 0.0
        %3530 = vmatpush.msra.mxu0 0.0
        %3531 = vmatpush.msra.mxu0 0.0
        %3532 = vmatpush.msra.mxu0 0.0
        %3533 = vmatpush.msra.mxu0 0.0
        %3534 = vmatpush.msra.mxu0 0.0
        %3535 = vmatpush.msra.mxu0 %v3510
        %3536 = vmatpush.msra.mxu0 %v3509
        %3537 = vmatmul.f32.gmra.mxu0 %v3516
        %v3538 = vpop.f32.mrf.mxu0
        %v3539 = vadd.f32 0.0, %v3538
        %3540 = vmatmul.f32.gmra.mxu0 %v3519
        %v3541 = vpop.f32.mrf.mxu0
        %v3542 = vadd.f32 0.0, %v3541
        %3543 = vdwg.mxu0
        %3544 = vmatpush.msra.mxu0 0.0
        %3545 = vmatpush.msra.mxu0 0.0
        %3546 = vmatpush.msra.mxu0 0.0
        %3547 = vmatpush.msra.mxu0 0.0
        %3548 = vmatpush.msra.mxu0 0.0
        %3549 = vmatpush.msra.mxu0 0.0
        %3550 = vmatpush.msra.mxu0 0.0
        %3551 = vmatpush.msra.mxu0 0.0
        %3552 = vmatpush.msra.mxu0 0.0
        %3553 = vmatpush.msra.mxu0 0.0
        %3554 = vmatpush.msra.mxu0 0.0
        %3555 = vmatpush.msra.mxu0 0.0
        %3556 = vmatpush.msra.mxu0 0.0
        %3557 = vmatpush.msra.mxu0 0.0
        %3558 = vmatpush.msra.mxu0 %v3508
        %3559 = vmatpush.msra.mxu0 %v3504
        %3560 = vmatmul.f32.gmra.mxu0 %v3516
        %v3561 = vpop.f32.mrf.mxu0
        %v3562 = vadd.f32 0.0, %v3561
        %3563 = vmatmul.f32.gmra.mxu0 %v3519
        %v3564 = vpop.f32.mrf.mxu0
        %v3565 = vadd.f32 0.0, %v3564
        %3566 = vdwg.mxu0
        %v3568 = vsel %vm2824, %v3492, 0
        %v3571 = vsel %vm2824, %v3493, 0
        %3573 = vmatpush.msra.mxu0 0.0
        %3574 = vmatpush.msra.mxu0 0.0
        %3575 = vmatpush.msra.mxu0 0.0
        %3576 = vmatpush.msra.mxu0 0.0
        %3577 = vmatpush.msra.mxu0 0.0
        %3578 = vmatpush.msra.mxu0 0.0
        %3579 = vmatpush.msra.mxu0 0.0
        %3580 = vmatpush.msra.mxu0 0.0
        %3581 = vmatpush.msra.mxu0 0.0
        %3582 = vmatpush.msra.mxu0 0.0
        %3583 = vmatpush.msra.mxu0 0.0
        %3584 = vmatpush.msra.mxu0 0.0
        %3585 = vmatpush.msra.mxu0 0.0
        %3586 = vmatpush.msra.mxu0 0.0
        %3587 = vmatpush.msra.mxu0 %v3488
        %3588 = vmatpush.msra.mxu0 %v3487
        %3589 = vmatmul.f32.gmra.mxu0 %v3568
        %v3590 = vpop.f32.mrf.mxu0
        %v3591 = vadd.f32 %v3539, %v3590
        %3592 = vmatmul.f32.gmra.mxu0 %v3571
        %v3593 = vpop.f32.mrf.mxu0
        %v3594 = vadd.f32 %v3542, %v3593
        %3595 = vdwg.mxu0
        %3596 = vmatpush.msra.mxu0 0.0
        %3597 = vmatpush.msra.mxu0 0.0
        %3598 = vmatpush.msra.mxu0 0.0
        %3599 = vmatpush.msra.mxu0 0.0
        %3600 = vmatpush.msra.mxu0 0.0
        %3601 = vmatpush.msra.mxu0 0.0
        %3602 = vmatpush.msra.mxu0 0.0
        %3603 = vmatpush.msra.mxu0 0.0
        %3604 = vmatpush.msra.mxu0 0.0
        %3605 = vmatpush.msra.mxu0 0.0
        %3606 = vmatpush.msra.mxu0 0.0
        %3607 = vmatpush.msra.mxu0 0.0
        %3608 = vmatpush.msra.mxu0 0.0
        %3609 = vmatpush.msra.mxu0 0.0
        %3610 = vmatpush.msra.mxu0 %v3491
        %3611 = vmatpush.msra.mxu0 %v3490
        %3612 = vmatmul.f32.gmra.mxu0 %v3568
        %v3613 = vpop.f32.mrf.mxu0
        %v3614 = vadd.f32 %v3562, %v3613
        %3615 = vmatmul.f32.gmra.mxu0 %v3571
        %v3616 = vpop.f32.mrf.mxu0
        %v3617 = vadd.f32 %v3565, %v3616
        %3618 = vdwg.mxu0
        %s3619 = scalar_lea.vmem %s5, 32
        %v3620 = vld [vmem:[%s3619] sm:$0xff]
        %v3621 = vld [vmem:[%s3619 + $0x8] sm:$0xff]
        %3622 = vrot.lane.b32.xlu0 %v3487, 126
        %v3623 = vpop.permute.xlu0 %3622
        %3624 = vrot.lane.b32.xlu0 %v3490, 126
        %v3625 = vpop.permute.xlu0 %3624
        %3626 = vrot.lane.b32.xlu0 %v3488, 126
        %v3627 = vpop.permute.xlu0 %3626
        %3628 = vrot.lane.b32.xlu0 %v3491, 126
        %v3629 = vpop.permute.xlu0 %3628
        %v3630 = vsel %vm539, %v3623, %v3625
        %v3631 = vsel %vm539, %v3627, %v3629
        %v3637 = vsel %vm2824, %v3620, 0
        %v3640 = vsel %vm2824, %v3621, 0
        %3642 = vmatpush.msra.mxu0 0.0
        %3643 = vmatpush.msra.mxu0 0.0
        %3644 = vmatpush.msra.mxu0 0.0
        %3645 = vmatpush.msra.mxu0 0.0
        %3646 = vmatpush.msra.mxu0 0.0
        %3647 = vmatpush.msra.mxu0 0.0
        %3648 = vmatpush.msra.mxu0 0.0
        %3649 = vmatpush.msra.mxu0 0.0
        %3650 = vmatpush.msra.mxu0 0.0
        %3651 = vmatpush.msra.mxu0 0.0
        %3652 = vmatpush.msra.mxu0 0.0
        %3653 = vmatpush.msra.mxu0 0.0
        %3654 = vmatpush.msra.mxu0 0.0
        %3655 = vmatpush.msra.mxu0 0.0
        %3656 = vmatpush.msra.mxu0 %v3631
        %3657 = vmatpush.msra.mxu0 %v3630
        %3658 = vmatmul.f32.gmra.mxu0 %v3637
        %v3659 = vpop.f32.mrf.mxu0
        %v3660 = vadd.f32 0.0, %v3659
        %3661 = vmatmul.f32.gmra.mxu0 %v3640
        %v3662 = vpop.f32.mrf.mxu0
        %v3663 = vadd.f32 0.0, %v3662
        %3664 = vdwg.mxu0
        %3665 = vmatpush.msra.mxu0 0.0
        %3666 = vmatpush.msra.mxu0 0.0
        %3667 = vmatpush.msra.mxu0 0.0
        %3668 = vmatpush.msra.mxu0 0.0
        %3669 = vmatpush.msra.mxu0 0.0
        %3670 = vmatpush.msra.mxu0 0.0
        %3671 = vmatpush.msra.mxu0 0.0
        %3672 = vmatpush.msra.mxu0 0.0
        %3673 = vmatpush.msra.mxu0 0.0
        %3674 = vmatpush.msra.mxu0 0.0
        %3675 = vmatpush.msra.mxu0 0.0
        %3676 = vmatpush.msra.mxu0 0.0
        %3677 = vmatpush.msra.mxu0 0.0
        %3678 = vmatpush.msra.mxu0 0.0
        %3679 = vmatpush.msra.mxu0 %v3629
        %3680 = vmatpush.msra.mxu0 %v3625
        %3681 = vmatmul.f32.gmra.mxu0 %v3637
        %v3682 = vpop.f32.mrf.mxu0
        %v3683 = vadd.f32 0.0, %v3682
        %3684 = vmatmul.f32.gmra.mxu0 %v3640
        %v3685 = vpop.f32.mrf.mxu0
        %v3686 = vadd.f32 0.0, %v3685
        %3687 = vdwg.mxu0
        %v3688 = vadd.f32 %v3591, %v3660
        %v3689 = vadd.f32 %v3614, %v3683
        %v3690 = vadd.f32 %v3594, %v3663
        %v3691 = vadd.f32 %v3617, %v3686
        %s3692 = scalar_lea.vmem %s5, 48
        %v3693 = vld [vmem:[%s3692] sm:$0xff]
        %v3694 = vld [vmem:[%s3692 + $0x8] sm:$0xff]
        %3695 = vrot.lane.b32.xlu0 %v3487, 114
        %v3696 = vpop.permute.xlu0 %3695
        %3697 = vrot.lane.b32.xlu0 %v3490, 114
        %v3698 = vpop.permute.xlu0 %3697
        %3699 = vrot.lane.b32.xlu0 %v3488, 114
        %v3700 = vpop.permute.xlu0 %3699
        %3701 = vrot.lane.b32.xlu0 %v3491, 114
        %v3702 = vpop.permute.xlu0 %3701
        %v3703 = vsel %vm3013, %v3696, %v3698
        %v3704 = vsel %vm3013, %v3700, %v3702
        %v3710 = vsel %vm2824, %v3693, 0
        %v3713 = vsel %vm2824, %v3694, 0
        %3715 = vmatpush.msra.mxu0 0.0
        %3716 = vmatpush.msra.mxu0 0.0
        %3717 = vmatpush.msra.mxu0 0.0
        %3718 = vmatpush.msra.mxu0 0.0
        %3719 = vmatpush.msra.mxu0 0.0
        %3720 = vmatpush.msra.mxu0 0.0
        %3721 = vmatpush.msra.mxu0 0.0
        %3722 = vmatpush.msra.mxu0 0.0
        %3723 = vmatpush.msra.mxu0 0.0
        %3724 = vmatpush.msra.mxu0 0.0
        %3725 = vmatpush.msra.mxu0 0.0
        %3726 = vmatpush.msra.mxu0 0.0
        %3727 = vmatpush.msra.mxu0 0.0
        %3728 = vmatpush.msra.mxu0 0.0
        %3729 = vmatpush.msra.mxu0 %v3704
        %3730 = vmatpush.msra.mxu0 %v3703
        %3731 = vmatmul.f32.gmra.mxu0 %v3710
        %v3732 = vpop.f32.mrf.mxu0
        %v3733 = vadd.f32 0.0, %v3732
        %3734 = vmatmul.f32.gmra.mxu0 %v3713
        %v3735 = vpop.f32.mrf.mxu0
        %v3736 = vadd.f32 0.0, %v3735
        %3737 = vdwg.mxu0
        %3738 = vmatpush.msra.mxu0 0.0
        %3739 = vmatpush.msra.mxu0 0.0
        %3740 = vmatpush.msra.mxu0 0.0
        %3741 = vmatpush.msra.mxu0 0.0
        %3742 = vmatpush.msra.mxu0 0.0
        %3743 = vmatpush.msra.mxu0 0.0
        %3744 = vmatpush.msra.mxu0 0.0
        %3745 = vmatpush.msra.mxu0 0.0
        %3746 = vmatpush.msra.mxu0 0.0
        %3747 = vmatpush.msra.mxu0 0.0
        %3748 = vmatpush.msra.mxu0 0.0
        %3749 = vmatpush.msra.mxu0 0.0
        %3750 = vmatpush.msra.mxu0 0.0
        %3751 = vmatpush.msra.mxu0 0.0
        %3752 = vmatpush.msra.mxu0 %v3702
        %3753 = vmatpush.msra.mxu0 %v3698
        %3754 = vmatmul.f32.gmra.mxu0 %v3710
        %v3755 = vpop.f32.mrf.mxu0
        %v3756 = vadd.f32 0.0, %v3755
        %3757 = vmatmul.f32.gmra.mxu0 %v3713
        %v3758 = vpop.f32.mrf.mxu0
        %v3759 = vadd.f32 0.0, %v3758
        %3760 = vdwg.mxu0
        %v3761 = vadd.f32 %v3688, %v3733
        %v3762 = vadd.f32 %v3689, %v3756
        %v3763 = vadd.f32 %v3690, %v3736
        %v3764 = vadd.f32 %v3691, %v3759
        %s3765 = scalar_lea.vmem %s5, 64
        %v3766 = vld [vmem:[%s3765] sm:$0xff]
        %v3767 = vld [vmem:[%s3765 + $0x8] sm:$0xff]
        %3768 = vrot.lane.b32.xlu0 %v3487, 113
        %v3769 = vpop.permute.xlu0 %3768
        %3770 = vrot.lane.b32.xlu0 %v3490, 113
        %v3771 = vpop.permute.xlu0 %3770
        %3772 = vrot.lane.b32.xlu0 %v3488, 113
        %v3773 = vpop.permute.xlu0 %3772
        %3774 = vrot.lane.b32.xlu0 %v3491, 113
        %v3775 = vpop.permute.xlu0 %3774
        %v3776 = vsel %vm3087, %v3769, %v3771
        %v3777 = vsel %vm3087, %v3773, %v3775
        %v3783 = vsel %vm2824, %v3766, 0
        %v3786 = vsel %vm2824, %v3767, 0
        %3788 = vmatpush.msra.mxu0 0.0
        %3789 = vmatpush.msra.mxu0 0.0
        %3790 = vmatpush.msra.mxu0 0.0
        %3791 = vmatpush.msra.mxu0 0.0
        %3792 = vmatpush.msra.mxu0 0.0
        %3793 = vmatpush.msra.mxu0 0.0
        %3794 = vmatpush.msra.mxu0 0.0
        %3795 = vmatpush.msra.mxu0 0.0
        %3796 = vmatpush.msra.mxu0 0.0
        %3797 = vmatpush.msra.mxu0 0.0
        %3798 = vmatpush.msra.mxu0 0.0
        %3799 = vmatpush.msra.mxu0 0.0
        %3800 = vmatpush.msra.mxu0 0.0
        %3801 = vmatpush.msra.mxu0 0.0
        %3802 = vmatpush.msra.mxu0 %v3777
        %3803 = vmatpush.msra.mxu0 %v3776
        %3804 = vmatmul.f32.gmra.mxu0 %v3783
        %v3805 = vpop.f32.mrf.mxu0
        %v3806 = vadd.f32 0.0, %v3805
        %3807 = vmatmul.f32.gmra.mxu0 %v3786
        %v3808 = vpop.f32.mrf.mxu0
        %v3809 = vadd.f32 0.0, %v3808
        %3810 = vdwg.mxu0
        %3811 = vmatpush.msra.mxu0 0.0
        %3812 = vmatpush.msra.mxu0 0.0
        %3813 = vmatpush.msra.mxu0 0.0
        %3814 = vmatpush.msra.mxu0 0.0
        %3815 = vmatpush.msra.mxu0 0.0
        %3816 = vmatpush.msra.mxu0 0.0
        %3817 = vmatpush.msra.mxu0 0.0
        %3818 = vmatpush.msra.mxu0 0.0
        %3819 = vmatpush.msra.mxu0 0.0
        %3820 = vmatpush.msra.mxu0 0.0
        %3821 = vmatpush.msra.mxu0 0.0
        %3822 = vmatpush.msra.mxu0 0.0
        %3823 = vmatpush.msra.mxu0 0.0
        %3824 = vmatpush.msra.mxu0 0.0
        %3825 = vmatpush.msra.mxu0 %v3775
        %3826 = vmatpush.msra.mxu0 %v3771
        %3827 = vmatmul.f32.gmra.mxu0 %v3783
        %v3828 = vpop.f32.mrf.mxu0
        %v3829 = vadd.f32 0.0, %v3828
        %3830 = vmatmul.f32.gmra.mxu0 %v3786
        %v3831 = vpop.f32.mrf.mxu0
        %v3832 = vadd.f32 0.0, %v3831
        %3833 = vdwg.mxu0
        %v3834 = vadd.f32 %v3761, %v3806
        %v3835 = vadd.f32 %v3762, %v3829
        %v3836 = vadd.f32 %v3763, %v3809
        %v3837 = vadd.f32 %v3764, %v3832
        %s3838 = scalar_lea.vmem %s5, 80
        %v3839 = vld [vmem:[%s3838] sm:$0xff]
        %v3840 = vld [vmem:[%s3838 + $0x8] sm:$0xff]
        %3841 = vrot.lane.b32.xlu0 %v3487, 112
        %v3842 = vpop.permute.xlu0 %3841
        %3843 = vrot.lane.b32.xlu0 %v3490, 112
        %v3844 = vpop.permute.xlu0 %3843
        %3845 = vrot.lane.b32.xlu0 %v3488, 112
        %v3846 = vpop.permute.xlu0 %3845
        %3847 = vrot.lane.b32.xlu0 %v3491, 112
        %v3848 = vpop.permute.xlu0 %3847
        %v3849 = vsel %vm2739, %v3842, %v3844
        %v3850 = vsel %vm2739, %v3846, %v3848
        %v3856 = vsel %vm2824, %v3839, 0
        %v3859 = vsel %vm2824, %v3840, 0
        %3861 = vmatpush.msra.mxu0 0.0
        %3862 = vmatpush.msra.mxu0 0.0
        %3863 = vmatpush.msra.mxu0 0.0
        %3864 = vmatpush.msra.mxu0 0.0
        %3865 = vmatpush.msra.mxu0 0.0
        %3866 = vmatpush.msra.mxu0 0.0
        %3867 = vmatpush.msra.mxu0 0.0
        %3868 = vmatpush.msra.mxu0 0.0
        %3869 = vmatpush.msra.mxu0 0.0
        %3870 = vmatpush.msra.mxu0 0.0
        %3871 = vmatpush.msra.mxu0 0.0
        %3872 = vmatpush.msra.mxu0 0.0
        %3873 = vmatpush.msra.mxu0 0.0
        %3874 = vmatpush.msra.mxu0 0.0
        %3875 = vmatpush.msra.mxu0 %v3850
        %3876 = vmatpush.msra.mxu0 %v3849
        %3877 = vmatmul.f32.gmra.mxu0 %v3856
        %v3878 = vpop.f32.mrf.mxu0
        %v3879 = vadd.f32 0.0, %v3878
        %3880 = vmatmul.f32.gmra.mxu0 %v3859
        %v3881 = vpop.f32.mrf.mxu0
        %v3882 = vadd.f32 0.0, %v3881
        %3883 = vdwg.mxu0
        %3884 = vmatpush.msra.mxu0 0.0
        %3885 = vmatpush.msra.mxu0 0.0
        %3886 = vmatpush.msra.mxu0 0.0
        %3887 = vmatpush.msra.mxu0 0.0
        %3888 = vmatpush.msra.mxu0 0.0
        %3889 = vmatpush.msra.mxu0 0.0
        %3890 = vmatpush.msra.mxu0 0.0
        %3891 = vmatpush.msra.mxu0 0.0
        %3892 = vmatpush.msra.mxu0 0.0
        %3893 = vmatpush.msra.mxu0 0.0
        %3894 = vmatpush.msra.mxu0 0.0
        %3895 = vmatpush.msra.mxu0 0.0
        %3896 = vmatpush.msra.mxu0 0.0
        %3897 = vmatpush.msra.mxu0 0.0
        %3898 = vmatpush.msra.mxu0 %v3848
        %3899 = vmatpush.msra.mxu0 %v3844
        %3900 = vmatmul.f32.gmra.mxu0 %v3856
        %v3901 = vpop.f32.mrf.mxu0
        %v3902 = vadd.f32 0.0, %v3901
        %3903 = vmatmul.f32.gmra.mxu0 %v3859
        %v3904 = vpop.f32.mrf.mxu0
        %v3905 = vadd.f32 0.0, %v3904
        %3906 = vdwg.mxu0
        %v3907 = vadd.f32 %v3834, %v3879
        %v3908 = vadd.f32 %v3835, %v3902
        %v3909 = vadd.f32 %v3836, %v3882
        %v3910 = vadd.f32 %v3837, %v3905
        %s3911 = scalar_lea.vmem %s5, 96
        %v3912 = vld [vmem:[%s3911] sm:$0xff]
        %v3913 = vld [vmem:[%s3911 + $0x8] sm:$0xff]
        %3914 = vrot.lane.b32.xlu0 %v3487, 100
        %v3915 = vpop.permute.xlu0 %3914
        %3916 = vrot.lane.b32.xlu0 %v3490, 100
        %v3917 = vpop.permute.xlu0 %3916
        %3918 = vrot.lane.b32.xlu0 %v3488, 100
        %v3919 = vpop.permute.xlu0 %3918
        %3920 = vrot.lane.b32.xlu0 %v3491, 100
        %v3921 = vpop.permute.xlu0 %3920
        %v3922 = vsel %vm611, %v3915, %v3917
        %v3923 = vsel %vm611, %v3919, %v3921
        %v3929 = vsel %vm2824, %v3912, 0
        %v3932 = vsel %vm2824, %v3913, 0
        %3934 = vmatpush.msra.mxu0 0.0
        %3935 = vmatpush.msra.mxu0 0.0
        %3936 = vmatpush.msra.mxu0 0.0
        %3937 = vmatpush.msra.mxu0 0.0
        %3938 = vmatpush.msra.mxu0 0.0
        %3939 = vmatpush.msra.mxu0 0.0
        %3940 = vmatpush.msra.mxu0 0.0
        %3941 = vmatpush.msra.mxu0 0.0
        %3942 = vmatpush.msra.mxu0 0.0
        %3943 = vmatpush.msra.mxu0 0.0
        %3944 = vmatpush.msra.mxu0 0.0
        %3945 = vmatpush.msra.mxu0 0.0
        %3946 = vmatpush.msra.mxu0 0.0
        %3947 = vmatpush.msra.mxu0 0.0
        %3948 = vmatpush.msra.mxu0 %v3923
        %3949 = vmatpush.msra.mxu0 %v3922
        %3950 = vmatmul.f32.gmra.mxu0 %v3929
        %v3951 = vpop.f32.mrf.mxu0
        %v3952 = vadd.f32 0.0, %v3951
        %3953 = vmatmul.f32.gmra.mxu0 %v3932
        %v3954 = vpop.f32.mrf.mxu0
        %v3955 = vadd.f32 0.0, %v3954
        %3956 = vdwg.mxu0
        %3957 = vmatpush.msra.mxu0 0.0
        %3958 = vmatpush.msra.mxu0 0.0
        %3959 = vmatpush.msra.mxu0 0.0
        %3960 = vmatpush.msra.mxu0 0.0
        %3961 = vmatpush.msra.mxu0 0.0
        %3962 = vmatpush.msra.mxu0 0.0
        %3963 = vmatpush.msra.mxu0 0.0
        %3964 = vmatpush.msra.mxu0 0.0
        %3965 = vmatpush.msra.mxu0 0.0
        %3966 = vmatpush.msra.mxu0 0.0
        %3967 = vmatpush.msra.mxu0 0.0
        %3968 = vmatpush.msra.mxu0 0.0
        %3969 = vmatpush.msra.mxu0 0.0
        %3970 = vmatpush.msra.mxu0 0.0
        %3971 = vmatpush.msra.mxu0 %v3921
        %3972 = vmatpush.msra.mxu0 %v3917
        %3973 = vmatmul.f32.gmra.mxu0 %v3929
        %v3974 = vpop.f32.mrf.mxu0
        %v3975 = vadd.f32 0.0, %v3974
        %3976 = vmatmul.f32.gmra.mxu0 %v3932
        %v3977 = vpop.f32.mrf.mxu0
        %v3978 = vadd.f32 0.0, %v3977
        %3979 = vdwg.mxu0
        %v3980 = vadd.f32 %v3907, %v3952
        %v3981 = vadd.f32 %v3908, %v3975
        %v3982 = vadd.f32 %v3909, %v3955
        %v3983 = vadd.f32 %v3910, %v3978
        %s3984 = scalar_lea.vmem %s5, 112
        %v3985 = vld [vmem:[%s3984] sm:$0xff]
        %v3986 = vld [vmem:[%s3984 + $0x8] sm:$0xff]
        %3987 = vrot.lane.b32.xlu0 %v3487, 99
        %v3988 = vpop.permute.xlu0 %3987
        %3989 = vrot.lane.b32.xlu0 %v3490, 99
        %v3990 = vpop.permute.xlu0 %3989
        %3991 = vrot.lane.b32.xlu0 %v3488, 99
        %v3992 = vpop.permute.xlu0 %3991
        %3993 = vrot.lane.b32.xlu0 %v3491, 99
        %v3994 = vpop.permute.xlu0 %3993
        %v3995 = vsel %vm635, %v3988, %v3990
        %v3996 = vsel %vm635, %v3992, %v3994
        %v4002 = vsel %vm2824, %v3985, 0
        %v4005 = vsel %vm2824, %v3986, 0
        %4007 = vmatpush.msra.mxu0 0.0
        %4008 = vmatpush.msra.mxu0 0.0
        %4009 = vmatpush.msra.mxu0 0.0
        %4010 = vmatpush.msra.mxu0 0.0
        %4011 = vmatpush.msra.mxu0 0.0
        %4012 = vmatpush.msra.mxu0 0.0
        %4013 = vmatpush.msra.mxu0 0.0
        %4014 = vmatpush.msra.mxu0 0.0
        %4015 = vmatpush.msra.mxu0 0.0
        %4016 = vmatpush.msra.mxu0 0.0
        %4017 = vmatpush.msra.mxu0 0.0
        %4018 = vmatpush.msra.mxu0 0.0
        %4019 = vmatpush.msra.mxu0 0.0
        %4020 = vmatpush.msra.mxu0 0.0
        %4021 = vmatpush.msra.mxu0 %v3996
        %4022 = vmatpush.msra.mxu0 %v3995
        %4023 = vmatmul.f32.gmra.mxu0 %v4002
        %v4024 = vpop.f32.mrf.mxu0
        %v4025 = vadd.f32 0.0, %v4024
        %4026 = vmatmul.f32.gmra.mxu0 %v4005
        %v4027 = vpop.f32.mrf.mxu0
        %v4028 = vadd.f32 0.0, %v4027
        %4029 = vdwg.mxu0
        %4030 = vmatpush.msra.mxu0 0.0
        %4031 = vmatpush.msra.mxu0 0.0
        %4032 = vmatpush.msra.mxu0 0.0
        %4033 = vmatpush.msra.mxu0 0.0
        %4034 = vmatpush.msra.mxu0 0.0
        %4035 = vmatpush.msra.mxu0 0.0
        %4036 = vmatpush.msra.mxu0 0.0
        %4037 = vmatpush.msra.mxu0 0.0
        %4038 = vmatpush.msra.mxu0 0.0
        %4039 = vmatpush.msra.mxu0 0.0
        %4040 = vmatpush.msra.mxu0 0.0
        %4041 = vmatpush.msra.mxu0 0.0
        %4042 = vmatpush.msra.mxu0 0.0
        %4043 = vmatpush.msra.mxu0 0.0
        %4044 = vmatpush.msra.mxu0 %v3994
        %4045 = vmatpush.msra.mxu0 %v3990
        %4046 = vmatmul.f32.gmra.mxu0 %v4002
        %v4047 = vpop.f32.mrf.mxu0
        %v4048 = vadd.f32 0.0, %v4047
        %4049 = vmatmul.f32.gmra.mxu0 %v4005
        %v4050 = vpop.f32.mrf.mxu0
        %v4051 = vadd.f32 0.0, %v4050
        %4052 = vdwg.mxu0
        %v4053 = vadd.f32 %v3980, %v4025
        %v4054 = vadd.f32 %v3981, %v4048
        %v4055 = vadd.f32 %v3982, %v4028
        %v4056 = vadd.f32 %v3983, %v4051
        %s4057 = scalar_lea.vmem %s5, 128
        %v4058 = vld [vmem:[%s4057] sm:$0xff]
        %v4059 = vld [vmem:[%s4057 + $0x8] sm:$0xff]
        %4060 = vrot.lane.b32.xlu0 %v3487, 98
        %v4061 = vpop.permute.xlu0 %4060
        %4062 = vrot.lane.b32.xlu0 %v3490, 98
        %v4063 = vpop.permute.xlu0 %4062
        %4064 = vrot.lane.b32.xlu0 %v3488, 98
        %v4065 = vpop.permute.xlu0 %4064
        %4066 = vrot.lane.b32.xlu0 %v3491, 98
        %v4067 = vpop.permute.xlu0 %4066
        %v4068 = vsel %vm659, %v4061, %v4063
        %v4069 = vsel %vm659, %v4065, %v4067
        %v4075 = vsel %vm2824, %v4058, 0
        %v4078 = vsel %vm2824, %v4059, 0
        %4080 = vmatpush.msra.mxu0 0.0
        %4081 = vmatpush.msra.mxu0 0.0
        %4082 = vmatpush.msra.mxu0 0.0
        %4083 = vmatpush.msra.mxu0 0.0
        %4084 = vmatpush.msra.mxu0 0.0
        %4085 = vmatpush.msra.mxu0 0.0
        %4086 = vmatpush.msra.mxu0 0.0
        %4087 = vmatpush.msra.mxu0 0.0
        %4088 = vmatpush.msra.mxu0 0.0
        %4089 = vmatpush.msra.mxu0 0.0
        %4090 = vmatpush.msra.mxu0 0.0
        %4091 = vmatpush.msra.mxu0 0.0
        %4092 = vmatpush.msra.mxu0 0.0
        %4093 = vmatpush.msra.mxu0 0.0
        %4094 = vmatpush.msra.mxu0 %v4069
        %4095 = vmatpush.msra.mxu0 %v4068
        %4096 = vmatmul.f32.gmra.mxu0 %v4075
        %v4097 = vpop.f32.mrf.mxu0
        %v4098 = vadd.f32 0.0, %v4097
        %4099 = vmatmul.f32.gmra.mxu0 %v4078
        %v4100 = vpop.f32.mrf.mxu0
        %v4101 = vadd.f32 0.0, %v4100
        %4102 = vdwg.mxu0
        %4103 = vmatpush.msra.mxu0 0.0
        %4104 = vmatpush.msra.mxu0 0.0
        %4105 = vmatpush.msra.mxu0 0.0
        %4106 = vmatpush.msra.mxu0 0.0
        %4107 = vmatpush.msra.mxu0 0.0
        %4108 = vmatpush.msra.mxu0 0.0
        %4109 = vmatpush.msra.mxu0 0.0
        %4110 = vmatpush.msra.mxu0 0.0
        %4111 = vmatpush.msra.mxu0 0.0
        %4112 = vmatpush.msra.mxu0 0.0
        %4113 = vmatpush.msra.mxu0 0.0
        %4114 = vmatpush.msra.mxu0 0.0
        %4115 = vmatpush.msra.mxu0 0.0
        %4116 = vmatpush.msra.mxu0 0.0
        %4117 = vmatpush.msra.mxu0 %v4067
        %4118 = vmatpush.msra.mxu0 %v4063
        %4119 = vmatmul.f32.gmra.mxu0 %v4075
        %v4120 = vpop.f32.mrf.mxu0
        %v4121 = vadd.f32 0.0, %v4120
        %4122 = vmatmul.f32.gmra.mxu0 %v4078
        %v4123 = vpop.f32.mrf.mxu0
        %v4124 = vadd.f32 0.0, %v4123
        %4125 = vdwg.mxu0
        %v4126 = vadd.f32 %v4053, %v4098
        %v4127 = vadd.f32 %v4054, %v4121
        %v4128 = vadd.f32 %v4055, %v4101
        %v4129 = vadd.f32 %v4056, %v4124
        %v4130 = vld [vmem:[%s6] sm:$0xff]
        %v4131 = vld [vmem:[%s6 + $0x8] sm:$0xff]
        %4133 = vset.pattern.permute.xlu0 0
        %4134 = vperm.xlu0 %4133, %v4130
        %v4135 = vpop.permute.xlu0 %4134
        %4138 = vset.pattern.permute.xlu0 0
        %4139 = vperm.xlu0 %4138, %v4131
        %v4140 = vpop.permute.xlu0 %4139
        %v4142 = vadd.f32 %v4126, %v4135
        %v4143 = vadd.f32 %v4127, %v4135
        %v4144 = vadd.f32 %v4128, %v4140
        %v4145 = vadd.f32 %v4129, %v4140
        %v4146 = vadd.f32 %v3464, %v4142
        %v4147 = vadd.f32 %v3465, %v4143
        %v4148 = vadd.f32 %v3466, %v4144
        %v4149 = vadd.f32 %v3467, %v4145
        %v4150 = vmax.f32 %v4146, 0.0
        %v4151 = vmax.f32 %v4147, 0.0
        %v4152 = vmax.f32 %v4148, 0.0
        %v4153 = vmax.f32 %v4149, 0.0
        %v4154 = vld [vmem:[%s7] sm:$0xff]
        %v4155 = vld [vmem:[%s7 + $0x8] sm:$0xff]
        %v4156 = vld [vmem:[%s7 + $0x10] sm:$0xff]
        %v4157 = vld [vmem:[%s7 + $0x18] sm:$0xff]
        %s4158 = scalar_lea.vmem %s7, 32
        %v4159 = vld [vmem:[%s4158] sm:$0xff]
        %v4160 = vld [vmem:[%s4158 + $0x8] sm:$0xff]
        %v4161 = vld [vmem:[%s4158 + $0x10] sm:$0xff]
        %v4162 = vld [vmem:[%s4158 + $0x18] sm:$0xff]
        %4165 = vrot.lane.b32.xlu0 %v4150, 127
        %v4166 = vpop.permute.xlu0 %4165
        %4167 = vrot.lane.b32.xlu0 %v4152, 127
        %v4168 = vpop.permute.xlu0 %4167
        %v4172 = vsel %vm2824, %v4159, 0
        %v4175 = vsel %vm2824, %v4160, 0
        %v4178 = vsel %vm2824, %v4161, 0
        %v4181 = vsel %vm2824, %v4162, 0
        %4183 = vmatpush.msra.mxu0 0.0
        %4184 = vmatpush.msra.mxu0 0.0
        %4185 = vmatpush.msra.mxu0 0.0
        %4186 = vmatpush.msra.mxu0 0.0
        %4187 = vmatpush.msra.mxu0 0.0
        %4188 = vmatpush.msra.mxu0 0.0
        %4189 = vmatpush.msra.mxu0 0.0
        %4190 = vmatpush.msra.mxu0 0.0
        %4191 = vmatpush.msra.mxu0 0.0
        %4192 = vmatpush.msra.mxu0 0.0
        %4193 = vmatpush.msra.mxu0 0.0
        %4194 = vmatpush.msra.mxu0 0.0
        %4195 = vmatpush.msra.mxu0 0.0
        %4196 = vmatpush.msra.mxu0 0.0
        %4197 = vmatpush.msra.mxu0 %v4168
        %4198 = vmatpush.msra.mxu0 %v4166
        %4199 = vmatmul.f32.gmra.mxu0 %v4172
        %v4200 = vpop.f32.mrf.mxu0
        %v4201 = vadd.f32 0.0, %v4200
        %4202 = vmatmul.f32.gmra.mxu0 %v4175
        %v4203 = vpop.f32.mrf.mxu0
        %v4204 = vadd.f32 0.0, %v4203
        %4205 = vmatmul.f32.gmra.mxu0 %v4178
        %v4206 = vpop.f32.mrf.mxu0
        %v4207 = vadd.f32 0.0, %v4206
        %4208 = vmatmul.f32.gmra.mxu0 %v4181
        %v4209 = vpop.f32.mrf.mxu0
        %v4210 = vadd.f32 0.0, %v4209
        %4211 = vdwg.mxu0
        %v4213 = vsel %vm2824, %v4154, 0
        %v4216 = vsel %vm2824, %v4155, 0
        %v4219 = vsel %vm2824, %v4156, 0
        %v4222 = vsel %vm2824, %v4157, 0
        %4224 = vmatpush.msra.mxu0 0.0
        %4225 = vmatpush.msra.mxu0 0.0
        %4226 = vmatpush.msra.mxu0 0.0
        %4227 = vmatpush.msra.mxu0 0.0
        %4228 = vmatpush.msra.mxu0 0.0
        %4229 = vmatpush.msra.mxu0 0.0
        %4230 = vmatpush.msra.mxu0 0.0
        %4231 = vmatpush.msra.mxu0 0.0
        %4232 = vmatpush.msra.mxu0 0.0
        %4233 = vmatpush.msra.mxu0 0.0
        %4234 = vmatpush.msra.mxu0 0.0
        %4235 = vmatpush.msra.mxu0 0.0
        %4236 = vmatpush.msra.mxu0 0.0
        %4237 = vmatpush.msra.mxu0 0.0
        %4238 = vmatpush.msra.mxu0 %v4152
        %4239 = vmatpush.msra.mxu0 %v4150
        %4240 = vmatmul.f32.gmra.mxu0 %v4213
        %v4241 = vpop.f32.mrf.mxu0
        %v4242 = vadd.f32 %v4201, %v4241
        %4243 = vmatmul.f32.gmra.mxu0 %v4216
        %v4244 = vpop.f32.mrf.mxu0
        %v4245 = vadd.f32 %v4204, %v4244
        %4246 = vmatmul.f32.gmra.mxu0 %v4219
        %v4247 = vpop.f32.mrf.mxu0
        %v4248 = vadd.f32 %v4207, %v4247
        %4249 = vmatmul.f32.gmra.mxu0 %v4222
        %v4250 = vpop.f32.mrf.mxu0
        %v4251 = vadd.f32 %v4210, %v4250
        %4252 = vdwg.mxu0
        %s4253 = scalar_lea.vmem %s7, 64
        %v4254 = vld [vmem:[%s4253] sm:$0xff]
        %v4255 = vld [vmem:[%s4253 + $0x8] sm:$0xff]
        %v4256 = vld [vmem:[%s4253 + $0x10] sm:$0xff]
        %v4257 = vld [vmem:[%s4253 + $0x18] sm:$0xff]
        %4258 = vrot.lane.b32.xlu0 %v4150, 126
        %v4259 = vpop.permute.xlu0 %4258
        %4260 = vrot.lane.b32.xlu0 %v4152, 126
        %v4261 = vpop.permute.xlu0 %4260
        %v4265 = vsel %vm2824, %v4254, 0
        %v4268 = vsel %vm2824, %v4255, 0
        %v4271 = vsel %vm2824, %v4256, 0
        %v4274 = vsel %vm2824, %v4257, 0
        %4276 = vmatpush.msra.mxu0 0.0
        %4277 = vmatpush.msra.mxu0 0.0
        %4278 = vmatpush.msra.mxu0 0.0
        %4279 = vmatpush.msra.mxu0 0.0
        %4280 = vmatpush.msra.mxu0 0.0
        %4281 = vmatpush.msra.mxu0 0.0
        %4282 = vmatpush.msra.mxu0 0.0
        %4283 = vmatpush.msra.mxu0 0.0
        %4284 = vmatpush.msra.mxu0 0.0
        %4285 = vmatpush.msra.mxu0 0.0
        %4286 = vmatpush.msra.mxu0 0.0
        %4287 = vmatpush.msra.mxu0 0.0
        %4288 = vmatpush.msra.mxu0 0.0
        %4289 = vmatpush.msra.mxu0 0.0
        %4290 = vmatpush.msra.mxu0 %v4261
        %4291 = vmatpush.msra.mxu0 %v4259
        %4292 = vmatmul.f32.gmra.mxu0 %v4265
        %v4293 = vpop.f32.mrf.mxu0
        %v4294 = vadd.f32 0.0, %v4293
        %4295 = vmatmul.f32.gmra.mxu0 %v4268
        %v4296 = vpop.f32.mrf.mxu0
        %v4297 = vadd.f32 0.0, %v4296
        %4298 = vmatmul.f32.gmra.mxu0 %v4271
        %v4299 = vpop.f32.mrf.mxu0
        %v4300 = vadd.f32 0.0, %v4299
        %4301 = vmatmul.f32.gmra.mxu0 %v4274
        %v4302 = vpop.f32.mrf.mxu0
        %v4303 = vadd.f32 0.0, %v4302
        %4304 = vdwg.mxu0
        %v4305 = vadd.f32 %v4242, %v4294
        %v4306 = vadd.f32 %v4245, %v4297
        %v4307 = vadd.f32 %v4248, %v4300
        %v4308 = vadd.f32 %v4251, %v4303
        %s4309 = scalar_lea.vmem %s7, 96
        %v4310 = vld [vmem:[%s4309] sm:$0xff]
        %v4311 = vld [vmem:[%s4309 + $0x8] sm:$0xff]
        %v4312 = vld [vmem:[%s4309 + $0x10] sm:$0xff]
        %v4313 = vld [vmem:[%s4309 + $0x18] sm:$0xff]
        %4314 = vrot.lane.b32.xlu0 %v4150, 125
        %v4315 = vpop.permute.xlu0 %4314
        %4316 = vrot.lane.b32.xlu0 %v4152, 125
        %v4317 = vpop.permute.xlu0 %4316
        %v4321 = vsel %vm2824, %v4310, 0
        %v4324 = vsel %vm2824, %v4311, 0
        %v4327 = vsel %vm2824, %v4312, 0
        %v4330 = vsel %vm2824, %v4313, 0
        %4332 = vmatpush.msra.mxu0 0.0
        %4333 = vmatpush.msra.mxu0 0.0
        %4334 = vmatpush.msra.mxu0 0.0
        %4335 = vmatpush.msra.mxu0 0.0
        %4336 = vmatpush.msra.mxu0 0.0
        %4337 = vmatpush.msra.mxu0 0.0
        %4338 = vmatpush.msra.mxu0 0.0
        %4339 = vmatpush.msra.mxu0 0.0
        %4340 = vmatpush.msra.mxu0 0.0
        %4341 = vmatpush.msra.mxu0 0.0
        %4342 = vmatpush.msra.mxu0 0.0
        %4343 = vmatpush.msra.mxu0 0.0
        %4344 = vmatpush.msra.mxu0 0.0
        %4345 = vmatpush.msra.mxu0 0.0
        %4346 = vmatpush.msra.mxu0 %v4317
        %4347 = vmatpush.msra.mxu0 %v4315
        %4348 = vmatmul.f32.gmra.mxu0 %v4321
        %v4349 = vpop.f32.mrf.mxu0
        %v4350 = vadd.f32 0.0, %v4349
        %4351 = vmatmul.f32.gmra.mxu0 %v4324
        %v4352 = vpop.f32.mrf.mxu0
        %v4353 = vadd.f32 0.0, %v4352
        %4354 = vmatmul.f32.gmra.mxu0 %v4327
        %v4355 = vpop.f32.mrf.mxu0
        %v4356 = vadd.f32 0.0, %v4355
        %4357 = vmatmul.f32.gmra.mxu0 %v4330
        %v4358 = vpop.f32.mrf.mxu0
        %v4359 = vadd.f32 0.0, %v4358
        %4360 = vdwg.mxu0
        %v4361 = vadd.f32 %v4305, %v4350
        %v4362 = vadd.f32 %v4306, %v4353
        %v4363 = vadd.f32 %v4307, %v4356
        %v4364 = vadd.f32 %v4308, %v4359
        %s4365 = scalar_lea.vmem %s7, 128
        %v4366 = vld [vmem:[%s4365] sm:$0xff]
        %v4367 = vld [vmem:[%s4365 + $0x8] sm:$0xff]
        %v4368 = vld [vmem:[%s4365 + $0x10] sm:$0xff]
        %v4369 = vld [vmem:[%s4365 + $0x18] sm:$0xff]
        %4370 = vrot.lane.b32.xlu0 %v4150, 124
        %v4371 = vpop.permute.xlu0 %4370
        %4372 = vrot.lane.b32.xlu0 %v4152, 124
        %v4373 = vpop.permute.xlu0 %4372
        %v4377 = vsel %vm2824, %v4366, 0
        %v4380 = vsel %vm2824, %v4367, 0
        %v4383 = vsel %vm2824, %v4368, 0
        %v4386 = vsel %vm2824, %v4369, 0
        %4388 = vmatpush.msra.mxu0 0.0
        %4389 = vmatpush.msra.mxu0 0.0
        %4390 = vmatpush.msra.mxu0 0.0
        %4391 = vmatpush.msra.mxu0 0.0
        %4392 = vmatpush.msra.mxu0 0.0
        %4393 = vmatpush.msra.mxu0 0.0
        %4394 = vmatpush.msra.mxu0 0.0
        %4395 = vmatpush.msra.mxu0 0.0
        %4396 = vmatpush.msra.mxu0 0.0
        %4397 = vmatpush.msra.mxu0 0.0
        %4398 = vmatpush.msra.mxu0 0.0
        %4399 = vmatpush.msra.mxu0 0.0
        %4400 = vmatpush.msra.mxu0 0.0
        %4401 = vmatpush.msra.mxu0 0.0
        %4402 = vmatpush.msra.mxu0 %v4373
        %4403 = vmatpush.msra.mxu0 %v4371
        %4404 = vmatmul.f32.gmra.mxu0 %v4377
        %v4405 = vpop.f32.mrf.mxu0
        %v4406 = vadd.f32 0.0, %v4405
        %4407 = vmatmul.f32.gmra.mxu0 %v4380
        %v4408 = vpop.f32.mrf.mxu0
        %v4409 = vadd.f32 0.0, %v4408
        %4410 = vmatmul.f32.gmra.mxu0 %v4383
        %v4411 = vpop.f32.mrf.mxu0
        %v4412 = vadd.f32 0.0, %v4411
        %4413 = vmatmul.f32.gmra.mxu0 %v4386
        %v4414 = vpop.f32.mrf.mxu0
        %v4415 = vadd.f32 0.0, %v4414
        %4416 = vdwg.mxu0
        %v4417 = vadd.f32 %v4361, %v4406
        %v4418 = vadd.f32 %v4362, %v4409
        %v4419 = vadd.f32 %v4363, %v4412
        %v4420 = vadd.f32 %v4364, %v4415
        %s4421 = scalar_lea.vmem %s7, 160
        %v4422 = vld [vmem:[%s4421] sm:$0xff]
        %v4423 = vld [vmem:[%s4421 + $0x8] sm:$0xff]
        %v4424 = vld [vmem:[%s4421 + $0x10] sm:$0xff]
        %v4425 = vld [vmem:[%s4421 + $0x18] sm:$0xff]
        %4426 = vrot.lane.b32.xlu0 %v4150, 114
        %v4427 = vpop.permute.xlu0 %4426
        %4428 = vrot.lane.b32.xlu0 %v4152, 114
        %v4429 = vpop.permute.xlu0 %4428
        %v4433 = vsel %vm2824, %v4422, 0
        %v4436 = vsel %vm2824, %v4423, 0
        %v4439 = vsel %vm2824, %v4424, 0
        %v4442 = vsel %vm2824, %v4425, 0
        %4444 = vmatpush.msra.mxu0 0.0
        %4445 = vmatpush.msra.mxu0 0.0
        %4446 = vmatpush.msra.mxu0 0.0
        %4447 = vmatpush.msra.mxu0 0.0
        %4448 = vmatpush.msra.mxu0 0.0
        %4449 = vmatpush.msra.mxu0 0.0
        %4450 = vmatpush.msra.mxu0 0.0
        %4451 = vmatpush.msra.mxu0 0.0
        %4452 = vmatpush.msra.mxu0 0.0
        %4453 = vmatpush.msra.mxu0 0.0
        %4454 = vmatpush.msra.mxu0 0.0
        %4455 = vmatpush.msra.mxu0 0.0
        %4456 = vmatpush.msra.mxu0 0.0
        %4457 = vmatpush.msra.mxu0 0.0
        %4458 = vmatpush.msra.mxu0 %v4429
        %4459 = vmatpush.msra.mxu0 %v4427
        %4460 = vmatmul.f32.gmra.mxu0 %v4433
        %v4461 = vpop.f32.mrf.mxu0
        %v4462 = vadd.f32 0.0, %v4461
        %4463 = vmatmul.f32.gmra.mxu0 %v4436
        %v4464 = vpop.f32.mrf.mxu0
        %v4465 = vadd.f32 0.0, %v4464
        %4466 = vmatmul.f32.gmra.mxu0 %v4439
        %v4467 = vpop.f32.mrf.mxu0
        %v4468 = vadd.f32 0.0, %v4467
        %4469 = vmatmul.f32.gmra.mxu0 %v4442
        %v4470 = vpop.f32.mrf.mxu0
        %v4471 = vadd.f32 0.0, %v4470
        %4472 = vdwg.mxu0
        %v4473 = vadd.f32 %v4417, %v4462
        %v4474 = vadd.f32 %v4418, %v4465
        %v4475 = vadd.f32 %v4419, %v4468
        %v4476 = vadd.f32 %v4420, %v4471
        %s4477 = scalar_lea.vmem %s7, 192
        %v4478 = vld [vmem:[%s4477] sm:$0xff]
        %v4479 = vld [vmem:[%s4477 + $0x8] sm:$0xff]
        %v4480 = vld [vmem:[%s4477 + $0x10] sm:$0xff]
        %v4481 = vld [vmem:[%s4477 + $0x18] sm:$0xff]
        %4482 = vrot.lane.b32.xlu0 %v4150, 113
        %v4483 = vpop.permute.xlu0 %4482
        %4484 = vrot.lane.b32.xlu0 %v4152, 113
        %v4485 = vpop.permute.xlu0 %4484
        %v4489 = vsel %vm2824, %v4478, 0
        %v4492 = vsel %vm2824, %v4479, 0
        %v4495 = vsel %vm2824, %v4480, 0
        %v4498 = vsel %vm2824, %v4481, 0
        %4500 = vmatpush.msra.mxu0 0.0
        %4501 = vmatpush.msra.mxu0 0.0
        %4502 = vmatpush.msra.mxu0 0.0
        %4503 = vmatpush.msra.mxu0 0.0
        %4504 = vmatpush.msra.mxu0 0.0
        %4505 = vmatpush.msra.mxu0 0.0
        %4506 = vmatpush.msra.mxu0 0.0
        %4507 = vmatpush.msra.mxu0 0.0
        %4508 = vmatpush.msra.mxu0 0.0
        %4509 = vmatpush.msra.mxu0 0.0
        %4510 = vmatpush.msra.mxu0 0.0
        %4511 = vmatpush.msra.mxu0 0.0
        %4512 = vmatpush.msra.mxu0 0.0
        %4513 = vmatpush.msra.mxu0 0.0
        %4514 = vmatpush.msra.mxu0 %v4485
        %4515 = vmatpush.msra.mxu0 %v4483
        %4516 = vmatmul.f32.gmra.mxu0 %v4489
        %v4517 = vpop.f32.mrf.mxu0
        %v4518 = vadd.f32 0.0, %v4517
        %4519 = vmatmul.f32.gmra.mxu0 %v4492
        %v4520 = vpop.f32.mrf.mxu0
        %v4521 = vadd.f32 0.0, %v4520
        %4522 = vmatmul.f32.gmra.mxu0 %v4495
        %v4523 = vpop.f32.mrf.mxu0
        %v4524 = vadd.f32 0.0, %v4523
        %4525 = vmatmul.f32.gmra.mxu0 %v4498
        %v4526 = vpop.f32.mrf.mxu0
        %v4527 = vadd.f32 0.0, %v4526
        %4528 = vdwg.mxu0
        %v4529 = vadd.f32 %v4473, %v4518
        %v4530 = vadd.f32 %v4474, %v4521
        %v4531 = vadd.f32 %v4475, %v4524
        %v4532 = vadd.f32 %v4476, %v4527
        %s4533 = scalar_lea.vmem %s7, 224
        %v4534 = vld [vmem:[%s4533] sm:$0xff]
        %v4535 = vld [vmem:[%s4533 + $0x8] sm:$0xff]
        %v4536 = vld [vmem:[%s4533 + $0x10] sm:$0xff]
        %v4537 = vld [vmem:[%s4533 + $0x18] sm:$0xff]
        %4538 = vrot.lane.b32.xlu0 %v4150, 112
        %v4539 = vpop.permute.xlu0 %4538
        %4540 = vrot.lane.b32.xlu0 %v4152, 112
        %v4541 = vpop.permute.xlu0 %4540
        %v4545 = vsel %vm2824, %v4534, 0
        %v4548 = vsel %vm2824, %v4535, 0
        %v4551 = vsel %vm2824, %v4536, 0
        %v4554 = vsel %vm2824, %v4537, 0
        %4556 = vmatpush.msra.mxu0 0.0
        %4557 = vmatpush.msra.mxu0 0.0
        %4558 = vmatpush.msra.mxu0 0.0
        %4559 = vmatpush.msra.mxu0 0.0
        %4560 = vmatpush.msra.mxu0 0.0
        %4561 = vmatpush.msra.mxu0 0.0
        %4562 = vmatpush.msra.mxu0 0.0
        %4563 = vmatpush.msra.mxu0 0.0
        %4564 = vmatpush.msra.mxu0 0.0
        %4565 = vmatpush.msra.mxu0 0.0
        %4566 = vmatpush.msra.mxu0 0.0
        %4567 = vmatpush.msra.mxu0 0.0
        %4568 = vmatpush.msra.mxu0 0.0
        %4569 = vmatpush.msra.mxu0 0.0
        %4570 = vmatpush.msra.mxu0 %v4541
        %4571 = vmatpush.msra.mxu0 %v4539
        %4572 = vmatmul.f32.gmra.mxu0 %v4545
        %v4573 = vpop.f32.mrf.mxu0
        %v4574 = vadd.f32 0.0, %v4573
        %4575 = vmatmul.f32.gmra.mxu0 %v4548
        %v4576 = vpop.f32.mrf.mxu0
        %v4577 = vadd.f32 0.0, %v4576
        %4578 = vmatmul.f32.gmra.mxu0 %v4551
        %v4579 = vpop.f32.mrf.mxu0
        %v4580 = vadd.f32 0.0, %v4579
        %4581 = vmatmul.f32.gmra.mxu0 %v4554
        %v4582 = vpop.f32.mrf.mxu0
        %v4583 = vadd.f32 0.0, %v4582
        %4584 = vdwg.mxu0
        %v4585 = vadd.f32 %v4529, %v4574
        %v4586 = vadd.f32 %v4530, %v4577
        %v4587 = vadd.f32 %v4531, %v4580
        %v4588 = vadd.f32 %v4532, %v4583
        %s4589 = scalar_lea.vmem %s7, 256
        %v4590 = vld [vmem:[%s4589] sm:$0xff]
        %v4591 = vld [vmem:[%s4589 + $0x8] sm:$0xff]
        %v4592 = vld [vmem:[%s4589 + $0x10] sm:$0xff]
        %v4593 = vld [vmem:[%s4589 + $0x18] sm:$0xff]
        %4594 = vrot.lane.b32.xlu0 %v4150, 111
        %v4595 = vpop.permute.xlu0 %4594
        %4596 = vrot.lane.b32.xlu0 %v4152, 111
        %v4597 = vpop.permute.xlu0 %4596
        %v4601 = vsel %vm2824, %v4590, 0
        %v4604 = vsel %vm2824, %v4591, 0
        %v4607 = vsel %vm2824, %v4592, 0
        %v4610 = vsel %vm2824, %v4593, 0
        %4612 = vmatpush.msra.mxu0 0.0
        %4613 = vmatpush.msra.mxu0 0.0
        %4614 = vmatpush.msra.mxu0 0.0
        %4615 = vmatpush.msra.mxu0 0.0
        %4616 = vmatpush.msra.mxu0 0.0
        %4617 = vmatpush.msra.mxu0 0.0
        %4618 = vmatpush.msra.mxu0 0.0
        %4619 = vmatpush.msra.mxu0 0.0
        %4620 = vmatpush.msra.mxu0 0.0
        %4621 = vmatpush.msra.mxu0 0.0
        %4622 = vmatpush.msra.mxu0 0.0
        %4623 = vmatpush.msra.mxu0 0.0
        %4624 = vmatpush.msra.mxu0 0.0
        %4625 = vmatpush.msra.mxu0 0.0
        %4626 = vmatpush.msra.mxu0 %v4597
        %4627 = vmatpush.msra.mxu0 %v4595
        %4628 = vmatmul.f32.gmra.mxu0 %v4601
        %v4629 = vpop.f32.mrf.mxu0
        %v4630 = vadd.f32 0.0, %v4629
        %4631 = vmatmul.f32.gmra.mxu0 %v4604
        %v4632 = vpop.f32.mrf.mxu0
        %v4633 = vadd.f32 0.0, %v4632
        %4634 = vmatmul.f32.gmra.mxu0 %v4607
        %v4635 = vpop.f32.mrf.mxu0
        %v4636 = vadd.f32 0.0, %v4635
        %4637 = vmatmul.f32.gmra.mxu0 %v4610
        %v4638 = vpop.f32.mrf.mxu0
        %v4639 = vadd.f32 0.0, %v4638
        %4640 = vdwg.mxu0
        %v4641 = vadd.f32 %v4585, %v4630
        %v4642 = vadd.f32 %v4586, %v4633
        %v4643 = vadd.f32 %v4587, %v4636
        %v4644 = vadd.f32 %v4588, %v4639
        %s4645 = scalar_lea.vmem %s7, 288
        %v4646 = vld [vmem:[%s4645] sm:$0xff]
        %v4647 = vld [vmem:[%s4645 + $0x8] sm:$0xff]
        %v4648 = vld [vmem:[%s4645 + $0x10] sm:$0xff]
        %v4649 = vld [vmem:[%s4645 + $0x18] sm:$0xff]
        %4650 = vrot.lane.b32.xlu0 %v4150, 110
        %v4651 = vpop.permute.xlu0 %4650
        %4652 = vrot.lane.b32.xlu0 %v4152, 110
        %v4653 = vpop.permute.xlu0 %4652
        %v4657 = vsel %vm2824, %v4646, 0
        %v4660 = vsel %vm2824, %v4647, 0
        %v4663 = vsel %vm2824, %v4648, 0
        %v4666 = vsel %vm2824, %v4649, 0
        %4668 = vmatpush.msra.mxu0 0.0
        %4669 = vmatpush.msra.mxu0 0.0
        %4670 = vmatpush.msra.mxu0 0.0
        %4671 = vmatpush.msra.mxu0 0.0
        %4672 = vmatpush.msra.mxu0 0.0
        %4673 = vmatpush.msra.mxu0 0.0
        %4674 = vmatpush.msra.mxu0 0.0
        %4675 = vmatpush.msra.mxu0 0.0
        %4676 = vmatpush.msra.mxu0 0.0
        %4677 = vmatpush.msra.mxu0 0.0
        %4678 = vmatpush.msra.mxu0 0.0
        %4679 = vmatpush.msra.mxu0 0.0
        %4680 = vmatpush.msra.mxu0 0.0
        %4681 = vmatpush.msra.mxu0 0.0
        %4682 = vmatpush.msra.mxu0 %v4653
        %4683 = vmatpush.msra.mxu0 %v4651
        %4684 = vmatmul.f32.gmra.mxu0 %v4657
        %v4685 = vpop.f32.mrf.mxu0
        %v4686 = vadd.f32 0.0, %v4685
        %4687 = vmatmul.f32.gmra.mxu0 %v4660
        %v4688 = vpop.f32.mrf.mxu0
        %v4689 = vadd.f32 0.0, %v4688
        %4690 = vmatmul.f32.gmra.mxu0 %v4663
        %v4691 = vpop.f32.mrf.mxu0
        %v4692 = vadd.f32 0.0, %v4691
        %4693 = vmatmul.f32.gmra.mxu0 %v4666
        %v4694 = vpop.f32.mrf.mxu0
        %v4695 = vadd.f32 0.0, %v4694
        %4696 = vdwg.mxu0
        %v4697 = vadd.f32 %v4641, %v4686
        %v4698 = vadd.f32 %v4642, %v4689
        %v4699 = vadd.f32 %v4643, %v4692
        %v4700 = vadd.f32 %v4644, %v4695
        %s4701 = scalar_lea.vmem %s7, 320
        %v4702 = vld [vmem:[%s4701] sm:$0xff]
        %v4703 = vld [vmem:[%s4701 + $0x8] sm:$0xff]
        %v4704 = vld [vmem:[%s4701 + $0x10] sm:$0xff]
        %v4705 = vld [vmem:[%s4701 + $0x18] sm:$0xff]
        %4708 = vrot.lane.b32.xlu0 %v4150, 100
        %v4709 = vpop.permute.xlu0 %4708
        %4710 = vrot.lane.b32.xlu0 %v4151, 100
        %v4711 = vpop.permute.xlu0 %4710
        %4712 = vrot.lane.b32.xlu0 %v4152, 100
        %v4713 = vpop.permute.xlu0 %4712
        %4714 = vrot.lane.b32.xlu0 %v4153, 100
        %v4715 = vpop.permute.xlu0 %4714
        %v4716 = vsel %vm611, %v4709, %v4711
        %v4717 = vsel %vm611, %v4713, %v4715
        %v4721 = vsel %vm2824, %v4702, 0
        %v4724 = vsel %vm2824, %v4703, 0
        %v4727 = vsel %vm2824, %v4704, 0
        %v4730 = vsel %vm2824, %v4705, 0
        %4732 = vmatpush.msra.mxu0 0.0
        %4733 = vmatpush.msra.mxu0 0.0
        %4734 = vmatpush.msra.mxu0 0.0
        %4735 = vmatpush.msra.mxu0 0.0
        %4736 = vmatpush.msra.mxu0 0.0
        %4737 = vmatpush.msra.mxu0 0.0
        %4738 = vmatpush.msra.mxu0 0.0
        %4739 = vmatpush.msra.mxu0 0.0
        %4740 = vmatpush.msra.mxu0 0.0
        %4741 = vmatpush.msra.mxu0 0.0
        %4742 = vmatpush.msra.mxu0 0.0
        %4743 = vmatpush.msra.mxu0 0.0
        %4744 = vmatpush.msra.mxu0 0.0
        %4745 = vmatpush.msra.mxu0 0.0
        %4746 = vmatpush.msra.mxu0 %v4717
        %4747 = vmatpush.msra.mxu0 %v4716
        %4748 = vmatmul.f32.gmra.mxu0 %v4721
        %v4749 = vpop.f32.mrf.mxu0
        %v4750 = vadd.f32 0.0, %v4749
        %4751 = vmatmul.f32.gmra.mxu0 %v4724
        %v4752 = vpop.f32.mrf.mxu0
        %v4753 = vadd.f32 0.0, %v4752
        %4754 = vmatmul.f32.gmra.mxu0 %v4727
        %v4755 = vpop.f32.mrf.mxu0
        %v4756 = vadd.f32 0.0, %v4755
        %4757 = vmatmul.f32.gmra.mxu0 %v4730
        %v4758 = vpop.f32.mrf.mxu0
        %v4759 = vadd.f32 0.0, %v4758
        %4760 = vdwg.mxu0
        %v4761 = vadd.f32 %v4697, %v4750
        %v4762 = vadd.f32 %v4698, %v4753
        %v4763 = vadd.f32 %v4699, %v4756
        %v4764 = vadd.f32 %v4700, %v4759
        %s4765 = scalar_lea.vmem %s7, 352
        %v4766 = vld [vmem:[%s4765] sm:$0xff]
        %v4767 = vld [vmem:[%s4765 + $0x8] sm:$0xff]
        %v4768 = vld [vmem:[%s4765 + $0x10] sm:$0xff]
        %v4769 = vld [vmem:[%s4765 + $0x18] sm:$0xff]
        %4770 = vrot.lane.b32.xlu0 %v4150, 99
        %v4771 = vpop.permute.xlu0 %4770
        %4772 = vrot.lane.b32.xlu0 %v4151, 99
        %v4773 = vpop.permute.xlu0 %4772
        %4774 = vrot.lane.b32.xlu0 %v4152, 99
        %v4775 = vpop.permute.xlu0 %4774
        %4776 = vrot.lane.b32.xlu0 %v4153, 99
        %v4777 = vpop.permute.xlu0 %4776
        %v4778 = vsel %vm635, %v4771, %v4773
        %v4779 = vsel %vm635, %v4775, %v4777
        %v4783 = vsel %vm2824, %v4766, 0
        %v4786 = vsel %vm2824, %v4767, 0
        %v4789 = vsel %vm2824, %v4768, 0
        %v4792 = vsel %vm2824, %v4769, 0
        %4794 = vmatpush.msra.mxu0 0.0
        %4795 = vmatpush.msra.mxu0 0.0
        %4796 = vmatpush.msra.mxu0 0.0
        %4797 = vmatpush.msra.mxu0 0.0
        %4798 = vmatpush.msra.mxu0 0.0
        %4799 = vmatpush.msra.mxu0 0.0
        %4800 = vmatpush.msra.mxu0 0.0
        %4801 = vmatpush.msra.mxu0 0.0
        %4802 = vmatpush.msra.mxu0 0.0
        %4803 = vmatpush.msra.mxu0 0.0
        %4804 = vmatpush.msra.mxu0 0.0
        %4805 = vmatpush.msra.mxu0 0.0
        %4806 = vmatpush.msra.mxu0 0.0
        %4807 = vmatpush.msra.mxu0 0.0
        %4808 = vmatpush.msra.mxu0 %v4779
        %4809 = vmatpush.msra.mxu0 %v4778
        %4810 = vmatmul.f32.gmra.mxu0 %v4783
        %v4811 = vpop.f32.mrf.mxu0
        %v4812 = vadd.f32 0.0, %v4811
        %4813 = vmatmul.f32.gmra.mxu0 %v4786
        %v4814 = vpop.f32.mrf.mxu0
        %v4815 = vadd.f32 0.0, %v4814
        %4816 = vmatmul.f32.gmra.mxu0 %v4789
        %v4817 = vpop.f32.mrf.mxu0
        %v4818 = vadd.f32 0.0, %v4817
        %4819 = vmatmul.f32.gmra.mxu0 %v4792
        %v4820 = vpop.f32.mrf.mxu0
        %v4821 = vadd.f32 0.0, %v4820
        %4822 = vdwg.mxu0
        %v4823 = vadd.f32 %v4761, %v4812
        %v4824 = vadd.f32 %v4762, %v4815
        %v4825 = vadd.f32 %v4763, %v4818
        %v4826 = vadd.f32 %v4764, %v4821
        %s4827 = scalar_lea.vmem %s7, 384
        %v4828 = vld [vmem:[%s4827] sm:$0xff]
        %v4829 = vld [vmem:[%s4827 + $0x8] sm:$0xff]
        %v4830 = vld [vmem:[%s4827 + $0x10] sm:$0xff]
        %v4831 = vld [vmem:[%s4827 + $0x18] sm:$0xff]
        %4832 = vrot.lane.b32.xlu0 %v4150, 98
        %v4833 = vpop.permute.xlu0 %4832
        %4834 = vrot.lane.b32.xlu0 %v4151, 98
        %v4835 = vpop.permute.xlu0 %4834
        %4836 = vrot.lane.b32.xlu0 %v4152, 98
        %v4837 = vpop.permute.xlu0 %4836
        %4838 = vrot.lane.b32.xlu0 %v4153, 98
        %v4839 = vpop.permute.xlu0 %4838
        %v4840 = vsel %vm659, %v4833, %v4835
        %v4841 = vsel %vm659, %v4837, %v4839
        %v4845 = vsel %vm2824, %v4828, 0
        %v4848 = vsel %vm2824, %v4829, 0
        %v4851 = vsel %vm2824, %v4830, 0
        %v4854 = vsel %vm2824, %v4831, 0
        %4856 = vmatpush.msra.mxu0 0.0
        %4857 = vmatpush.msra.mxu0 0.0
        %4858 = vmatpush.msra.mxu0 0.0
        %4859 = vmatpush.msra.mxu0 0.0
        %4860 = vmatpush.msra.mxu0 0.0
        %4861 = vmatpush.msra.mxu0 0.0
        %4862 = vmatpush.msra.mxu0 0.0
        %4863 = vmatpush.msra.mxu0 0.0
        %4864 = vmatpush.msra.mxu0 0.0
        %4865 = vmatpush.msra.mxu0 0.0
        %4866 = vmatpush.msra.mxu0 0.0
        %4867 = vmatpush.msra.mxu0 0.0
        %4868 = vmatpush.msra.mxu0 0.0
        %4869 = vmatpush.msra.mxu0 0.0
        %4870 = vmatpush.msra.mxu0 %v4841
        %4871 = vmatpush.msra.mxu0 %v4840
        %4872 = vmatmul.f32.gmra.mxu0 %v4845
        %v4873 = vpop.f32.mrf.mxu0
        %v4874 = vadd.f32 0.0, %v4873
        %4875 = vmatmul.f32.gmra.mxu0 %v4848
        %v4876 = vpop.f32.mrf.mxu0
        %v4877 = vadd.f32 0.0, %v4876
        %4878 = vmatmul.f32.gmra.mxu0 %v4851
        %v4879 = vpop.f32.mrf.mxu0
        %v4880 = vadd.f32 0.0, %v4879
        %4881 = vmatmul.f32.gmra.mxu0 %v4854
        %v4882 = vpop.f32.mrf.mxu0
        %v4883 = vadd.f32 0.0, %v4882
        %4884 = vdwg.mxu0
        %v4885 = vadd.f32 %v4823, %v4874
        %v4886 = vadd.f32 %v4824, %v4877
        %v4887 = vadd.f32 %v4825, %v4880
        %v4888 = vadd.f32 %v4826, %v4883
        %s4889 = scalar_lea.vmem %s7, 416
        %v4890 = vld [vmem:[%s4889] sm:$0xff]
        %v4891 = vld [vmem:[%s4889 + $0x8] sm:$0xff]
        %v4892 = vld [vmem:[%s4889 + $0x10] sm:$0xff]
        %v4893 = vld [vmem:[%s4889 + $0x18] sm:$0xff]
        %4894 = vrot.lane.b32.xlu0 %v4150, 97
        %v4895 = vpop.permute.xlu0 %4894
        %4896 = vrot.lane.b32.xlu0 %v4151, 97
        %v4897 = vpop.permute.xlu0 %4896
        %4898 = vrot.lane.b32.xlu0 %v4152, 97
        %v4899 = vpop.permute.xlu0 %4898
        %4900 = vrot.lane.b32.xlu0 %v4153, 97
        %v4901 = vpop.permute.xlu0 %4900
        %v4902 = vsel %vm683, %v4895, %v4897
        %v4903 = vsel %vm683, %v4899, %v4901
        %v4907 = vsel %vm2824, %v4890, 0
        %v4910 = vsel %vm2824, %v4891, 0
        %v4913 = vsel %vm2824, %v4892, 0
        %v4916 = vsel %vm2824, %v4893, 0
        %4918 = vmatpush.msra.mxu0 0.0
        %4919 = vmatpush.msra.mxu0 0.0
        %4920 = vmatpush.msra.mxu0 0.0
        %4921 = vmatpush.msra.mxu0 0.0
        %4922 = vmatpush.msra.mxu0 0.0
        %4923 = vmatpush.msra.mxu0 0.0
        %4924 = vmatpush.msra.mxu0 0.0
        %4925 = vmatpush.msra.mxu0 0.0
        %4926 = vmatpush.msra.mxu0 0.0
        %4927 = vmatpush.msra.mxu0 0.0
        %4928 = vmatpush.msra.mxu0 0.0
        %4929 = vmatpush.msra.mxu0 0.0
        %4930 = vmatpush.msra.mxu0 0.0
        %4931 = vmatpush.msra.mxu0 0.0
        %4932 = vmatpush.msra.mxu0 %v4903
        %4933 = vmatpush.msra.mxu0 %v4902
        %4934 = vmatmul.f32.gmra.mxu0 %v4907
        %v4935 = vpop.f32.mrf.mxu0
        %v4936 = vadd.f32 0.0, %v4935
        %4937 = vmatmul.f32.gmra.mxu0 %v4910
        %v4938 = vpop.f32.mrf.mxu0
        %v4939 = vadd.f32 0.0, %v4938
        %4940 = vmatmul.f32.gmra.mxu0 %v4913
        %v4941 = vpop.f32.mrf.mxu0
        %v4942 = vadd.f32 0.0, %v4941
        %4943 = vmatmul.f32.gmra.mxu0 %v4916
        %v4944 = vpop.f32.mrf.mxu0
        %v4945 = vadd.f32 0.0, %v4944
        %4946 = vdwg.mxu0
        %v4947 = vadd.f32 %v4885, %v4936
        %v4948 = vadd.f32 %v4886, %v4939
        %v4949 = vadd.f32 %v4887, %v4942
        %v4950 = vadd.f32 %v4888, %v4945
        %s4951 = scalar_lea.vmem %s7, 448
        %v4952 = vld [vmem:[%s4951] sm:$0xff]
        %v4953 = vld [vmem:[%s4951 + $0x8] sm:$0xff]
        %v4954 = vld [vmem:[%s4951 + $0x10] sm:$0xff]
        %v4955 = vld [vmem:[%s4951 + $0x18] sm:$0xff]
        %4956 = vrot.lane.b32.xlu0 %v4150, 96
        %v4957 = vpop.permute.xlu0 %4956
        %4958 = vrot.lane.b32.xlu0 %v4151, 96
        %v4959 = vpop.permute.xlu0 %4958
        %4960 = vrot.lane.b32.xlu0 %v4152, 96
        %v4961 = vpop.permute.xlu0 %4960
        %4962 = vrot.lane.b32.xlu0 %v4153, 96
        %v4963 = vpop.permute.xlu0 %4962
        %v4964 = vsel %vm707, %v4957, %v4959
        %v4965 = vsel %vm707, %v4961, %v4963
        %v4969 = vsel %vm2824, %v4952, 0
        %v4972 = vsel %vm2824, %v4953, 0
        %v4975 = vsel %vm2824, %v4954, 0
        %v4978 = vsel %vm2824, %v4955, 0
        %4980 = vmatpush.msra.mxu0 0.0
        %4981 = vmatpush.msra.mxu0 0.0
        %4982 = vmatpush.msra.mxu0 0.0
        %4983 = vmatpush.msra.mxu0 0.0
        %4984 = vmatpush.msra.mxu0 0.0
        %4985 = vmatpush.msra.mxu0 0.0
        %4986 = vmatpush.msra.mxu0 0.0
        %4987 = vmatpush.msra.mxu0 0.0
        %4988 = vmatpush.msra.mxu0 0.0
        %4989 = vmatpush.msra.mxu0 0.0
        %4990 = vmatpush.msra.mxu0 0.0
        %4991 = vmatpush.msra.mxu0 0.0
        %4992 = vmatpush.msra.mxu0 0.0
        %4993 = vmatpush.msra.mxu0 0.0
        %4994 = vmatpush.msra.mxu0 %v4965
        %4995 = vmatpush.msra.mxu0 %v4964
        %4996 = vmatmul.f32.gmra.mxu0 %v4969
        %v4997 = vpop.f32.mrf.mxu0
        %v4998 = vadd.f32 0.0, %v4997
        %4999 = vmatmul.f32.gmra.mxu0 %v4972
        %v5000 = vpop.f32.mrf.mxu0
        %v5001 = vadd.f32 0.0, %v5000
        %5002 = vmatmul.f32.gmra.mxu0 %v4975
        %v5003 = vpop.f32.mrf.mxu0
        %v5004 = vadd.f32 0.0, %v5003
        %5005 = vmatmul.f32.gmra.mxu0 %v4978
        %v5006 = vpop.f32.mrf.mxu0
        %v5007 = vadd.f32 0.0, %v5006
        %5008 = vdwg.mxu0
        %v5009 = vadd.f32 %v4947, %v4998
        %v5010 = vadd.f32 %v4948, %v5001
        %v5011 = vadd.f32 %v4949, %v5004
        %v5012 = vadd.f32 %v4950, %v5007
        %s5013 = scalar_lea.vmem %s7, 480
        %v5014 = vld [vmem:[%s5013] sm:$0xff]
        %v5015 = vld [vmem:[%s5013 + $0x8] sm:$0xff]
        %v5016 = vld [vmem:[%s5013 + $0x10] sm:$0xff]
        %v5017 = vld [vmem:[%s5013 + $0x18] sm:$0xff]
        %5018 = vrot.lane.b32.xlu0 %v4150, 86
        %v5019 = vpop.permute.xlu0 %5018
        %5020 = vrot.lane.b32.xlu0 %v4151, 86
        %v5021 = vpop.permute.xlu0 %5020
        %5022 = vrot.lane.b32.xlu0 %v4152, 86
        %v5023 = vpop.permute.xlu0 %5022
        %5024 = vrot.lane.b32.xlu0 %v4153, 86
        %v5025 = vpop.permute.xlu0 %5024
        %vm5026 = vcmask 703488
        %v5027 = vsel %vm5026, %v5019, %v5021
        %v5028 = vsel %vm5026, %v5023, %v5025
        %v5032 = vsel %vm2824, %v5014, 0
        %v5035 = vsel %vm2824, %v5015, 0
        %v5038 = vsel %vm2824, %v5016, 0
        %v5041 = vsel %vm2824, %v5017, 0
        %5043 = vmatpush.msra.mxu0 0.0
        %5044 = vmatpush.msra.mxu0 0.0
        %5045 = vmatpush.msra.mxu0 0.0
        %5046 = vmatpush.msra.mxu0 0.0
        %5047 = vmatpush.msra.mxu0 0.0
        %5048 = vmatpush.msra.mxu0 0.0
        %5049 = vmatpush.msra.mxu0 0.0
        %5050 = vmatpush.msra.mxu0 0.0
        %5051 = vmatpush.msra.mxu0 0.0
        %5052 = vmatpush.msra.mxu0 0.0
        %5053 = vmatpush.msra.mxu0 0.0
        %5054 = vmatpush.msra.mxu0 0.0
        %5055 = vmatpush.msra.mxu0 0.0
        %5056 = vmatpush.msra.mxu0 0.0
        %5057 = vmatpush.msra.mxu0 %v5028
        %5058 = vmatpush.msra.mxu0 %v5027
        %5059 = vmatmul.f32.gmra.mxu0 %v5032
        %v5060 = vpop.f32.mrf.mxu0
        %v5061 = vadd.f32 0.0, %v5060
        %5062 = vmatmul.f32.gmra.mxu0 %v5035
        %v5063 = vpop.f32.mrf.mxu0
        %v5064 = vadd.f32 0.0, %v5063
        %5065 = vmatmul.f32.gmra.mxu0 %v5038
        %v5066 = vpop.f32.mrf.mxu0
        %v5067 = vadd.f32 0.0, %v5066
        %5068 = vmatmul.f32.gmra.mxu0 %v5041
        %v5069 = vpop.f32.mrf.mxu0
        %v5070 = vadd.f32 0.0, %v5069
        %5071 = vdwg.mxu0
        %v5072 = vadd.f32 %v5009, %v5061
        %v5073 = vadd.f32 %v5010, %v5064
        %v5074 = vadd.f32 %v5011, %v5067
        %v5075 = vadd.f32 %v5012, %v5070
        %s5076 = scalar_lea.vmem %s7, 512
        %v5077 = vld [vmem:[%s5076] sm:$0xff]
        %v5078 = vld [vmem:[%s5076 + $0x8] sm:$0xff]
        %v5079 = vld [vmem:[%s5076 + $0x10] sm:$0xff]
        %v5080 = vld [vmem:[%s5076 + $0x18] sm:$0xff]
        %5081 = vrot.lane.b32.xlu0 %v4150, 85
        %v5082 = vpop.permute.xlu0 %5081
        %5083 = vrot.lane.b32.xlu0 %v4151, 85
        %v5084 = vpop.permute.xlu0 %5083
        %5085 = vrot.lane.b32.xlu0 %v4152, 85
        %v5086 = vpop.permute.xlu0 %5085
        %5087 = vrot.lane.b32.xlu0 %v4153, 85
        %v5088 = vpop.permute.xlu0 %5087
        %vm5089 = vcmask 695296
        %v5090 = vsel %vm5089, %v5082, %v5084
        %v5091 = vsel %vm5089, %v5086, %v5088
        %v5095 = vsel %vm2824, %v5077, 0
        %v5098 = vsel %vm2824, %v5078, 0
        %v5101 = vsel %vm2824, %v5079, 0
        %v5104 = vsel %vm2824, %v5080, 0
        %5106 = vmatpush.msra.mxu0 0.0
        %5107 = vmatpush.msra.mxu0 0.0
        %5108 = vmatpush.msra.mxu0 0.0
        %5109 = vmatpush.msra.mxu0 0.0
        %5110 = vmatpush.msra.mxu0 0.0
        %5111 = vmatpush.msra.mxu0 0.0
        %5112 = vmatpush.msra.mxu0 0.0
        %5113 = vmatpush.msra.mxu0 0.0
        %5114 = vmatpush.msra.mxu0 0.0
        %5115 = vmatpush.msra.mxu0 0.0
        %5116 = vmatpush.msra.mxu0 0.0
        %5117 = vmatpush.msra.mxu0 0.0
        %5118 = vmatpush.msra.mxu0 0.0
        %5119 = vmatpush.msra.mxu0 0.0
        %5120 = vmatpush.msra.mxu0 %v5091
        %5121 = vmatpush.msra.mxu0 %v5090
        %5122 = vmatmul.f32.gmra.mxu0 %v5095
        %v5123 = vpop.f32.mrf.mxu0
        %v5124 = vadd.f32 0.0, %v5123
        %5125 = vmatmul.f32.gmra.mxu0 %v5098
        %v5126 = vpop.f32.mrf.mxu0
        %v5127 = vadd.f32 0.0, %v5126
        %5128 = vmatmul.f32.gmra.mxu0 %v5101
        %v5129 = vpop.f32.mrf.mxu0
        %v5130 = vadd.f32 0.0, %v5129
        %5131 = vmatmul.f32.gmra.mxu0 %v5104
        %v5132 = vpop.f32.mrf.mxu0
        %v5133 = vadd.f32 0.0, %v5132
        %5134 = vdwg.mxu0
        %v5135 = vadd.f32 %v5072, %v5124
        %v5136 = vadd.f32 %v5073, %v5127
        %v5137 = vadd.f32 %v5074, %v5130
        %v5138 = vadd.f32 %v5075, %v5133
        %s5139 = scalar_lea.vmem %s7, 544
        %v5140 = vld [vmem:[%s5139] sm:$0xff]
        %v5141 = vld [vmem:[%s5139 + $0x8] sm:$0xff]
        %v5142 = vld [vmem:[%s5139 + $0x10] sm:$0xff]
        %v5143 = vld [vmem:[%s5139 + $0x18] sm:$0xff]
        %5144 = vrot.lane.b32.xlu0 %v4150, 84
        %v5145 = vpop.permute.xlu0 %5144
        %5146 = vrot.lane.b32.xlu0 %v4151, 84
        %v5147 = vpop.permute.xlu0 %5146
        %5148 = vrot.lane.b32.xlu0 %v4152, 84
        %v5149 = vpop.permute.xlu0 %5148
        %5150 = vrot.lane.b32.xlu0 %v4153, 84
        %v5151 = vpop.permute.xlu0 %5150
        %v5152 = vsel %vm2734, %v5145, %v5147
        %v5153 = vsel %vm2734, %v5149, %v5151
        %v5157 = vsel %vm2824, %v5140, 0
        %v5160 = vsel %vm2824, %v5141, 0
        %v5163 = vsel %vm2824, %v5142, 0
        %v5166 = vsel %vm2824, %v5143, 0
        %5168 = vmatpush.msra.mxu0 0.0
        %5169 = vmatpush.msra.mxu0 0.0
        %5170 = vmatpush.msra.mxu0 0.0
        %5171 = vmatpush.msra.mxu0 0.0
        %5172 = vmatpush.msra.mxu0 0.0
        %5173 = vmatpush.msra.mxu0 0.0
        %5174 = vmatpush.msra.mxu0 0.0
        %5175 = vmatpush.msra.mxu0 0.0
        %5176 = vmatpush.msra.mxu0 0.0
        %5177 = vmatpush.msra.mxu0 0.0
        %5178 = vmatpush.msra.mxu0 0.0
        %5179 = vmatpush.msra.mxu0 0.0
        %5180 = vmatpush.msra.mxu0 0.0
        %5181 = vmatpush.msra.mxu0 0.0
        %5182 = vmatpush.msra.mxu0 %v5153
        %5183 = vmatpush.msra.mxu0 %v5152
        %5184 = vmatmul.f32.gmra.mxu0 %v5157
        %v5185 = vpop.f32.mrf.mxu0
        %v5186 = vadd.f32 0.0, %v5185
        %5187 = vmatmul.f32.gmra.mxu0 %v5160
        %v5188 = vpop.f32.mrf.mxu0
        %v5189 = vadd.f32 0.0, %v5188
        %5190 = vmatmul.f32.gmra.mxu0 %v5163
        %v5191 = vpop.f32.mrf.mxu0
        %v5192 = vadd.f32 0.0, %v5191
        %5193 = vmatmul.f32.gmra.mxu0 %v5166
        %v5194 = vpop.f32.mrf.mxu0
        %v5195 = vadd.f32 0.0, %v5194
        %5196 = vdwg.mxu0
        %v5197 = vadd.f32 %v5135, %v5186
        %v5198 = vadd.f32 %v5136, %v5189
        %v5199 = vadd.f32 %v5137, %v5192
        %v5200 = vadd.f32 %v5138, %v5195
        %s5201 = scalar_lea.vmem %s7, 576
        %v5202 = vld [vmem:[%s5201] sm:$0xff]
        %v5203 = vld [vmem:[%s5201 + $0x8] sm:$0xff]
        %v5204 = vld [vmem:[%s5201 + $0x10] sm:$0xff]
        %v5205 = vld [vmem:[%s5201 + $0x18] sm:$0xff]
        %5206 = vrot.lane.b32.xlu0 %v4150, 83
        %v5207 = vpop.permute.xlu0 %5206
        %5208 = vrot.lane.b32.xlu0 %v4151, 83
        %v5209 = vpop.permute.xlu0 %5208
        %5210 = vrot.lane.b32.xlu0 %v4152, 83
        %v5211 = vpop.permute.xlu0 %5210
        %5212 = vrot.lane.b32.xlu0 %v4153, 83
        %v5213 = vpop.permute.xlu0 %5212
        %vm5214 = vcmask 678912
        %v5215 = vsel %vm5214, %v5207, %v5209
        %v5216 = vsel %vm5214, %v5211, %v5213
        %v5220 = vsel %vm2824, %v5202, 0
        %v5223 = vsel %vm2824, %v5203, 0
        %v5226 = vsel %vm2824, %v5204, 0
        %v5229 = vsel %vm2824, %v5205, 0
        %5231 = vmatpush.msra.mxu0 0.0
        %5232 = vmatpush.msra.mxu0 0.0
        %5233 = vmatpush.msra.mxu0 0.0
        %5234 = vmatpush.msra.mxu0 0.0
        %5235 = vmatpush.msra.mxu0 0.0
        %5236 = vmatpush.msra.mxu0 0.0
        %5237 = vmatpush.msra.mxu0 0.0
        %5238 = vmatpush.msra.mxu0 0.0
        %5239 = vmatpush.msra.mxu0 0.0
        %5240 = vmatpush.msra.mxu0 0.0
        %5241 = vmatpush.msra.mxu0 0.0
        %5242 = vmatpush.msra.mxu0 0.0
        %5243 = vmatpush.msra.mxu0 0.0
        %5244 = vmatpush.msra.mxu0 0.0
        %5245 = vmatpush.msra.mxu0 %v5216
        %5246 = vmatpush.msra.mxu0 %v5215
        %5247 = vmatmul.f32.gmra.mxu0 %v5220
        %v5248 = vpop.f32.mrf.mxu0
        %v5249 = vadd.f32 0.0, %v5248
        %5250 = vmatmul.f32.gmra.mxu0 %v5223
        %v5251 = vpop.f32.mrf.mxu0
        %v5252 = vadd.f32 0.0, %v5251
        %5253 = vmatmul.f32.gmra.mxu0 %v5226
        %v5254 = vpop.f32.mrf.mxu0
        %v5255 = vadd.f32 0.0, %v5254
        %5256 = vmatmul.f32.gmra.mxu0 %v5229
        %v5257 = vpop.f32.mrf.mxu0
        %v5258 = vadd.f32 0.0, %v5257
        %5259 = vdwg.mxu0
        %v5260 = vadd.f32 %v5197, %v5249
        %v5261 = vadd.f32 %v5198, %v5252
        %v5262 = vadd.f32 %v5199, %v5255
        %v5263 = vadd.f32 %v5200, %v5258
        %s5264 = scalar_lea.vmem %s7, 608
        %v5265 = vld [vmem:[%s5264] sm:$0xff]
        %v5266 = vld [vmem:[%s5264 + $0x8] sm:$0xff]
        %v5267 = vld [vmem:[%s5264 + $0x10] sm:$0xff]
        %v5268 = vld [vmem:[%s5264 + $0x18] sm:$0xff]
        %5269 = vrot.lane.b32.xlu0 %v4150, 82
        %v5270 = vpop.permute.xlu0 %5269
        %5271 = vrot.lane.b32.xlu0 %v4151, 82
        %v5272 = vpop.permute.xlu0 %5271
        %5273 = vrot.lane.b32.xlu0 %v4152, 82
        %v5274 = vpop.permute.xlu0 %5273
        %5275 = vrot.lane.b32.xlu0 %v4153, 82
        %v5276 = vpop.permute.xlu0 %5275
        %vm5277 = vcmask 670720
        %v5278 = vsel %vm5277, %v5270, %v5272
        %v5279 = vsel %vm5277, %v5274, %v5276
        %v5283 = vsel %vm2824, %v5265, 0
        %v5286 = vsel %vm2824, %v5266, 0
        %v5289 = vsel %vm2824, %v5267, 0
        %v5292 = vsel %vm2824, %v5268, 0
        %5294 = vmatpush.msra.mxu0 0.0
        %5295 = vmatpush.msra.mxu0 0.0
        %5296 = vmatpush.msra.mxu0 0.0
        %5297 = vmatpush.msra.mxu0 0.0
        %5298 = vmatpush.msra.mxu0 0.0
        %5299 = vmatpush.msra.mxu0 0.0
        %5300 = vmatpush.msra.mxu0 0.0
        %5301 = vmatpush.msra.mxu0 0.0
        %5302 = vmatpush.msra.mxu0 0.0
        %5303 = vmatpush.msra.mxu0 0.0
        %5304 = vmatpush.msra.mxu0 0.0
        %5305 = vmatpush.msra.mxu0 0.0
        %5306 = vmatpush.msra.mxu0 0.0
        %5307 = vmatpush.msra.mxu0 0.0
        %5308 = vmatpush.msra.mxu0 %v5279
        %5309 = vmatpush.msra.mxu0 %v5278
        %5310 = vmatmul.f32.gmra.mxu0 %v5283
        %v5311 = vpop.f32.mrf.mxu0
        %v5312 = vadd.f32 0.0, %v5311
        %5313 = vmatmul.f32.gmra.mxu0 %v5286
        %v5314 = vpop.f32.mrf.mxu0
        %v5315 = vadd.f32 0.0, %v5314
        %5316 = vmatmul.f32.gmra.mxu0 %v5289
        %v5317 = vpop.f32.mrf.mxu0
        %v5318 = vadd.f32 0.0, %v5317
        %5319 = vmatmul.f32.gmra.mxu0 %v5292
        %v5320 = vpop.f32.mrf.mxu0
        %v5321 = vadd.f32 0.0, %v5320
        %5322 = vdwg.mxu0
        %v5323 = vadd.f32 %v5260, %v5312
        %v5324 = vadd.f32 %v5261, %v5315
        %v5325 = vadd.f32 %v5262, %v5318
        %v5326 = vadd.f32 %v5263, %v5321
        %s5327 = scalar_lea.vmem %s7, 640
        %v5328 = vld [vmem:[%s5327] sm:$0xff]
        %v5329 = vld [vmem:[%s5327 + $0x8] sm:$0xff]
        %v5330 = vld [vmem:[%s5327 + $0x10] sm:$0xff]
        %v5331 = vld [vmem:[%s5327 + $0x18] sm:$0xff]
        %5332 = vrot.lane.b32.xlu0 %v4150, 72
        %v5333 = vpop.permute.xlu0 %5332
        %5334 = vrot.lane.b32.xlu0 %v4151, 72
        %v5335 = vpop.permute.xlu0 %5334
        %5336 = vrot.lane.b32.xlu0 %v4152, 72
        %v5337 = vpop.permute.xlu0 %5336
        %5338 = vrot.lane.b32.xlu0 %v4153, 72
        %v5339 = vpop.permute.xlu0 %5338
        %v5340 = vsel %vm731, %v5333, %v5335
        %v5341 = vsel %vm731, %v5337, %v5339
        %v5345 = vsel %vm2824, %v5328, 0
        %v5348 = vsel %vm2824, %v5329, 0
        %v5351 = vsel %vm2824, %v5330, 0
        %v5354 = vsel %vm2824, %v5331, 0
        %5356 = vmatpush.msra.mxu0 0.0
        %5357 = vmatpush.msra.mxu0 0.0
        %5358 = vmatpush.msra.mxu0 0.0
        %5359 = vmatpush.msra.mxu0 0.0
        %5360 = vmatpush.msra.mxu0 0.0
        %5361 = vmatpush.msra.mxu0 0.0
        %5362 = vmatpush.msra.mxu0 0.0
        %5363 = vmatpush.msra.mxu0 0.0
        %5364 = vmatpush.msra.mxu0 0.0
        %5365 = vmatpush.msra.mxu0 0.0
        %5366 = vmatpush.msra.mxu0 0.0
        %5367 = vmatpush.msra.mxu0 0.0
        %5368 = vmatpush.msra.mxu0 0.0
        %5369 = vmatpush.msra.mxu0 0.0
        %5370 = vmatpush.msra.mxu0 %v5341
        %5371 = vmatpush.msra.mxu0 %v5340
        %5372 = vmatmul.f32.gmra.mxu0 %v5345
        %v5373 = vpop.f32.mrf.mxu0
        %v5374 = vadd.f32 0.0, %v5373
        %5375 = vmatmul.f32.gmra.mxu0 %v5348
        %v5376 = vpop.f32.mrf.mxu0
        %v5377 = vadd.f32 0.0, %v5376
        %5378 = vmatmul.f32.gmra.mxu0 %v5351
        %v5379 = vpop.f32.mrf.mxu0
        %v5380 = vadd.f32 0.0, %v5379
        %5381 = vmatmul.f32.gmra.mxu0 %v5354
        %v5382 = vpop.f32.mrf.mxu0
        %v5383 = vadd.f32 0.0, %v5382
        %5384 = vdwg.mxu0
        %v5385 = vadd.f32 %v5323, %v5374
        %v5386 = vadd.f32 %v5324, %v5377
        %v5387 = vadd.f32 %v5325, %v5380
        %v5388 = vadd.f32 %v5326, %v5383
        %s5389 = scalar_lea.vmem %s7, 672
        %v5390 = vld [vmem:[%s5389] sm:$0xff]
        %v5391 = vld [vmem:[%s5389 + $0x8] sm:$0xff]
        %v5392 = vld [vmem:[%s5389 + $0x10] sm:$0xff]
        %v5393 = vld [vmem:[%s5389 + $0x18] sm:$0xff]
        %5394 = vrot.lane.b32.xlu0 %v4150, 71
        %v5395 = vpop.permute.xlu0 %5394
        %5396 = vrot.lane.b32.xlu0 %v4151, 71
        %v5397 = vpop.permute.xlu0 %5396
        %5398 = vrot.lane.b32.xlu0 %v4152, 71
        %v5399 = vpop.permute.xlu0 %5398
        %5400 = vrot.lane.b32.xlu0 %v4153, 71
        %v5401 = vpop.permute.xlu0 %5400
        %v5402 = vsel %vm755, %v5395, %v5397
        %v5403 = vsel %vm755, %v5399, %v5401
        %v5407 = vsel %vm2824, %v5390, 0
        %v5410 = vsel %vm2824, %v5391, 0
        %v5413 = vsel %vm2824, %v5392, 0
        %v5416 = vsel %vm2824, %v5393, 0
        %5418 = vmatpush.msra.mxu0 0.0
        %5419 = vmatpush.msra.mxu0 0.0
        %5420 = vmatpush.msra.mxu0 0.0
        %5421 = vmatpush.msra.mxu0 0.0
        %5422 = vmatpush.msra.mxu0 0.0
        %5423 = vmatpush.msra.mxu0 0.0
        %5424 = vmatpush.msra.mxu0 0.0
        %5425 = vmatpush.msra.mxu0 0.0
        %5426 = vmatpush.msra.mxu0 0.0
        %5427 = vmatpush.msra.mxu0 0.0
        %5428 = vmatpush.msra.mxu0 0.0
        %5429 = vmatpush.msra.mxu0 0.0
        %5430 = vmatpush.msra.mxu0 0.0
        %5431 = vmatpush.msra.mxu0 0.0
        %5432 = vmatpush.msra.mxu0 %v5403
        %5433 = vmatpush.msra.mxu0 %v5402
        %5434 = vmatmul.f32.gmra.mxu0 %v5407
        %v5435 = vpop.f32.mrf.mxu0
        %v5436 = vadd.f32 0.0, %v5435
        %5437 = vmatmul.f32.gmra.mxu0 %v5410
        %v5438 = vpop.f32.mrf.mxu0
        %v5439 = vadd.f32 0.0, %v5438
        %5440 = vmatmul.f32.gmra.mxu0 %v5413
        %v5441 = vpop.f32.mrf.mxu0
        %v5442 = vadd.f32 0.0, %v5441
        %5443 = vmatmul.f32.gmra.mxu0 %v5416
        %v5444 = vpop.f32.mrf.mxu0
        %v5445 = vadd.f32 0.0, %v5444
        %5446 = vdwg.mxu0
        %v5447 = vadd.f32 %v5385, %v5436
        %v5448 = vadd.f32 %v5386, %v5439
        %v5449 = vadd.f32 %v5387, %v5442
        %v5450 = vadd.f32 %v5388, %v5445
        %s5451 = scalar_lea.vmem %s7, 704
        %v5452 = vld [vmem:[%s5451] sm:$0xff]
        %v5453 = vld [vmem:[%s5451 + $0x8] sm:$0xff]
        %v5454 = vld [vmem:[%s5451 + $0x10] sm:$0xff]
        %v5455 = vld [vmem:[%s5451 + $0x18] sm:$0xff]
        %5456 = vrot.lane.b32.xlu0 %v4150, 70
        %v5457 = vpop.permute.xlu0 %5456
        %5458 = vrot.lane.b32.xlu0 %v4151, 70
        %v5459 = vpop.permute.xlu0 %5458
        %5460 = vrot.lane.b32.xlu0 %v4152, 70
        %v5461 = vpop.permute.xlu0 %5460
        %5462 = vrot.lane.b32.xlu0 %v4153, 70
        %v5463 = vpop.permute.xlu0 %5462
        %v5464 = vsel %vm779, %v5457, %v5459
        %v5465 = vsel %vm779, %v5461, %v5463
        %v5469 = vsel %vm2824, %v5452, 0
        %v5472 = vsel %vm2824, %v5453, 0
        %v5475 = vsel %vm2824, %v5454, 0
        %v5478 = vsel %vm2824, %v5455, 0
        %5480 = vmatpush.msra.mxu0 0.0
        %5481 = vmatpush.msra.mxu0 0.0
        %5482 = vmatpush.msra.mxu0 0.0
        %5483 = vmatpush.msra.mxu0 0.0
        %5484 = vmatpush.msra.mxu0 0.0
        %5485 = vmatpush.msra.mxu0 0.0
        %5486 = vmatpush.msra.mxu0 0.0
        %5487 = vmatpush.msra.mxu0 0.0
        %5488 = vmatpush.msra.mxu0 0.0
        %5489 = vmatpush.msra.mxu0 0.0
        %5490 = vmatpush.msra.mxu0 0.0
        %5491 = vmatpush.msra.mxu0 0.0
        %5492 = vmatpush.msra.mxu0 0.0
        %5493 = vmatpush.msra.mxu0 0.0
        %5494 = vmatpush.msra.mxu0 %v5465
        %5495 = vmatpush.msra.mxu0 %v5464
        %5496 = vmatmul.f32.gmra.mxu0 %v5469
        %v5497 = vpop.f32.mrf.mxu0
        %v5498 = vadd.f32 0.0, %v5497
        %5499 = vmatmul.f32.gmra.mxu0 %v5472
        %v5500 = vpop.f32.mrf.mxu0
        %v5501 = vadd.f32 0.0, %v5500
        %5502 = vmatmul.f32.gmra.mxu0 %v5475
        %v5503 = vpop.f32.mrf.mxu0
        %v5504 = vadd.f32 0.0, %v5503
        %5505 = vmatmul.f32.gmra.mxu0 %v5478
        %v5506 = vpop.f32.mrf.mxu0
        %v5507 = vadd.f32 0.0, %v5506
        %5508 = vdwg.mxu0
        %v5509 = vadd.f32 %v5447, %v5498
        %v5510 = vadd.f32 %v5448, %v5501
        %v5511 = vadd.f32 %v5449, %v5504
        %v5512 = vadd.f32 %v5450, %v5507
        %s5513 = scalar_lea.vmem %s7, 736
        %v5514 = vld [vmem:[%s5513] sm:$0xff]
        %v5515 = vld [vmem:[%s5513 + $0x8] sm:$0xff]
        %v5516 = vld [vmem:[%s5513 + $0x10] sm:$0xff]
        %v5517 = vld [vmem:[%s5513 + $0x18] sm:$0xff]
        %5518 = vrot.lane.b32.xlu0 %v4150, 69
        %v5519 = vpop.permute.xlu0 %5518
        %5520 = vrot.lane.b32.xlu0 %v4151, 69
        %v5521 = vpop.permute.xlu0 %5520
        %5522 = vrot.lane.b32.xlu0 %v4152, 69
        %v5523 = vpop.permute.xlu0 %5522
        %5524 = vrot.lane.b32.xlu0 %v4153, 69
        %v5525 = vpop.permute.xlu0 %5524
        %v5526 = vsel %vm803, %v5519, %v5521
        %v5527 = vsel %vm803, %v5523, %v5525
        %v5531 = vsel %vm2824, %v5514, 0
        %v5534 = vsel %vm2824, %v5515, 0
        %v5537 = vsel %vm2824, %v5516, 0
        %v5540 = vsel %vm2824, %v5517, 0
        %5542 = vmatpush.msra.mxu0 0.0
        %5543 = vmatpush.msra.mxu0 0.0
        %5544 = vmatpush.msra.mxu0 0.0
        %5545 = vmatpush.msra.mxu0 0.0
        %5546 = vmatpush.msra.mxu0 0.0
        %5547 = vmatpush.msra.mxu0 0.0
        %5548 = vmatpush.msra.mxu0 0.0
        %5549 = vmatpush.msra.mxu0 0.0
        %5550 = vmatpush.msra.mxu0 0.0
        %5551 = vmatpush.msra.mxu0 0.0
        %5552 = vmatpush.msra.mxu0 0.0
        %5553 = vmatpush.msra.mxu0 0.0
        %5554 = vmatpush.msra.mxu0 0.0
        %5555 = vmatpush.msra.mxu0 0.0
        %5556 = vmatpush.msra.mxu0 %v5527
        %5557 = vmatpush.msra.mxu0 %v5526
        %5558 = vmatmul.f32.gmra.mxu0 %v5531
        %v5559 = vpop.f32.mrf.mxu0
        %v5560 = vadd.f32 0.0, %v5559
        %5561 = vmatmul.f32.gmra.mxu0 %v5534
        %v5562 = vpop.f32.mrf.mxu0
        %v5563 = vadd.f32 0.0, %v5562
        %5564 = vmatmul.f32.gmra.mxu0 %v5537
        %v5565 = vpop.f32.mrf.mxu0
        %v5566 = vadd.f32 0.0, %v5565
        %5567 = vmatmul.f32.gmra.mxu0 %v5540
        %v5568 = vpop.f32.mrf.mxu0
        %v5569 = vadd.f32 0.0, %v5568
        %5570 = vdwg.mxu0
        %v5571 = vadd.f32 %v5509, %v5560
        %v5572 = vadd.f32 %v5510, %v5563
        %v5573 = vadd.f32 %v5511, %v5566
        %v5574 = vadd.f32 %v5512, %v5569
        %s5575 = scalar_lea.vmem %s7, 768
        %v5576 = vld [vmem:[%s5575] sm:$0xff]
        %v5577 = vld [vmem:[%s5575 + $0x8] sm:$0xff]
        %v5578 = vld [vmem:[%s5575 + $0x10] sm:$0xff]
        %v5579 = vld [vmem:[%s5575 + $0x18] sm:$0xff]
        %5580 = vrot.lane.b32.xlu0 %v4150, 68
        %v5581 = vpop.permute.xlu0 %5580
        %5582 = vrot.lane.b32.xlu0 %v4151, 68
        %v5583 = vpop.permute.xlu0 %5582
        %5584 = vrot.lane.b32.xlu0 %v4152, 68
        %v5585 = vpop.permute.xlu0 %5584
        %5586 = vrot.lane.b32.xlu0 %v4153, 68
        %v5587 = vpop.permute.xlu0 %5586
        %v5588 = vsel %vm827, %v5581, %v5583
        %v5589 = vsel %vm827, %v5585, %v5587
        %v5593 = vsel %vm2824, %v5576, 0
        %v5596 = vsel %vm2824, %v5577, 0
        %v5599 = vsel %vm2824, %v5578, 0
        %v5602 = vsel %vm2824, %v5579, 0
        %5604 = vmatpush.msra.mxu0 0.0
        %5605 = vmatpush.msra.mxu0 0.0
        %5606 = vmatpush.msra.mxu0 0.0
        %5607 = vmatpush.msra.mxu0 0.0
        %5608 = vmatpush.msra.mxu0 0.0
        %5609 = vmatpush.msra.mxu0 0.0
        %5610 = vmatpush.msra.mxu0 0.0
        %5611 = vmatpush.msra.mxu0 0.0
        %5612 = vmatpush.msra.mxu0 0.0
        %5613 = vmatpush.msra.mxu0 0.0
        %5614 = vmatpush.msra.mxu0 0.0
        %5615 = vmatpush.msra.mxu0 0.0
        %5616 = vmatpush.msra.mxu0 0.0
        %5617 = vmatpush.msra.mxu0 0.0
        %5618 = vmatpush.msra.mxu0 %v5589
        %5619 = vmatpush.msra.mxu0 %v5588
        %5620 = vmatmul.f32.gmra.mxu0 %v5593
        %v5621 = vpop.f32.mrf.mxu0
        %v5622 = vadd.f32 0.0, %v5621
        %5623 = vmatmul.f32.gmra.mxu0 %v5596
        %v5624 = vpop.f32.mrf.mxu0
        %v5625 = vadd.f32 0.0, %v5624
        %5626 = vmatmul.f32.gmra.mxu0 %v5599
        %v5627 = vpop.f32.mrf.mxu0
        %v5628 = vadd.f32 0.0, %v5627
        %5629 = vmatmul.f32.gmra.mxu0 %v5602
        %v5630 = vpop.f32.mrf.mxu0
        %v5631 = vadd.f32 0.0, %v5630
        %5632 = vdwg.mxu0
        %v5633 = vadd.f32 %v5571, %v5622
        %v5634 = vadd.f32 %v5572, %v5625
        %v5635 = vadd.f32 %v5573, %v5628
        %v5636 = vadd.f32 %v5574, %v5631
        %v5637 = vld [vmem:[%s8] sm:$0xff]
        %v5638 = vld [vmem:[%s8 + $0x8] sm:$0xff]
        %v5639 = vld [vmem:[%s8 + $0x10] sm:$0xff]
        %v5640 = vld [vmem:[%s8 + $0x18] sm:$0xff]
        %5642 = vset.pattern.permute.xlu0 0
        %5643 = vperm.xlu0 %5642, %v5637
        %v5644 = vpop.permute.xlu0 %5643
        %5647 = vset.pattern.permute.xlu0 0
        %5648 = vperm.xlu0 %5647, %v5638
        %v5649 = vpop.permute.xlu0 %5648
        %5652 = vset.pattern.permute.xlu0 0
        %5653 = vperm.xlu0 %5652, %v5639
        %v5654 = vpop.permute.xlu0 %5653
        %5657 = vset.pattern.permute.xlu0 0
        %5658 = vperm.xlu0 %5657, %v5640
        %v5659 = vpop.permute.xlu0 %5658
        %v5661 = vadd.f32 %v5633, %v5644
        %v5662 = vadd.f32 %v5634, %v5649
        %v5663 = vadd.f32 %v5635, %v5654
        %v5664 = vadd.f32 %v5636, %v5659
        %v5665 = vmax.f32 %v5661, 0.0
        %v5666 = vmax.f32 %v5662, 0.0
        %v5667 = vmax.f32 %v5663, 0.0
        %v5668 = vmax.f32 %v5664, 0.0
        %5673 = vrot.lane.b32.xlu0 %v5665, 114
        %v5674 = vpop.permute.xlu0 %5673
        %5675 = vrot.lane.b32.xlu0 %v5666, 114
        %v5676 = vpop.permute.xlu0 %5675
        %5677 = vrot.lane.b32.xlu0 %v5667, 114
        %v5678 = vpop.permute.xlu0 %5677
        %5679 = vrot.lane.b32.xlu0 %v5668, 114
        %v5680 = vpop.permute.xlu0 %5679
        %v5685 = vmax.f32 %v5665, %v5674
        %v5686 = vmax.f32 %v5666, %v5676
        %v5687 = vmax.f32 %v5667, %v5678
        %v5688 = vmax.f32 %v5668, %v5680
        %5693 = vrot.lane.b32.xlu0 %v5685, 127
        %v5694 = vpop.permute.xlu0 %5693
        %5695 = vrot.lane.b32.xlu0 %v5686, 127
        %v5696 = vpop.permute.xlu0 %5695
        %5697 = vrot.lane.b32.xlu0 %v5687, 127
        %v5698 = vpop.permute.xlu0 %5697
        %5699 = vrot.lane.b32.xlu0 %v5688, 127
        %v5700 = vpop.permute.xlu0 %5699
        %v5705 = vmax.f32 %v5685, %v5694
        %v5706 = vmax.f32 %v5686, %v5696
        %v5707 = vmax.f32 %v5687, %v5698
        %v5708 = vmax.f32 %v5688, %v5700
        %5713 = vrot.lane.b32.xlu0 %v5705, 1
        %v5714 = vpop.permute.xlu0 %5713
        %5715 = vrot.lane.b32.xlu0 %v5706, 1
        %v5716 = vpop.permute.xlu0 %5715
        %5717 = vrot.lane.b32.xlu0 %v5707, 1
        %v5718 = vpop.permute.xlu0 %5717
        %5719 = vrot.lane.b32.xlu0 %v5708, 1
        %v5720 = vpop.permute.xlu0 %5719
        %5725 = vrot.lane.b32.xlu0 %v5705, 127
        %v5726 = vpop.permute.xlu0 %5725
        %5727 = vrot.lane.b32.xlu0 %v5706, 127
        %v5728 = vpop.permute.xlu0 %5727
        %5729 = vrot.lane.b32.xlu0 %v5707, 127
        %v5730 = vpop.permute.xlu0 %5729
        %5731 = vrot.lane.b32.xlu0 %v5708, 127
        %v5732 = vpop.permute.xlu0 %5731
        %5737 = vrot.lane.b32.xlu0 %v5705, 126
        %v5738 = vpop.permute.xlu0 %5737
        %5739 = vrot.lane.b32.xlu0 %v5706, 126
        %v5740 = vpop.permute.xlu0 %5739
        %5741 = vrot.lane.b32.xlu0 %v5707, 126
        %v5742 = vpop.permute.xlu0 %5741
        %5743 = vrot.lane.b32.xlu0 %v5708, 126
        %v5744 = vpop.permute.xlu0 %5743
        %v5749 = vsel %vm1339, 0.0, %v5714
        %v5750 = vsel %vm1339, 0.0, %v5716
        %v5751 = vsel %vm1339, 0.0, %v5718
        %v5752 = vsel %vm1339, 0.0, %v5720
        %v5753 = vsel %vm1342, %v5749, %v5705
        %v5754 = vsel %vm1342, %v5750, %v5706
        %v5755 = vsel %vm1342, %v5751, %v5707
        %v5756 = vsel %vm1342, %v5752, %v5708
        %v5757 = vsel %vm1345, %v5753, %v5726
        %v5758 = vsel %vm1345, %v5754, %v5728
        %v5759 = vsel %vm1345, %v5755, %v5730
        %v5760 = vsel %vm1345, %v5756, %v5732
        %v5761 = vsel %vm1348, %v5757, %v5738
        %v5762 = vsel %vm1348, %v5758, %v5740
        %v5763 = vsel %vm1348, %v5759, %v5742
        %v5764 = vsel %vm1348, %v5760, %v5744
        %v5765 = vsel %vm1351, %v5761, 0.0
        %v5766 = vsel %vm1351, %v5762, 0.0
        %v5767 = vsel %vm1351, %v5763, 0.0
        %v5768 = vsel %vm1351, %v5764, 0.0
        %5769 = vrot.lane.b32.xlu0 %v5705, 101
        %v5770 = vpop.permute.xlu0 %5769
        %5771 = vrot.lane.b32.xlu0 %v5706, 101
        %v5772 = vpop.permute.xlu0 %5771
        %5773 = vrot.lane.b32.xlu0 %v5707, 101
        %v5774 = vpop.permute.xlu0 %5773
        %5775 = vrot.lane.b32.xlu0 %v5708, 101
        %v5776 = vpop.permute.xlu0 %5775
        %5781 = vrot.lane.b32.xlu0 %v5705, 100
        %v5782 = vpop.permute.xlu0 %5781
        %5783 = vrot.lane.b32.xlu0 %v5706, 100
        %v5784 = vpop.permute.xlu0 %5783
        %5785 = vrot.lane.b32.xlu0 %v5707, 100
        %v5786 = vpop.permute.xlu0 %5785
        %5787 = vrot.lane.b32.xlu0 %v5708, 100
        %v5788 = vpop.permute.xlu0 %5787
        %5793 = vrot.lane.b32.xlu0 %v5705, 99
        %v5794 = vpop.permute.xlu0 %5793
        %5795 = vrot.lane.b32.xlu0 %v5706, 99
        %v5796 = vpop.permute.xlu0 %5795
        %5797 = vrot.lane.b32.xlu0 %v5707, 99
        %v5798 = vpop.permute.xlu0 %5797
        %5799 = vrot.lane.b32.xlu0 %v5708, 99
        %v5800 = vpop.permute.xlu0 %5799
        %5805 = vrot.lane.b32.xlu0 %v5705, 98
        %v5806 = vpop.permute.xlu0 %5805
        %5807 = vrot.lane.b32.xlu0 %v5706, 98
        %v5808 = vpop.permute.xlu0 %5807
        %5809 = vrot.lane.b32.xlu0 %v5707, 98
        %v5810 = vpop.permute.xlu0 %5809
        %5811 = vrot.lane.b32.xlu0 %v5708, 98
        %v5812 = vpop.permute.xlu0 %5811
        %v5817 = vsel %vm1339, 0.0, %v5770
        %v5818 = vsel %vm1339, 0.0, %v5772
        %v5819 = vsel %vm1339, 0.0, %v5774
        %v5820 = vsel %vm1339, 0.0, %v5776
        %v5821 = vsel %vm1342, %v5817, %v5782
        %v5822 = vsel %vm1342, %v5818, %v5784
        %v5823 = vsel %vm1342, %v5819, %v5786
        %v5824 = vsel %vm1342, %v5820, %v5788
        %v5825 = vsel %vm1345, %v5821, %v5794
        %v5826 = vsel %vm1345, %v5822, %v5796
        %v5827 = vsel %vm1345, %v5823, %v5798
        %v5828 = vsel %vm1345, %v5824, %v5800
        %v5829 = vsel %vm1348, %v5825, %v5806
        %v5830 = vsel %vm1348, %v5826, %v5808
        %v5831 = vsel %vm1348, %v5827, %v5810
        %v5832 = vsel %vm1348, %v5828, %v5812
        %v5833 = vsel %vm1351, %v5829, 0.0
        %v5834 = vsel %vm1351, %v5830, 0.0
        %v5835 = vsel %vm1351, %v5831, 0.0
        %v5836 = vsel %vm1351, %v5832, 0.0
        %5837 = vrot.lane.b32.xlu0 %v5705, 73
        %v5838 = vpop.permute.xlu0 %5837
        %5839 = vrot.lane.b32.xlu0 %v5706, 73
        %v5840 = vpop.permute.xlu0 %5839
        %5841 = vrot.lane.b32.xlu0 %v5707, 73
        %v5842 = vpop.permute.xlu0 %5841
        %5843 = vrot.lane.b32.xlu0 %v5708, 73
        %v5844 = vpop.permute.xlu0 %5843
        %5849 = vrot.lane.b32.xlu0 %v5705, 72
        %v5850 = vpop.permute.xlu0 %5849
        %5851 = vrot.lane.b32.xlu0 %v5706, 72
        %v5852 = vpop.permute.xlu0 %5851
        %5853 = vrot.lane.b32.xlu0 %v5707, 72
        %v5854 = vpop.permute.xlu0 %5853
        %5855 = vrot.lane.b32.xlu0 %v5708, 72
        %v5856 = vpop.permute.xlu0 %5855
        %5861 = vrot.lane.b32.xlu0 %v5705, 71
        %v5862 = vpop.permute.xlu0 %5861
        %5863 = vrot.lane.b32.xlu0 %v5706, 71
        %v5864 = vpop.permute.xlu0 %5863
        %5865 = vrot.lane.b32.xlu0 %v5707, 71
        %v5866 = vpop.permute.xlu0 %5865
        %5867 = vrot.lane.b32.xlu0 %v5708, 71
        %v5868 = vpop.permute.xlu0 %5867
        %5873 = vrot.lane.b32.xlu0 %v5705, 70
        %v5874 = vpop.permute.xlu0 %5873
        %5875 = vrot.lane.b32.xlu0 %v5706, 70
        %v5876 = vpop.permute.xlu0 %5875
        %5877 = vrot.lane.b32.xlu0 %v5707, 70
        %v5878 = vpop.permute.xlu0 %5877
        %5879 = vrot.lane.b32.xlu0 %v5708, 70
        %v5880 = vpop.permute.xlu0 %5879
        %v5885 = vsel %vm1339, 0.0, %v5838
        %v5886 = vsel %vm1339, 0.0, %v5840
        %v5887 = vsel %vm1339, 0.0, %v5842
        %v5888 = vsel %vm1339, 0.0, %v5844
        %v5889 = vsel %vm1342, %v5885, %v5850
        %v5890 = vsel %vm1342, %v5886, %v5852
        %v5891 = vsel %vm1342, %v5887, %v5854
        %v5892 = vsel %vm1342, %v5888, %v5856
        %v5893 = vsel %vm1345, %v5889, %v5862
        %v5894 = vsel %vm1345, %v5890, %v5864
        %v5895 = vsel %vm1345, %v5891, %v5866
        %v5896 = vsel %vm1345, %v5892, %v5868
        %v5897 = vsel %vm1348, %v5893, %v5874
        %v5898 = vsel %vm1348, %v5894, %v5876
        %v5899 = vsel %vm1348, %v5895, %v5878
        %v5900 = vsel %vm1348, %v5896, %v5880
        %v5901 = vsel %vm1351, %v5897, 0.0
        %v5902 = vsel %vm1351, %v5898, 0.0
        %v5903 = vsel %vm1351, %v5899, 0.0
        %v5904 = vsel %vm1351, %v5900, 0.0
        %5905 = vrot.lane.b32.xlu0 %v5705, 45
        %v5906 = vpop.permute.xlu0 %5905
        %5907 = vrot.lane.b32.xlu0 %v5706, 45
        %v5908 = vpop.permute.xlu0 %5907
        %5909 = vrot.lane.b32.xlu0 %v5707, 45
        %v5910 = vpop.permute.xlu0 %5909
        %5911 = vrot.lane.b32.xlu0 %v5708, 45
        %v5912 = vpop.permute.xlu0 %5911
        %5917 = vrot.lane.b32.xlu0 %v5705, 44
        %v5918 = vpop.permute.xlu0 %5917
        %5919 = vrot.lane.b32.xlu0 %v5706, 44
        %v5920 = vpop.permute.xlu0 %5919
        %5921 = vrot.lane.b32.xlu0 %v5707, 44
        %v5922 = vpop.permute.xlu0 %5921
        %5923 = vrot.lane.b32.xlu0 %v5708, 44
        %v5924 = vpop.permute.xlu0 %5923
        %5929 = vrot.lane.b32.xlu0 %v5705, 43
        %v5930 = vpop.permute.xlu0 %5929
        %5931 = vrot.lane.b32.xlu0 %v5706, 43
        %v5932 = vpop.permute.xlu0 %5931
        %5933 = vrot.lane.b32.xlu0 %v5707, 43
        %v5934 = vpop.permute.xlu0 %5933
        %5935 = vrot.lane.b32.xlu0 %v5708, 43
        %v5936 = vpop.permute.xlu0 %5935
        %5941 = vrot.lane.b32.xlu0 %v5705, 42
        %v5942 = vpop.permute.xlu0 %5941
        %5943 = vrot.lane.b32.xlu0 %v5706, 42
        %v5944 = vpop.permute.xlu0 %5943
        %5945 = vrot.lane.b32.xlu0 %v5707, 42
        %v5946 = vpop.permute.xlu0 %5945
        %5947 = vrot.lane.b32.xlu0 %v5708, 42
        %v5948 = vpop.permute.xlu0 %5947
        %v5953 = vsel %vm1339, 0.0, %v5906
        %v5954 = vsel %vm1339, 0.0, %v5908
        %v5955 = vsel %vm1339, 0.0, %v5910
        %v5956 = vsel %vm1339, 0.0, %v5912
        %v5957 = vsel %vm1342, %v5953, %v5918
        %v5958 = vsel %vm1342, %v5954, %v5920
        %v5959 = vsel %vm1342, %v5955, %v5922
        %v5960 = vsel %vm1342, %v5956, %v5924
        %v5961 = vsel %vm1345, %v5957, %v5930
        %v5962 = vsel %vm1345, %v5958, %v5932
        %v5963 = vsel %vm1345, %v5959, %v5934
        %v5964 = vsel %vm1345, %v5960, %v5936
        %v5965 = vsel %vm1348, %v5961, %v5942
        %v5966 = vsel %vm1348, %v5962, %v5944
        %v5967 = vsel %vm1348, %v5963, %v5946
        %v5968 = vsel %vm1348, %v5964, %v5948
        %v5969 = vsel %vm1351, %v5965, 0.0
        %v5970 = vsel %vm1351, %v5966, 0.0
        %v5971 = vsel %vm1351, %v5967, 0.0
        %v5972 = vsel %vm1351, %v5968, 0.0
        %5977 = vrot.lane.b32.xlu0 %v5765, 6
        %v5978 = vpop.permute.xlu0 %5977
        %5979 = vrot.lane.b32.xlu0 %v5766, 6
        %v5980 = vpop.permute.xlu0 %5979
        %5981 = vrot.lane.b32.xlu0 %v5767, 6
        %v5982 = vpop.permute.xlu0 %5981
        %5983 = vrot.lane.b32.xlu0 %v5768, 6
        %v5984 = vpop.permute.xlu0 %5983
        %5993 = vrot.lane.b32.xlu0 %v5833, 12
        %v5994 = vpop.permute.xlu0 %5993
        %5995 = vrot.lane.b32.xlu0 %v5834, 12
        %v5996 = vpop.permute.xlu0 %5995
        %5997 = vrot.lane.b32.xlu0 %v5835, 12
        %v5998 = vpop.permute.xlu0 %5997
        %5999 = vrot.lane.b32.xlu0 %v5836, 12
        %v6000 = vpop.permute.xlu0 %5999
        %6009 = vrot.lane.b32.xlu0 %v5901, 18
        %v6010 = vpop.permute.xlu0 %6009
        %6011 = vrot.lane.b32.xlu0 %v5902, 18
        %v6012 = vpop.permute.xlu0 %6011
        %6013 = vrot.lane.b32.xlu0 %v5903, 18
        %v6014 = vpop.permute.xlu0 %6013
        %6015 = vrot.lane.b32.xlu0 %v5904, 18
        %v6016 = vpop.permute.xlu0 %6015
        %6025 = vrot.lane.b32.xlu0 %v5969, 24
        %v6026 = vpop.permute.xlu0 %6025
        %6027 = vrot.lane.b32.xlu0 %v5970, 24
        %v6028 = vpop.permute.xlu0 %6027
        %6029 = vrot.lane.b32.xlu0 %v5971, 24
        %v6030 = vpop.permute.xlu0 %6029
        %6031 = vrot.lane.b32.xlu0 %v5972, 24
        %v6032 = vpop.permute.xlu0 %6031
        %v6037 = vsel %vm1354, 0.0, %v5978
        %v6038 = vsel %vm1354, 0.0, %v5980
        %v6039 = vsel %vm1354, 0.0, %v5982
        %v6040 = vsel %vm1354, 0.0, %v5984
        %v6041 = vsel %vm1372, %v6037, %v5994
        %v6042 = vsel %vm1372, %v6038, %v5996
        %v6043 = vsel %vm1372, %v6039, %v5998
        %v6044 = vsel %vm1372, %v6040, %v6000
        %vm6045 = vcmask 146432
        %v6046 = vsel %vm6045, %v6041, %v6010
        %v6047 = vsel %vm6045, %v6042, %v6012
        %v6048 = vsel %vm6045, %v6043, %v6014
        %v6049 = vsel %vm6045, %v6044, %v6016
        %vm6050 = vcmask 195584
        %v6051 = vsel %vm6050, %v6046, %v6026
        %v6052 = vsel %vm6050, %v6047, %v6028
        %v6053 = vsel %vm6050, %v6048, %v6030
        %v6054 = vsel %vm6050, %v6049, %v6032
        %vm6055 = vcmask 244736
        %v6056 = vsel %vm6055, %v6051, 0.0
        %v6057 = vsel %vm6055, %v6052, 0.0
        %v6058 = vsel %vm6055, %v6053, 0.0
        %v6059 = vsel %vm6055, %v6054, 0.0
        %v6060 = vsel %vm1348, 1.0, 0.0
        %6062 = vrot.lane.b32.xlu0 %v6060, 6
        %v6063 = vpop.permute.xlu0 %6062
        %6065 = vrot.lane.b32.xlu0 %v6060, 12
        %v6066 = vpop.permute.xlu0 %6065
        %6068 = vrot.lane.b32.xlu0 %v6060, 18
        %v6069 = vpop.permute.xlu0 %6068
        %v6071 = vsel %vm1354, %v6060, %v6063
        %v6072 = vsel %vm1372, %v6071, %v6066
        %v6073 = vsel %vm6045, %v6072, %v6069
        %v6074 = vld [vmem:[%s9] sm:$0xff]
        %v6075 = vld [vmem:[%s9 + $0x8] sm:$0xff]
        %v6076 = vld [vmem:[%s9 + $0x10] sm:$0xff]
        %v6077 = vld [vmem:[%s9 + $0x18] sm:$0xff]
        %s6078 = scalar_lea.vmem %s9, 32
        %v6079 = vld [vmem:[%s6078] sm:$0xff]
        %v6080 = vld [vmem:[%s6078 + $0x8] sm:$0xff]
        %v6081 = vld [vmem:[%s6078 + $0x10] sm:$0xff]
        %v6082 = vld [vmem:[%s6078 + $0x18] sm:$0xff]
        %6087 = vrot.lane.b32.xlu0 %v6056, 127
        %v6088 = vpop.permute.xlu0 %6087
        %6089 = vrot.lane.b32.xlu0 %v6057, 127
        %v6090 = vpop.permute.xlu0 %6089
        %6091 = vrot.lane.b32.xlu0 %v6058, 127
        %v6092 = vpop.permute.xlu0 %6091
        %6093 = vrot.lane.b32.xlu0 %v6059, 127
        %v6094 = vpop.permute.xlu0 %6093
        %vm6099 = vcmask 261120
        %v6101 = vsel %vm6099, %v6079, 0
        %v6104 = vsel %vm6099, %v6080, 0
        %v6107 = vsel %vm6099, %v6081, 0
        %v6110 = vsel %vm6099, %v6082, 0
        %6112 = vmatpush.msra.mxu0 0.0
        %6113 = vmatpush.msra.mxu0 0.0
        %6114 = vmatpush.msra.mxu0 0.0
        %6115 = vmatpush.msra.mxu0 0.0
        %6116 = vmatpush.msra.mxu0 0.0
        %6117 = vmatpush.msra.mxu0 0.0
        %6118 = vmatpush.msra.mxu0 0.0
        %6119 = vmatpush.msra.mxu0 0.0
        %6120 = vmatpush.msra.mxu0 0.0
        %6121 = vmatpush.msra.mxu0 0.0
        %6122 = vmatpush.msra.mxu0 0.0
        %6123 = vmatpush.msra.mxu0 0.0
        %6124 = vmatpush.msra.mxu0 %v6094
        %6125 = vmatpush.msra.mxu0 %v6092
        %6126 = vmatpush.msra.mxu0 %v6090
        %6127 = vmatpush.msra.mxu0 %v6088
        %6128 = vmatmul.f32.gmra.mxu0 %v6101
        %v6129 = vpop.f32.mrf.mxu0
        %v6130 = vadd.f32 0.0, %v6129
        %6131 = vmatmul.f32.gmra.mxu0 %v6104
        %v6132 = vpop.f32.mrf.mxu0
        %v6133 = vadd.f32 0.0, %v6132
        %6134 = vmatmul.f32.gmra.mxu0 %v6107
        %v6135 = vpop.f32.mrf.mxu0
        %v6136 = vadd.f32 0.0, %v6135
        %6137 = vmatmul.f32.gmra.mxu0 %v6110
        %v6138 = vpop.f32.mrf.mxu0
        %v6139 = vadd.f32 0.0, %v6138
        %6140 = vdwg.mxu0
        %v6142 = vsel %vm6099, %v6074, 0
        %v6145 = vsel %vm6099, %v6075, 0
        %v6148 = vsel %vm6099, %v6076, 0
        %v6151 = vsel %vm6099, %v6077, 0
        %6153 = vmatpush.msra.mxu0 0.0
        %6154 = vmatpush.msra.mxu0 0.0
        %6155 = vmatpush.msra.mxu0 0.0
        %6156 = vmatpush.msra.mxu0 0.0
        %6157 = vmatpush.msra.mxu0 0.0
        %6158 = vmatpush.msra.mxu0 0.0
        %6159 = vmatpush.msra.mxu0 0.0
        %6160 = vmatpush.msra.mxu0 0.0
        %6161 = vmatpush.msra.mxu0 0.0
        %6162 = vmatpush.msra.mxu0 0.0
        %6163 = vmatpush.msra.mxu0 0.0
        %6164 = vmatpush.msra.mxu0 0.0
        %6165 = vmatpush.msra.mxu0 %v6059
        %6166 = vmatpush.msra.mxu0 %v6058
        %6167 = vmatpush.msra.mxu0 %v6057
        %6168 = vmatpush.msra.mxu0 %v6056
        %6169 = vmatmul.f32.gmra.mxu0 %v6142
        %v6170 = vpop.f32.mrf.mxu0
        %v6171 = vadd.f32 %v6130, %v6170
        %6172 = vmatmul.f32.gmra.mxu0 %v6145
        %v6173 = vpop.f32.mrf.mxu0
        %v6174 = vadd.f32 %v6133, %v6173
        %6175 = vmatmul.f32.gmra.mxu0 %v6148
        %v6176 = vpop.f32.mrf.mxu0
        %v6177 = vadd.f32 %v6136, %v6176
        %6178 = vmatmul.f32.gmra.mxu0 %v6151
        %v6179 = vpop.f32.mrf.mxu0
        %v6180 = vadd.f32 %v6139, %v6179
        %6181 = vdwg.mxu0
        %s6182 = scalar_lea.vmem %s9, 64
        %v6183 = vld [vmem:[%s6182] sm:$0xff]
        %v6184 = vld [vmem:[%s6182 + $0x8] sm:$0xff]
        %v6185 = vld [vmem:[%s6182 + $0x10] sm:$0xff]
        %v6186 = vld [vmem:[%s6182 + $0x18] sm:$0xff]
        %6187 = vrot.lane.b32.xlu0 %v6056, 126
        %v6188 = vpop.permute.xlu0 %6187
        %6189 = vrot.lane.b32.xlu0 %v6057, 126
        %v6190 = vpop.permute.xlu0 %6189
        %6191 = vrot.lane.b32.xlu0 %v6058, 126
        %v6192 = vpop.permute.xlu0 %6191
        %6193 = vrot.lane.b32.xlu0 %v6059, 126
        %v6194 = vpop.permute.xlu0 %6193
        %v6200 = vsel %vm6099, %v6183, 0
        %v6203 = vsel %vm6099, %v6184, 0
        %v6206 = vsel %vm6099, %v6185, 0
        %v6209 = vsel %vm6099, %v6186, 0
        %6211 = vmatpush.msra.mxu0 0.0
        %6212 = vmatpush.msra.mxu0 0.0
        %6213 = vmatpush.msra.mxu0 0.0
        %6214 = vmatpush.msra.mxu0 0.0
        %6215 = vmatpush.msra.mxu0 0.0
        %6216 = vmatpush.msra.mxu0 0.0
        %6217 = vmatpush.msra.mxu0 0.0
        %6218 = vmatpush.msra.mxu0 0.0
        %6219 = vmatpush.msra.mxu0 0.0
        %6220 = vmatpush.msra.mxu0 0.0
        %6221 = vmatpush.msra.mxu0 0.0
        %6222 = vmatpush.msra.mxu0 0.0
        %6223 = vmatpush.msra.mxu0 %v6194
        %6224 = vmatpush.msra.mxu0 %v6192
        %6225 = vmatpush.msra.mxu0 %v6190
        %6226 = vmatpush.msra.mxu0 %v6188
        %6227 = vmatmul.f32.gmra.mxu0 %v6200
        %v6228 = vpop.f32.mrf.mxu0
        %v6229 = vadd.f32 0.0, %v6228
        %6230 = vmatmul.f32.gmra.mxu0 %v6203
        %v6231 = vpop.f32.mrf.mxu0
        %v6232 = vadd.f32 0.0, %v6231
        %6233 = vmatmul.f32.gmra.mxu0 %v6206
        %v6234 = vpop.f32.mrf.mxu0
        %v6235 = vadd.f32 0.0, %v6234
        %6236 = vmatmul.f32.gmra.mxu0 %v6209
        %v6237 = vpop.f32.mrf.mxu0
        %v6238 = vadd.f32 0.0, %v6237
        %6239 = vdwg.mxu0
        %v6240 = vadd.f32 %v6171, %v6229
        %v6241 = vadd.f32 %v6174, %v6232
        %v6242 = vadd.f32 %v6177, %v6235
        %v6243 = vadd.f32 %v6180, %v6238
        %s6244 = scalar_lea.vmem %s9, 96
        %v6245 = vld [vmem:[%s6244] sm:$0xff]
        %v6246 = vld [vmem:[%s6244 + $0x8] sm:$0xff]
        %v6247 = vld [vmem:[%s6244 + $0x10] sm:$0xff]
        %v6248 = vld [vmem:[%s6244 + $0x18] sm:$0xff]
        %6249 = vrot.lane.b32.xlu0 %v6056, 122
        %v6250 = vpop.permute.xlu0 %6249
        %6251 = vrot.lane.b32.xlu0 %v6057, 122
        %v6252 = vpop.permute.xlu0 %6251
        %6253 = vrot.lane.b32.xlu0 %v6058, 122
        %v6254 = vpop.permute.xlu0 %6253
        %6255 = vrot.lane.b32.xlu0 %v6059, 122
        %v6256 = vpop.permute.xlu0 %6255
        %v6262 = vsel %vm6099, %v6245, 0
        %v6265 = vsel %vm6099, %v6246, 0
        %v6268 = vsel %vm6099, %v6247, 0
        %v6271 = vsel %vm6099, %v6248, 0
        %6273 = vmatpush.msra.mxu0 0.0
        %6274 = vmatpush.msra.mxu0 0.0
        %6275 = vmatpush.msra.mxu0 0.0
        %6276 = vmatpush.msra.mxu0 0.0
        %6277 = vmatpush.msra.mxu0 0.0
        %6278 = vmatpush.msra.mxu0 0.0
        %6279 = vmatpush.msra.mxu0 0.0
        %6280 = vmatpush.msra.mxu0 0.0
        %6281 = vmatpush.msra.mxu0 0.0
        %6282 = vmatpush.msra.mxu0 0.0
        %6283 = vmatpush.msra.mxu0 0.0
        %6284 = vmatpush.msra.mxu0 0.0
        %6285 = vmatpush.msra.mxu0 %v6256
        %6286 = vmatpush.msra.mxu0 %v6254
        %6287 = vmatpush.msra.mxu0 %v6252
        %6288 = vmatpush.msra.mxu0 %v6250
        %6289 = vmatmul.f32.gmra.mxu0 %v6262
        %v6290 = vpop.f32.mrf.mxu0
        %v6291 = vadd.f32 0.0, %v6290
        %6292 = vmatmul.f32.gmra.mxu0 %v6265
        %v6293 = vpop.f32.mrf.mxu0
        %v6294 = vadd.f32 0.0, %v6293
        %6295 = vmatmul.f32.gmra.mxu0 %v6268
        %v6296 = vpop.f32.mrf.mxu0
        %v6297 = vadd.f32 0.0, %v6296
        %6298 = vmatmul.f32.gmra.mxu0 %v6271
        %v6299 = vpop.f32.mrf.mxu0
        %v6300 = vadd.f32 0.0, %v6299
        %6301 = vdwg.mxu0
        %v6302 = vadd.f32 %v6240, %v6291
        %v6303 = vadd.f32 %v6241, %v6294
        %v6304 = vadd.f32 %v6242, %v6297
        %v6305 = vadd.f32 %v6243, %v6300
        %s6306 = scalar_lea.vmem %s9, 128
        %v6307 = vld [vmem:[%s6306] sm:$0xff]
        %v6308 = vld [vmem:[%s6306 + $0x8] sm:$0xff]
        %v6309 = vld [vmem:[%s6306 + $0x10] sm:$0xff]
        %v6310 = vld [vmem:[%s6306 + $0x18] sm:$0xff]
        %6311 = vrot.lane.b32.xlu0 %v6056, 121
        %v6312 = vpop.permute.xlu0 %6311
        %6313 = vrot.lane.b32.xlu0 %v6057, 121
        %v6314 = vpop.permute.xlu0 %6313
        %6315 = vrot.lane.b32.xlu0 %v6058, 121
        %v6316 = vpop.permute.xlu0 %6315
        %6317 = vrot.lane.b32.xlu0 %v6059, 121
        %v6318 = vpop.permute.xlu0 %6317
        %v6324 = vsel %vm6099, %v6307, 0
        %v6327 = vsel %vm6099, %v6308, 0
        %v6330 = vsel %vm6099, %v6309, 0
        %v6333 = vsel %vm6099, %v6310, 0
        %6335 = vmatpush.msra.mxu0 0.0
        %6336 = vmatpush.msra.mxu0 0.0
        %6337 = vmatpush.msra.mxu0 0.0
        %6338 = vmatpush.msra.mxu0 0.0
        %6339 = vmatpush.msra.mxu0 0.0
        %6340 = vmatpush.msra.mxu0 0.0
        %6341 = vmatpush.msra.mxu0 0.0
        %6342 = vmatpush.msra.mxu0 0.0
        %6343 = vmatpush.msra.mxu0 0.0
        %6344 = vmatpush.msra.mxu0 0.0
        %6345 = vmatpush.msra.mxu0 0.0
        %6346 = vmatpush.msra.mxu0 0.0
        %6347 = vmatpush.msra.mxu0 %v6318
        %6348 = vmatpush.msra.mxu0 %v6316
        %6349 = vmatpush.msra.mxu0 %v6314
        %6350 = vmatpush.msra.mxu0 %v6312
        %6351 = vmatmul.f32.gmra.mxu0 %v6324
        %v6352 = vpop.f32.mrf.mxu0
        %v6353 = vadd.f32 0.0, %v6352
        %6354 = vmatmul.f32.gmra.mxu0 %v6327
        %v6355 = vpop.f32.mrf.mxu0
        %v6356 = vadd.f32 0.0, %v6355
        %6357 = vmatmul.f32.gmra.mxu0 %v6330
        %v6358 = vpop.f32.mrf.mxu0
        %v6359 = vadd.f32 0.0, %v6358
        %6360 = vmatmul.f32.gmra.mxu0 %v6333
        %v6361 = vpop.f32.mrf.mxu0
        %v6362 = vadd.f32 0.0, %v6361
        %6363 = vdwg.mxu0
        %v6364 = vadd.f32 %v6302, %v6353
        %v6365 = vadd.f32 %v6303, %v6356
        %v6366 = vadd.f32 %v6304, %v6359
        %v6367 = vadd.f32 %v6305, %v6362
        %s6368 = scalar_lea.vmem %s9, 160
        %v6369 = vld [vmem:[%s6368] sm:$0xff]
        %v6370 = vld [vmem:[%s6368 + $0x8] sm:$0xff]
        %v6371 = vld [vmem:[%s6368 + $0x10] sm:$0xff]
        %v6372 = vld [vmem:[%s6368 + $0x18] sm:$0xff]
        %6373 = vrot.lane.b32.xlu0 %v6056, 120
        %v6374 = vpop.permute.xlu0 %6373
        %6375 = vrot.lane.b32.xlu0 %v6057, 120
        %v6376 = vpop.permute.xlu0 %6375
        %6377 = vrot.lane.b32.xlu0 %v6058, 120
        %v6378 = vpop.permute.xlu0 %6377
        %6379 = vrot.lane.b32.xlu0 %v6059, 120
        %v6380 = vpop.permute.xlu0 %6379
        %v6386 = vsel %vm6099, %v6369, 0
        %v6389 = vsel %vm6099, %v6370, 0
        %v6392 = vsel %vm6099, %v6371, 0
        %v6395 = vsel %vm6099, %v6372, 0
        %6397 = vmatpush.msra.mxu0 0.0
        %6398 = vmatpush.msra.mxu0 0.0
        %6399 = vmatpush.msra.mxu0 0.0
        %6400 = vmatpush.msra.mxu0 0.0
        %6401 = vmatpush.msra.mxu0 0.0
        %6402 = vmatpush.msra.mxu0 0.0
        %6403 = vmatpush.msra.mxu0 0.0
        %6404 = vmatpush.msra.mxu0 0.0
        %6405 = vmatpush.msra.mxu0 0.0
        %6406 = vmatpush.msra.mxu0 0.0
        %6407 = vmatpush.msra.mxu0 0.0
        %6408 = vmatpush.msra.mxu0 0.0
        %6409 = vmatpush.msra.mxu0 %v6380
        %6410 = vmatpush.msra.mxu0 %v6378
        %6411 = vmatpush.msra.mxu0 %v6376
        %6412 = vmatpush.msra.mxu0 %v6374
        %6413 = vmatmul.f32.gmra.mxu0 %v6386
        %v6414 = vpop.f32.mrf.mxu0
        %v6415 = vadd.f32 0.0, %v6414
        %6416 = vmatmul.f32.gmra.mxu0 %v6389
        %v6417 = vpop.f32.mrf.mxu0
        %v6418 = vadd.f32 0.0, %v6417
        %6419 = vmatmul.f32.gmra.mxu0 %v6392
        %v6420 = vpop.f32.mrf.mxu0
        %v6421 = vadd.f32 0.0, %v6420
        %6422 = vmatmul.f32.gmra.mxu0 %v6395
        %v6423 = vpop.f32.mrf.mxu0
        %v6424 = vadd.f32 0.0, %v6423
        %6425 = vdwg.mxu0
        %v6426 = vadd.f32 %v6364, %v6415
        %v6427 = vadd.f32 %v6365, %v6418
        %v6428 = vadd.f32 %v6366, %v6421
        %v6429 = vadd.f32 %v6367, %v6424
        %s6430 = scalar_lea.vmem %s9, 192
        %v6431 = vld [vmem:[%s6430] sm:$0xff]
        %v6432 = vld [vmem:[%s6430 + $0x8] sm:$0xff]
        %v6433 = vld [vmem:[%s6430 + $0x10] sm:$0xff]
        %v6434 = vld [vmem:[%s6430 + $0x18] sm:$0xff]
        %6435 = vrot.lane.b32.xlu0 %v6056, 116
        %v6436 = vpop.permute.xlu0 %6435
        %6437 = vrot.lane.b32.xlu0 %v6057, 116
        %v6438 = vpop.permute.xlu0 %6437
        %6439 = vrot.lane.b32.xlu0 %v6058, 116
        %v6440 = vpop.permute.xlu0 %6439
        %6441 = vrot.lane.b32.xlu0 %v6059, 116
        %v6442 = vpop.permute.xlu0 %6441
        %v6448 = vsel %vm6099, %v6431, 0
        %v6451 = vsel %vm6099, %v6432, 0
        %v6454 = vsel %vm6099, %v6433, 0
        %v6457 = vsel %vm6099, %v6434, 0
        %6459 = vmatpush.msra.mxu0 0.0
        %6460 = vmatpush.msra.mxu0 0.0
        %6461 = vmatpush.msra.mxu0 0.0
        %6462 = vmatpush.msra.mxu0 0.0
        %6463 = vmatpush.msra.mxu0 0.0
        %6464 = vmatpush.msra.mxu0 0.0
        %6465 = vmatpush.msra.mxu0 0.0
        %6466 = vmatpush.msra.mxu0 0.0
        %6467 = vmatpush.msra.mxu0 0.0
        %6468 = vmatpush.msra.mxu0 0.0
        %6469 = vmatpush.msra.mxu0 0.0
        %6470 = vmatpush.msra.mxu0 0.0
        %6471 = vmatpush.msra.mxu0 %v6442
        %6472 = vmatpush.msra.mxu0 %v6440
        %6473 = vmatpush.msra.mxu0 %v6438
        %6474 = vmatpush.msra.mxu0 %v6436
        %6475 = vmatmul.f32.gmra.mxu0 %v6448
        %v6476 = vpop.f32.mrf.mxu0
        %v6477 = vadd.f32 0.0, %v6476
        %6478 = vmatmul.f32.gmra.mxu0 %v6451
        %v6479 = vpop.f32.mrf.mxu0
        %v6480 = vadd.f32 0.0, %v6479
        %6481 = vmatmul.f32.gmra.mxu0 %v6454
        %v6482 = vpop.f32.mrf.mxu0
        %v6483 = vadd.f32 0.0, %v6482
        %6484 = vmatmul.f32.gmra.mxu0 %v6457
        %v6485 = vpop.f32.mrf.mxu0
        %v6486 = vadd.f32 0.0, %v6485
        %6487 = vdwg.mxu0
        %v6488 = vadd.f32 %v6426, %v6477
        %v6489 = vadd.f32 %v6427, %v6480
        %v6490 = vadd.f32 %v6428, %v6483
        %v6491 = vadd.f32 %v6429, %v6486
        %s6492 = scalar_lea.vmem %s9, 224
        %v6493 = vld [vmem:[%s6492] sm:$0xff]
        %v6494 = vld [vmem:[%s6492 + $0x8] sm:$0xff]
        %v6495 = vld [vmem:[%s6492 + $0x10] sm:$0xff]
        %v6496 = vld [vmem:[%s6492 + $0x18] sm:$0xff]
        %6497 = vrot.lane.b32.xlu0 %v6056, 115
        %v6498 = vpop.permute.xlu0 %6497
        %6499 = vrot.lane.b32.xlu0 %v6057, 115
        %v6500 = vpop.permute.xlu0 %6499
        %6501 = vrot.lane.b32.xlu0 %v6058, 115
        %v6502 = vpop.permute.xlu0 %6501
        %6503 = vrot.lane.b32.xlu0 %v6059, 115
        %v6504 = vpop.permute.xlu0 %6503
        %v6510 = vsel %vm6099, %v6493, 0
        %v6513 = vsel %vm6099, %v6494, 0
        %v6516 = vsel %vm6099, %v6495, 0
        %v6519 = vsel %vm6099, %v6496, 0
        %6521 = vmatpush.msra.mxu0 0.0
        %6522 = vmatpush.msra.mxu0 0.0
        %6523 = vmatpush.msra.mxu0 0.0
        %6524 = vmatpush.msra.mxu0 0.0
        %6525 = vmatpush.msra.mxu0 0.0
        %6526 = vmatpush.msra.mxu0 0.0
        %6527 = vmatpush.msra.mxu0 0.0
        %6528 = vmatpush.msra.mxu0 0.0
        %6529 = vmatpush.msra.mxu0 0.0
        %6530 = vmatpush.msra.mxu0 0.0
        %6531 = vmatpush.msra.mxu0 0.0
        %6532 = vmatpush.msra.mxu0 0.0
        %6533 = vmatpush.msra.mxu0 %v6504
        %6534 = vmatpush.msra.mxu0 %v6502
        %6535 = vmatpush.msra.mxu0 %v6500
        %6536 = vmatpush.msra.mxu0 %v6498
        %6537 = vmatmul.f32.gmra.mxu0 %v6510
        %v6538 = vpop.f32.mrf.mxu0
        %v6539 = vadd.f32 0.0, %v6538
        %6540 = vmatmul.f32.gmra.mxu0 %v6513
        %v6541 = vpop.f32.mrf.mxu0
        %v6542 = vadd.f32 0.0, %v6541
        %6543 = vmatmul.f32.gmra.mxu0 %v6516
        %v6544 = vpop.f32.mrf.mxu0
        %v6545 = vadd.f32 0.0, %v6544
        %6546 = vmatmul.f32.gmra.mxu0 %v6519
        %v6547 = vpop.f32.mrf.mxu0
        %v6548 = vadd.f32 0.0, %v6547
        %6549 = vdwg.mxu0
        %v6550 = vadd.f32 %v6488, %v6539
        %v6551 = vadd.f32 %v6489, %v6542
        %v6552 = vadd.f32 %v6490, %v6545
        %v6553 = vadd.f32 %v6491, %v6548
        %s6554 = scalar_lea.vmem %s9, 256
        %v6555 = vld [vmem:[%s6554] sm:$0xff]
        %v6556 = vld [vmem:[%s6554 + $0x8] sm:$0xff]
        %v6557 = vld [vmem:[%s6554 + $0x10] sm:$0xff]
        %v6558 = vld [vmem:[%s6554 + $0x18] sm:$0xff]
        %6559 = vrot.lane.b32.xlu0 %v6056, 114
        %v6560 = vpop.permute.xlu0 %6559
        %6561 = vrot.lane.b32.xlu0 %v6057, 114
        %v6562 = vpop.permute.xlu0 %6561
        %6563 = vrot.lane.b32.xlu0 %v6058, 114
        %v6564 = vpop.permute.xlu0 %6563
        %6565 = vrot.lane.b32.xlu0 %v6059, 114
        %v6566 = vpop.permute.xlu0 %6565
        %v6572 = vsel %vm6099, %v6555, 0
        %v6575 = vsel %vm6099, %v6556, 0
        %v6578 = vsel %vm6099, %v6557, 0
        %v6581 = vsel %vm6099, %v6558, 0
        %6583 = vmatpush.msra.mxu0 0.0
        %6584 = vmatpush.msra.mxu0 0.0
        %6585 = vmatpush.msra.mxu0 0.0
        %6586 = vmatpush.msra.mxu0 0.0
        %6587 = vmatpush.msra.mxu0 0.0
        %6588 = vmatpush.msra.mxu0 0.0
        %6589 = vmatpush.msra.mxu0 0.0
        %6590 = vmatpush.msra.mxu0 0.0
        %6591 = vmatpush.msra.mxu0 0.0
        %6592 = vmatpush.msra.mxu0 0.0
        %6593 = vmatpush.msra.mxu0 0.0
        %6594 = vmatpush.msra.mxu0 0.0
        %6595 = vmatpush.msra.mxu0 %v6566
        %6596 = vmatpush.msra.mxu0 %v6564
        %6597 = vmatpush.msra.mxu0 %v6562
        %6598 = vmatpush.msra.mxu0 %v6560
        %6599 = vmatmul.f32.gmra.mxu0 %v6572
        %v6600 = vpop.f32.mrf.mxu0
        %v6601 = vadd.f32 0.0, %v6600
        %6602 = vmatmul.f32.gmra.mxu0 %v6575
        %v6603 = vpop.f32.mrf.mxu0
        %v6604 = vadd.f32 0.0, %v6603
        %6605 = vmatmul.f32.gmra.mxu0 %v6578
        %v6606 = vpop.f32.mrf.mxu0
        %v6607 = vadd.f32 0.0, %v6606
        %6608 = vmatmul.f32.gmra.mxu0 %v6581
        %v6609 = vpop.f32.mrf.mxu0
        %v6610 = vadd.f32 0.0, %v6609
        %6611 = vdwg.mxu0
        %v6612 = vadd.f32 %v6550, %v6601
        %v6613 = vadd.f32 %v6551, %v6604
        %v6614 = vadd.f32 %v6552, %v6607
        %v6615 = vadd.f32 %v6553, %v6610
        %v6616 = vld [vmem:[%s10] sm:$0xff]
        %v6617 = vld [vmem:[%s10 + $0x8] sm:$0xff]
        %v6618 = vld [vmem:[%s10 + $0x10] sm:$0xff]
        %v6619 = vld [vmem:[%s10 + $0x18] sm:$0xff]
        %6621 = vset.pattern.permute.xlu0 0
        %6622 = vperm.xlu0 %6621, %v6616
        %v6623 = vpop.permute.xlu0 %6622
        %6626 = vset.pattern.permute.xlu0 0
        %6627 = vperm.xlu0 %6626, %v6617
        %v6628 = vpop.permute.xlu0 %6627
        %6631 = vset.pattern.permute.xlu0 0
        %6632 = vperm.xlu0 %6631, %v6618
        %v6633 = vpop.permute.xlu0 %6632
        %6636 = vset.pattern.permute.xlu0 0
        %6637 = vperm.xlu0 %6636, %v6619
        %v6638 = vpop.permute.xlu0 %6637
        %v6640 = vadd.f32 %v6612, %v6623
        %v6641 = vadd.f32 %v6613, %v6628
        %v6642 = vadd.f32 %v6614, %v6633
        %v6643 = vadd.f32 %v6615, %v6638
        %v6644 = vmax.f32 %v6640, 0.0
        %v6645 = vmax.f32 %v6641, 0.0
        %v6646 = vmax.f32 %v6642, 0.0
        %v6647 = vmax.f32 %v6643, 0.0
        %v6648 = vperm.slane %v6073, 0
        %v6649 = vmul.f32 %v6644, %v6648
        %v6650 = vmul.f32 %v6645, %v6648
        %v6651 = vmul.f32 %v6646, %v6648
        %v6652 = vmul.f32 %v6647, %v6648
        %6657 = vrot.lane.b32.xlu0 %v6649, 7
        %v6658 = vpop.permute.xlu0 %6657
        %6659 = vrot.lane.b32.xlu0 %v6650, 7
        %v6660 = vpop.permute.xlu0 %6659
        %6661 = vrot.lane.b32.xlu0 %v6651, 7
        %v6662 = vpop.permute.xlu0 %6661
        %6663 = vrot.lane.b32.xlu0 %v6652, 7
        %v6664 = vpop.permute.xlu0 %6663
        %v6669 = vsel %vm1357, 0.0, %v6658
        %v6670 = vsel %vm1357, 0.0, %v6660
        %v6671 = vsel %vm1357, 0.0, %v6662
        %v6672 = vsel %vm1357, 0.0, %v6664
        %vm6673 = vcmask 236544
        %v6674 = vsel %vm6673, %v6669, 0.0
        %v6675 = vsel %vm6673, %v6670, 0.0
        %v6676 = vsel %vm6673, %v6671, 0.0
        %v6677 = vsel %vm6673, %v6672, 0.0
        %v6678 = vld [vmem:[%s11] sm:$0xff]
        %v6679 = vld [vmem:[%s11 + $0x8] sm:$0xff]
        %v6680 = vld [vmem:[%s11 + $0x10] sm:$0xff]
        %v6681 = vld [vmem:[%s11 + $0x18] sm:$0xff]
        %s6682 = scalar_lea.vmem %s11, 32
        %v6683 = vld [vmem:[%s6682] sm:$0xff]
        %v6684 = vld [vmem:[%s6682 + $0x8] sm:$0xff]
        %v6685 = vld [vmem:[%s6682 + $0x10] sm:$0xff]
        %v6686 = vld [vmem:[%s6682 + $0x18] sm:$0xff]
        %6691 = vrot.lane.b32.xlu0 %v6674, 127
        %v6692 = vpop.permute.xlu0 %6691
        %6693 = vrot.lane.b32.xlu0 %v6675, 127
        %v6694 = vpop.permute.xlu0 %6693
        %6695 = vrot.lane.b32.xlu0 %v6676, 127
        %v6696 = vpop.permute.xlu0 %6695
        %6697 = vrot.lane.b32.xlu0 %v6677, 127
        %v6698 = vpop.permute.xlu0 %6697
        %v6704 = vsel %vm6099, %v6683, 0
        %v6707 = vsel %vm6099, %v6684, 0
        %v6710 = vsel %vm6099, %v6685, 0
        %v6713 = vsel %vm6099, %v6686, 0
        %6715 = vmatpush.msra.mxu0 0.0
        %6716 = vmatpush.msra.mxu0 0.0
        %6717 = vmatpush.msra.mxu0 0.0
        %6718 = vmatpush.msra.mxu0 0.0
        %6719 = vmatpush.msra.mxu0 0.0
        %6720 = vmatpush.msra.mxu0 0.0
        %6721 = vmatpush.msra.mxu0 0.0
        %6722 = vmatpush.msra.mxu0 0.0
        %6723 = vmatpush.msra.mxu0 0.0
        %6724 = vmatpush.msra.mxu0 0.0
        %6725 = vmatpush.msra.mxu0 0.0
        %6726 = vmatpush.msra.mxu0 0.0
        %6727 = vmatpush.msra.mxu0 %v6698
        %6728 = vmatpush.msra.mxu0 %v6696
        %6729 = vmatpush.msra.mxu0 %v6694
        %6730 = vmatpush.msra.mxu0 %v6692
        %6731 = vmatmul.f32.gmra.mxu0 %v6704
        %v6732 = vpop.f32.mrf.mxu0
        %v6733 = vadd.f32 0.0, %v6732
        %6734 = vmatmul.f32.gmra.mxu0 %v6707
        %v6735 = vpop.f32.mrf.mxu0
        %v6736 = vadd.f32 0.0, %v6735
        %6737 = vmatmul.f32.gmra.mxu0 %v6710
        %v6738 = vpop.f32.mrf.mxu0
        %v6739 = vadd.f32 0.0, %v6738
        %6740 = vmatmul.f32.gmra.mxu0 %v6713
        %v6741 = vpop.f32.mrf.mxu0
        %v6742 = vadd.f32 0.0, %v6741
        %6743 = vdwg.mxu0
        %v6745 = vsel %vm6099, %v6678, 0
        %v6748 = vsel %vm6099, %v6679, 0
        %v6751 = vsel %vm6099, %v6680, 0
        %v6754 = vsel %vm6099, %v6681, 0
        %6756 = vmatpush.msra.mxu0 0.0
        %6757 = vmatpush.msra.mxu0 0.0
        %6758 = vmatpush.msra.mxu0 0.0
        %6759 = vmatpush.msra.mxu0 0.0
        %6760 = vmatpush.msra.mxu0 0.0
        %6761 = vmatpush.msra.mxu0 0.0
        %6762 = vmatpush.msra.mxu0 0.0
        %6763 = vmatpush.msra.mxu0 0.0
        %6764 = vmatpush.msra.mxu0 0.0
        %6765 = vmatpush.msra.mxu0 0.0
        %6766 = vmatpush.msra.mxu0 0.0
        %6767 = vmatpush.msra.mxu0 0.0
        %6768 = vmatpush.msra.mxu0 %v6677
        %6769 = vmatpush.msra.mxu0 %v6676
        %6770 = vmatpush.msra.mxu0 %v6675
        %6771 = vmatpush.msra.mxu0 %v6674
        %6772 = vmatmul.f32.gmra.mxu0 %v6745
        %v6773 = vpop.f32.mrf.mxu0
        %v6774 = vadd.f32 %v6733, %v6773
        %6775 = vmatmul.f32.gmra.mxu0 %v6748
        %v6776 = vpop.f32.mrf.mxu0
        %v6777 = vadd.f32 %v6736, %v6776
        %6778 = vmatmul.f32.gmra.mxu0 %v6751
        %v6779 = vpop.f32.mrf.mxu0
        %v6780 = vadd.f32 %v6739, %v6779
        %6781 = vmatmul.f32.gmra.mxu0 %v6754
        %v6782 = vpop.f32.mrf.mxu0
        %v6783 = vadd.f32 %v6742, %v6782
        %6784 = vdwg.mxu0
        %s6785 = scalar_lea.vmem %s11, 64
        %v6786 = vld [vmem:[%s6785] sm:$0xff]
        %v6787 = vld [vmem:[%s6785 + $0x8] sm:$0xff]
        %v6788 = vld [vmem:[%s6785 + $0x10] sm:$0xff]
        %v6789 = vld [vmem:[%s6785 + $0x18] sm:$0xff]
        %6790 = vrot.lane.b32.xlu0 %v6674, 126
        %v6791 = vpop.permute.xlu0 %6790
        %6792 = vrot.lane.b32.xlu0 %v6675, 126
        %v6793 = vpop.permute.xlu0 %6792
        %6794 = vrot.lane.b32.xlu0 %v6676, 126
        %v6795 = vpop.permute.xlu0 %6794
        %6796 = vrot.lane.b32.xlu0 %v6677, 126
        %v6797 = vpop.permute.xlu0 %6796
        %v6803 = vsel %vm6099, %v6786, 0
        %v6806 = vsel %vm6099, %v6787, 0
        %v6809 = vsel %vm6099, %v6788, 0
        %v6812 = vsel %vm6099, %v6789, 0
        %6814 = vmatpush.msra.mxu0 0.0
        %6815 = vmatpush.msra.mxu0 0.0
        %6816 = vmatpush.msra.mxu0 0.0
        %6817 = vmatpush.msra.mxu0 0.0
        %6818 = vmatpush.msra.mxu0 0.0
        %6819 = vmatpush.msra.mxu0 0.0
        %6820 = vmatpush.msra.mxu0 0.0
        %6821 = vmatpush.msra.mxu0 0.0
        %6822 = vmatpush.msra.mxu0 0.0
        %6823 = vmatpush.msra.mxu0 0.0
        %6824 = vmatpush.msra.mxu0 0.0
        %6825 = vmatpush.msra.mxu0 0.0
        %6826 = vmatpush.msra.mxu0 %v6797
        %6827 = vmatpush.msra.mxu0 %v6795
        %6828 = vmatpush.msra.mxu0 %v6793
        %6829 = vmatpush.msra.mxu0 %v6791
        %6830 = vmatmul.f32.gmra.mxu0 %v6803
        %v6831 = vpop.f32.mrf.mxu0
        %v6832 = vadd.f32 0.0, %v6831
        %6833 = vmatmul.f32.gmra.mxu0 %v6806
        %v6834 = vpop.f32.mrf.mxu0
        %v6835 = vadd.f32 0.0, %v6834
        %6836 = vmatmul.f32.gmra.mxu0 %v6809
        %v6837 = vpop.f32.mrf.mxu0
        %v6838 = vadd.f32 0.0, %v6837
        %6839 = vmatmul.f32.gmra.mxu0 %v6812
        %v6840 = vpop.f32.mrf.mxu0
        %v6841 = vadd.f32 0.0, %v6840
        %6842 = vdwg.mxu0
        %v6843 = vadd.f32 %v6774, %v6832
        %v6844 = vadd.f32 %v6777, %v6835
        %v6845 = vadd.f32 %v6780, %v6838
        %v6846 = vadd.f32 %v6783, %v6841
        %s6847 = scalar_lea.vmem %s11, 96
        %v6848 = vld [vmem:[%s6847] sm:$0xff]
        %v6849 = vld [vmem:[%s6847 + $0x8] sm:$0xff]
        %v6850 = vld [vmem:[%s6847 + $0x10] sm:$0xff]
        %v6851 = vld [vmem:[%s6847 + $0x18] sm:$0xff]
        %6852 = vrot.lane.b32.xlu0 %v6674, 122
        %v6853 = vpop.permute.xlu0 %6852
        %6854 = vrot.lane.b32.xlu0 %v6675, 122
        %v6855 = vpop.permute.xlu0 %6854
        %6856 = vrot.lane.b32.xlu0 %v6676, 122
        %v6857 = vpop.permute.xlu0 %6856
        %6858 = vrot.lane.b32.xlu0 %v6677, 122
        %v6859 = vpop.permute.xlu0 %6858
        %v6865 = vsel %vm6099, %v6848, 0
        %v6868 = vsel %vm6099, %v6849, 0
        %v6871 = vsel %vm6099, %v6850, 0
        %v6874 = vsel %vm6099, %v6851, 0
        %6876 = vmatpush.msra.mxu0 0.0
        %6877 = vmatpush.msra.mxu0 0.0
        %6878 = vmatpush.msra.mxu0 0.0
        %6879 = vmatpush.msra.mxu0 0.0
        %6880 = vmatpush.msra.mxu0 0.0
        %6881 = vmatpush.msra.mxu0 0.0
        %6882 = vmatpush.msra.mxu0 0.0
        %6883 = vmatpush.msra.mxu0 0.0
        %6884 = vmatpush.msra.mxu0 0.0
        %6885 = vmatpush.msra.mxu0 0.0
        %6886 = vmatpush.msra.mxu0 0.0
        %6887 = vmatpush.msra.mxu0 0.0
        %6888 = vmatpush.msra.mxu0 %v6859
        %6889 = vmatpush.msra.mxu0 %v6857
        %6890 = vmatpush.msra.mxu0 %v6855
        %6891 = vmatpush.msra.mxu0 %v6853
        %6892 = vmatmul.f32.gmra.mxu0 %v6865
        %v6893 = vpop.f32.mrf.mxu0
        %v6894 = vadd.f32 0.0, %v6893
        %6895 = vmatmul.f32.gmra.mxu0 %v6868
        %v6896 = vpop.f32.mrf.mxu0
        %v6897 = vadd.f32 0.0, %v6896
        %6898 = vmatmul.f32.gmra.mxu0 %v6871
        %v6899 = vpop.f32.mrf.mxu0
        %v6900 = vadd.f32 0.0, %v6899
        %6901 = vmatmul.f32.gmra.mxu0 %v6874
        %v6902 = vpop.f32.mrf.mxu0
        %v6903 = vadd.f32 0.0, %v6902
        %6904 = vdwg.mxu0
        %v6905 = vadd.f32 %v6843, %v6894
        %v6906 = vadd.f32 %v6844, %v6897
        %v6907 = vadd.f32 %v6845, %v6900
        %v6908 = vadd.f32 %v6846, %v6903
        %s6909 = scalar_lea.vmem %s11, 128
        %v6910 = vld [vmem:[%s6909] sm:$0xff]
        %v6911 = vld [vmem:[%s6909 + $0x8] sm:$0xff]
        %v6912 = vld [vmem:[%s6909 + $0x10] sm:$0xff]
        %v6913 = vld [vmem:[%s6909 + $0x18] sm:$0xff]
        %6914 = vrot.lane.b32.xlu0 %v6674, 121
        %v6915 = vpop.permute.xlu0 %6914
        %6916 = vrot.lane.b32.xlu0 %v6675, 121
        %v6917 = vpop.permute.xlu0 %6916
        %6918 = vrot.lane.b32.xlu0 %v6676, 121
        %v6919 = vpop.permute.xlu0 %6918
        %6920 = vrot.lane.b32.xlu0 %v6677, 121
        %v6921 = vpop.permute.xlu0 %6920
        %v6927 = vsel %vm6099, %v6910, 0
        %v6930 = vsel %vm6099, %v6911, 0
        %v6933 = vsel %vm6099, %v6912, 0
        %v6936 = vsel %vm6099, %v6913, 0
        %6938 = vmatpush.msra.mxu0 0.0
        %6939 = vmatpush.msra.mxu0 0.0
        %6940 = vmatpush.msra.mxu0 0.0
        %6941 = vmatpush.msra.mxu0 0.0
        %6942 = vmatpush.msra.mxu0 0.0
        %6943 = vmatpush.msra.mxu0 0.0
        %6944 = vmatpush.msra.mxu0 0.0
        %6945 = vmatpush.msra.mxu0 0.0
        %6946 = vmatpush.msra.mxu0 0.0
        %6947 = vmatpush.msra.mxu0 0.0
        %6948 = vmatpush.msra.mxu0 0.0
        %6949 = vmatpush.msra.mxu0 0.0
        %6950 = vmatpush.msra.mxu0 %v6921
        %6951 = vmatpush.msra.mxu0 %v6919
        %6952 = vmatpush.msra.mxu0 %v6917
        %6953 = vmatpush.msra.mxu0 %v6915
        %6954 = vmatmul.f32.gmra.mxu0 %v6927
        %v6955 = vpop.f32.mrf.mxu0
        %v6956 = vadd.f32 0.0, %v6955
        %6957 = vmatmul.f32.gmra.mxu0 %v6930
        %v6958 = vpop.f32.mrf.mxu0
        %v6959 = vadd.f32 0.0, %v6958
        %6960 = vmatmul.f32.gmra.mxu0 %v6933
        %v6961 = vpop.f32.mrf.mxu0
        %v6962 = vadd.f32 0.0, %v6961
        %6963 = vmatmul.f32.gmra.mxu0 %v6936
        %v6964 = vpop.f32.mrf.mxu0
        %v6965 = vadd.f32 0.0, %v6964
        %6966 = vdwg.mxu0
        %v6967 = vadd.f32 %v6905, %v6956
        %v6968 = vadd.f32 %v6906, %v6959
        %v6969 = vadd.f32 %v6907, %v6962
        %v6970 = vadd.f32 %v6908, %v6965
        %s6971 = scalar_lea.vmem %s11, 160
        %v6972 = vld [vmem:[%s6971] sm:$0xff]
        %v6973 = vld [vmem:[%s6971 + $0x8] sm:$0xff]
        %v6974 = vld [vmem:[%s6971 + $0x10] sm:$0xff]
        %v6975 = vld [vmem:[%s6971 + $0x18] sm:$0xff]
        %6976 = vrot.lane.b32.xlu0 %v6674, 120
        %v6977 = vpop.permute.xlu0 %6976
        %6978 = vrot.lane.b32.xlu0 %v6675, 120
        %v6979 = vpop.permute.xlu0 %6978
        %6980 = vrot.lane.b32.xlu0 %v6676, 120
        %v6981 = vpop.permute.xlu0 %6980
        %6982 = vrot.lane.b32.xlu0 %v6677, 120
        %v6983 = vpop.permute.xlu0 %6982
        %v6989 = vsel %vm6099, %v6972, 0
        %v6992 = vsel %vm6099, %v6973, 0
        %v6995 = vsel %vm6099, %v6974, 0
        %v6998 = vsel %vm6099, %v6975, 0
        %7000 = vmatpush.msra.mxu0 0.0
        %7001 = vmatpush.msra.mxu0 0.0
        %7002 = vmatpush.msra.mxu0 0.0
        %7003 = vmatpush.msra.mxu0 0.0
        %7004 = vmatpush.msra.mxu0 0.0
        %7005 = vmatpush.msra.mxu0 0.0
        %7006 = vmatpush.msra.mxu0 0.0
        %7007 = vmatpush.msra.mxu0 0.0
        %7008 = vmatpush.msra.mxu0 0.0
        %7009 = vmatpush.msra.mxu0 0.0
        %7010 = vmatpush.msra.mxu0 0.0
        %7011 = vmatpush.msra.mxu0 0.0
        %7012 = vmatpush.msra.mxu0 %v6983
        %7013 = vmatpush.msra.mxu0 %v6981
        %7014 = vmatpush.msra.mxu0 %v6979
        %7015 = vmatpush.msra.mxu0 %v6977
        %7016 = vmatmul.f32.gmra.mxu0 %v6989
        %v7017 = vpop.f32.mrf.mxu0
        %v7018 = vadd.f32 0.0, %v7017
        %7019 = vmatmul.f32.gmra.mxu0 %v6992
        %v7020 = vpop.f32.mrf.mxu0
        %v7021 = vadd.f32 0.0, %v7020
        %7022 = vmatmul.f32.gmra.mxu0 %v6995
        %v7023 = vpop.f32.mrf.mxu0
        %v7024 = vadd.f32 0.0, %v7023
        %7025 = vmatmul.f32.gmra.mxu0 %v6998
        %v7026 = vpop.f32.mrf.mxu0
        %v7027 = vadd.f32 0.0, %v7026
        %7028 = vdwg.mxu0
        %v7029 = vadd.f32 %v6967, %v7018
        %v7030 = vadd.f32 %v6968, %v7021
        %v7031 = vadd.f32 %v6969, %v7024
        %v7032 = vadd.f32 %v6970, %v7027
        %s7033 = scalar_lea.vmem %s11, 192
        %v7034 = vld [vmem:[%s7033] sm:$0xff]
        %v7035 = vld [vmem:[%s7033 + $0x8] sm:$0xff]
        %v7036 = vld [vmem:[%s7033 + $0x10] sm:$0xff]
        %v7037 = vld [vmem:[%s7033 + $0x18] sm:$0xff]
        %7038 = vrot.lane.b32.xlu0 %v6674, 116
        %v7039 = vpop.permute.xlu0 %7038
        %7040 = vrot.lane.b32.xlu0 %v6675, 116
        %v7041 = vpop.permute.xlu0 %7040
        %7042 = vrot.lane.b32.xlu0 %v6676, 116
        %v7043 = vpop.permute.xlu0 %7042
        %7044 = vrot.lane.b32.xlu0 %v6677, 116
        %v7045 = vpop.permute.xlu0 %7044
        %v7051 = vsel %vm6099, %v7034, 0
        %v7054 = vsel %vm6099, %v7035, 0
        %v7057 = vsel %vm6099, %v7036, 0
        %v7060 = vsel %vm6099, %v7037, 0
        %7062 = vmatpush.msra.mxu0 0.0
        %7063 = vmatpush.msra.mxu0 0.0
        %7064 = vmatpush.msra.mxu0 0.0
        %7065 = vmatpush.msra.mxu0 0.0
        %7066 = vmatpush.msra.mxu0 0.0
        %7067 = vmatpush.msra.mxu0 0.0
        %7068 = vmatpush.msra.mxu0 0.0
        %7069 = vmatpush.msra.mxu0 0.0
        %7070 = vmatpush.msra.mxu0 0.0
        %7071 = vmatpush.msra.mxu0 0.0
        %7072 = vmatpush.msra.mxu0 0.0
        %7073 = vmatpush.msra.mxu0 0.0
        %7074 = vmatpush.msra.mxu0 %v7045
        %7075 = vmatpush.msra.mxu0 %v7043
        %7076 = vmatpush.msra.mxu0 %v7041
        %7077 = vmatpush.msra.mxu0 %v7039
        %7078 = vmatmul.f32.gmra.mxu0 %v7051
        %v7079 = vpop.f32.mrf.mxu0
        %v7080 = vadd.f32 0.0, %v7079
        %7081 = vmatmul.f32.gmra.mxu0 %v7054
        %v7082 = vpop.f32.mrf.mxu0
        %v7083 = vadd.f32 0.0, %v7082
        %7084 = vmatmul.f32.gmra.mxu0 %v7057
        %v7085 = vpop.f32.mrf.mxu0
        %v7086 = vadd.f32 0.0, %v7085
        %7087 = vmatmul.f32.gmra.mxu0 %v7060
        %v7088 = vpop.f32.mrf.mxu0
        %v7089 = vadd.f32 0.0, %v7088
        %7090 = vdwg.mxu0
        %v7091 = vadd.f32 %v7029, %v7080
        %v7092 = vadd.f32 %v7030, %v7083
        %v7093 = vadd.f32 %v7031, %v7086
        %v7094 = vadd.f32 %v7032, %v7089
        %s7095 = scalar_lea.vmem %s11, 224
        %v7096 = vld [vmem:[%s7095] sm:$0xff]
        %v7097 = vld [vmem:[%s7095 + $0x8] sm:$0xff]
        %v7098 = vld [vmem:[%s7095 + $0x10] sm:$0xff]
        %v7099 = vld [vmem:[%s7095 + $0x18] sm:$0xff]
        %7100 = vrot.lane.b32.xlu0 %v6674, 115
        %v7101 = vpop.permute.xlu0 %7100
        %7102 = vrot.lane.b32.xlu0 %v6675, 115
        %v7103 = vpop.permute.xlu0 %7102
        %7104 = vrot.lane.b32.xlu0 %v6676, 115
        %v7105 = vpop.permute.xlu0 %7104
        %7106 = vrot.lane.b32.xlu0 %v6677, 115
        %v7107 = vpop.permute.xlu0 %7106
        %v7113 = vsel %vm6099, %v7096, 0
        %v7116 = vsel %vm6099, %v7097, 0
        %v7119 = vsel %vm6099, %v7098, 0
        %v7122 = vsel %vm6099, %v7099, 0
        %7124 = vmatpush.msra.mxu0 0.0
        %7125 = vmatpush.msra.mxu0 0.0
        %7126 = vmatpush.msra.mxu0 0.0
        %7127 = vmatpush.msra.mxu0 0.0
        %7128 = vmatpush.msra.mxu0 0.0
        %7129 = vmatpush.msra.mxu0 0.0
        %7130 = vmatpush.msra.mxu0 0.0
        %7131 = vmatpush.msra.mxu0 0.0
        %7132 = vmatpush.msra.mxu0 0.0
        %7133 = vmatpush.msra.mxu0 0.0
        %7134 = vmatpush.msra.mxu0 0.0
        %7135 = vmatpush.msra.mxu0 0.0
        %7136 = vmatpush.msra.mxu0 %v7107
        %7137 = vmatpush.msra.mxu0 %v7105
        %7138 = vmatpush.msra.mxu0 %v7103
        %7139 = vmatpush.msra.mxu0 %v7101
        %7140 = vmatmul.f32.gmra.mxu0 %v7113
        %v7141 = vpop.f32.mrf.mxu0
        %v7142 = vadd.f32 0.0, %v7141
        %7143 = vmatmul.f32.gmra.mxu0 %v7116
        %v7144 = vpop.f32.mrf.mxu0
        %v7145 = vadd.f32 0.0, %v7144
        %7146 = vmatmul.f32.gmra.mxu0 %v7119
        %v7147 = vpop.f32.mrf.mxu0
        %v7148 = vadd.f32 0.0, %v7147
        %7149 = vmatmul.f32.gmra.mxu0 %v7122
        %v7150 = vpop.f32.mrf.mxu0
        %v7151 = vadd.f32 0.0, %v7150
        %7152 = vdwg.mxu0
        %v7153 = vadd.f32 %v7091, %v7142
        %v7154 = vadd.f32 %v7092, %v7145
        %v7155 = vadd.f32 %v7093, %v7148
        %v7156 = vadd.f32 %v7094, %v7151
        %s7157 = scalar_lea.vmem %s11, 256
        %v7158 = vld [vmem:[%s7157] sm:$0xff]
        %v7159 = vld [vmem:[%s7157 + $0x8] sm:$0xff]
        %v7160 = vld [vmem:[%s7157 + $0x10] sm:$0xff]
        %v7161 = vld [vmem:[%s7157 + $0x18] sm:$0xff]
        %7162 = vrot.lane.b32.xlu0 %v6674, 114
        %v7163 = vpop.permute.xlu0 %7162
        %7164 = vrot.lane.b32.xlu0 %v6675, 114
        %v7165 = vpop.permute.xlu0 %7164
        %7166 = vrot.lane.b32.xlu0 %v6676, 114
        %v7167 = vpop.permute.xlu0 %7166
        %7168 = vrot.lane.b32.xlu0 %v6677, 114
        %v7169 = vpop.permute.xlu0 %7168
        %v7175 = vsel %vm6099, %v7158, 0
        %v7178 = vsel %vm6099, %v7159, 0
        %v7181 = vsel %vm6099, %v7160, 0
        %v7184 = vsel %vm6099, %v7161, 0
        %7186 = vmatpush.msra.mxu0 0.0
        %7187 = vmatpush.msra.mxu0 0.0
        %7188 = vmatpush.msra.mxu0 0.0
        %7189 = vmatpush.msra.mxu0 0.0
        %7190 = vmatpush.msra.mxu0 0.0
        %7191 = vmatpush.msra.mxu0 0.0
        %7192 = vmatpush.msra.mxu0 0.0
        %7193 = vmatpush.msra.mxu0 0.0
        %7194 = vmatpush.msra.mxu0 0.0
        %7195 = vmatpush.msra.mxu0 0.0
        %7196 = vmatpush.msra.mxu0 0.0
        %7197 = vmatpush.msra.mxu0 0.0
        %7198 = vmatpush.msra.mxu0 %v7169
        %7199 = vmatpush.msra.mxu0 %v7167
        %7200 = vmatpush.msra.mxu0 %v7165
        %7201 = vmatpush.msra.mxu0 %v7163
        %7202 = vmatmul.f32.gmra.mxu0 %v7175
        %v7203 = vpop.f32.mrf.mxu0
        %v7204 = vadd.f32 0.0, %v7203
        %7205 = vmatmul.f32.gmra.mxu0 %v7178
        %v7206 = vpop.f32.mrf.mxu0
        %v7207 = vadd.f32 0.0, %v7206
        %7208 = vmatmul.f32.gmra.mxu0 %v7181
        %v7209 = vpop.f32.mrf.mxu0
        %v7210 = vadd.f32 0.0, %v7209
        %7211 = vmatmul.f32.gmra.mxu0 %v7184
        %v7212 = vpop.f32.mrf.mxu0
        %v7213 = vadd.f32 0.0, %v7212
        %7214 = vdwg.mxu0
        %v7215 = vadd.f32 %v7153, %v7204
        %v7216 = vadd.f32 %v7154, %v7207
        %v7217 = vadd.f32 %v7155, %v7210
        %v7218 = vadd.f32 %v7156, %v7213
        %v7219 = vld [vmem:[%s12] sm:$0xff]
        %v7220 = vld [vmem:[%s12 + $0x8] sm:$0xff]
        %v7221 = vld [vmem:[%s12 + $0x10] sm:$0xff]
        %v7222 = vld [vmem:[%s12 + $0x18] sm:$0xff]
        %7224 = vset.pattern.permute.xlu0 0
        %7225 = vperm.xlu0 %7224, %v7219
        %v7226 = vpop.permute.xlu0 %7225
        %7229 = vset.pattern.permute.xlu0 0
        %7230 = vperm.xlu0 %7229, %v7220
        %v7231 = vpop.permute.xlu0 %7230
        %7234 = vset.pattern.permute.xlu0 0
        %7235 = vperm.xlu0 %7234, %v7221
        %v7236 = vpop.permute.xlu0 %7235
        %7239 = vset.pattern.permute.xlu0 0
        %7240 = vperm.xlu0 %7239, %v7222
        %v7241 = vpop.permute.xlu0 %7240
        %v7243 = vadd.f32 %v7215, %v7226
        %v7244 = vadd.f32 %v7216, %v7231
        %v7245 = vadd.f32 %v7217, %v7236
        %v7246 = vadd.f32 %v7218, %v7241
        %v7247 = vadd.f32 %v6649, %v7243
        %v7248 = vadd.f32 %v6650, %v7244
        %v7249 = vadd.f32 %v6651, %v7245
        %v7250 = vadd.f32 %v6652, %v7246
        %v7251 = vmax.f32 %v7247, 0.0
        %v7252 = vmax.f32 %v7248, 0.0
        %v7253 = vmax.f32 %v7249, 0.0
        %v7254 = vmax.f32 %v7250, 0.0
        %7259 = vrot.lane.b32.xlu0 %v7251, 126
        %v7260 = vpop.permute.xlu0 %7259
        %7261 = vrot.lane.b32.xlu0 %v7252, 126
        %v7262 = vpop.permute.xlu0 %7261
        %7263 = vrot.lane.b32.xlu0 %v7253, 126
        %v7264 = vpop.permute.xlu0 %7263
        %7265 = vrot.lane.b32.xlu0 %v7254, 126
        %v7266 = vpop.permute.xlu0 %7265
        %7271 = vrot.lane.b32.xlu0 %v7251, 124
        %v7272 = vpop.permute.xlu0 %7271
        %7273 = vrot.lane.b32.xlu0 %v7252, 124
        %v7274 = vpop.permute.xlu0 %7273
        %7275 = vrot.lane.b32.xlu0 %v7253, 124
        %v7276 = vpop.permute.xlu0 %7275
        %7277 = vrot.lane.b32.xlu0 %v7254, 124
        %v7278 = vpop.permute.xlu0 %7277
        %7283 = vrot.lane.b32.xlu0 %v7251, 122
        %v7284 = vpop.permute.xlu0 %7283
        %7285 = vrot.lane.b32.xlu0 %v7252, 122
        %v7286 = vpop.permute.xlu0 %7285
        %7287 = vrot.lane.b32.xlu0 %v7253, 122
        %v7288 = vpop.permute.xlu0 %7287
        %7289 = vrot.lane.b32.xlu0 %v7254, 122
        %v7290 = vpop.permute.xlu0 %7289
        %v7295 = vsel %vm1348, %v7251, %v7260
        %v7296 = vsel %vm1348, %v7252, %v7262
        %v7297 = vsel %vm1348, %v7253, %v7264
        %v7298 = vsel %vm1348, %v7254, %v7266
        %v7299 = vsel %vm1360, %v7295, %v7272
        %v7300 = vsel %vm1360, %v7296, %v7274
        %v7301 = vsel %vm1360, %v7297, %v7276
        %v7302 = vsel %vm1360, %v7298, %v7278
        %v7303 = vsel %vm1372, %v7299, %v7284
        %v7304 = vsel %vm1372, %v7300, %v7286
        %v7305 = vsel %vm1372, %v7301, %v7288
        %v7306 = vsel %vm1372, %v7302, %v7290
        %v7308 = vrot.slane %v7303, 1
        %7309 = vrot.lane.b32.xlu0 %v7308, 16
        %v7310 = vpop.permute.xlu0 %7309
        %v7312 = vrot.slane %v7303, 2
        %7313 = vrot.lane.b32.xlu0 %v7312, 32
        %v7314 = vpop.permute.xlu0 %7313
        %v7316 = vrot.slane %v7303, 3
        %7317 = vrot.lane.b32.xlu0 %v7316, 48
        %v7318 = vpop.permute.xlu0 %7317
        %v7320 = vrot.slane %v7303, 4
        %7321 = vrot.lane.b32.xlu0 %v7320, 64
        %v7322 = vpop.permute.xlu0 %7321
        %v7324 = vrot.slane %v7303, 5
        %7325 = vrot.lane.b32.xlu0 %v7324, 80
        %v7326 = vpop.permute.xlu0 %7325
        %v7328 = vrot.slane %v7303, 6
        %7329 = vrot.lane.b32.xlu0 %v7328, 96
        %v7330 = vpop.permute.xlu0 %7329
        %v7332 = vrot.slane %v7303, 7
        %7333 = vrot.lane.b32.xlu0 %v7332, 112
        %v7334 = vpop.permute.xlu0 %7333
        %v7337 = vrot.slane %v7304, 1
        %7338 = vrot.lane.b32.xlu0 %v7337, 16
        %v7339 = vpop.permute.xlu0 %7338
        %v7341 = vrot.slane %v7304, 2
        %7342 = vrot.lane.b32.xlu0 %v7341, 32
        %v7343 = vpop.permute.xlu0 %7342
        %v7345 = vrot.slane %v7304, 3
        %7346 = vrot.lane.b32.xlu0 %v7345, 48
        %v7347 = vpop.permute.xlu0 %7346
        %v7349 = vrot.slane %v7304, 4
        %7350 = vrot.lane.b32.xlu0 %v7349, 64
        %v7351 = vpop.permute.xlu0 %7350
        %v7353 = vrot.slane %v7304, 5
        %7354 = vrot.lane.b32.xlu0 %v7353, 80
        %v7355 = vpop.permute.xlu0 %7354
        %v7357 = vrot.slane %v7304, 6
        %7358 = vrot.lane.b32.xlu0 %v7357, 96
        %v7359 = vpop.permute.xlu0 %7358
        %v7361 = vrot.slane %v7304, 7
        %7362 = vrot.lane.b32.xlu0 %v7361, 112
        %v7363 = vpop.permute.xlu0 %7362
        %v7365 = vsel %vm2824, %v7303, %v7310
        %v7366 = vsel %vm6099, %v7365, %v7314
        %vm7367 = vcmask 392192
        %v7368 = vsel %vm7367, %v7366, %v7318
        %vm7369 = vcmask 523264
        %v7370 = vsel %vm7369, %v7368, %v7322
        %vm7371 = vcmask 654336
        %v7372 = vsel %vm7371, %v7370, %v7326
        %v7373 = vsel %vm707, %v7372, %v7330
        %v7374 = vsel %vm2739, %v7373, %v7334
        %v7375 = vsel %vm2824, %v7304, %v7339
        %v7376 = vsel %vm6099, %v7375, %v7343
        %v7377 = vsel %vm7367, %v7376, %v7347
        %v7378 = vsel %vm7369, %v7377, %v7351
        %v7379 = vsel %vm7371, %v7378, %v7355
        %v7380 = vsel %vm707, %v7379, %v7359
        %v7381 = vsel %vm2739, %v7380, %v7363
        %v7383 = vrot.slane %v7305, 1
        %7384 = vrot.lane.b32.xlu0 %v7383, 16
        %v7385 = vpop.permute.xlu0 %7384
        %v7387 = vrot.slane %v7305, 2
        %7388 = vrot.lane.b32.xlu0 %v7387, 32
        %v7389 = vpop.permute.xlu0 %7388
        %v7391 = vrot.slane %v7305, 3
        %7392 = vrot.lane.b32.xlu0 %v7391, 48
        %v7393 = vpop.permute.xlu0 %7392
        %v7395 = vrot.slane %v7305, 4
        %7396 = vrot.lane.b32.xlu0 %v7395, 64
        %v7397 = vpop.permute.xlu0 %7396
        %v7399 = vrot.slane %v7305, 5
        %7400 = vrot.lane.b32.xlu0 %v7399, 80
        %v7401 = vpop.permute.xlu0 %7400
        %v7403 = vrot.slane %v7305, 6
        %7404 = vrot.lane.b32.xlu0 %v7403, 96
        %v7405 = vpop.permute.xlu0 %7404
        %v7407 = vrot.slane %v7305, 7
        %7408 = vrot.lane.b32.xlu0 %v7407, 112
        %v7409 = vpop.permute.xlu0 %7408
        %v7412 = vrot.slane %v7306, 1
        %7413 = vrot.lane.b32.xlu0 %v7412, 16
        %v7414 = vpop.permute.xlu0 %7413
        %v7416 = vrot.slane %v7306, 2
        %7417 = vrot.lane.b32.xlu0 %v7416, 32
        %v7418 = vpop.permute.xlu0 %7417
        %v7420 = vrot.slane %v7306, 3
        %7421 = vrot.lane.b32.xlu0 %v7420, 48
        %v7422 = vpop.permute.xlu0 %7421
        %v7424 = vrot.slane %v7306, 4
        %7425 = vrot.lane.b32.xlu0 %v7424, 64
        %v7426 = vpop.permute.xlu0 %7425
        %v7428 = vrot.slane %v7306, 5
        %7429 = vrot.lane.b32.xlu0 %v7428, 80
        %v7430 = vpop.permute.xlu0 %7429
        %v7432 = vrot.slane %v7306, 6
        %7433 = vrot.lane.b32.xlu0 %v7432, 96
        %v7434 = vpop.permute.xlu0 %7433
        %v7436 = vrot.slane %v7306, 7
        %7437 = vrot.lane.b32.xlu0 %v7436, 112
        %v7438 = vpop.permute.xlu0 %7437
        %v7440 = vsel %vm2824, %v7305, %v7385
        %v7441 = vsel %vm6099, %v7440, %v7389
        %v7442 = vsel %vm7367, %v7441, %v7393
        %v7443 = vsel %vm7369, %v7442, %v7397
        %v7444 = vsel %vm7371, %v7443, %v7401
        %v7445 = vsel %vm707, %v7444, %v7405
        %v7446 = vsel %vm2739, %v7445, %v7409
        %v7447 = vsel %vm2824, %v7306, %v7414
        %v7448 = vsel %vm6099, %v7447, %v7418
        %v7449 = vsel %vm7367, %v7448, %v7422
        %v7450 = vsel %vm7369, %v7449, %v7426
        %v7451 = vsel %vm7371, %v7450, %v7430
        %v7452 = vsel %vm707, %v7451, %v7434
        %v7453 = vsel %vm2739, %v7452, %v7438
        %v7454 = vld [vmem:[%s13] sm:$0xff]
        %v7455 = vld [vmem:[%s13 + $0x8] sm:$0xff]
        %v7456 = vld [vmem:[%s13 + $0x10] sm:$0xff]
        %v7457 = vld [vmem:[%s13 + $0x18] sm:$0xff]
        %v7458 = vld [vmem:[%s13 + $0x20] sm:$0xff]
        %v7459 = vld [vmem:[%s13 + $0x28] sm:$0xff]
        %v7460 = vld [vmem:[%s13 + $0x30] sm:$0xff]
        %v7461 = vld [vmem:[%s13 + $0x38] sm:$0xff]
        %v7462 = vld [vmem:[%s13 + $0x40] sm:$0xff]
        %v7463 = vld [vmem:[%s13 + $0x48] sm:$0xff]
        %v7464 = vld [vmem:[%s13 + $0x50] sm:$0xff]
        %v7465 = vld [vmem:[%s13 + $0x58] sm:$0xff]
        %v7466 = vld [vmem:[%s13 + $0x60] sm:$0xff]
        %v7467 = vld [vmem:[%s13 + $0x68] sm:$0xff]
        %v7468 = vld [vmem:[%s13 + $0x70] sm:$0xff]
        %v7469 = vld [vmem:[%s13 + $0x78] sm:$0xff]
        %v7470 = vld [vmem:[%s13 + $0x80] sm:$0xff]
        %v7471 = vld [vmem:[%s13 + $0x88] sm:$0xff]
        %v7472 = vld [vmem:[%s13 + $0x90] sm:$0xff]
        %v7473 = vld [vmem:[%s13 + $0x98] sm:$0xff]
        %v7474 = vld [vmem:[%s13 + $0xa0] sm:$0xff]
        %v7475 = vld [vmem:[%s13 + $0xa8] sm:$0xff]
        %v7476 = vld [vmem:[%s13 + $0xb0] sm:$0xff]
        %v7477 = vld [vmem:[%s13 + $0xb8] sm:$0xff]
        %v7478 = vld [vmem:[%s13 + $0xc0] sm:$0xff]
        %v7479 = vld [vmem:[%s13 + $0xc8] sm:$0xff]
        %v7480 = vld [vmem:[%s13 + $0xd0] sm:$0xff]
        %v7481 = vld [vmem:[%s13 + $0xd8] sm:$0xff]
        %v7482 = vld [vmem:[%s13 + $0xe0] sm:$0xff]
        %v7483 = vld [vmem:[%s13 + $0xe8] sm:$0xff]
        %v7484 = vld [vmem:[%s13 + $0xf0] sm:$0xff]
        %v7485 = vld [vmem:[%s13 + $0xf8] sm:$0xff]
        %v7486 = vld [vmem:[%s13 + $0x100] sm:$0xff]
        %v7487 = vld [vmem:[%s13 + $0x108] sm:$0xff]
        %v7488 = vld [vmem:[%s13 + $0x110] sm:$0xff]
        %v7489 = vld [vmem:[%s13 + $0x118] sm:$0xff]
        %v7490 = vld [vmem:[%s13 + $0x120] sm:$0xff]
        %v7491 = vld [vmem:[%s13 + $0x128] sm:$0xff]
        %v7492 = vld [vmem:[%s13 + $0x130] sm:$0xff]
        %v7493 = vld [vmem:[%s13 + $0x138] sm:$0xff]
        %v7494 = vld [vmem:[%s13 + $0x140] sm:$0xff]
        %v7495 = vld [vmem:[%s13 + $0x148] sm:$0xff]
        %v7496 = vld [vmem:[%s13 + $0x150] sm:$0xff]
        %v7497 = vld [vmem:[%s13 + $0x158] sm:$0xff]
        %v7498 = vld [vmem:[%s13 + $0x160] sm:$0xff]
        %v7499 = vld [vmem:[%s13 + $0x168] sm:$0xff]
        %v7500 = vld [vmem:[%s13 + $0x170] sm:$0xff]
        %v7501 = vld [vmem:[%s13 + $0x178] sm:$0xff]
        %v7502 = vld [vmem:[%s13 + $0x180] sm:$0xff]
        %v7503 = vld [vmem:[%s13 + $0x188] sm:$0xff]
        %v7504 = vld [vmem:[%s13 + $0x190] sm:$0xff]
        %v7505 = vld [vmem:[%s13 + $0x198] sm:$0xff]
        %v7506 = vld [vmem:[%s13 + $0x1a0] sm:$0xff]
        %v7507 = vld [vmem:[%s13 + $0x1a8] sm:$0xff]
        %v7508 = vld [vmem:[%s13 + $0x1b0] sm:$0xff]
        %v7509 = vld [vmem:[%s13 + $0x1b8] sm:$0xff]
        %v7510 = vld [vmem:[%s13 + $0x1c0] sm:$0xff]
        %v7511 = vld [vmem:[%s13 + $0x1c8] sm:$0xff]
        %v7512 = vld [vmem:[%s13 + $0x1d0] sm:$0xff]
        %v7513 = vld [vmem:[%s13 + $0x1d8] sm:$0xff]
        %v7514 = vld [vmem:[%s13 + $0x1e0] sm:$0xff]
        %v7515 = vld [vmem:[%s13 + $0x1e8] sm:$0xff]
        %v7516 = vld [vmem:[%s13 + $0x1f0] sm:$0xff]
        %v7517 = vld [vmem:[%s13 + $0x1f8] sm:$0xff]
        %v7518 = vld [vmem:[%s14] sm:$0x1]
        %7519 = vmatpush.msra.mxu0 %v7469
        %7520 = vmatpush.msra.mxu0 %v7468
        %7521 = vmatpush.msra.mxu0 %v7467
        %7522 = vmatpush.msra.mxu0 %v7466
        %7523 = vmatpush.msra.mxu0 %v7465
        %7524 = vmatpush.msra.mxu0 %v7464
        %7525 = vmatpush.msra.mxu0 %v7463
        %7526 = vmatpush.msra.mxu0 %v7462
        %7527 = vmatpush.msra.mxu0 %v7461
        %7528 = vmatpush.msra.mxu0 %v7460
        %7529 = vmatpush.msra.mxu0 %v7459
        %7530 = vmatpush.msra.mxu0 %v7458
        %7531 = vmatpush.msra.mxu0 %v7457
        %7532 = vmatpush.msra.mxu0 %v7456
        %7533 = vmatpush.msra.mxu0 %v7455
        %7534 = vmatpush.msra.mxu0 %v7454
        %7535 = vmatmul.f32.gmra.mxu0 %v7374
        %v7536 = vpop.f32.mrf.mxu0
        %v7537 = vadd.f32 %v7518, %v7536
        %7538 = vdwg.mxu0
        %7539 = vmatpush.msra.mxu0 %v7485
        %7540 = vmatpush.msra.mxu0 %v7484
        %7541 = vmatpush.msra.mxu0 %v7483
        %7542 = vmatpush.msra.mxu0 %v7482
        %7543 = vmatpush.msra.mxu0 %v7481
        %7544 = vmatpush.msra.mxu0 %v7480
        %7545 = vmatpush.msra.mxu0 %v7479
        %7546 = vmatpush.msra.mxu0 %v7478
        %7547 = vmatpush.msra.mxu0 %v7477
        %7548 = vmatpush.msra.mxu0 %v7476
        %7549 = vmatpush.msra.mxu0 %v7475
        %7550 = vmatpush.msra.mxu0 %v7474
        %7551 = vmatpush.msra.mxu0 %v7473
        %7552 = vmatpush.msra.mxu0 %v7472
        %7553 = vmatpush.msra.mxu0 %v7471
        %7554 = vmatpush.msra.mxu0 %v7470
        %7555 = vmatmul.f32.gmra.mxu0 %v7381
        %v7556 = vpop.f32.mrf.mxu0
        %v7557 = vadd.f32 %v7537, %v7556
        %7558 = vdwg.mxu0
        %7559 = vmatpush.msra.mxu0 %v7501
        %7560 = vmatpush.msra.mxu0 %v7500
        %7561 = vmatpush.msra.mxu0 %v7499
        %7562 = vmatpush.msra.mxu0 %v7498
        %7563 = vmatpush.msra.mxu0 %v7497
        %7564 = vmatpush.msra.mxu0 %v7496
        %7565 = vmatpush.msra.mxu0 %v7495
        %7566 = vmatpush.msra.mxu0 %v7494
        %7567 = vmatpush.msra.mxu0 %v7493
        %7568 = vmatpush.msra.mxu0 %v7492
        %7569 = vmatpush.msra.mxu0 %v7491
        %7570 = vmatpush.msra.mxu0 %v7490
        %7571 = vmatpush.msra.mxu0 %v7489
        %7572 = vmatpush.msra.mxu0 %v7488
        %7573 = vmatpush.msra.mxu0 %v7487
        %7574 = vmatpush.msra.mxu0 %v7486
        %7575 = vmatmul.f32.gmra.mxu0 %v7446
        %v7576 = vpop.f32.mrf.mxu0
        %v7577 = vadd.f32 %v7557, %v7576
        %7578 = vdwg.mxu0
        %7579 = vmatpush.msra.mxu0 %v7517
        %7580 = vmatpush.msra.mxu0 %v7516
        %7581 = vmatpush.msra.mxu0 %v7515
        %7582 = vmatpush.msra.mxu0 %v7514
        %7583 = vmatpush.msra.mxu0 %v7513
        %7584 = vmatpush.msra.mxu0 %v7512
        %7585 = vmatpush.msra.mxu0 %v7511
        %7586 = vmatpush.msra.mxu0 %v7510
        %7587 = vmatpush.msra.mxu0 %v7509
        %7588 = vmatpush.msra.mxu0 %v7508
        %7589 = vmatpush.msra.mxu0 %v7507
        %7590 = vmatpush.msra.mxu0 %v7506
        %7591 = vmatpush.msra.mxu0 %v7505
        %7592 = vmatpush.msra.mxu0 %v7504
        %7593 = vmatpush.msra.mxu0 %v7503
        %7594 = vmatpush.msra.mxu0 %v7502
        %7595 = vmatmul.f32.gmra.mxu0 %v7453
        %v7596 = vpop.f32.mrf.mxu0
        %v7597 = vadd.f32 %v7577, %v7596
        %7598 = vdwg.mxu0
        %7599 = vst [vmem:[%s484] sm:$0x1] %v7597
        %s7600 = sand.u32 %s357, 1
        %s7601 = scalar_lea.sflag [#allocation3], %s7600
        %s7602 = sand.u32 %s357, 1
        %s7603 = scalar_lea.vmem [#allocation2], %s7602
        // Predicated region
        $region81: #{residual_net_forward.1} parent=79 // pred_check
          %p7604 = pneg %p367
        $region82: #{residual_net_forward.1} parent=79 // pred_check_branch
          %7606 = sbr.rel (%p7604) target = $region84
        $region83: #{residual_net_forward.1} parent=79 // pred_region
          %7608 = vsyncadd %s7601, 0
          %s7609 = scalar_lea.hbm %s15, %s29
          %s7611 = sshll.u32 %s7603, 4
          %s7612 = int_to_ptr.vmem [resolvable:$true] %s7611
          %s7613 = sshll.u32 %s7609, 4
          %s7614 = int_to_ptr.hbm [resolvable:$true] %s7613
          %7616 = dma.vmem_to_hbm [thread:$0]  %s7612, 16, %s7614, %s7601
        $region84: #{residual_net_forward.1} parent=79 // pred_fallthru
          _
      $region80: #{residual_net_forward.1} parent=5 // pred_fallthru
        _
      %p7617 = scmp.le.s32.totalorder 2, %s24
      // Predicated region
      $region85: #{residual_net_forward.1} parent=5 // pred_check
        %p7618 = pneg %p7617
      $region86: #{residual_net_forward.1} parent=5 // pred_check_branch
        %7620 = sbr.rel (%p7618) target = $region88
      $region87: #{residual_net_forward.1} parent=5 // pred_region
        %s7621 = ssub.s32 %s24, 2
        // Predicated region
        $region89: #{residual_net_forward.1} parent=87 // pred_check
          %p7622 = pneg %p373
        $region90: #{residual_net_forward.1} parent=87 // pred_check_branch
          %7624 = sbr.rel (%p7622) target = $region92
        $region91: #{residual_net_forward.1} parent=87 // pred_region
          %s7625 = sand.u32 %s358, 1
          %s7626 = scalar_lea.sflag [#allocation3], %s7625
          %s7627 = sand.u32 %s358, 1
          %s7628 = scalar_lea.vmem [#allocation2], %s7627
          %7630 = dma.done %s7626, 16
        $region92: #{residual_net_forward.1} parent=87 // pred_fallthru
          _
      $region88: #{residual_net_forward.1} parent=5 // pred_fallthru
        _
    $region6: #{residual_net_forward.1} parent=1 // loop_footer
      %s28 = sadd.s32 1, %s24
    $region7: #{residual_net_forward.1} parent=1 // loop_footer_branch
      %23 = sbr.rel target = $region3
    $region8: #{residual_net_forward.1} parent=1 // loop_exit
      _
    %7631 = vsyncpa [#allocation3], 1
    %s7632 = scalar_lea.sflag [#allocation3], 1
    %7633 = vsyncpa %s7632, 1

</llo_original>
